<compile_context>
chip_gen: v6e
topology: v6e:2x2x1
jax: 0.10.0
libtpu: 0.0.40
codegen_flags: <defaults>
</compile_context>

<pallas_src>
import functools

import jax
import jax.numpy as jnp
from jax.experimental import pallas as pl
from jax.experimental.pallas import tpu as pltpu


# ------------------------------ Pallas kernel -------------------------------


def _inception_kernel(x_ref, wb_ref, w4_ref, w3_ref, w2_ref, w1_ref,
                      scale_ref, shift_ref, o_ref, botpad_ref, xpad_ref,
                      *, L, op, k4, k3, k2, pmax):
    x = x_ref[0].astype(jnp.float32)                                   # (Cin, L)

    # ---- bottleneck: 1x1 conv, no bias -> (op, Cin) @ (Cin, L) ----
    bot = jnp.dot(wb_ref[...], x, preferred_element_type=jnp.float32)  # (op, L)

    # Zero-padded copy of the bottleneck output for the wide convolutions.
    botpad_ref[...] = jnp.zeros(botpad_ref.shape, botpad_ref.dtype)
    botpad_ref[:, pmax:pmax + L] = bot
    botpad = botpad_ref[...]                                           # (op, L+2*pmax)

    def tap_conv(w_ref, k):
        # Conv1d(op -> op, kernel=k, padding=(k-1)//2, no bias) as k small matmuls.
        pad = (k - 1) // 2
        base = pmax - pad
        acc = jnp.zeros((op, L), jnp.float32)
        for t in range(k):                       # static unroll
            win = botpad[:, base + t: base + t + L]                    # (op, L)
            acc = acc + jnp.dot(w_ref[t], win,
                                preferred_element_type=jnp.float32)
        return acc

    out4 = tap_conv(w4_ref, k4)
    out3 = tap_conv(w3_ref, k3)
    out2 = tap_conv(w2_ref, k2)

    # ---- maxpool(k=3, s=1, p=1) on x, then 1x1 conv ----
    xpad_ref[...] = jnp.full(xpad_ref.shape, -1e30, xpad_ref.dtype)
    xpad_ref[:, 1:1 + L] = x
    xp = xpad_ref[...]                                                 # (Cin, L+2)
    pooled = jnp.maximum(jnp.maximum(xp[:, 0:L], xp[:, 1:1 + L]), xp[:, 2:2 + L])
    out1 = jnp.dot(w1_ref[...], pooled, preferred_element_type=jnp.float32)

    # ---- cat((out1, out2, out3, out4), dim=channels) -> BN(eval) -> ReLU ----
    branches = (out1, out2, out3, out4)
    for i, br in enumerate(branches):
        sc = scale_ref[i * op:(i + 1) * op, :]                         # (op, 1)
        sh = shift_ref[i * op:(i + 1) * op, :]
        y = jnp.maximum(br * sc + sh, 0.0)
        o_ref[0, i * op:(i + 1) * op, :] = y.astype(o_ref.dtype)


# ------------------------------- Wrapper -------------------------------------


def inception_base_block(x, params, eps=1e-5):
    """x: (B, in_planes, L). params holds PyTorch-layout conv weights + BN stats."""
    B, cin, L = x.shape

    wb = params["bottleneck"][:, :, 0]                 # (op, cin)  1x1 conv
    w1 = params["conv1"][:, :, 0]                      # (op, cin)  1x1 conv
    w4 = jnp.transpose(params["conv4"], (2, 0, 1))     # (K4, op, op) tap-major
    w3 = jnp.transpose(params["conv3"], (2, 0, 1))
    w2 = jnp.transpose(params["conv2"], (2, 0, 1))
    op = wb.shape[0]
    k4, k3, k2 = w4.shape[0], w3.shape[0], w2.shape[0]
    pmax = max((k4 - 1) // 2, (k3 - 1) // 2, (k2 - 1) // 2)

    gamma, beta, mean, var = params["bn"]
    inv_std = 1.0 / jnp.sqrt(var + eps)
    scale = (gamma * inv_std).reshape(4 * op, 1).astype(jnp.float32)
    shift = (beta - mean * gamma * inv_std).reshape(4 * op, 1).astype(jnp.float32)

    kernel = functools.partial(_inception_kernel, L=L, op=op,
                               k4=k4, k3=k3, k2=k2, pmax=pmax)

    return pl.pallas_call(
        kernel,
        out_shape=jax.ShapeDtypeStruct((B, 4 * op, L), x.dtype),
        grid=(B,),
        in_specs=[
            pl.BlockSpec((1, cin, L), lambda b: (b, 0, 0)),        # x: per-batch block
            pl.BlockSpec(wb.shape, lambda b: (0, 0)),              # bottleneck W
            pl.BlockSpec(w4.shape, lambda b: (0, 0, 0)),           # conv4 W
            pl.BlockSpec(w3.shape, lambda b: (0, 0, 0)),           # conv3 W
            pl.BlockSpec(w2.shape, lambda b: (0, 0, 0)),           # conv2 W
            pl.BlockSpec(w1.shape, lambda b: (0, 0)),              # conv1 W
            pl.BlockSpec(scale.shape, lambda b: (0, 0)),           # BN scale
            pl.BlockSpec(shift.shape, lambda b: (0, 0)),           # BN shift
        ],
        out_specs=pl.BlockSpec((1, 4 * op, L), lambda b: (b, 0, 0)),
        scratch_shapes=[
            pltpu.VMEM((op, L + 2 * pmax), jnp.float32),           # zero-padded bottleneck
            pltpu.VMEM((cin, L + 2), jnp.float32),                 # -inf padded x (maxpool)
        ],
        compiler_params=pltpu.CompilerParams(
            dimension_semantics=("parallel",)),
    )(x, wb, w4, w3, w2, w1, scale, shift)


# ---------------------------- Pure-JAX reference -----------------------------


def _reference(x, params, eps=1e-5):
    def conv1d(z, w, pad):
        return jax.lax.conv_general_dilated(
            z, w, window_strides=(1,), padding=[(pad, pad)],
            dimension_numbers=("NCH", "OIH", "NCH"),
            precision=jax.lax.Precision.HIGHEST)

    bot = conv1d(x, params["bottleneck"], 0)
    o4 = conv1d(bot, params["conv4"], (params["conv4"].shape[-1] - 1) // 2)
    o3 = conv1d(bot, params["conv3"], (params["conv3"].shape[-1] - 1) // 2)
    o2 = conv1d(bot, params["conv2"], (params["conv2"].shape[-1] - 1) // 2)
    pooled = jax.lax.reduce_window(x, -jnp.inf, jax.lax.max,
                                   (1, 1, 3), (1, 1, 1),
                                   ((0, 0), (0, 0), (1, 1)))
    o1 = conv1d(pooled, params["conv1"], 0)
    cat = jnp.concatenate([o1, o2, o3, o4], axis=1)
    gamma, beta, mean, var = params["bn"]
    y = (cat - mean[None, :, None]) / jnp.sqrt(var[None, :, None] + eps)
    y = y * gamma[None, :, None] + beta[None, :, None]
    return jnp.maximum(y, 0.0)


# ---------------------------------- Main --------------------------------------


if __name__ == "__main__":
    # Small shapes consistent with the module: InceptionBaseBlock(in_planes=8, out_planes=32)
    B, in_planes, out_planes, L = 2, 8, 32, 128
    op = out_planes // 4

    key = jax.random.PRNGKey(0)
    kx, kb, k4, k3, k2, k1, kg, kbt, km, kv = jax.random.split(key, 10)
    s = 0.05
    x = jax.random.normal(kx, (B, in_planes, L), jnp.float32)
    params = dict(
        bottleneck=jax.random.normal(kb, (op, in_planes, 1), jnp.float32) * s,
        conv4=jax.random.normal(k4, (op, op, 39), jnp.float32) * s,
        conv3=jax.random.normal(k3, (op, op, 19), jnp.float32) * s,
        conv2=jax.random.normal(k2, (op, op, 9), jnp.float32) * s,
        conv1=jax.random.normal(k1, (op, in_planes, 1), jnp.float32) * s,
        bn=(1.0 + 0.1 * jax.random.normal(kg, (out_planes,), jnp.float32),   # gamma
            0.1 * jax.random.normal(kbt, (out_planes,), jnp.float32),        # beta
            0.1 * jax.random.normal(km, (out_planes,), jnp.float32),         # running_mean
            jax.random.uniform(kv, (out_planes,), jnp.float32, 0.5, 1.5)),   # running_var
    )

    out = inception_base_block(x, params)
    jax.block_until_ready(out)
    assert out.shape == (B, out_planes, L), out.shape

    ref = _reference(x, params)
    err = float(jnp.max(jnp.abs(out - ref)))
    assert err < 1e-2, f"max abs error vs reference: {err}"

    print("KERNEL_OK")
</pallas_src>

<mosaic_0001>
module attributes {stable_mosaic.version = 11 : i64} {
  func.func @_inception_kernel(%arg0: i32, %arg1: memref<1x8x128xf32, #tpu.memory_space<vmem>>, %arg2: memref<8x8xf32, #tpu.memory_space<vmem>>, %arg3: memref<39x8x8xf32, #tpu.memory_space<vmem>>, %arg4: memref<19x8x8xf32, #tpu.memory_space<vmem>>, %arg5: memref<9x8x8xf32, #tpu.memory_space<vmem>>, %arg6: memref<8x8xf32, #tpu.memory_space<vmem>>, %arg7: memref<32x1xf32, #tpu.memory_space<vmem>>, %arg8: memref<32x1xf32, #tpu.memory_space<vmem>>, %arg9: memref<1x32x128xf32, #tpu.memory_space<vmem>>, %arg10: memref<8x166xf32, #tpu.memory_space<vmem>>, %arg11: memref<8x130xf32, #tpu.memory_space<vmem>>) attributes {dimension_semantics = [#tpu.dimension_semantics<parallel>], iteration_bounds = array<i64: 2>, scalar_prefetch = 0 : i64, scratch_operands = 2 : i64, tpu.core_type = #tpu.core_type<tc>, window_params = [{transform_indices = @transform_0, window_bounds = array<i64: 1, 8, 128>}, {pipeline_mode = #tpu.pipeline_mode<synchronous>, transform_indices = @transform_1, window_bounds = array<i64: 8, 8>}, {pipeline_mode = #tpu.pipeline_mode<synchronous>, transform_indices = @transform_2, window_bounds = array<i64: 39, 8, 8>}, {pipeline_mode = #tpu.pipeline_mode<synchronous>, transform_indices = @transform_3, window_bounds = array<i64: 19, 8, 8>}, {pipeline_mode = #tpu.pipeline_mode<synchronous>, transform_indices = @transform_4, window_bounds = array<i64: 9, 8, 8>}, {pipeline_mode = #tpu.pipeline_mode<synchronous>, transform_indices = @transform_5, window_bounds = array<i64: 8, 8>}, {pipeline_mode = #tpu.pipeline_mode<synchronous>, transform_indices = @transform_6, window_bounds = array<i64: 32, 1>}, {pipeline_mode = #tpu.pipeline_mode<synchronous>, transform_indices = @transform_7, window_bounds = array<i64: 32, 1>}, {transform_indices = @transform_8, window_bounds = array<i64: 1, 32, 128>}]} {
    %c0 = arith.constant 0 : index
    %c0_0 = arith.constant 0 : index
    %c0_1 = arith.constant 0 : index
    %0 = vector.load %arg1[%c0, %c0_0, %c0_1] : memref<1x8x128xf32, #tpu.memory_space<vmem>>, vector<1x8x128xf32>
    %1 = vector.shape_cast %0 : vector<1x8x128xf32> to vector<8x128xf32>
    %c0_2 = arith.constant 0 : index
    %c0_3 = arith.constant 0 : index
    %2 = vector.load %arg2[%c0_2, %c0_3] : memref<8x8xf32, #tpu.memory_space<vmem>>, vector<8x8xf32>
    %cst = arith.constant dense<0.000000e+00> : vector<8x128xf32>
    %3 = tpu.matmul %2, %1, %cst {dimension_numbers = #tpu.dot_dimension_numbers<[1], [0], [0], [1], [0, 0, 1, 1], [], []>} : vector<8x8xf32>, vector<8x128xf32>, vector<8x128xf32> -> vector<8x128xf32>
    %cst_4 = arith.constant 0.000000e+00 : f32
    %4 = vector.broadcast %cst_4 : f32 to vector<8x166xf32>
    %c0_5 = arith.constant 0 : index
    %c0_6 = arith.constant 0 : index
    %5 = vector.load %arg10[%c0_5, %c0_6] : memref<8x166xf32, #tpu.memory_space<vmem>>, vector<8x166xf32>
    tpu.vector_store %arg10[%c0_5, %c0_6], %4 {strides = array<i32>} : memref<8x166xf32, #tpu.memory_space<vmem>>, vector<8x166xf32>,
    %c0_7 = arith.constant 0 : index
    %c19 = arith.constant 19 : index
    %6 = vector.load %arg10[%c0_7, %c19] : memref<8x166xf32, #tpu.memory_space<vmem>>, vector<8x128xf32>
    tpu.vector_store %arg10[%c0_7, %c19], %3 {strides = array<i32>} : memref<8x166xf32, #tpu.memory_space<vmem>>, vector<8x128xf32>,
    %c0_8 = arith.constant 0 : index
    %c0_9 = arith.constant 0 : index
    %7 = vector.load %arg10[%c0_8, %c0_9] : memref<8x166xf32, #tpu.memory_space<vmem>>, vector<8x166xf32>
    %cst_10 = arith.constant 0.000000e+00 : f32
    %8 = vector.broadcast %cst_10 : f32 to vector<8x128xf32>
    %9 = vector.extract_strided_slice %7 {offsets = [0, 0], sizes = [8, 128], strides = [1, 1]} : vector<8x166xf32> to vector<8x128xf32>
    %c0_11 = arith.constant 0 : index
    %c0_12 = arith.constant 0 : index
    %c0_13 = arith.constant 0 : index
    %10 = vector.load %arg3[%c0_11, %c0_12, %c0_13] : memref<39x8x8xf32, #tpu.memory_space<vmem>>, vector<1x8x8xf32>
    %11 = vector.shape_cast %10 : vector<1x8x8xf32> to vector<8x8xf32>
    %cst_14 = arith.constant dense<0.000000e+00> : vector<8x128xf32>
    %12 = tpu.matmul %11, %9, %cst_14 {dimension_numbers = #tpu.dot_dimension_numbers<[1], [0], [0], [1], [0, 0, 1, 1], [], []>} : vector<8x8xf32>, vector<8x128xf32>, vector<8x128xf32> -> vector<8x128xf32>
    %13 = arith.addf %8, %12 : vector<8x128xf32>
    %14 = vector.extract_strided_slice %7 {offsets = [0, 1], sizes = [8, 128], strides = [1, 1]} : vector<8x166xf32> to vector<8x128xf32>
    %c1 = arith.constant 1 : index
    %c0_15 = arith.constant 0 : index
    %c0_16 = arith.constant 0 : index
    %15 = vector.load %arg3[%c1, %c0_15, %c0_16] : memref<39x8x8xf32, #tpu.memory_space<vmem>>, vector<1x8x8xf32>
    %16 = vector.shape_cast %15 : vector<1x8x8xf32> to vector<8x8xf32>
    %cst_17 = arith.constant dense<0.000000e+00> : vector<8x128xf32>
    %17 = tpu.matmul %16, %14, %cst_17 {dimension_numbers = #tpu.dot_dimension_numbers<[1], [0], [0], [1], [0, 0, 1, 1], [], []>} : vector<8x8xf32>, vector<8x128xf32>, vector<8x128xf32> -> vector<8x128xf32>
    %18 = arith.addf %13, %17 : vector<8x128xf32>
    %19 = vector.extract_strided_slice %7 {offsets = [0, 2], sizes = [8, 128], strides = [1, 1]} : vector<8x166xf32> to vector<8x128xf32>
    %c2 = arith.constant 2 : index
    %c0_18 = arith.constant 0 : index
    %c0_19 = arith.constant 0 : index
    %20 = vector.load %arg3[%c2, %c0_18, %c0_19] : memref<39x8x8xf32, #tpu.memory_space<vmem>>, vector<1x8x8xf32>
    %21 = vector.shape_cast %20 : vector<1x8x8xf32> to vector<8x8xf32>
    %cst_20 = arith.constant dense<0.000000e+00> : vector<8x128xf32>
    %22 = tpu.matmul %21, %19, %cst_20 {dimension_numbers = #tpu.dot_dimension_numbers<[1], [0], [0], [1], [0, 0, 1, 1], [], []>} : vector<8x8xf32>, vector<8x128xf32>, vector<8x128xf32> -> vector<8x128xf32>
    %23 = arith.addf %18, %22 : vector<8x128xf32>
    %24 = vector.extract_strided_slice %7 {offsets = [0, 3], sizes = [8, 128], strides = [1, 1]} : vector<8x166xf32> to vector<8x128xf32>
    %c3 = arith.constant 3 : index
    %c0_21 = arith.constant 0 : index
    %c0_22 = arith.constant 0 : index
    %25 = vector.load %arg3[%c3, %c0_21, %c0_22] : memref<39x8x8xf32, #tpu.memory_space<vmem>>, vector<1x8x8xf32>
    %26 = vector.shape_cast %25 : vector<1x8x8xf32> to vector<8x8xf32>
    %cst_23 = arith.constant dense<0.000000e+00> : vector<8x128xf32>
    %27 = tpu.matmul %26, %24, %cst_23 {dimension_numbers = #tpu.dot_dimension_numbers<[1], [0], [0], [1], [0, 0, 1, 1], [], []>} : vector<8x8xf32>, vector<8x128xf32>, vector<8x128xf32> -> vector<8x128xf32>
    %28 = arith.addf %23, %27 : vector<8x128xf32>
    %29 = vector.extract_strided_slice %7 {offsets = [0, 4], sizes = [8, 128], strides = [1, 1]} : vector<8x166xf32> to vector<8x128xf32>
    %c4 = arith.constant 4 : index
    %c0_24 = arith.constant 0 : index
    %c0_25 = arith.constant 0 : index
    %30 = vector.load %arg3[%c4, %c0_24, %c0_25] : memref<39x8x8xf32, #tpu.memory_space<vmem>>, vector<1x8x8xf32>
    %31 = vector.shape_cast %30 : vector<1x8x8xf32> to vector<8x8xf32>
    %cst_26 = arith.constant dense<0.000000e+00> : vector<8x128xf32>
    %32 = tpu.matmul %31, %29, %cst_26 {dimension_numbers = #tpu.dot_dimension_numbers<[1], [0], [0], [1], [0, 0, 1, 1], [], []>} : vector<8x8xf32>, vector<8x128xf32>, vector<8x128xf32> -> vector<8x128xf32>
    %33 = arith.addf %28, %32 : vector<8x128xf32>
    %34 = vector.extract_strided_slice %7 {offsets = [0, 5], sizes = [8, 128], strides = [1, 1]} : vector<8x166xf32> to vector<8x128xf32>
    %c5 = arith.constant 5 : index
    %c0_27 = arith.constant 0 : index
    %c0_28 = arith.constant 0 : index
    %35 = vector.load %arg3[%c5, %c0_27, %c0_28] : memref<39x8x8xf32, #tpu.memory_space<vmem>>, vector<1x8x8xf32>
    %36 = vector.shape_cast %35 : vector<1x8x8xf32> to vector<8x8xf32>
    %cst_29 = arith.constant dense<0.000000e+00> : vector<8x128xf32>
    %37 = tpu.matmul %36, %34, %cst_29 {dimension_numbers = #tpu.dot_dimension_numbers<[1], [0], [0], [1], [0, 0, 1, 1], [], []>} : vector<8x8xf32>, vector<8x128xf32>, vector<8x128xf32> -> vector<8x128xf32>
    %38 = arith.addf %33, %37 : vector<8x128xf32>
    %39 = vector.extract_strided_slice %7 {offsets = [0, 6], sizes = [8, 128], strides = [1, 1]} : vector<8x166xf32> to vector<8x128xf32>
    %c6 = arith.constant 6 : index
    %c0_30 = arith.constant 0 : index
    %c0_31 = arith.constant 0 : index
    %40 = vector.load %arg3[%c6, %c0_30, %c0_31] : memref<39x8x8xf32, #tpu.memory_space<vmem>>, vector<1x8x8xf32>
    %41 = vector.shape_cast %40 : vector<1x8x8xf32> to vector<8x8xf32>
    %cst_32 = arith.constant dense<0.000000e+00> : vector<8x128xf32>
    %42 = tpu.matmul %41, %39, %cst_32 {dimension_numbers = #tpu.dot_dimension_numbers<[1], [0], [0], [1], [0, 0, 1, 1], [], []>} : vector<8x8xf32>, vector<8x128xf32>, vector<8x128xf32> -> vector<8x128xf32>
    %43 = arith.addf %38, %42 : vector<8x128xf32>
    %44 = vector.extract_strided_slice %7 {offsets = [0, 7], sizes = [8, 128], strides = [1, 1]} : vector<8x166xf32> to vector<8x128xf32>
    %c7 = arith.constant 7 : index
    %c0_33 = arith.constant 0 : index
    %c0_34 = arith.constant 0 : index
    %45 = vector.load %arg3[%c7, %c0_33, %c0_34] : memref<39x8x8xf32, #tpu.memory_space<vmem>>, vector<1x8x8xf32>
    %46 = vector.shape_cast %45 : vector<1x8x8xf32> to vector<8x8xf32>
    %cst_35 = arith.constant dense<0.000000e+00> : vector<8x128xf32>
    %47 = tpu.matmul %46, %44, %cst_35 {dimension_numbers = #tpu.dot_dimension_numbers<[1], [0], [0], [1], [0, 0, 1, 1], [], []>} : vector<8x8xf32>, vector<8x128xf32>, vector<8x128xf32> -> vector<8x128xf32>
    %48 = arith.addf %43, %47 : vector<8x128xf32>
    %49 = vector.extract_strided_slice %7 {offsets = [0, 8], sizes = [8, 128], strides = [1, 1]} : vector<8x166xf32> to vector<8x128xf32>
    %c8 = arith.constant 8 : index
    %c0_36 = arith.constant 0 : index
    %c0_37 = arith.constant 0 : index
    %50 = vector.load %arg3[%c8, %c0_36, %c0_37] : memref<39x8x8xf32, #tpu.memory_space<vmem>>, vector<1x8x8xf32>
    %51 = vector.shape_cast %50 : vector<1x8x8xf32> to vector<8x8xf32>
    %cst_38 = arith.constant dense<0.000000e+00> : vector<8x128xf32>
    %52 = tpu.matmul %51, %49, %cst_38 {dimension_numbers = #tpu.dot_dimension_numbers<[1], [0], [0], [1], [0, 0, 1, 1], [], []>} : vector<8x8xf32>, vector<8x128xf32>, vector<8x128xf32> -> vector<8x128xf32>
    %53 = arith.addf %48, %52 : vector<8x128xf32>
    %54 = vector.extract_strided_slice %7 {offsets = [0, 9], sizes = [8, 128], strides = [1, 1]} : vector<8x166xf32> to vector<8x128xf32>
    %c9 = arith.constant 9 : index
    %c0_39 = arith.constant 0 : index
    %c0_40 = arith.constant 0 : index
    %55 = vector.load %arg3[%c9, %c0_39, %c0_40] : memref<39x8x8xf32, #tpu.memory_space<vmem>>, vector<1x8x8xf32>
    %56 = vector.shape_cast %55 : vector<1x8x8xf32> to vector<8x8xf32>
    %cst_41 = arith.constant dense<0.000000e+00> : vector<8x128xf32>
    %57 = tpu.matmul %56, %54, %cst_41 {dimension_numbers = #tpu.dot_dimension_numbers<[1], [0], [0], [1], [0, 0, 1, 1], [], []>} : vector<8x8xf32>, vector<8x128xf32>, vector<8x128xf32> -> vector<8x128xf32>
    %58 = arith.addf %53, %57 : vector<8x128xf32>
    %59 = vector.extract_strided_slice %7 {offsets = [0, 10], sizes = [8, 128], strides = [1, 1]} : vector<8x166xf32> to vector<8x128xf32>
    %c10 = arith.constant 10 : index
    %c0_42 = arith.constant 0 : index
    %c0_43 = arith.constant 0 : index
    %60 = vector.load %arg3[%c10, %c0_42, %c0_43] : memref<39x8x8xf32, #tpu.memory_space<vmem>>, vector<1x8x8xf32>
    %61 = vector.shape_cast %60 : vector<1x8x8xf32> to vector<8x8xf32>
    %cst_44 = arith.constant dense<0.000000e+00> : vector<8x128xf32>
    %62 = tpu.matmul %61, %59, %cst_44 {dimension_numbers = #tpu.dot_dimension_numbers<[1], [0], [0], [1], [0, 0, 1, 1], [], []>} : vector<8x8xf32>, vector<8x128xf32>, vector<8x128xf32> -> vector<8x128xf32>
    %63 = arith.addf %58, %62 : vector<8x128xf32>
    %64 = vector.extract_strided_slice %7 {offsets = [0, 11], sizes = [8, 128], strides = [1, 1]} : vector<8x166xf32> to vector<8x128xf32>
    %c11 = arith.constant 11 : index
    %c0_45 = arith.constant 0 : index
    %c0_46 = arith.constant 0 : index
    %65 = vector.load %arg3[%c11, %c0_45, %c0_46] : memref<39x8x8xf32, #tpu.memory_space<vmem>>, vector<1x8x8xf32>
    %66 = vector.shape_cast %65 : vector<1x8x8xf32> to vector<8x8xf32>
    %cst_47 = arith.constant dense<0.000000e+00> : vector<8x128xf32>
    %67 = tpu.matmul %66, %64, %cst_47 {dimension_numbers = #tpu.dot_dimension_numbers<[1], [0], [0], [1], [0, 0, 1, 1], [], []>} : vector<8x8xf32>, vector<8x128xf32>, vector<8x128xf32> -> vector<8x128xf32>
    %68 = arith.addf %63, %67 : vector<8x128xf32>
    %69 = vector.extract_strided_slice %7 {offsets = [0, 12], sizes = [8, 128], strides = [1, 1]} : vector<8x166xf32> to vector<8x128xf32>
    %c12 = arith.constant 12 : index
    %c0_48 = arith.constant 0 : index
    %c0_49 = arith.constant 0 : index
    %70 = vector.load %arg3[%c12, %c0_48, %c0_49] : memref<39x8x8xf32, #tpu.memory_space<vmem>>, vector<1x8x8xf32>
    %71 = vector.shape_cast %70 : vector<1x8x8xf32> to vector<8x8xf32>
    %cst_50 = arith.constant dense<0.000000e+00> : vector<8x128xf32>
    %72 = tpu.matmul %71, %69, %cst_50 {dimension_numbers = #tpu.dot_dimension_numbers<[1], [0], [0], [1], [0, 0, 1, 1], [], []>} : vector<8x8xf32>, vector<8x128xf32>, vector<8x128xf32> -> vector<8x128xf32>
    %73 = arith.addf %68, %72 : vector<8x128xf32>
    %74 = vector.extract_strided_slice %7 {offsets = [0, 13], sizes = [8, 128], strides = [1, 1]} : vector<8x166xf32> to vector<8x128xf32>
    %c13 = arith.constant 13 : index
    %c0_51 = arith.constant 0 : index
    %c0_52 = arith.constant 0 : index
    %75 = vector.load %arg3[%c13, %c0_51, %c0_52] : memref<39x8x8xf32, #tpu.memory_space<vmem>>, vector<1x8x8xf32>
    %76 = vector.shape_cast %75 : vector<1x8x8xf32> to vector<8x8xf32>
    %cst_53 = arith.constant dense<0.000000e+00> : vector<8x128xf32>
    %77 = tpu.matmul %76, %74, %cst_53 {dimension_numbers = #tpu.dot_dimension_numbers<[1], [0], [0], [1], [0, 0, 1, 1], [], []>} : vector<8x8xf32>, vector<8x128xf32>, vector<8x128xf32> -> vector<8x128xf32>
    %78 = arith.addf %73, %77 : vector<8x128xf32>
    %79 = vector.extract_strided_slice %7 {offsets = [0, 14], sizes = [8, 128], strides = [1, 1]} : vector<8x166xf32> to vector<8x128xf32>
    %c14 = arith.constant 14 : index
    %c0_54 = arith.constant 0 : index
    %c0_55 = arith.constant 0 : index
    %80 = vector.load %arg3[%c14, %c0_54, %c0_55] : memref<39x8x8xf32, #tpu.memory_space<vmem>>, vector<1x8x8xf32>
    %81 = vector.shape_cast %80 : vector<1x8x8xf32> to vector<8x8xf32>
    %cst_56 = arith.constant dense<0.000000e+00> : vector<8x128xf32>
    %82 = tpu.matmul %81, %79, %cst_56 {dimension_numbers = #tpu.dot_dimension_numbers<[1], [0], [0], [1], [0, 0, 1, 1], [], []>} : vector<8x8xf32>, vector<8x128xf32>, vector<8x128xf32> -> vector<8x128xf32>
    %83 = arith.addf %78, %82 : vector<8x128xf32>
    %84 = vector.extract_strided_slice %7 {offsets = [0, 15], sizes = [8, 128], strides = [1, 1]} : vector<8x166xf32> to vector<8x128xf32>
    %c15 = arith.constant 15 : index
    %c0_57 = arith.constant 0 : index
    %c0_58 = arith.constant 0 : index
    %85 = vector.load %arg3[%c15, %c0_57, %c0_58] : memref<39x8x8xf32, #tpu.memory_space<vmem>>, vector<1x8x8xf32>
    %86 = vector.shape_cast %85 : vector<1x8x8xf32> to vector<8x8xf32>
    %cst_59 = arith.constant dense<0.000000e+00> : vector<8x128xf32>
    %87 = tpu.matmul %86, %84, %cst_59 {dimension_numbers = #tpu.dot_dimension_numbers<[1], [0], [0], [1], [0, 0, 1, 1], [], []>} : vector<8x8xf32>, vector<8x128xf32>, vector<8x128xf32> -> vector<8x128xf32>
    %88 = arith.addf %83, %87 : vector<8x128xf32>
    %89 = vector.extract_strided_slice %7 {offsets = [0, 16], sizes = [8, 128], strides = [1, 1]} : vector<8x166xf32> to vector<8x128xf32>
    %c16 = arith.constant 16 : index
    %c0_60 = arith.constant 0 : index
    %c0_61 = arith.constant 0 : index
    %90 = vector.load %arg3[%c16, %c0_60, %c0_61] : memref<39x8x8xf32, #tpu.memory_space<vmem>>, vector<1x8x8xf32>
    %91 = vector.shape_cast %90 : vector<1x8x8xf32> to vector<8x8xf32>
    %cst_62 = arith.constant dense<0.000000e+00> : vector<8x128xf32>
    %92 = tpu.matmul %91, %89, %cst_62 {dimension_numbers = #tpu.dot_dimension_numbers<[1], [0], [0], [1], [0, 0, 1, 1], [], []>} : vector<8x8xf32>, vector<8x128xf32>, vector<8x128xf32> -> vector<8x128xf32>
    %93 = arith.addf %88, %92 : vector<8x128xf32>
    %94 = vector.extract_strided_slice %7 {offsets = [0, 17], sizes = [8, 128], strides = [1, 1]} : vector<8x166xf32> to vector<8x128xf32>
    %c17 = arith.constant 17 : index
    %c0_63 = arith.constant 0 : index
    %c0_64 = arith.constant 0 : index
    %95 = vector.load %arg3[%c17, %c0_63, %c0_64] : memref<39x8x8xf32, #tpu.memory_space<vmem>>, vector<1x8x8xf32>
    %96 = vector.shape_cast %95 : vector<1x8x8xf32> to vector<8x8xf32>
    %cst_65 = arith.constant dense<0.000000e+00> : vector<8x128xf32>
    %97 = tpu.matmul %96, %94, %cst_65 {dimension_numbers = #tpu.dot_dimension_numbers<[1], [0], [0], [1], [0, 0, 1, 1], [], []>} : vector<8x8xf32>, vector<8x128xf32>, vector<8x128xf32> -> vector<8x128xf32>
    %98 = arith.addf %93, %97 : vector<8x128xf32>
    %99 = vector.extract_strided_slice %7 {offsets = [0, 18], sizes = [8, 128], strides = [1, 1]} : vector<8x166xf32> to vector<8x128xf32>
    %c18 = arith.constant 18 : index
    %c0_66 = arith.constant 0 : index
    %c0_67 = arith.constant 0 : index
    %100 = vector.load %arg3[%c18, %c0_66, %c0_67] : memref<39x8x8xf32, #tpu.memory_space<vmem>>, vector<1x8x8xf32>
    %101 = vector.shape_cast %100 : vector<1x8x8xf32> to vector<8x8xf32>
    %cst_68 = arith.constant dense<0.000000e+00> : vector<8x128xf32>
    %102 = tpu.matmul %101, %99, %cst_68 {dimension_numbers = #tpu.dot_dimension_numbers<[1], [0], [0], [1], [0, 0, 1, 1], [], []>} : vector<8x8xf32>, vector<8x128xf32>, vector<8x128xf32> -> vector<8x128xf32>
    %103 = arith.addf %98, %102 : vector<8x128xf32>
    %104 = vector.extract_strided_slice %7 {offsets = [0, 19], sizes = [8, 128], strides = [1, 1]} : vector<8x166xf32> to vector<8x128xf32>
    %c19_69 = arith.constant 19 : index
    %c0_70 = arith.constant 0 : index
    %c0_71 = arith.constant 0 : index
    %105 = vector.load %arg3[%c19_69, %c0_70, %c0_71] : memref<39x8x8xf32, #tpu.memory_space<vmem>>, vector<1x8x8xf32>
    %106 = vector.shape_cast %105 : vector<1x8x8xf32> to vector<8x8xf32>
    %cst_72 = arith.constant dense<0.000000e+00> : vector<8x128xf32>
    %107 = tpu.matmul %106, %104, %cst_72 {dimension_numbers = #tpu.dot_dimension_numbers<[1], [0], [0], [1], [0, 0, 1, 1], [], []>} : vector<8x8xf32>, vector<8x128xf32>, vector<8x128xf32> -> vector<8x128xf32>
    %108 = arith.addf %103, %107 : vector<8x128xf32>
    %109 = vector.extract_strided_slice %7 {offsets = [0, 20], sizes = [8, 128], strides = [1, 1]} : vector<8x166xf32> to vector<8x128xf32>
    %c20 = arith.constant 20 : index
    %c0_73 = arith.constant 0 : index
    %c0_74 = arith.constant 0 : index
    %110 = vector.load %arg3[%c20, %c0_73, %c0_74] : memref<39x8x8xf32, #tpu.memory_space<vmem>>, vector<1x8x8xf32>
    %111 = vector.shape_cast %110 : vector<1x8x8xf32> to vector<8x8xf32>
    %cst_75 = arith.constant dense<0.000000e+00> : vector<8x128xf32>
    %112 = tpu.matmul %111, %109, %cst_75 {dimension_numbers = #tpu.dot_dimension_numbers<[1], [0], [0], [1], [0, 0, 1, 1], [], []>} : vector<8x8xf32>, vector<8x128xf32>, vector<8x128xf32> -> vector<8x128xf32>
    %113 = arith.addf %108, %112 : vector<8x128xf32>
    %114 = vector.extract_strided_slice %7 {offsets = [0, 21], sizes = [8, 128], strides = [1, 1]} : vector<8x166xf32> to vector<8x128xf32>
    %c21 = arith.constant 21 : index
    %c0_76 = arith.constant 0 : index
    %c0_77 = arith.constant 0 : index
    %115 = vector.load %arg3[%c21, %c0_76, %c0_77] : memref<39x8x8xf32, #tpu.memory_space<vmem>>, vector<1x8x8xf32>
    %116 = vector.shape_cast %115 : vector<1x8x8xf32> to vector<8x8xf32>
    %cst_78 = arith.constant dense<0.000000e+00> : vector<8x128xf32>
    %117 = tpu.matmul %116, %114, %cst_78 {dimension_numbers = #tpu.dot_dimension_numbers<[1], [0], [0], [1], [0, 0, 1, 1], [], []>} : vector<8x8xf32>, vector<8x128xf32>, vector<8x128xf32> -> vector<8x128xf32>
    %118 = arith.addf %113, %117 : vector<8x128xf32>
    %119 = vector.extract_strided_slice %7 {offsets = [0, 22], sizes = [8, 128], strides = [1, 1]} : vector<8x166xf32> to vector<8x128xf32>
    %c22 = arith.constant 22 : index
    %c0_79 = arith.constant 0 : index
    %c0_80 = arith.constant 0 : index
    %120 = vector.load %arg3[%c22, %c0_79, %c0_80] : memref<39x8x8xf32, #tpu.memory_space<vmem>>, vector<1x8x8xf32>
    %121 = vector.shape_cast %120 : vector<1x8x8xf32> to vector<8x8xf32>
    %cst_81 = arith.constant dense<0.000000e+00> : vector<8x128xf32>
    %122 = tpu.matmul %121, %119, %cst_81 {dimension_numbers = #tpu.dot_dimension_numbers<[1], [0], [0], [1], [0, 0, 1, 1], [], []>} : vector<8x8xf32>, vector<8x128xf32>, vector<8x128xf32> -> vector<8x128xf32>
    %123 = arith.addf %118, %122 : vector<8x128xf32>
    %124 = vector.extract_strided_slice %7 {offsets = [0, 23], sizes = [8, 128], strides = [1, 1]} : vector<8x166xf32> to vector<8x128xf32>
    %c23 = arith.constant 23 : index
    %c0_82 = arith.constant 0 : index
    %c0_83 = arith.constant 0 : index
    %125 = vector.load %arg3[%c23, %c0_82, %c0_83] : memref<39x8x8xf32, #tpu.memory_space<vmem>>, vector<1x8x8xf32>
    %126 = vector.shape_cast %125 : vector<1x8x8xf32> to vector<8x8xf32>
    %cst_84 = arith.constant dense<0.000000e+00> : vector<8x128xf32>
    %127 = tpu.matmul %126, %124, %cst_84 {dimension_numbers = #tpu.dot_dimension_numbers<[1], [0], [0], [1], [0, 0, 1, 1], [], []>} : vector<8x8xf32>, vector<8x128xf32>, vector<8x128xf32> -> vector<8x128xf32>
    %128 = arith.addf %123, %127 : vector<8x128xf32>
    %129 = vector.extract_strided_slice %7 {offsets = [0, 24], sizes = [8, 128], strides = [1, 1]} : vector<8x166xf32> to vector<8x128xf32>
    %c24 = arith.constant 24 : index
    %c0_85 = arith.constant 0 : index
    %c0_86 = arith.constant 0 : index
    %130 = vector.load %arg3[%c24, %c0_85, %c0_86] : memref<39x8x8xf32, #tpu.memory_space<vmem>>, vector<1x8x8xf32>
    %131 = vector.shape_cast %130 : vector<1x8x8xf32> to vector<8x8xf32>
    %cst_87 = arith.constant dense<0.000000e+00> : vector<8x128xf32>
    %132 = tpu.matmul %131, %129, %cst_87 {dimension_numbers = #tpu.dot_dimension_numbers<[1], [0], [0], [1], [0, 0, 1, 1], [], []>} : vector<8x8xf32>, vector<8x128xf32>, vector<8x128xf32> -> vector<8x128xf32>
    %133 = arith.addf %128, %132 : vector<8x128xf32>
    %134 = vector.extract_strided_slice %7 {offsets = [0, 25], sizes = [8, 128], strides = [1, 1]} : vector<8x166xf32> to vector<8x128xf32>
    %c25 = arith.constant 25 : index
    %c0_88 = arith.constant 0 : index
    %c0_89 = arith.constant 0 : index
    %135 = vector.load %arg3[%c25, %c0_88, %c0_89] : memref<39x8x8xf32, #tpu.memory_space<vmem>>, vector<1x8x8xf32>
    %136 = vector.shape_cast %135 : vector<1x8x8xf32> to vector<8x8xf32>
    %cst_90 = arith.constant dense<0.000000e+00> : vector<8x128xf32>
    %137 = tpu.matmul %136, %134, %cst_90 {dimension_numbers = #tpu.dot_dimension_numbers<[1], [0], [0], [1], [0, 0, 1, 1], [], []>} : vector<8x8xf32>, vector<8x128xf32>, vector<8x128xf32> -> vector<8x128xf32>
    %138 = arith.addf %133, %137 : vector<8x128xf32>
    %139 = vector.extract_strided_slice %7 {offsets = [0, 26], sizes = [8, 128], strides = [1, 1]} : vector<8x166xf32> to vector<8x128xf32>
    %c26 = arith.constant 26 : index
    %c0_91 = arith.constant 0 : index
    %c0_92 = arith.constant 0 : index
    %140 = vector.load %arg3[%c26, %c0_91, %c0_92] : memref<39x8x8xf32, #tpu.memory_space<vmem>>, vector<1x8x8xf32>
    %141 = vector.shape_cast %140 : vector<1x8x8xf32> to vector<8x8xf32>
    %cst_93 = arith.constant dense<0.000000e+00> : vector<8x128xf32>
    %142 = tpu.matmul %141, %139, %cst_93 {dimension_numbers = #tpu.dot_dimension_numbers<[1], [0], [0], [1], [0, 0, 1, 1], [], []>} : vector<8x8xf32>, vector<8x128xf32>, vector<8x128xf32> -> vector<8x128xf32>
    %143 = arith.addf %138, %142 : vector<8x128xf32>
    %144 = vector.extract_strided_slice %7 {offsets = [0, 27], sizes = [8, 128], strides = [1, 1]} : vector<8x166xf32> to vector<8x128xf32>
    %c27 = arith.constant 27 : index
    %c0_94 = arith.constant 0 : index
    %c0_95 = arith.constant 0 : index
    %145 = vector.load %arg3[%c27, %c0_94, %c0_95] : memref<39x8x8xf32, #tpu.memory_space<vmem>>, vector<1x8x8xf32>
    %146 = vector.shape_cast %145 : vector<1x8x8xf32> to vector<8x8xf32>
    %cst_96 = arith.constant dense<0.000000e+00> : vector<8x128xf32>
    %147 = tpu.matmul %146, %144, %cst_96 {dimension_numbers = #tpu.dot_dimension_numbers<[1], [0], [0], [1], [0, 0, 1, 1], [], []>} : vector<8x8xf32>, vector<8x128xf32>, vector<8x128xf32> -> vector<8x128xf32>
    %148 = arith.addf %143, %147 : vector<8x128xf32>
    %149 = vector.extract_strided_slice %7 {offsets = [0, 28], sizes = [8, 128], strides = [1, 1]} : vector<8x166xf32> to vector<8x128xf32>
    %c28 = arith.constant 28 : index
    %c0_97 = arith.constant 0 : index
    %c0_98 = arith.constant 0 : index
    %150 = vector.load %arg3[%c28, %c0_97, %c0_98] : memref<39x8x8xf32, #tpu.memory_space<vmem>>, vector<1x8x8xf32>
    %151 = vector.shape_cast %150 : vector<1x8x8xf32> to vector<8x8xf32>
    %cst_99 = arith.constant dense<0.000000e+00> : vector<8x128xf32>
    %152 = tpu.matmul %151, %149, %cst_99 {dimension_numbers = #tpu.dot_dimension_numbers<[1], [0], [0], [1], [0, 0, 1, 1], [], []>} : vector<8x8xf32>, vector<8x128xf32>, vector<8x128xf32> -> vector<8x128xf32>
    %153 = arith.addf %148, %152 : vector<8x128xf32>
    %154 = vector.extract_strided_slice %7 {offsets = [0, 29], sizes = [8, 128], strides = [1, 1]} : vector<8x166xf32> to vector<8x128xf32>
    %c29 = arith.constant 29 : index
    %c0_100 = arith.constant 0 : index
    %c0_101 = arith.constant 0 : index
    %155 = vector.load %arg3[%c29, %c0_100, %c0_101] : memref<39x8x8xf32, #tpu.memory_space<vmem>>, vector<1x8x8xf32>
    %156 = vector.shape_cast %155 : vector<1x8x8xf32> to vector<8x8xf32>
    %cst_102 = arith.constant dense<0.000000e+00> : vector<8x128xf32>
    %157 = tpu.matmul %156, %154, %cst_102 {dimension_numbers = #tpu.dot_dimension_numbers<[1], [0], [0], [1], [0, 0, 1, 1], [], []>} : vector<8x8xf32>, vector<8x128xf32>, vector<8x128xf32> -> vector<8x128xf32>
    %158 = arith.addf %153, %157 : vector<8x128xf32>
    %159 = vector.extract_strided_slice %7 {offsets = [0, 30], sizes = [8, 128], strides = [1, 1]} : vector<8x166xf32> to vector<8x128xf32>
    %c30 = arith.constant 30 : index
    %c0_103 = arith.constant 0 : index
    %c0_104 = arith.constant 0 : index
    %160 = vector.load %arg3[%c30, %c0_103, %c0_104] : memref<39x8x8xf32, #tpu.memory_space<vmem>>, vector<1x8x8xf32>
    %161 = vector.shape_cast %160 : vector<1x8x8xf32> to vector<8x8xf32>
    %cst_105 = arith.constant dense<0.000000e+00> : vector<8x128xf32>
    %162 = tpu.matmul %161, %159, %cst_105 {dimension_numbers = #tpu.dot_dimension_numbers<[1], [0], [0], [1], [0, 0, 1, 1], [], []>} : vector<8x8xf32>, vector<8x128xf32>, vector<8x128xf32> -> vector<8x128xf32>
    %163 = arith.addf %158, %162 : vector<8x128xf32>
    %164 = vector.extract_strided_slice %7 {offsets = [0, 31], sizes = [8, 128], strides = [1, 1]} : vector<8x166xf32> to vector<8x128xf32>
    %c31 = arith.constant 31 : index
    %c0_106 = arith.constant 0 : index
    %c0_107 = arith.constant 0 : index
    %165 = vector.load %arg3[%c31, %c0_106, %c0_107] : memref<39x8x8xf32, #tpu.memory_space<vmem>>, vector<1x8x8xf32>
    %166 = vector.shape_cast %165 : vector<1x8x8xf32> to vector<8x8xf32>
    %cst_108 = arith.constant dense<0.000000e+00> : vector<8x128xf32>
    %167 = tpu.matmul %166, %164, %cst_108 {dimension_numbers = #tpu.dot_dimension_numbers<[1], [0], [0], [1], [0, 0, 1, 1], [], []>} : vector<8x8xf32>, vector<8x128xf32>, vector<8x128xf32> -> vector<8x128xf32>
    %168 = arith.addf %163, %167 : vector<8x128xf32>
    %169 = vector.extract_strided_slice %7 {offsets = [0, 32], sizes = [8, 128], strides = [1, 1]} : vector<8x166xf32> to vector<8x128xf32>
    %c32 = arith.constant 32 : index
    %c0_109 = arith.constant 0 : index
    %c0_110 = arith.constant 0 : index
    %170 = vector.load %arg3[%c32, %c0_109, %c0_110] : memref<39x8x8xf32, #tpu.memory_space<vmem>>, vector<1x8x8xf32>
    %171 = vector.shape_cast %170 : vector<1x8x8xf32> to vector<8x8xf32>
    %cst_111 = arith.constant dense<0.000000e+00> : vector<8x128xf32>
    %172 = tpu.matmul %171, %169, %cst_111 {dimension_numbers = #tpu.dot_dimension_numbers<[1], [0], [0], [1], [0, 0, 1, 1], [], []>} : vector<8x8xf32>, vector<8x128xf32>, vector<8x128xf32> -> vector<8x128xf32>
    %173 = arith.addf %168, %172 : vector<8x128xf32>
    %174 = vector.extract_strided_slice %7 {offsets = [0, 33], sizes = [8, 128], strides = [1, 1]} : vector<8x166xf32> to vector<8x128xf32>
    %c33 = arith.constant 33 : index
    %c0_112 = arith.constant 0 : index
    %c0_113 = arith.constant 0 : index
    %175 = vector.load %arg3[%c33, %c0_112, %c0_113] : memref<39x8x8xf32, #tpu.memory_space<vmem>>, vector<1x8x8xf32>
    %176 = vector.shape_cast %175 : vector<1x8x8xf32> to vector<8x8xf32>
    %cst_114 = arith.constant dense<0.000000e+00> : vector<8x128xf32>
    %177 = tpu.matmul %176, %174, %cst_114 {dimension_numbers = #tpu.dot_dimension_numbers<[1], [0], [0], [1], [0, 0, 1, 1], [], []>} : vector<8x8xf32>, vector<8x128xf32>, vector<8x128xf32> -> vector<8x128xf32>
    %178 = arith.addf %173, %177 : vector<8x128xf32>
    %179 = vector.extract_strided_slice %7 {offsets = [0, 34], sizes = [8, 128], strides = [1, 1]} : vector<8x166xf32> to vector<8x128xf32>
    %c34 = arith.constant 34 : index
    %c0_115 = arith.constant 0 : index
    %c0_116 = arith.constant 0 : index
    %180 = vector.load %arg3[%c34, %c0_115, %c0_116] : memref<39x8x8xf32, #tpu.memory_space<vmem>>, vector<1x8x8xf32>
    %181 = vector.shape_cast %180 : vector<1x8x8xf32> to vector<8x8xf32>
    %cst_117 = arith.constant dense<0.000000e+00> : vector<8x128xf32>
    %182 = tpu.matmul %181, %179, %cst_117 {dimension_numbers = #tpu.dot_dimension_numbers<[1], [0], [0], [1], [0, 0, 1, 1], [], []>} : vector<8x8xf32>, vector<8x128xf32>, vector<8x128xf32> -> vector<8x128xf32>
    %183 = arith.addf %178, %182 : vector<8x128xf32>
    %184 = vector.extract_strided_slice %7 {offsets = [0, 35], sizes = [8, 128], strides = [1, 1]} : vector<8x166xf32> to vector<8x128xf32>
    %c35 = arith.constant 35 : index
    %c0_118 = arith.constant 0 : index
    %c0_119 = arith.constant 0 : index
    %185 = vector.load %arg3[%c35, %c0_118, %c0_119] : memref<39x8x8xf32, #tpu.memory_space<vmem>>, vector<1x8x8xf32>
    %186 = vector.shape_cast %185 : vector<1x8x8xf32> to vector<8x8xf32>
    %cst_120 = arith.constant dense<0.000000e+00> : vector<8x128xf32>
    %187 = tpu.matmul %186, %184, %cst_120 {dimension_numbers = #tpu.dot_dimension_numbers<[1], [0], [0], [1], [0, 0, 1, 1], [], []>} : vector<8x8xf32>, vector<8x128xf32>, vector<8x128xf32> -> vector<8x128xf32>
    %188 = arith.addf %183, %187 : vector<8x128xf32>
    %189 = vector.extract_strided_slice %7 {offsets = [0, 36], sizes = [8, 128], strides = [1, 1]} : vector<8x166xf32> to vector<8x128xf32>
    %c36 = arith.constant 36 : index
    %c0_121 = arith.constant 0 : index
    %c0_122 = arith.constant 0 : index
    %190 = vector.load %arg3[%c36, %c0_121, %c0_122] : memref<39x8x8xf32, #tpu.memory_space<vmem>>, vector<1x8x8xf32>
    %191 = vector.shape_cast %190 : vector<1x8x8xf32> to vector<8x8xf32>
    %cst_123 = arith.constant dense<0.000000e+00> : vector<8x128xf32>
    %192 = tpu.matmul %191, %189, %cst_123 {dimension_numbers = #tpu.dot_dimension_numbers<[1], [0], [0], [1], [0, 0, 1, 1], [], []>} : vector<8x8xf32>, vector<8x128xf32>, vector<8x128xf32> -> vector<8x128xf32>
    %193 = arith.addf %188, %192 : vector<8x128xf32>
    %194 = vector.extract_strided_slice %7 {offsets = [0, 37], sizes = [8, 128], strides = [1, 1]} : vector<8x166xf32> to vector<8x128xf32>
    %c37 = arith.constant 37 : index
    %c0_124 = arith.constant 0 : index
    %c0_125 = arith.constant 0 : index
    %195 = vector.load %arg3[%c37, %c0_124, %c0_125] : memref<39x8x8xf32, #tpu.memory_space<vmem>>, vector<1x8x8xf32>
    %196 = vector.shape_cast %195 : vector<1x8x8xf32> to vector<8x8xf32>
    %cst_126 = arith.constant dense<0.000000e+00> : vector<8x128xf32>
    %197 = tpu.matmul %196, %194, %cst_126 {dimension_numbers = #tpu.dot_dimension_numbers<[1], [0], [0], [1], [0, 0, 1, 1], [], []>} : vector<8x8xf32>, vector<8x128xf32>, vector<8x128xf32> -> vector<8x128xf32>
    %198 = arith.addf %193, %197 : vector<8x128xf32>
    %199 = vector.extract_strided_slice %7 {offsets = [0, 38], sizes = [8, 128], strides = [1, 1]} : vector<8x166xf32> to vector<8x128xf32>
    %c38 = arith.constant 38 : index
    %c0_127 = arith.constant 0 : index
    %c0_128 = arith.constant 0 : index
    %200 = vector.load %arg3[%c38, %c0_127, %c0_128] : memref<39x8x8xf32, #tpu.memory_space<vmem>>, vector<1x8x8xf32>
    %201 = vector.shape_cast %200 : vector<1x8x8xf32> to vector<8x8xf32>
    %cst_129 = arith.constant dense<0.000000e+00> : vector<8x128xf32>
    %202 = tpu.matmul %201, %199, %cst_129 {dimension_numbers = #tpu.dot_dimension_numbers<[1], [0], [0], [1], [0, 0, 1, 1], [], []>} : vector<8x8xf32>, vector<8x128xf32>, vector<8x128xf32> -> vector<8x128xf32>
    %203 = arith.addf %198, %202 : vector<8x128xf32>
    %cst_130 = arith.constant 0.000000e+00 : f32
    %204 = vector.broadcast %cst_130 : f32 to vector<8x128xf32>
    %205 = vector.extract_strided_slice %7 {offsets = [0, 10], sizes = [8, 128], strides = [1, 1]} : vector<8x166xf32> to vector<8x128xf32>
    %c0_131 = arith.constant 0 : index
    %c0_132 = arith.constant 0 : index
    %c0_133 = arith.constant 0 : index
    %206 = vector.load %arg4[%c0_131, %c0_132, %c0_133] : memref<19x8x8xf32, #tpu.memory_space<vmem>>, vector<1x8x8xf32>
    %207 = vector.shape_cast %206 : vector<1x8x8xf32> to vector<8x8xf32>
    %cst_134 = arith.constant dense<0.000000e+00> : vector<8x128xf32>
    %208 = tpu.matmul %207, %205, %cst_134 {dimension_numbers = #tpu.dot_dimension_numbers<[1], [0], [0], [1], [0, 0, 1, 1], [], []>} : vector<8x8xf32>, vector<8x128xf32>, vector<8x128xf32> -> vector<8x128xf32>
    %209 = arith.addf %204, %208 : vector<8x128xf32>
    %210 = vector.extract_strided_slice %7 {offsets = [0, 11], sizes = [8, 128], strides = [1, 1]} : vector<8x166xf32> to vector<8x128xf32>
    %c1_135 = arith.constant 1 : index
    %c0_136 = arith.constant 0 : index
    %c0_137 = arith.constant 0 : index
    %211 = vector.load %arg4[%c1_135, %c0_136, %c0_137] : memref<19x8x8xf32, #tpu.memory_space<vmem>>, vector<1x8x8xf32>
    %212 = vector.shape_cast %211 : vector<1x8x8xf32> to vector<8x8xf32>
    %cst_138 = arith.constant dense<0.000000e+00> : vector<8x128xf32>
    %213 = tpu.matmul %212, %210, %cst_138 {dimension_numbers = #tpu.dot_dimension_numbers<[1], [0], [0], [1], [0, 0, 1, 1], [], []>} : vector<8x8xf32>, vector<8x128xf32>, vector<8x128xf32> -> vector<8x128xf32>
    %214 = arith.addf %209, %213 : vector<8x128xf32>
    %215 = vector.extract_strided_slice %7 {offsets = [0, 12], sizes = [8, 128], strides = [1, 1]} : vector<8x166xf32> to vector<8x128xf32>
    %c2_139 = arith.constant 2 : index
    %c0_140 = arith.constant 0 : index
    %c0_141 = arith.constant 0 : index
    %216 = vector.load %arg4[%c2_139, %c0_140, %c0_141] : memref<19x8x8xf32, #tpu.memory_space<vmem>>, vector<1x8x8xf32>
    %217 = vector.shape_cast %216 : vector<1x8x8xf32> to vector<8x8xf32>
    %cst_142 = arith.constant dense<0.000000e+00> : vector<8x128xf32>
    %218 = tpu.matmul %217, %215, %cst_142 {dimension_numbers = #tpu.dot_dimension_numbers<[1], [0], [0], [1], [0, 0, 1, 1], [], []>} : vector<8x8xf32>, vector<8x128xf32>, vector<8x128xf32> -> vector<8x128xf32>
    %219 = arith.addf %214, %218 : vector<8x128xf32>
    %220 = vector.extract_strided_slice %7 {offsets = [0, 13], sizes = [8, 128], strides = [1, 1]} : vector<8x166xf32> to vector<8x128xf32>
    %c3_143 = arith.constant 3 : index
    %c0_144 = arith.constant 0 : index
    %c0_145 = arith.constant 0 : index
    %221 = vector.load %arg4[%c3_143, %c0_144, %c0_145] : memref<19x8x8xf32, #tpu.memory_space<vmem>>, vector<1x8x8xf32>
    %222 = vector.shape_cast %221 : vector<1x8x8xf32> to vector<8x8xf32>
    %cst_146 = arith.constant dense<0.000000e+00> : vector<8x128xf32>
    %223 = tpu.matmul %222, %220, %cst_146 {dimension_numbers = #tpu.dot_dimension_numbers<[1], [0], [0], [1], [0, 0, 1, 1], [], []>} : vector<8x8xf32>, vector<8x128xf32>, vector<8x128xf32> -> vector<8x128xf32>
    %224 = arith.addf %219, %223 : vector<8x128xf32>
    %225 = vector.extract_strided_slice %7 {offsets = [0, 14], sizes = [8, 128], strides = [1, 1]} : vector<8x166xf32> to vector<8x128xf32>
    %c4_147 = arith.constant 4 : index
    %c0_148 = arith.constant 0 : index
    %c0_149 = arith.constant 0 : index
    %226 = vector.load %arg4[%c4_147, %c0_148, %c0_149] : memref<19x8x8xf32, #tpu.memory_space<vmem>>, vector<1x8x8xf32>
    %227 = vector.shape_cast %226 : vector<1x8x8xf32> to vector<8x8xf32>
    %cst_150 = arith.constant dense<0.000000e+00> : vector<8x128xf32>
    %228 = tpu.matmul %227, %225, %cst_150 {dimension_numbers = #tpu.dot_dimension_numbers<[1], [0], [0], [1], [0, 0, 1, 1], [], []>} : vector<8x8xf32>, vector<8x128xf32>, vector<8x128xf32> -> vector<8x128xf32>
    %229 = arith.addf %224, %228 : vector<8x128xf32>
    %230 = vector.extract_strided_slice %7 {offsets = [0, 15], sizes = [8, 128], strides = [1, 1]} : vector<8x166xf32> to vector<8x128xf32>
    %c5_151 = arith.constant 5 : index
    %c0_152 = arith.constant 0 : index
    %c0_153 = arith.constant 0 : index
    %231 = vector.load %arg4[%c5_151, %c0_152, %c0_153] : memref<19x8x8xf32, #tpu.memory_space<vmem>>, vector<1x8x8xf32>
    %232 = vector.shape_cast %231 : vector<1x8x8xf32> to vector<8x8xf32>
    %cst_154 = arith.constant dense<0.000000e+00> : vector<8x128xf32>
    %233 = tpu.matmul %232, %230, %cst_154 {dimension_numbers = #tpu.dot_dimension_numbers<[1], [0], [0], [1], [0, 0, 1, 1], [], []>} : vector<8x8xf32>, vector<8x128xf32>, vector<8x128xf32> -> vector<8x128xf32>
    %234 = arith.addf %229, %233 : vector<8x128xf32>
    %235 = vector.extract_strided_slice %7 {offsets = [0, 16], sizes = [8, 128], strides = [1, 1]} : vector<8x166xf32> to vector<8x128xf32>
    %c6_155 = arith.constant 6 : index
    %c0_156 = arith.constant 0 : index
    %c0_157 = arith.constant 0 : index
    %236 = vector.load %arg4[%c6_155, %c0_156, %c0_157] : memref<19x8x8xf32, #tpu.memory_space<vmem>>, vector<1x8x8xf32>
    %237 = vector.shape_cast %236 : vector<1x8x8xf32> to vector<8x8xf32>
    %cst_158 = arith.constant dense<0.000000e+00> : vector<8x128xf32>
    %238 = tpu.matmul %237, %235, %cst_158 {dimension_numbers = #tpu.dot_dimension_numbers<[1], [0], [0], [1], [0, 0, 1, 1], [], []>} : vector<8x8xf32>, vector<8x128xf32>, vector<8x128xf32> -> vector<8x128xf32>
    %239 = arith.addf %234, %238 : vector<8x128xf32>
    %240 = vector.extract_strided_slice %7 {offsets = [0, 17], sizes = [8, 128], strides = [1, 1]} : vector<8x166xf32> to vector<8x128xf32>
    %c7_159 = arith.constant 7 : index
    %c0_160 = arith.constant 0 : index
    %c0_161 = arith.constant 0 : index
    %241 = vector.load %arg4[%c7_159, %c0_160, %c0_161] : memref<19x8x8xf32, #tpu.memory_space<vmem>>, vector<1x8x8xf32>
    %242 = vector.shape_cast %241 : vector<1x8x8xf32> to vector<8x8xf32>
    %cst_162 = arith.constant dense<0.000000e+00> : vector<8x128xf32>
    %243 = tpu.matmul %242, %240, %cst_162 {dimension_numbers = #tpu.dot_dimension_numbers<[1], [0], [0], [1], [0, 0, 1, 1], [], []>} : vector<8x8xf32>, vector<8x128xf32>, vector<8x128xf32> -> vector<8x128xf32>
    %244 = arith.addf %239, %243 : vector<8x128xf32>
    %245 = vector.extract_strided_slice %7 {offsets = [0, 18], sizes = [8, 128], strides = [1, 1]} : vector<8x166xf32> to vector<8x128xf32>
    %c8_163 = arith.constant 8 : index
    %c0_164 = arith.constant 0 : index
    %c0_165 = arith.constant 0 : index
    %246 = vector.load %arg4[%c8_163, %c0_164, %c0_165] : memref<19x8x8xf32, #tpu.memory_space<vmem>>, vector<1x8x8xf32>
    %247 = vector.shape_cast %246 : vector<1x8x8xf32> to vector<8x8xf32>
    %cst_166 = arith.constant dense<0.000000e+00> : vector<8x128xf32>
    %248 = tpu.matmul %247, %245, %cst_166 {dimension_numbers = #tpu.dot_dimension_numbers<[1], [0], [0], [1], [0, 0, 1, 1], [], []>} : vector<8x8xf32>, vector<8x128xf32>, vector<8x128xf32> -> vector<8x128xf32>
    %249 = arith.addf %244, %248 : vector<8x128xf32>
    %250 = vector.extract_strided_slice %7 {offsets = [0, 19], sizes = [8, 128], strides = [1, 1]} : vector<8x166xf32> to vector<8x128xf32>
    %c9_167 = arith.constant 9 : index
    %c0_168 = arith.constant 0 : index
    %c0_169 = arith.constant 0 : index
    %251 = vector.load %arg4[%c9_167, %c0_168, %c0_169] : memref<19x8x8xf32, #tpu.memory_space<vmem>>, vector<1x8x8xf32>
    %252 = vector.shape_cast %251 : vector<1x8x8xf32> to vector<8x8xf32>
    %cst_170 = arith.constant dense<0.000000e+00> : vector<8x128xf32>
    %253 = tpu.matmul %252, %250, %cst_170 {dimension_numbers = #tpu.dot_dimension_numbers<[1], [0], [0], [1], [0, 0, 1, 1], [], []>} : vector<8x8xf32>, vector<8x128xf32>, vector<8x128xf32> -> vector<8x128xf32>
    %254 = arith.addf %249, %253 : vector<8x128xf32>
    %255 = vector.extract_strided_slice %7 {offsets = [0, 20], sizes = [8, 128], strides = [1, 1]} : vector<8x166xf32> to vector<8x128xf32>
    %c10_171 = arith.constant 10 : index
    %c0_172 = arith.constant 0 : index
    %c0_173 = arith.constant 0 : index
    %256 = vector.load %arg4[%c10_171, %c0_172, %c0_173] : memref<19x8x8xf32, #tpu.memory_space<vmem>>, vector<1x8x8xf32>
    %257 = vector.shape_cast %256 : vector<1x8x8xf32> to vector<8x8xf32>
    %cst_174 = arith.constant dense<0.000000e+00> : vector<8x128xf32>
    %258 = tpu.matmul %257, %255, %cst_174 {dimension_numbers = #tpu.dot_dimension_numbers<[1], [0], [0], [1], [0, 0, 1, 1], [], []>} : vector<8x8xf32>, vector<8x128xf32>, vector<8x128xf32> -> vector<8x128xf32>
    %259 = arith.addf %254, %258 : vector<8x128xf32>
    %260 = vector.extract_strided_slice %7 {offsets = [0, 21], sizes = [8, 128], strides = [1, 1]} : vector<8x166xf32> to vector<8x128xf32>
    %c11_175 = arith.constant 11 : index
    %c0_176 = arith.constant 0 : index
    %c0_177 = arith.constant 0 : index
    %261 = vector.load %arg4[%c11_175, %c0_176, %c0_177] : memref<19x8x8xf32, #tpu.memory_space<vmem>>, vector<1x8x8xf32>
    %262 = vector.shape_cast %261 : vector<1x8x8xf32> to vector<8x8xf32>
    %cst_178 = arith.constant dense<0.000000e+00> : vector<8x128xf32>
    %263 = tpu.matmul %262, %260, %cst_178 {dimension_numbers = #tpu.dot_dimension_numbers<[1], [0], [0], [1], [0, 0, 1, 1], [], []>} : vector<8x8xf32>, vector<8x128xf32>, vector<8x128xf32> -> vector<8x128xf32>
    %264 = arith.addf %259, %263 : vector<8x128xf32>
    %265 = vector.extract_strided_slice %7 {offsets = [0, 22], sizes = [8, 128], strides = [1, 1]} : vector<8x166xf32> to vector<8x128xf32>
    %c12_179 = arith.constant 12 : index
    %c0_180 = arith.constant 0 : index
    %c0_181 = arith.constant 0 : index
    %266 = vector.load %arg4[%c12_179, %c0_180, %c0_181] : memref<19x8x8xf32, #tpu.memory_space<vmem>>, vector<1x8x8xf32>
    %267 = vector.shape_cast %266 : vector<1x8x8xf32> to vector<8x8xf32>
    %cst_182 = arith.constant dense<0.000000e+00> : vector<8x128xf32>
    %268 = tpu.matmul %267, %265, %cst_182 {dimension_numbers = #tpu.dot_dimension_numbers<[1], [0], [0], [1], [0, 0, 1, 1], [], []>} : vector<8x8xf32>, vector<8x128xf32>, vector<8x128xf32> -> vector<8x128xf32>
    %269 = arith.addf %264, %268 : vector<8x128xf32>
    %270 = vector.extract_strided_slice %7 {offsets = [0, 23], sizes = [8, 128], strides = [1, 1]} : vector<8x166xf32> to vector<8x128xf32>
    %c13_183 = arith.constant 13 : index
    %c0_184 = arith.constant 0 : index
    %c0_185 = arith.constant 0 : index
    %271 = vector.load %arg4[%c13_183, %c0_184, %c0_185] : memref<19x8x8xf32, #tpu.memory_space<vmem>>, vector<1x8x8xf32>
    %272 = vector.shape_cast %271 : vector<1x8x8xf32> to vector<8x8xf32>
    %cst_186 = arith.constant dense<0.000000e+00> : vector<8x128xf32>
    %273 = tpu.matmul %272, %270, %cst_186 {dimension_numbers = #tpu.dot_dimension_numbers<[1], [0], [0], [1], [0, 0, 1, 1], [], []>} : vector<8x8xf32>, vector<8x128xf32>, vector<8x128xf32> -> vector<8x128xf32>
    %274 = arith.addf %269, %273 : vector<8x128xf32>
    %275 = vector.extract_strided_slice %7 {offsets = [0, 24], sizes = [8, 128], strides = [1, 1]} : vector<8x166xf32> to vector<8x128xf32>
    %c14_187 = arith.constant 14 : index
    %c0_188 = arith.constant 0 : index
    %c0_189 = arith.constant 0 : index
    %276 = vector.load %arg4[%c14_187, %c0_188, %c0_189] : memref<19x8x8xf32, #tpu.memory_space<vmem>>, vector<1x8x8xf32>
    %277 = vector.shape_cast %276 : vector<1x8x8xf32> to vector<8x8xf32>
    %cst_190 = arith.constant dense<0.000000e+00> : vector<8x128xf32>
    %278 = tpu.matmul %277, %275, %cst_190 {dimension_numbers = #tpu.dot_dimension_numbers<[1], [0], [0], [1], [0, 0, 1, 1], [], []>} : vector<8x8xf32>, vector<8x128xf32>, vector<8x128xf32> -> vector<8x128xf32>
    %279 = arith.addf %274, %278 : vector<8x128xf32>
    %280 = vector.extract_strided_slice %7 {offsets = [0, 25], sizes = [8, 128], strides = [1, 1]} : vector<8x166xf32> to vector<8x128xf32>
    %c15_191 = arith.constant 15 : index
    %c0_192 = arith.constant 0 : index
    %c0_193 = arith.constant 0 : index
    %281 = vector.load %arg4[%c15_191, %c0_192, %c0_193] : memref<19x8x8xf32, #tpu.memory_space<vmem>>, vector<1x8x8xf32>
    %282 = vector.shape_cast %281 : vector<1x8x8xf32> to vector<8x8xf32>
    %cst_194 = arith.constant dense<0.000000e+00> : vector<8x128xf32>
    %283 = tpu.matmul %282, %280, %cst_194 {dimension_numbers = #tpu.dot_dimension_numbers<[1], [0], [0], [1], [0, 0, 1, 1], [], []>} : vector<8x8xf32>, vector<8x128xf32>, vector<8x128xf32> -> vector<8x128xf32>
    %284 = arith.addf %279, %283 : vector<8x128xf32>
    %285 = vector.extract_strided_slice %7 {offsets = [0, 26], sizes = [8, 128], strides = [1, 1]} : vector<8x166xf32> to vector<8x128xf32>
    %c16_195 = arith.constant 16 : index
    %c0_196 = arith.constant 0 : index
    %c0_197 = arith.constant 0 : index
    %286 = vector.load %arg4[%c16_195, %c0_196, %c0_197] : memref<19x8x8xf32, #tpu.memory_space<vmem>>, vector<1x8x8xf32>
    %287 = vector.shape_cast %286 : vector<1x8x8xf32> to vector<8x8xf32>
    %cst_198 = arith.constant dense<0.000000e+00> : vector<8x128xf32>
    %288 = tpu.matmul %287, %285, %cst_198 {dimension_numbers = #tpu.dot_dimension_numbers<[1], [0], [0], [1], [0, 0, 1, 1], [], []>} : vector<8x8xf32>, vector<8x128xf32>, vector<8x128xf32> -> vector<8x128xf32>
    %289 = arith.addf %284, %288 : vector<8x128xf32>
    %290 = vector.extract_strided_slice %7 {offsets = [0, 27], sizes = [8, 128], strides = [1, 1]} : vector<8x166xf32> to vector<8x128xf32>
    %c17_199 = arith.constant 17 : index
    %c0_200 = arith.constant 0 : index
    %c0_201 = arith.constant 0 : index
    %291 = vector.load %arg4[%c17_199, %c0_200, %c0_201] : memref<19x8x8xf32, #tpu.memory_space<vmem>>, vector<1x8x8xf32>
    %292 = vector.shape_cast %291 : vector<1x8x8xf32> to vector<8x8xf32>
    %cst_202 = arith.constant dense<0.000000e+00> : vector<8x128xf32>
    %293 = tpu.matmul %292, %290, %cst_202 {dimension_numbers = #tpu.dot_dimension_numbers<[1], [0], [0], [1], [0, 0, 1, 1], [], []>} : vector<8x8xf32>, vector<8x128xf32>, vector<8x128xf32> -> vector<8x128xf32>
    %294 = arith.addf %289, %293 : vector<8x128xf32>
    %295 = vector.extract_strided_slice %7 {offsets = [0, 28], sizes = [8, 128], strides = [1, 1]} : vector<8x166xf32> to vector<8x128xf32>
    %c18_203 = arith.constant 18 : index
    %c0_204 = arith.constant 0 : index
    %c0_205 = arith.constant 0 : index
    %296 = vector.load %arg4[%c18_203, %c0_204, %c0_205] : memref<19x8x8xf32, #tpu.memory_space<vmem>>, vector<1x8x8xf32>
    %297 = vector.shape_cast %296 : vector<1x8x8xf32> to vector<8x8xf32>
    %cst_206 = arith.constant dense<0.000000e+00> : vector<8x128xf32>
    %298 = tpu.matmul %297, %295, %cst_206 {dimension_numbers = #tpu.dot_dimension_numbers<[1], [0], [0], [1], [0, 0, 1, 1], [], []>} : vector<8x8xf32>, vector<8x128xf32>, vector<8x128xf32> -> vector<8x128xf32>
    %299 = arith.addf %294, %298 : vector<8x128xf32>
    %cst_207 = arith.constant 0.000000e+00 : f32
    %300 = vector.broadcast %cst_207 : f32 to vector<8x128xf32>
    %301 = vector.extract_strided_slice %7 {offsets = [0, 15], sizes = [8, 128], strides = [1, 1]} : vector<8x166xf32> to vector<8x128xf32>
    %c0_208 = arith.constant 0 : index
    %c0_209 = arith.constant 0 : index
    %c0_210 = arith.constant 0 : index
    %302 = vector.load %arg5[%c0_208, %c0_209, %c0_210] : memref<9x8x8xf32, #tpu.memory_space<vmem>>, vector<1x8x8xf32>
    %303 = vector.shape_cast %302 : vector<1x8x8xf32> to vector<8x8xf32>
    %cst_211 = arith.constant dense<0.000000e+00> : vector<8x128xf32>
    %304 = tpu.matmul %303, %301, %cst_211 {dimension_numbers = #tpu.dot_dimension_numbers<[1], [0], [0], [1], [0, 0, 1, 1], [], []>} : vector<8x8xf32>, vector<8x128xf32>, vector<8x128xf32> -> vector<8x128xf32>
    %305 = arith.addf %300, %304 : vector<8x128xf32>
    %306 = vector.extract_strided_slice %7 {offsets = [0, 16], sizes = [8, 128], strides = [1, 1]} : vector<8x166xf32> to vector<8x128xf32>
    %c1_212 = arith.constant 1 : index
    %c0_213 = arith.constant 0 : index
    %c0_214 = arith.constant 0 : index
    %307 = vector.load %arg5[%c1_212, %c0_213, %c0_214] : memref<9x8x8xf32, #tpu.memory_space<vmem>>, vector<1x8x8xf32>
    %308 = vector.shape_cast %307 : vector<1x8x8xf32> to vector<8x8xf32>
    %cst_215 = arith.constant dense<0.000000e+00> : vector<8x128xf32>
    %309 = tpu.matmul %308, %306, %cst_215 {dimension_numbers = #tpu.dot_dimension_numbers<[1], [0], [0], [1], [0, 0, 1, 1], [], []>} : vector<8x8xf32>, vector<8x128xf32>, vector<8x128xf32> -> vector<8x128xf32>
    %310 = arith.addf %305, %309 : vector<8x128xf32>
    %311 = vector.extract_strided_slice %7 {offsets = [0, 17], sizes = [8, 128], strides = [1, 1]} : vector<8x166xf32> to vector<8x128xf32>
    %c2_216 = arith.constant 2 : index
    %c0_217 = arith.constant 0 : index
    %c0_218 = arith.constant 0 : index
    %312 = vector.load %arg5[%c2_216, %c0_217, %c0_218] : memref<9x8x8xf32, #tpu.memory_space<vmem>>, vector<1x8x8xf32>
    %313 = vector.shape_cast %312 : vector<1x8x8xf32> to vector<8x8xf32>
    %cst_219 = arith.constant dense<0.000000e+00> : vector<8x128xf32>
    %314 = tpu.matmul %313, %311, %cst_219 {dimension_numbers = #tpu.dot_dimension_numbers<[1], [0], [0], [1], [0, 0, 1, 1], [], []>} : vector<8x8xf32>, vector<8x128xf32>, vector<8x128xf32> -> vector<8x128xf32>
    %315 = arith.addf %310, %314 : vector<8x128xf32>
    %316 = vector.extract_strided_slice %7 {offsets = [0, 18], sizes = [8, 128], strides = [1, 1]} : vector<8x166xf32> to vector<8x128xf32>
    %c3_220 = arith.constant 3 : index
    %c0_221 = arith.constant 0 : index
    %c0_222 = arith.constant 0 : index
    %317 = vector.load %arg5[%c3_220, %c0_221, %c0_222] : memref<9x8x8xf32, #tpu.memory_space<vmem>>, vector<1x8x8xf32>
    %318 = vector.shape_cast %317 : vector<1x8x8xf32> to vector<8x8xf32>
    %cst_223 = arith.constant dense<0.000000e+00> : vector<8x128xf32>
    %319 = tpu.matmul %318, %316, %cst_223 {dimension_numbers = #tpu.dot_dimension_numbers<[1], [0], [0], [1], [0, 0, 1, 1], [], []>} : vector<8x8xf32>, vector<8x128xf32>, vector<8x128xf32> -> vector<8x128xf32>
    %320 = arith.addf %315, %319 : vector<8x128xf32>
    %321 = vector.extract_strided_slice %7 {offsets = [0, 19], sizes = [8, 128], strides = [1, 1]} : vector<8x166xf32> to vector<8x128xf32>
    %c4_224 = arith.constant 4 : index
    %c0_225 = arith.constant 0 : index
    %c0_226 = arith.constant 0 : index
    %322 = vector.load %arg5[%c4_224, %c0_225, %c0_226] : memref<9x8x8xf32, #tpu.memory_space<vmem>>, vector<1x8x8xf32>
    %323 = vector.shape_cast %322 : vector<1x8x8xf32> to vector<8x8xf32>
    %cst_227 = arith.constant dense<0.000000e+00> : vector<8x128xf32>
    %324 = tpu.matmul %323, %321, %cst_227 {dimension_numbers = #tpu.dot_dimension_numbers<[1], [0], [0], [1], [0, 0, 1, 1], [], []>} : vector<8x8xf32>, vector<8x128xf32>, vector<8x128xf32> -> vector<8x128xf32>
    %325 = arith.addf %320, %324 : vector<8x128xf32>
    %326 = vector.extract_strided_slice %7 {offsets = [0, 20], sizes = [8, 128], strides = [1, 1]} : vector<8x166xf32> to vector<8x128xf32>
    %c5_228 = arith.constant 5 : index
    %c0_229 = arith.constant 0 : index
    %c0_230 = arith.constant 0 : index
    %327 = vector.load %arg5[%c5_228, %c0_229, %c0_230] : memref<9x8x8xf32, #tpu.memory_space<vmem>>, vector<1x8x8xf32>
    %328 = vector.shape_cast %327 : vector<1x8x8xf32> to vector<8x8xf32>
    %cst_231 = arith.constant dense<0.000000e+00> : vector<8x128xf32>
    %329 = tpu.matmul %328, %326, %cst_231 {dimension_numbers = #tpu.dot_dimension_numbers<[1], [0], [0], [1], [0, 0, 1, 1], [], []>} : vector<8x8xf32>, vector<8x128xf32>, vector<8x128xf32> -> vector<8x128xf32>
    %330 = arith.addf %325, %329 : vector<8x128xf32>
    %331 = vector.extract_strided_slice %7 {offsets = [0, 21], sizes = [8, 128], strides = [1, 1]} : vector<8x166xf32> to vector<8x128xf32>
    %c6_232 = arith.constant 6 : index
    %c0_233 = arith.constant 0 : index
    %c0_234 = arith.constant 0 : index
    %332 = vector.load %arg5[%c6_232, %c0_233, %c0_234] : memref<9x8x8xf32, #tpu.memory_space<vmem>>, vector<1x8x8xf32>
    %333 = vector.shape_cast %332 : vector<1x8x8xf32> to vector<8x8xf32>
    %cst_235 = arith.constant dense<0.000000e+00> : vector<8x128xf32>
    %334 = tpu.matmul %333, %331, %cst_235 {dimension_numbers = #tpu.dot_dimension_numbers<[1], [0], [0], [1], [0, 0, 1, 1], [], []>} : vector<8x8xf32>, vector<8x128xf32>, vector<8x128xf32> -> vector<8x128xf32>
    %335 = arith.addf %330, %334 : vector<8x128xf32>
    %336 = vector.extract_strided_slice %7 {offsets = [0, 22], sizes = [8, 128], strides = [1, 1]} : vector<8x166xf32> to vector<8x128xf32>
    %c7_236 = arith.constant 7 : index
    %c0_237 = arith.constant 0 : index
    %c0_238 = arith.constant 0 : index
    %337 = vector.load %arg5[%c7_236, %c0_237, %c0_238] : memref<9x8x8xf32, #tpu.memory_space<vmem>>, vector<1x8x8xf32>
    %338 = vector.shape_cast %337 : vector<1x8x8xf32> to vector<8x8xf32>
    %cst_239 = arith.constant dense<0.000000e+00> : vector<8x128xf32>
    %339 = tpu.matmul %338, %336, %cst_239 {dimension_numbers = #tpu.dot_dimension_numbers<[1], [0], [0], [1], [0, 0, 1, 1], [], []>} : vector<8x8xf32>, vector<8x128xf32>, vector<8x128xf32> -> vector<8x128xf32>
    %340 = arith.addf %335, %339 : vector<8x128xf32>
    %341 = vector.extract_strided_slice %7 {offsets = [0, 23], sizes = [8, 128], strides = [1, 1]} : vector<8x166xf32> to vector<8x128xf32>
    %c8_240 = arith.constant 8 : index
    %c0_241 = arith.constant 0 : index
    %c0_242 = arith.constant 0 : index
    %342 = vector.load %arg5[%c8_240, %c0_241, %c0_242] : memref<9x8x8xf32, #tpu.memory_space<vmem>>, vector<1x8x8xf32>
    %343 = vector.shape_cast %342 : vector<1x8x8xf32> to vector<8x8xf32>
    %cst_243 = arith.constant dense<0.000000e+00> : vector<8x128xf32>
    %344 = tpu.matmul %343, %341, %cst_243 {dimension_numbers = #tpu.dot_dimension_numbers<[1], [0], [0], [1], [0, 0, 1, 1], [], []>} : vector<8x8xf32>, vector<8x128xf32>, vector<8x128xf32> -> vector<8x128xf32>
    %345 = arith.addf %340, %344 : vector<8x128xf32>
    %cst_244 = arith.constant -1.000000e+30 : f32
    %346 = vector.broadcast %cst_244 : f32 to vector<8x130xf32>
    %c0_245 = arith.constant 0 : index
    %c0_246 = arith.constant 0 : index
    %347 = vector.load %arg11[%c0_245, %c0_246] : memref<8x130xf32, #tpu.memory_space<vmem>>, vector<8x130xf32>
    tpu.vector_store %arg11[%c0_245, %c0_246], %346 {strides = array<i32>} : memref<8x130xf32, #tpu.memory_space<vmem>>, vector<8x130xf32>,
    %c0_247 = arith.constant 0 : index
    %c1_248 = arith.constant 1 : index
    %348 = vector.load %arg11[%c0_247, %c1_248] : memref<8x130xf32, #tpu.memory_space<vmem>>, vector<8x128xf32>
    tpu.vector_store %arg11[%c0_247, %c1_248], %1 {strides = array<i32>} : memref<8x130xf32, #tpu.memory_space<vmem>>, vector<8x128xf32>,
    %c0_249 = arith.constant 0 : index
    %c0_250 = arith.constant 0 : index
    %349 = vector.load %arg11[%c0_249, %c0_250] : memref<8x130xf32, #tpu.memory_space<vmem>>, vector<8x130xf32>
    %350 = vector.extract_strided_slice %349 {offsets = [0, 0], sizes = [8, 128], strides = [1, 1]} : vector<8x130xf32> to vector<8x128xf32>
    %351 = vector.extract_strided_slice %349 {offsets = [0, 1], sizes = [8, 128], strides = [1, 1]} : vector<8x130xf32> to vector<8x128xf32>
    %352 = arith.maximumf %350, %351 : vector<8x128xf32>
    %353 = vector.extract_strided_slice %349 {offsets = [0, 2], sizes = [8, 128], strides = [1, 1]} : vector<8x130xf32> to vector<8x128xf32>
    %354 = arith.maximumf %352, %353 : vector<8x128xf32>
    %c0_251 = arith.constant 0 : index
    %c0_252 = arith.constant 0 : index
    %355 = vector.load %arg6[%c0_251, %c0_252] : memref<8x8xf32, #tpu.memory_space<vmem>>, vector<8x8xf32>
    %cst_253 = arith.constant dense<0.000000e+00> : vector<8x128xf32>
    %356 = tpu.matmul %355, %354, %cst_253 {dimension_numbers = #tpu.dot_dimension_numbers<[1], [0], [0], [1], [0, 0, 1, 1], [], []>} : vector<8x8xf32>, vector<8x128xf32>, vector<8x128xf32> -> vector<8x128xf32>
    %c0_254 = arith.constant 0 : index
    %c0_255 = arith.constant 0 : index
    %357 = vector.load %arg7[%c0_254, %c0_255] : memref<32x1xf32, #tpu.memory_space<vmem>>, vector<8x1xf32>
    %c0_256 = arith.constant 0 : index
    %c0_257 = arith.constant 0 : index
    %358 = vector.load %arg8[%c0_256, %c0_257] : memref<32x1xf32, #tpu.memory_space<vmem>>, vector<8x1xf32>
    %359 = vector.broadcast %357 : vector<8x1xf32> to vector<8x128xf32>
    %360 = arith.mulf %356, %359 : vector<8x128xf32>
    %361 = vector.broadcast %358 : vector<8x1xf32> to vector<8x128xf32>
    %362 = arith.addf %360, %361 : vector<8x128xf32>
    %cst_258 = arith.constant 0.000000e+00 : f32
    %363 = vector.broadcast %cst_258 : f32 to vector<8x128xf32>
    %364 = arith.maximumf %362, %363 : vector<8x128xf32>
    %c0_259 = arith.constant 0 : index
    %c0_260 = arith.constant 0 : index
    %c0_261 = arith.constant 0 : index
    %365 = vector.load %arg9[%c0_259, %c0_260, %c0_261] : memref<1x32x128xf32, #tpu.memory_space<vmem>>, vector<1x8x128xf32>
    %366 = vector.shape_cast %365 : vector<1x8x128xf32> to vector<8x128xf32>
    %367 = vector.shape_cast %364 : vector<8x128xf32> to vector<1x8x128xf32>
    tpu.vector_store %arg9[%c0_259, %c0_260, %c0_261], %367 {strides = array<i32>} : memref<1x32x128xf32, #tpu.memory_space<vmem>>, vector<1x8x128xf32>,
    %c8_262 = arith.constant 8 : index
    %c0_263 = arith.constant 0 : index
    %368 = vector.load %arg7[%c8_262, %c0_263] : memref<32x1xf32, #tpu.memory_space<vmem>>, vector<8x1xf32>
    %c8_264 = arith.constant 8 : index
    %c0_265 = arith.constant 0 : index
    %369 = vector.load %arg8[%c8_264, %c0_265] : memref<32x1xf32, #tpu.memory_space<vmem>>, vector<8x1xf32>
    %370 = vector.broadcast %368 : vector<8x1xf32> to vector<8x128xf32>
    %371 = arith.mulf %345, %370 : vector<8x128xf32>
    %372 = vector.broadcast %369 : vector<8x1xf32> to vector<8x128xf32>
    %373 = arith.addf %371, %372 : vector<8x128xf32>
    %cst_266 = arith.constant 0.000000e+00 : f32
    %374 = vector.broadcast %cst_266 : f32 to vector<8x128xf32>
    %375 = arith.maximumf %373, %374 : vector<8x128xf32>
    %c0_267 = arith.constant 0 : index
    %c8_268 = arith.constant 8 : index
    %c0_269 = arith.constant 0 : index
    %376 = vector.load %arg9[%c0_267, %c8_268, %c0_269] : memref<1x32x128xf32, #tpu.memory_space<vmem>>, vector<1x8x128xf32>
    %377 = vector.shape_cast %376 : vector<1x8x128xf32> to vector<8x128xf32>
    %378 = vector.shape_cast %375 : vector<8x128xf32> to vector<1x8x128xf32>
    tpu.vector_store %arg9[%c0_267, %c8_268, %c0_269], %378 {strides = array<i32>} : memref<1x32x128xf32, #tpu.memory_space<vmem>>, vector<1x8x128xf32>,
    %c16_270 = arith.constant 16 : index
    %c0_271 = arith.constant 0 : index
    %379 = vector.load %arg7[%c16_270, %c0_271] : memref<32x1xf32, #tpu.memory_space<vmem>>, vector<8x1xf32>
    %c16_272 = arith.constant 16 : index
    %c0_273 = arith.constant 0 : index
    %380 = vector.load %arg8[%c16_272, %c0_273] : memref<32x1xf32, #tpu.memory_space<vmem>>, vector<8x1xf32>
    %381 = vector.broadcast %379 : vector<8x1xf32> to vector<8x128xf32>
    %382 = arith.mulf %299, %381 : vector<8x128xf32>
    %383 = vector.broadcast %380 : vector<8x1xf32> to vector<8x128xf32>
    %384 = arith.addf %382, %383 : vector<8x128xf32>
    %cst_274 = arith.constant 0.000000e+00 : f32
    %385 = vector.broadcast %cst_274 : f32 to vector<8x128xf32>
    %386 = arith.maximumf %384, %385 : vector<8x128xf32>
    %c0_275 = arith.constant 0 : index
    %c16_276 = arith.constant 16 : index
    %c0_277 = arith.constant 0 : index
    %387 = vector.load %arg9[%c0_275, %c16_276, %c0_277] : memref<1x32x128xf32, #tpu.memory_space<vmem>>, vector<1x8x128xf32>
    %388 = vector.shape_cast %387 : vector<1x8x128xf32> to vector<8x128xf32>
    %389 = vector.shape_cast %386 : vector<8x128xf32> to vector<1x8x128xf32>
    tpu.vector_store %arg9[%c0_275, %c16_276, %c0_277], %389 {strides = array<i32>} : memref<1x32x128xf32, #tpu.memory_space<vmem>>, vector<1x8x128xf32>,
    %c24_278 = arith.constant 24 : index
    %c0_279 = arith.constant 0 : index
    %390 = vector.load %arg7[%c24_278, %c0_279] : memref<32x1xf32, #tpu.memory_space<vmem>>, vector<8x1xf32>
    %c24_280 = arith.constant 24 : index
    %c0_281 = arith.constant 0 : index
    %391 = vector.load %arg8[%c24_280, %c0_281] : memref<32x1xf32, #tpu.memory_space<vmem>>, vector<8x1xf32>
    %392 = vector.broadcast %390 : vector<8x1xf32> to vector<8x128xf32>
    %393 = arith.mulf %203, %392 : vector<8x128xf32>
    %394 = vector.broadcast %391 : vector<8x1xf32> to vector<8x128xf32>
    %395 = arith.addf %393, %394 : vector<8x128xf32>
    %cst_282 = arith.constant 0.000000e+00 : f32
    %396 = vector.broadcast %cst_282 : f32 to vector<8x128xf32>
    %397 = arith.maximumf %395, %396 : vector<8x128xf32>
    %c0_283 = arith.constant 0 : index
    %c24_284 = arith.constant 24 : index
    %c0_285 = arith.constant 0 : index
    %398 = vector.load %arg9[%c0_283, %c24_284, %c0_285] : memref<1x32x128xf32, #tpu.memory_space<vmem>>, vector<1x8x128xf32>
    %399 = vector.shape_cast %398 : vector<1x8x128xf32> to vector<8x128xf32>
    %400 = vector.shape_cast %397 : vector<8x128xf32> to vector<1x8x128xf32>
    tpu.vector_store %arg9[%c0_283, %c24_284, %c0_285], %400 {strides = array<i32>} : memref<1x32x128xf32, #tpu.memory_space<vmem>>, vector<1x8x128xf32>,
    return
  }
  func.func @transform_0(%arg0: i32) -> (i32, i32, i32) {
    %c0_i32 = arith.constant 0 : i32
    %c0_i32_0 = arith.constant 0 : i32
    %c0_i32_1 = arith.constant 0 : i32
    return %arg0, %c0_i32, %c0_i32_0 : i32, i32, i32
  }
  func.func @transform_1(%arg0: i32) -> (i32, i32) {
    %c0_i32 = arith.constant 0 : i32
    %c0_i32_0 = arith.constant 0 : i32
    %c0_i32_1 = arith.constant 0 : i32
    return %c0_i32, %c0_i32_0 : i32, i32
  }
  func.func @transform_2(%arg0: i32) -> (i32, i32, i32) {
    %c0_i32 = arith.constant 0 : i32
    %c0_i32_0 = arith.constant 0 : i32
    %c0_i32_1 = arith.constant 0 : i32
    %c0_i32_2 = arith.constant 0 : i32
    return %c0_i32, %c0_i32_0, %c0_i32_1 : i32, i32, i32
  }
  func.func @transform_3(%arg0: i32) -> (i32, i32, i32) {
    %c0_i32 = arith.constant 0 : i32
    %c0_i32_0 = arith.constant 0 : i32
    %c0_i32_1 = arith.constant 0 : i32
    %c0_i32_2 = arith.constant 0 : i32
    return %c0_i32, %c0_i32_0, %c0_i32_1 : i32, i32, i32
  }
  func.func @transform_4(%arg0: i32) -> (i32, i32, i32) {
    %c0_i32 = arith.constant 0 : i32
    %c0_i32_0 = arith.constant 0 : i32
    %c0_i32_1 = arith.constant 0 : i32
    %c0_i32_2 = arith.constant 0 : i32
    return %c0_i32, %c0_i32_0, %c0_i32_1 : i32, i32, i32
  }
  func.func @transform_5(%arg0: i32) -> (i32, i32) {
    %c0_i32 = arith.constant 0 : i32
    %c0_i32_0 = arith.constant 0 : i32
    %c0_i32_1 = arith.constant 0 : i32
    return %c0_i32, %c0_i32_0 : i32, i32
  }
  func.func @transform_6(%arg0: i32) -> (i32, i32) {
    %c0_i32 = arith.constant 0 : i32
    %c0_i32_0 = arith.constant 0 : i32
    %c0_i32_1 = arith.constant 0 : i32
    return %c0_i32, %c0_i32_0 : i32, i32
  }
  func.func @transform_7(%arg0: i32) -> (i32, i32) {
    %c0_i32 = arith.constant 0 : i32
    %c0_i32_0 = arith.constant 0 : i32
    %c0_i32_1 = arith.constant 0 : i32
    return %c0_i32, %c0_i32_0 : i32, i32
  }
  func.func @transform_8(%arg0: i32) -> (i32, i32, i32) {
    %c0_i32 = arith.constant 0 : i32
    %c0_i32_0 = arith.constant 0 : i32
    %c0_i32_1 = arith.constant 0 : i32
    return %arg0, %c0_i32, %c0_i32_0 : i32, i32, i32
  }
}

</mosaic_0001>

<llo_original>
// kernel: tpu_custom_call.1
$region0: #{tpu_custom_call.1}
  #allocation0 [shape = 'u32[]', space=smem, size = 0x4, offset = 0x4, fixed_abs, tag = 'smem constant byte address 0x4 - core index']
  #allocation1 [shape = 'u32[144,128]{1,0:T(1,128)}', space=vmem, size = 0x12000, scoped, tag = 'internal scratch']
  #allocation2 [shape = 'f32[8,166]{1,0:T(8,128)}', space=vmem, size = 0x2000, scoped, tag = 'scratch operand']
  #allocation3 [shape = 'f32[8,130]{1,0:T(8,128)}', space=vmem, size = 0x2000, scoped, tag = 'scratch operand']
  %s0 = inlined_call_operand.vmem [shape: f32[2,8,128], index: 0, kind: input, shape index: {}]
  %s1 = inlined_call_operand.vmem [shape: f32[8,8], index: 1, kind: input, shape index: {}]
  %s2 = inlined_call_operand.vmem [shape: f32[39,8,8], index: 2, kind: input, shape index: {}]
  %s3 = inlined_call_operand.vmem [shape: f32[19,8,8], index: 3, kind: input, shape index: {}]
  %s4 = inlined_call_operand.vmem [shape: f32[9,8,8], index: 4, kind: input, shape index: {}]
  %s5 = inlined_call_operand.vmem [shape: f32[8,8], index: 5, kind: input, shape index: {}]
  %s6 = inlined_call_operand.vmem [shape: f32[32,1], index: 6, kind: input, shape index: {}]
  %s7 = inlined_call_operand.vmem [shape: f32[32,1], index: 7, kind: input, shape index: {}]
  %s8 = inlined_call_operand.hbm [shape: f32[2,32,128], index: 8, kind: output, shape index: {}]
  %s9 = sld [smem:[#allocation0]]
  $region65: #{tpu_custom_call.1} parent=0
    _
  %s11 = ssub.s32 1, %s9
  %s12 = scalar_select 0, %s11, %s9
  $region1: #{tpu_custom_call.1} parent=0
    #allocation4 [shape = 'u8[32768]{0}', space=vmem, size = 0x8000, scoped, tag = 'output window, operand 0']
    #allocation5 [shape = 's32[2]{0}', space=sflag, size = 0x8, scoped, tag = 'scoped memory for tpu_custom_call.1']
    %13 = vsyncpa [#allocation5], 0
    %s14 = scalar_lea.sflag [#allocation5], 1
    %15 = vsyncpa %s14, 0
    loop: start=0, step=1, limit=4
    $region2: #{tpu_custom_call.1} parent=1 // loop_pre_header
      _
    $region3: #{tpu_custom_call.1} parent=1 // loop_header
      %s17 = sphi 0, %s21
      %p18 = scmp.ge.s32.totalorder %s17, 4
      %s27 = sphi 0, %s29
      %s30 = sphi 0, %s27
      %s31 = sphi 0, %s30
      %s47 = sphi 0, %s31
      %s51 = sphi 0, %s51
      %s53 = sphi 0, %s51
      %s54 = sphi 0, %s53
      %s68 = sphi 0, %s54
      %s72 = sphi 0, %s72
      %s74 = sphi 0, %s72
      %s75 = sphi 0, %s74
      %s89 = sphi 0, %s75
      %s93 = sphi 0, %s93
      %s95 = sphi 0, %s93
      %s96 = sphi 0, %s95
      %s110 = sphi 0, %s96
      %s114 = sphi 0, %s114
      %s116 = sphi 0, %s114
      %s117 = sphi 0, %s116
      %s131 = sphi 0, %s117
      %s135 = sphi 0, %s135
      %s137 = sphi 0, %s135
      %s138 = sphi 0, %s137
      %s152 = sphi 0, %s138
      %s156 = sphi 0, %s156
      %s158 = sphi 0, %s156
      %s159 = sphi 0, %s158
      %s173 = sphi 0, %s159
      %s177 = sphi 0, %s177
      %s179 = sphi 0, %s177
      %s180 = sphi 0, %s179
      %s194 = sphi 0, %s180
      %s200 = sphi 0, %s202
      %s203 = sphi 0, %s200
      %s204 = sphi 0, %s203
      %s220 = sphi 0, %s204
    $region4: #{tpu_custom_call.1} parent=1 // loop_header_branch
      %20 = sbr.rel (%p18) target = $region8
    $region5: #{tpu_custom_call.1} parent=1 // loop_body
      %s22 = ssub.s32 %s17, 1
      %s23 = ssub.s32 %s17, 2
      %s24 = sadd.s32 %s17, 1
      %s25 = ssub.s32 %s17, %s24
      %p26 = scmp.eq.s32.totalorder %s25, 0
      %s28 = sadd.s32 %s27, 1
      %s29 = scalar_select %p26, %s27, %s28
      %p32 = pneg %p26
      %p33 = scmp.eq.s32.totalorder %s17, 1
      %p34 = por %p32, %p33
      %p35 = scmp.ne.s32.totalorder %s27, %s30
      %p36 = scmp.eq.s32.totalorder %s17, 0
      %p37 = por %p35, %p36
      %p38 = scmp.ne.s32.totalorder %s27, %s30
      %p39 = scmp.eq.s32.totalorder %s22, 1
      %p40 = por %p38, %p39
      %p41 = scmp.ne.s32.totalorder %s30, %s31
      %p42 = scmp.eq.s32.totalorder %s22, 0
      %p43 = por %p41, %p42
      %p44 = scmp.ne.s32.totalorder %s30, %s31
      %p45 = scmp.eq.s32.totalorder %s23, 1
      %p46 = por %p44, %p45
      %p48 = scmp.ne.s32.totalorder %s31, %s47
      %p49 = scmp.eq.s32.totalorder %s23, 0
      %p50 = por %p48, %p49
      %s52 = sadd.s32 %s51, 1
      %p55 = scmp.eq.s32.totalorder %s17, 1
      %p56 = scmp.ne.s32.totalorder %s51, %s53
      %p57 = scmp.eq.s32.totalorder %s17, 0
      %p58 = por %p56, %p57
      %p59 = scmp.ne.s32.totalorder %s51, %s53
      %p60 = scmp.eq.s32.totalorder %s22, 1
      %p61 = por %p59, %p60
      %p62 = scmp.ne.s32.totalorder %s53, %s54
      %p63 = scmp.eq.s32.totalorder %s22, 0
      %p64 = por %p62, %p63
      %p65 = scmp.ne.s32.totalorder %s53, %s54
      %p66 = scmp.eq.s32.totalorder %s23, 1
      %p67 = por %p65, %p66
      %p69 = scmp.ne.s32.totalorder %s54, %s68
      %p70 = scmp.eq.s32.totalorder %s23, 0
      %p71 = por %p69, %p70
      %s73 = sadd.s32 %s72, 1
      %p76 = scmp.eq.s32.totalorder %s17, 1
      %p77 = scmp.ne.s32.totalorder %s72, %s74
      %p78 = scmp.eq.s32.totalorder %s17, 0
      %p79 = por %p77, %p78
      %p80 = scmp.ne.s32.totalorder %s72, %s74
      %p81 = scmp.eq.s32.totalorder %s22, 1
      %p82 = por %p80, %p81
      %p83 = scmp.ne.s32.totalorder %s74, %s75
      %p84 = scmp.eq.s32.totalorder %s22, 0
      %p85 = por %p83, %p84
      %p86 = scmp.ne.s32.totalorder %s74, %s75
      %p87 = scmp.eq.s32.totalorder %s23, 1
      %p88 = por %p86, %p87
      %p90 = scmp.ne.s32.totalorder %s75, %s89
      %p91 = scmp.eq.s32.totalorder %s23, 0
      %p92 = por %p90, %p91
      %s94 = sadd.s32 %s93, 1
      %p97 = scmp.eq.s32.totalorder %s17, 1
      %p98 = scmp.ne.s32.totalorder %s93, %s95
      %p99 = scmp.eq.s32.totalorder %s17, 0
      %p100 = por %p98, %p99
      %p101 = scmp.ne.s32.totalorder %s93, %s95
      %p102 = scmp.eq.s32.totalorder %s22, 1
      %p103 = por %p101, %p102
      %p104 = scmp.ne.s32.totalorder %s95, %s96
      %p105 = scmp.eq.s32.totalorder %s22, 0
      %p106 = por %p104, %p105
      %p107 = scmp.ne.s32.totalorder %s95, %s96
      %p108 = scmp.eq.s32.totalorder %s23, 1
      %p109 = por %p107, %p108
      %p111 = scmp.ne.s32.totalorder %s96, %s110
      %p112 = scmp.eq.s32.totalorder %s23, 0
      %p113 = por %p111, %p112
      %s115 = sadd.s32 %s114, 1
      %p118 = scmp.eq.s32.totalorder %s17, 1
      %p119 = scmp.ne.s32.totalorder %s114, %s116
      %p120 = scmp.eq.s32.totalorder %s17, 0
      %p121 = por %p119, %p120
      %p122 = scmp.ne.s32.totalorder %s114, %s116
      %p123 = scmp.eq.s32.totalorder %s22, 1
      %p124 = por %p122, %p123
      %p125 = scmp.ne.s32.totalorder %s116, %s117
      %p126 = scmp.eq.s32.totalorder %s22, 0
      %p127 = por %p125, %p126
      %p128 = scmp.ne.s32.totalorder %s116, %s117
      %p129 = scmp.eq.s32.totalorder %s23, 1
      %p130 = por %p128, %p129
      %p132 = scmp.ne.s32.totalorder %s117, %s131
      %p133 = scmp.eq.s32.totalorder %s23, 0
      %p134 = por %p132, %p133
      %s136 = sadd.s32 %s135, 1
      %p139 = scmp.eq.s32.totalorder %s17, 1
      %p140 = scmp.ne.s32.totalorder %s135, %s137
      %p141 = scmp.eq.s32.totalorder %s17, 0
      %p142 = por %p140, %p141
      %p143 = scmp.ne.s32.totalorder %s135, %s137
      %p144 = scmp.eq.s32.totalorder %s22, 1
      %p145 = por %p143, %p144
      %p146 = scmp.ne.s32.totalorder %s137, %s138
      %p147 = scmp.eq.s32.totalorder %s22, 0
      %p148 = por %p146, %p147
      %p149 = scmp.ne.s32.totalorder %s137, %s138
      %p150 = scmp.eq.s32.totalorder %s23, 1
      %p151 = por %p149, %p150
      %p153 = scmp.ne.s32.totalorder %s138, %s152
      %p154 = scmp.eq.s32.totalorder %s23, 0
      %p155 = por %p153, %p154
      %s157 = sadd.s32 %s156, 1
      %p160 = scmp.eq.s32.totalorder %s17, 1
      %p161 = scmp.ne.s32.totalorder %s156, %s158
      %p162 = scmp.eq.s32.totalorder %s17, 0
      %p163 = por %p161, %p162
      %p164 = scmp.ne.s32.totalorder %s156, %s158
      %p165 = scmp.eq.s32.totalorder %s22, 1
      %p166 = por %p164, %p165
      %p167 = scmp.ne.s32.totalorder %s158, %s159
      %p168 = scmp.eq.s32.totalorder %s22, 0
      %p169 = por %p167, %p168
      %p170 = scmp.ne.s32.totalorder %s158, %s159
      %p171 = scmp.eq.s32.totalorder %s23, 1
      %p172 = por %p170, %p171
      %p174 = scmp.ne.s32.totalorder %s159, %s173
      %p175 = scmp.eq.s32.totalorder %s23, 0
      %p176 = por %p174, %p175
      %s178 = sadd.s32 %s177, 1
      %p181 = scmp.eq.s32.totalorder %s17, 1
      %p182 = scmp.ne.s32.totalorder %s177, %s179
      %p183 = scmp.eq.s32.totalorder %s17, 0
      %p184 = por %p182, %p183
      %p185 = scmp.ne.s32.totalorder %s177, %s179
      %p186 = scmp.eq.s32.totalorder %s22, 1
      %p187 = por %p185, %p186
      %p188 = scmp.ne.s32.totalorder %s179, %s180
      %p189 = scmp.eq.s32.totalorder %s22, 0
      %p190 = por %p188, %p189
      %p191 = scmp.ne.s32.totalorder %s179, %s180
      %p192 = scmp.eq.s32.totalorder %s23, 1
      %p193 = por %p191, %p192
      %p195 = scmp.ne.s32.totalorder %s180, %s194
      %p196 = scmp.eq.s32.totalorder %s23, 0
      %p197 = por %p195, %p196
      %s198 = ssub.s32 %s17, %s24
      %p199 = scmp.eq.s32.totalorder %s198, 0
      %s201 = sadd.s32 %s200, 1
      %s202 = scalar_select %p199, %s200, %s201
      %p205 = pneg %p199
      %p206 = scmp.eq.s32.totalorder %s17, 1
      %p207 = por %p205, %p206
      %p208 = scmp.ne.s32.totalorder %s200, %s203
      %p209 = scmp.eq.s32.totalorder %s17, 0
      %p210 = por %p208, %p209
      %p211 = scmp.ne.s32.totalorder %s200, %s203
      %p212 = scmp.eq.s32.totalorder %s22, 1
      %p213 = por %p211, %p212
      %p214 = scmp.ne.s32.totalorder %s203, %s204
      %p215 = scmp.eq.s32.totalorder %s22, 0
      %p216 = por %p214, %p215
      %p217 = scmp.ne.s32.totalorder %s203, %s204
      %p218 = scmp.eq.s32.totalorder %s23, 1
      %p219 = por %p217, %p218
      %p221 = scmp.ne.s32.totalorder %s204, %s220
      %p222 = scmp.eq.s32.totalorder %s23, 0
      %p223 = por %p221, %p222
      %p224 = scmp.le.s32.totalorder 1, %s17
      %p225 = scmp.lt.s32.totalorder %s17, 3
      %p226 = pnand %p224, %p225
      %p227 = pneg %p226
      // Predicated region
      $region9: #{tpu_custom_call.1} parent=5 // pred_check
        _
      $region10: #{tpu_custom_call.1} parent=5 // pred_check_branch
        %229 = sbr.rel (%p226) target = $region12
      $region11: #{tpu_custom_call.1} parent=5 // pred_region
        %s230 = ssub.s32 %s17, 1
        // Predicated region
        $region13: #{tpu_custom_call.1} parent=11 // pred_check
          %p231 = pneg %p64
        $region14: #{tpu_custom_call.1} parent=11 // pred_check_branch
          %233 = sbr.rel (%p231) target = $region16
        $region15: #{tpu_custom_call.1} parent=11 // pred_region
          _
        $region16: #{tpu_custom_call.1} parent=11 // pred_fallthru
          _
        // Predicated region
        $region17: #{tpu_custom_call.1} parent=11 // pred_check
          %p234 = pneg %p85
        $region18: #{tpu_custom_call.1} parent=11 // pred_check_branch
          %236 = sbr.rel (%p234) target = $region20
        $region19: #{tpu_custom_call.1} parent=11 // pred_region
          _
        $region20: #{tpu_custom_call.1} parent=11 // pred_fallthru
          _
        // Predicated region
        $region21: #{tpu_custom_call.1} parent=11 // pred_check
          %p237 = pneg %p106
        $region22: #{tpu_custom_call.1} parent=11 // pred_check_branch
          %239 = sbr.rel (%p237) target = $region24
        $region23: #{tpu_custom_call.1} parent=11 // pred_region
          _
        $region24: #{tpu_custom_call.1} parent=11 // pred_fallthru
          _
        // Predicated region
        $region25: #{tpu_custom_call.1} parent=11 // pred_check
          %p240 = pneg %p127
        $region26: #{tpu_custom_call.1} parent=11 // pred_check_branch
          %242 = sbr.rel (%p240) target = $region28
        $region27: #{tpu_custom_call.1} parent=11 // pred_region
          _
        $region28: #{tpu_custom_call.1} parent=11 // pred_fallthru
          _
        // Predicated region
        $region29: #{tpu_custom_call.1} parent=11 // pred_check
          %p243 = pneg %p148
        $region30: #{tpu_custom_call.1} parent=11 // pred_check_branch
          %245 = sbr.rel (%p243) target = $region32
        $region31: #{tpu_custom_call.1} parent=11 // pred_region
          _
        $region32: #{tpu_custom_call.1} parent=11 // pred_fallthru
          _
        // Predicated region
        $region33: #{tpu_custom_call.1} parent=11 // pred_check
          %p246 = pneg %p169
        $region34: #{tpu_custom_call.1} parent=11 // pred_check_branch
          %248 = sbr.rel (%p246) target = $region36
        $region35: #{tpu_custom_call.1} parent=11 // pred_region
          _
        $region36: #{tpu_custom_call.1} parent=11 // pred_fallthru
          _
        // Predicated region
        $region37: #{tpu_custom_call.1} parent=11 // pred_check
          %p249 = pneg %p190
        $region38: #{tpu_custom_call.1} parent=11 // pred_check_branch
          %251 = sbr.rel (%p249) target = $region40
        $region39: #{tpu_custom_call.1} parent=11 // pred_region
          _
        $region40: #{tpu_custom_call.1} parent=11 // pred_fallthru
          _
      $region12: #{tpu_custom_call.1} parent=5 // pred_fallthru
        _
      %p252 = scmp.lt.s32.totalorder %s17, 2
      // Predicated region
      $region41: #{tpu_custom_call.1} parent=5 // pred_check
        %p253 = pneg %p252
      $region42: #{tpu_custom_call.1} parent=5 // pred_check_branch
        %255 = sbr.rel (%p253) target = $region44
      $region43: #{tpu_custom_call.1} parent=5 // pred_region
        // Predicated region
        $region45: #{tpu_custom_call.1} parent=43 // pred_check
          %p256 = pneg %p37
        $region46: #{tpu_custom_call.1} parent=43 // pred_check_branch
          %258 = sbr.rel (%p256) target = $region48
        $region47: #{tpu_custom_call.1} parent=43 // pred_region
          %p259 = scmp.lt.s32.totalorder %s17, 1
          %s260 = scalar_select %p259, %s17, 1
          %s261 = smul.addr %s260, 8
          %s262 = scalar_lea.vmem %s0, %s261
        $region48: #{tpu_custom_call.1} parent=43 // pred_fallthru
          _
      $region44: #{tpu_custom_call.1} parent=5 // pred_fallthru
        _
      %p263 = scmp.le.s32.totalorder 1, %s17
      %p264 = scmp.lt.s32.totalorder %s17, 3
      %p265 = pnand %p263, %p264
      %p266 = pneg %p265
      // Predicated region
      $region49: #{tpu_custom_call.1} parent=5 // pred_check
        _
      $region50: #{tpu_custom_call.1} parent=5 // pred_check_branch
        %268 = sbr.rel (%p265) target = $region52
      $region51: #{tpu_custom_call.1} parent=5 // pred_region
        %s269 = ssub.s32 %s17, 1
        %p270 = scmp.lt.s32.totalorder %s22, 1
        %s271 = scalar_select %p270, %s22, 1
        %s272 = smul.addr %s271, 8
        %s273 = scalar_lea.vmem %s0, %s272
        %p274 = pneg %p43
        %p275 = pneg %p40
        %p276 = pneg %p64
        %p277 = pneg %p61
        %p278 = pneg %p85
        %p279 = pneg %p82
        %p280 = pneg %p106
        %p281 = pneg %p103
        %p282 = pneg %p127
        %p283 = pneg %p124
        %p284 = pneg %p148
        %p285 = pneg %p145
        %p286 = pneg %p169
        %p287 = pneg %p166
        %p288 = pneg %p190
        %p289 = pneg %p187
        %p290 = pneg %p216
        %p291 = pneg %p213
        %s292 = sand.u32 %s203, 1
        %s293 = scalar_lea.sflag [#allocation5], %s292
        %s294 = sand.u32 %s203, 1
        %s295 = smul.addr %s294, 32
        %s296 = scalar_lea.vmem [#allocation4], %s295
        %p297 = scmp.lt.s32.totalorder %s22, 1
        %s298 = scalar_select %p297, %s22, 1
        %s299 = smul.addr %s298, 8
        %s300 = scalar_lea.vmem %s0, %s299
        %v301 = vld [vmem:[%s300] sm:$0xff]
        %v302 = vld [vmem:[%s1] sm:$0xff]
        %vm303 = vcmask 64512
        %v305 = vsel %vm303, %v302, 0
        %307 = vmatprep.subr.mxu0 0.0
        %308 = vmatpush1.msra.mxu0 0.0
        %309 = vmatprep.subr.mxu0 0.0
        %310 = vmatpush1.msra.mxu0 0.0
        %311 = vmatprep.subr.mxu0 0.0
        %312 = vmatpush1.msra.mxu0 0.0
        %313 = vmatprep.subr.mxu0 0.0
        %314 = vmatpush1.msra.mxu0 0.0
        %315 = vmatprep.subr.mxu0 0.0
        %316 = vmatpush1.msra.mxu0 0.0
        %317 = vmatprep.subr.mxu0 0.0
        %318 = vmatpush1.msra.mxu0 0.0
        %319 = vmatprep.subr.mxu0 0.0
        %320 = vmatpush1.msra.mxu0 0.0
        %321 = vmatprep.subr.mxu0 0.0
        %322 = vmatpush1.msra.mxu0 0.0
        %323 = vmatprep.subr.mxu0 0.0
        %324 = vmatpush1.msra.mxu0 0.0
        %325 = vmatprep.subr.mxu0 0.0
        %326 = vmatpush1.msra.mxu0 0.0
        %327 = vmatprep.subr.mxu0 0.0
        %328 = vmatpush1.msra.mxu0 0.0
        %329 = vmatprep.subr.mxu0 0.0
        %330 = vmatpush1.msra.mxu0 0.0
        %331 = vmatprep.subr.mxu0 0.0
        %332 = vmatpush1.msra.mxu0 0.0
        %333 = vmatprep.subr.mxu0 0.0
        %334 = vmatpush1.msra.mxu0 0.0
        %335 = vmatprep.subr.mxu0 0.0
        %336 = vmatpush1.msra.mxu0 0.0
        %337 = vmatprep.subr.mxu0 0.0
        %338 = vmatpush1.msra.mxu0 %v301
        %339 = vmatprep.subr.mxu0 0.0
        %340 = vmatpush2.msra.mxu0 0.0
        %341 = vmatprep.subr.mxu0 0.0
        %342 = vmatpush2.msra.mxu0 0.0
        %343 = vmatprep.subr.mxu0 0.0
        %344 = vmatpush2.msra.mxu0 0.0
        %345 = vmatprep.subr.mxu0 0.0
        %346 = vmatpush2.msra.mxu0 0.0
        %347 = vmatprep.subr.mxu0 0.0
        %348 = vmatpush2.msra.mxu0 0.0
        %349 = vmatprep.subr.mxu0 0.0
        %350 = vmatpush2.msra.mxu0 0.0
        %351 = vmatprep.subr.mxu0 0.0
        %352 = vmatpush2.msra.mxu0 0.0
        %353 = vmatprep.subr.mxu0 0.0
        %354 = vmatpush2.msra.mxu0 0.0
        %355 = vmatprep.subr.mxu0 0.0
        %356 = vmatpush2.msra.mxu0 0.0
        %357 = vmatprep.subr.mxu0 0.0
        %358 = vmatpush2.msra.mxu0 0.0
        %359 = vmatprep.subr.mxu0 0.0
        %360 = vmatpush2.msra.mxu0 0.0
        %361 = vmatprep.subr.mxu0 0.0
        %362 = vmatpush2.msra.mxu0 0.0
        %363 = vmatprep.subr.mxu0 0.0
        %364 = vmatpush2.msra.mxu0 0.0
        %365 = vmatprep.subr.mxu0 0.0
        %366 = vmatpush2.msra.mxu0 0.0
        %367 = vmatprep.subr.mxu0 0.0
        %368 = vmatpush2.msra.mxu0 0.0
        %369 = vmatprep.subr.mxu0 0.0
        %370 = vmatpush2.msra.mxu0 0.0
        %371 = vmatprep.mubr.f32.mxu0 0.0
        %372 = vmatmul.mubr.f32.gmra.mxu0 %v305
        %v373 = vpop.f32.mrf.mxu0
        %v374 = vadd.f32 0.0, %v373
        %v375 = vpop.f32.mrf.mxu0
        %376 = vdwg.mxu0
        %377 = vst [vmem:[#allocation2] sm:$0xff] 0.0
        %vm378 = vcmask 310272
        %379 = vst.msk [vmem:[#allocation2 + $0x8] sm:$0xff] %vm378, 0.0
        %381 = vrot.lane.b32.xlu0 %v374, 19
        %v382 = vpop.permute.xlu0 %381
        %vm384 = vcmask 1047704
        %385 = vst.msk [vmem:[#allocation2] sm:$0xff] %vm384, %v382
        %vm386 = vcmask 154624
        %387 = vst.msk [vmem:[#allocation2 + $0x8] sm:$0xff] %vm386, %v382
        %v388 = vld [vmem:[#allocation2] sm:$0xff]
        %v389 = vld [vmem:[#allocation2 + $0x8] sm:$0xff]
        %v390 = vld [vmem:[%s2] sm:$0xff]
        %s391 = scalar_lea.vmem %s2, 8
        %v392 = vld [vmem:[%s391] sm:$0xff]
        %395 = vrot.lane.b32.xlu0 %v388, 127
        %v396 = vpop.permute.xlu0 %395
        %397 = vrot.lane.b32.xlu0 %v389, 127
        %v398 = vpop.permute.xlu0 %397
        %vm399 = vcmask 1039360
        %v400 = vsel %vm399, %v396, %v398
        %v403 = vsel %vm303, %v392, 0
        %405 = vmatprep.subr.mxu0 0.0
        %406 = vmatpush1.msra.mxu0 0.0
        %407 = vmatprep.subr.mxu0 0.0
        %408 = vmatpush1.msra.mxu0 0.0
        %409 = vmatprep.subr.mxu0 0.0
        %410 = vmatpush1.msra.mxu0 0.0
        %411 = vmatprep.subr.mxu0 0.0
        %412 = vmatpush1.msra.mxu0 0.0
        %413 = vmatprep.subr.mxu0 0.0
        %414 = vmatpush1.msra.mxu0 0.0
        %415 = vmatprep.subr.mxu0 0.0
        %416 = vmatpush1.msra.mxu0 0.0
        %417 = vmatprep.subr.mxu0 0.0
        %418 = vmatpush1.msra.mxu0 0.0
        %419 = vmatprep.subr.mxu0 0.0
        %420 = vmatpush1.msra.mxu0 0.0
        %421 = vmatprep.subr.mxu0 0.0
        %422 = vmatpush1.msra.mxu0 0.0
        %423 = vmatprep.subr.mxu0 0.0
        %424 = vmatpush1.msra.mxu0 0.0
        %425 = vmatprep.subr.mxu0 0.0
        %426 = vmatpush1.msra.mxu0 0.0
        %427 = vmatprep.subr.mxu0 0.0
        %428 = vmatpush1.msra.mxu0 0.0
        %429 = vmatprep.subr.mxu0 0.0
        %430 = vmatpush1.msra.mxu0 0.0
        %431 = vmatprep.subr.mxu0 0.0
        %432 = vmatpush1.msra.mxu0 0.0
        %433 = vmatprep.subr.mxu0 0.0
        %434 = vmatpush1.msra.mxu0 0.0
        %435 = vmatprep.subr.mxu0 0.0
        %436 = vmatpush1.msra.mxu0 %v400
        %437 = vmatprep.subr.mxu0 0.0
        %438 = vmatpush2.msra.mxu0 0.0
        %439 = vmatprep.subr.mxu0 0.0
        %440 = vmatpush2.msra.mxu0 0.0
        %441 = vmatprep.subr.mxu0 0.0
        %442 = vmatpush2.msra.mxu0 0.0
        %443 = vmatprep.subr.mxu0 0.0
        %444 = vmatpush2.msra.mxu0 0.0
        %445 = vmatprep.subr.mxu0 0.0
        %446 = vmatpush2.msra.mxu0 0.0
        %447 = vmatprep.subr.mxu0 0.0
        %448 = vmatpush2.msra.mxu0 0.0
        %449 = vmatprep.subr.mxu0 0.0
        %450 = vmatpush2.msra.mxu0 0.0
        %451 = vmatprep.subr.mxu0 0.0
        %452 = vmatpush2.msra.mxu0 0.0
        %453 = vmatprep.subr.mxu0 0.0
        %454 = vmatpush2.msra.mxu0 0.0
        %455 = vmatprep.subr.mxu0 0.0
        %456 = vmatpush2.msra.mxu0 0.0
        %457 = vmatprep.subr.mxu0 0.0
        %458 = vmatpush2.msra.mxu0 0.0
        %459 = vmatprep.subr.mxu0 0.0
        %460 = vmatpush2.msra.mxu0 0.0
        %461 = vmatprep.subr.mxu0 0.0
        %462 = vmatpush2.msra.mxu0 0.0
        %463 = vmatprep.subr.mxu0 0.0
        %464 = vmatpush2.msra.mxu0 0.0
        %465 = vmatprep.subr.mxu0 0.0
        %466 = vmatpush2.msra.mxu0 0.0
        %467 = vmatprep.subr.mxu0 0.0
        %468 = vmatpush2.msra.mxu0 0.0
        %469 = vmatprep.mubr.f32.mxu0 0.0
        %470 = vmatmul.mubr.f32.gmra.mxu0 %v403
        %v471 = vpop.f32.mrf.mxu0
        %v472 = vadd.f32 0.0, %v471
        %v473 = vpop.f32.mrf.mxu0
        %474 = vdwg.mxu0
        %v476 = vsel %vm303, %v390, 0
        %478 = vmatprep.subr.mxu0 0.0
        %479 = vmatpush1.msra.mxu0 0.0
        %480 = vmatprep.subr.mxu0 0.0
        %481 = vmatpush1.msra.mxu0 0.0
        %482 = vmatprep.subr.mxu0 0.0
        %483 = vmatpush1.msra.mxu0 0.0
        %484 = vmatprep.subr.mxu0 0.0
        %485 = vmatpush1.msra.mxu0 0.0
        %486 = vmatprep.subr.mxu0 0.0
        %487 = vmatpush1.msra.mxu0 0.0
        %488 = vmatprep.subr.mxu0 0.0
        %489 = vmatpush1.msra.mxu0 0.0
        %490 = vmatprep.subr.mxu0 0.0
        %491 = vmatpush1.msra.mxu0 0.0
        %492 = vmatprep.subr.mxu0 0.0
        %493 = vmatpush1.msra.mxu0 0.0
        %494 = vmatprep.subr.mxu0 0.0
        %495 = vmatpush1.msra.mxu0 0.0
        %496 = vmatprep.subr.mxu0 0.0
        %497 = vmatpush1.msra.mxu0 0.0
        %498 = vmatprep.subr.mxu0 0.0
        %499 = vmatpush1.msra.mxu0 0.0
        %500 = vmatprep.subr.mxu0 0.0
        %501 = vmatpush1.msra.mxu0 0.0
        %502 = vmatprep.subr.mxu0 0.0
        %503 = vmatpush1.msra.mxu0 0.0
        %504 = vmatprep.subr.mxu0 0.0
        %505 = vmatpush1.msra.mxu0 0.0
        %506 = vmatprep.subr.mxu0 0.0
        %507 = vmatpush1.msra.mxu0 0.0
        %508 = vmatprep.subr.mxu0 0.0
        %509 = vmatpush1.msra.mxu0 %v388
        %510 = vmatprep.subr.mxu0 0.0
        %511 = vmatpush2.msra.mxu0 0.0
        %512 = vmatprep.subr.mxu0 0.0
        %513 = vmatpush2.msra.mxu0 0.0
        %514 = vmatprep.subr.mxu0 0.0
        %515 = vmatpush2.msra.mxu0 0.0
        %516 = vmatprep.subr.mxu0 0.0
        %517 = vmatpush2.msra.mxu0 0.0
        %518 = vmatprep.subr.mxu0 0.0
        %519 = vmatpush2.msra.mxu0 0.0
        %520 = vmatprep.subr.mxu0 0.0
        %521 = vmatpush2.msra.mxu0 0.0
        %522 = vmatprep.subr.mxu0 0.0
        %523 = vmatpush2.msra.mxu0 0.0
        %524 = vmatprep.subr.mxu0 0.0
        %525 = vmatpush2.msra.mxu0 0.0
        %526 = vmatprep.subr.mxu0 0.0
        %527 = vmatpush2.msra.mxu0 0.0
        %528 = vmatprep.subr.mxu0 0.0
        %529 = vmatpush2.msra.mxu0 0.0
        %530 = vmatprep.subr.mxu0 0.0
        %531 = vmatpush2.msra.mxu0 0.0
        %532 = vmatprep.subr.mxu0 0.0
        %533 = vmatpush2.msra.mxu0 0.0
        %534 = vmatprep.subr.mxu0 0.0
        %535 = vmatpush2.msra.mxu0 0.0
        %536 = vmatprep.subr.mxu0 0.0
        %537 = vmatpush2.msra.mxu0 0.0
        %538 = vmatprep.subr.mxu0 0.0
        %539 = vmatpush2.msra.mxu0 0.0
        %540 = vmatprep.subr.mxu0 0.0
        %541 = vmatpush2.msra.mxu0 0.0
        %542 = vmatprep.mubr.f32.mxu0 0.0
        %543 = vmatmul.mubr.f32.gmra.mxu0 %v476
        %v544 = vpop.f32.mrf.mxu0
        %v545 = vadd.f32 %v472, %v544
        %v546 = vpop.f32.mrf.mxu0
        %547 = vdwg.mxu0
        %s548 = scalar_lea.vmem %s2, 16
        %v549 = vld [vmem:[%s548] sm:$0xff]
        %550 = vrot.lane.b32.xlu0 %v388, 126
        %v551 = vpop.permute.xlu0 %550
        %552 = vrot.lane.b32.xlu0 %v389, 126
        %v553 = vpop.permute.xlu0 %552
        %vm554 = vcmask 1031168
        %v555 = vsel %vm554, %v551, %v553
        %v558 = vsel %vm303, %v549, 0
        %560 = vmatprep.subr.mxu0 0.0
        %561 = vmatpush1.msra.mxu0 0.0
        %562 = vmatprep.subr.mxu0 0.0
        %563 = vmatpush1.msra.mxu0 0.0
        %564 = vmatprep.subr.mxu0 0.0
        %565 = vmatpush1.msra.mxu0 0.0
        %566 = vmatprep.subr.mxu0 0.0
        %567 = vmatpush1.msra.mxu0 0.0
        %568 = vmatprep.subr.mxu0 0.0
        %569 = vmatpush1.msra.mxu0 0.0
        %570 = vmatprep.subr.mxu0 0.0
        %571 = vmatpush1.msra.mxu0 0.0
        %572 = vmatprep.subr.mxu0 0.0
        %573 = vmatpush1.msra.mxu0 0.0
        %574 = vmatprep.subr.mxu0 0.0
        %575 = vmatpush1.msra.mxu0 0.0
        %576 = vmatprep.subr.mxu0 0.0
        %577 = vmatpush1.msra.mxu0 0.0
        %578 = vmatprep.subr.mxu0 0.0
        %579 = vmatpush1.msra.mxu0 0.0
        %580 = vmatprep.subr.mxu0 0.0
        %581 = vmatpush1.msra.mxu0 0.0
        %582 = vmatprep.subr.mxu0 0.0
        %583 = vmatpush1.msra.mxu0 0.0
        %584 = vmatprep.subr.mxu0 0.0
        %585 = vmatpush1.msra.mxu0 0.0
        %586 = vmatprep.subr.mxu0 0.0
        %587 = vmatpush1.msra.mxu0 0.0
        %588 = vmatprep.subr.mxu0 0.0
        %589 = vmatpush1.msra.mxu0 0.0
        %590 = vmatprep.subr.mxu0 0.0
        %591 = vmatpush1.msra.mxu0 %v555
        %592 = vmatprep.subr.mxu0 0.0
        %593 = vmatpush2.msra.mxu0 0.0
        %594 = vmatprep.subr.mxu0 0.0
        %595 = vmatpush2.msra.mxu0 0.0
        %596 = vmatprep.subr.mxu0 0.0
        %597 = vmatpush2.msra.mxu0 0.0
        %598 = vmatprep.subr.mxu0 0.0
        %599 = vmatpush2.msra.mxu0 0.0
        %600 = vmatprep.subr.mxu0 0.0
        %601 = vmatpush2.msra.mxu0 0.0
        %602 = vmatprep.subr.mxu0 0.0
        %603 = vmatpush2.msra.mxu0 0.0
        %604 = vmatprep.subr.mxu0 0.0
        %605 = vmatpush2.msra.mxu0 0.0
        %606 = vmatprep.subr.mxu0 0.0
        %607 = vmatpush2.msra.mxu0 0.0
        %608 = vmatprep.subr.mxu0 0.0
        %609 = vmatpush2.msra.mxu0 0.0
        %610 = vmatprep.subr.mxu0 0.0
        %611 = vmatpush2.msra.mxu0 0.0
        %612 = vmatprep.subr.mxu0 0.0
        %613 = vmatpush2.msra.mxu0 0.0
        %614 = vmatprep.subr.mxu0 0.0
        %615 = vmatpush2.msra.mxu0 0.0
        %616 = vmatprep.subr.mxu0 0.0
        %617 = vmatpush2.msra.mxu0 0.0
        %618 = vmatprep.subr.mxu0 0.0
        %619 = vmatpush2.msra.mxu0 0.0
        %620 = vmatprep.subr.mxu0 0.0
        %621 = vmatpush2.msra.mxu0 0.0
        %622 = vmatprep.subr.mxu0 0.0
        %623 = vmatpush2.msra.mxu0 0.0
        %624 = vmatprep.mubr.f32.mxu0 0.0
        %625 = vmatmul.mubr.f32.gmra.mxu0 %v558
        %v626 = vpop.f32.mrf.mxu0
        %v627 = vadd.f32 0.0, %v626
        %v628 = vpop.f32.mrf.mxu0
        %629 = vdwg.mxu0
        %v630 = vadd.f32 %v545, %v627
        %s631 = scalar_lea.vmem %s2, 24
        %v632 = vld [vmem:[%s631] sm:$0xff]
        %633 = vrot.lane.b32.xlu0 %v388, 125
        %v634 = vpop.permute.xlu0 %633
        %635 = vrot.lane.b32.xlu0 %v389, 125
        %v636 = vpop.permute.xlu0 %635
        %vm637 = vcmask 1022976
        %v638 = vsel %vm637, %v634, %v636
        %v641 = vsel %vm303, %v632, 0
        %643 = vmatprep.subr.mxu0 0.0
        %644 = vmatpush1.msra.mxu0 0.0
        %645 = vmatprep.subr.mxu0 0.0
        %646 = vmatpush1.msra.mxu0 0.0
        %647 = vmatprep.subr.mxu0 0.0
        %648 = vmatpush1.msra.mxu0 0.0
        %649 = vmatprep.subr.mxu0 0.0
        %650 = vmatpush1.msra.mxu0 0.0
        %651 = vmatprep.subr.mxu0 0.0
        %652 = vmatpush1.msra.mxu0 0.0
        %653 = vmatprep.subr.mxu0 0.0
        %654 = vmatpush1.msra.mxu0 0.0
        %655 = vmatprep.subr.mxu0 0.0
        %656 = vmatpush1.msra.mxu0 0.0
        %657 = vmatprep.subr.mxu0 0.0
        %658 = vmatpush1.msra.mxu0 0.0
        %659 = vmatprep.subr.mxu0 0.0
        %660 = vmatpush1.msra.mxu0 0.0
        %661 = vmatprep.subr.mxu0 0.0
        %662 = vmatpush1.msra.mxu0 0.0
        %663 = vmatprep.subr.mxu0 0.0
        %664 = vmatpush1.msra.mxu0 0.0
        %665 = vmatprep.subr.mxu0 0.0
        %666 = vmatpush1.msra.mxu0 0.0
        %667 = vmatprep.subr.mxu0 0.0
        %668 = vmatpush1.msra.mxu0 0.0
        %669 = vmatprep.subr.mxu0 0.0
        %670 = vmatpush1.msra.mxu0 0.0
        %671 = vmatprep.subr.mxu0 0.0
        %672 = vmatpush1.msra.mxu0 0.0
        %673 = vmatprep.subr.mxu0 0.0
        %674 = vmatpush1.msra.mxu0 %v638
        %675 = vmatprep.subr.mxu0 0.0
        %676 = vmatpush2.msra.mxu0 0.0
        %677 = vmatprep.subr.mxu0 0.0
        %678 = vmatpush2.msra.mxu0 0.0
        %679 = vmatprep.subr.mxu0 0.0
        %680 = vmatpush2.msra.mxu0 0.0
        %681 = vmatprep.subr.mxu0 0.0
        %682 = vmatpush2.msra.mxu0 0.0
        %683 = vmatprep.subr.mxu0 0.0
        %684 = vmatpush2.msra.mxu0 0.0
        %685 = vmatprep.subr.mxu0 0.0
        %686 = vmatpush2.msra.mxu0 0.0
        %687 = vmatprep.subr.mxu0 0.0
        %688 = vmatpush2.msra.mxu0 0.0
        %689 = vmatprep.subr.mxu0 0.0
        %690 = vmatpush2.msra.mxu0 0.0
        %691 = vmatprep.subr.mxu0 0.0
        %692 = vmatpush2.msra.mxu0 0.0
        %693 = vmatprep.subr.mxu0 0.0
        %694 = vmatpush2.msra.mxu0 0.0
        %695 = vmatprep.subr.mxu0 0.0
        %696 = vmatpush2.msra.mxu0 0.0
        %697 = vmatprep.subr.mxu0 0.0
        %698 = vmatpush2.msra.mxu0 0.0
        %699 = vmatprep.subr.mxu0 0.0
        %700 = vmatpush2.msra.mxu0 0.0
        %701 = vmatprep.subr.mxu0 0.0
        %702 = vmatpush2.msra.mxu0 0.0
        %703 = vmatprep.subr.mxu0 0.0
        %704 = vmatpush2.msra.mxu0 0.0
        %705 = vmatprep.subr.mxu0 0.0
        %706 = vmatpush2.msra.mxu0 0.0
        %707 = vmatprep.mubr.f32.mxu0 0.0
        %708 = vmatmul.mubr.f32.gmra.mxu0 %v641
        %v709 = vpop.f32.mrf.mxu0
        %v710 = vadd.f32 0.0, %v709
        %v711 = vpop.f32.mrf.mxu0
        %712 = vdwg.mxu0
        %v713 = vadd.f32 %v630, %v710
        %s714 = scalar_lea.vmem %s2, 32
        %v715 = vld [vmem:[%s714] sm:$0xff]
        %716 = vrot.lane.b32.xlu0 %v388, 124
        %v717 = vpop.permute.xlu0 %716
        %718 = vrot.lane.b32.xlu0 %v389, 124
        %v719 = vpop.permute.xlu0 %718
        %vm720 = vcmask 1014784
        %v721 = vsel %vm720, %v717, %v719
        %v724 = vsel %vm303, %v715, 0
        %726 = vmatprep.subr.mxu0 0.0
        %727 = vmatpush1.msra.mxu0 0.0
        %728 = vmatprep.subr.mxu0 0.0
        %729 = vmatpush1.msra.mxu0 0.0
        %730 = vmatprep.subr.mxu0 0.0
        %731 = vmatpush1.msra.mxu0 0.0
        %732 = vmatprep.subr.mxu0 0.0
        %733 = vmatpush1.msra.mxu0 0.0
        %734 = vmatprep.subr.mxu0 0.0
        %735 = vmatpush1.msra.mxu0 0.0
        %736 = vmatprep.subr.mxu0 0.0
        %737 = vmatpush1.msra.mxu0 0.0
        %738 = vmatprep.subr.mxu0 0.0
        %739 = vmatpush1.msra.mxu0 0.0
        %740 = vmatprep.subr.mxu0 0.0
        %741 = vmatpush1.msra.mxu0 0.0
        %742 = vmatprep.subr.mxu0 0.0
        %743 = vmatpush1.msra.mxu0 0.0
        %744 = vmatprep.subr.mxu0 0.0
        %745 = vmatpush1.msra.mxu0 0.0
        %746 = vmatprep.subr.mxu0 0.0
        %747 = vmatpush1.msra.mxu0 0.0
        %748 = vmatprep.subr.mxu0 0.0
        %749 = vmatpush1.msra.mxu0 0.0
        %750 = vmatprep.subr.mxu0 0.0
        %751 = vmatpush1.msra.mxu0 0.0
        %752 = vmatprep.subr.mxu0 0.0
        %753 = vmatpush1.msra.mxu0 0.0
        %754 = vmatprep.subr.mxu0 0.0
        %755 = vmatpush1.msra.mxu0 0.0
        %756 = vmatprep.subr.mxu0 0.0
        %757 = vmatpush1.msra.mxu0 %v721
        %758 = vmatprep.subr.mxu0 0.0
        %759 = vmatpush2.msra.mxu0 0.0
        %760 = vmatprep.subr.mxu0 0.0
        %761 = vmatpush2.msra.mxu0 0.0
        %762 = vmatprep.subr.mxu0 0.0
        %763 = vmatpush2.msra.mxu0 0.0
        %764 = vmatprep.subr.mxu0 0.0
        %765 = vmatpush2.msra.mxu0 0.0
        %766 = vmatprep.subr.mxu0 0.0
        %767 = vmatpush2.msra.mxu0 0.0
        %768 = vmatprep.subr.mxu0 0.0
        %769 = vmatpush2.msra.mxu0 0.0
        %770 = vmatprep.subr.mxu0 0.0
        %771 = vmatpush2.msra.mxu0 0.0
        %772 = vmatprep.subr.mxu0 0.0
        %773 = vmatpush2.msra.mxu0 0.0
        %774 = vmatprep.subr.mxu0 0.0
        %775 = vmatpush2.msra.mxu0 0.0
        %776 = vmatprep.subr.mxu0 0.0
        %777 = vmatpush2.msra.mxu0 0.0
        %778 = vmatprep.subr.mxu0 0.0
        %779 = vmatpush2.msra.mxu0 0.0
        %780 = vmatprep.subr.mxu0 0.0
        %781 = vmatpush2.msra.mxu0 0.0
        %782 = vmatprep.subr.mxu0 0.0
        %783 = vmatpush2.msra.mxu0 0.0
        %784 = vmatprep.subr.mxu0 0.0
        %785 = vmatpush2.msra.mxu0 0.0
        %786 = vmatprep.subr.mxu0 0.0
        %787 = vmatpush2.msra.mxu0 0.0
        %788 = vmatprep.subr.mxu0 0.0
        %789 = vmatpush2.msra.mxu0 0.0
        %790 = vmatprep.mubr.f32.mxu0 0.0
        %791 = vmatmul.mubr.f32.gmra.mxu0 %v724
        %v792 = vpop.f32.mrf.mxu0
        %v793 = vadd.f32 0.0, %v792
        %v794 = vpop.f32.mrf.mxu0
        %795 = vdwg.mxu0
        %v796 = vadd.f32 %v713, %v793
        %s797 = scalar_lea.vmem %s2, 40
        %v798 = vld [vmem:[%s797] sm:$0xff]
        %799 = vrot.lane.b32.xlu0 %v388, 123
        %v800 = vpop.permute.xlu0 %799
        %801 = vrot.lane.b32.xlu0 %v389, 123
        %v802 = vpop.permute.xlu0 %801
        %vm803 = vcmask 1006592
        %v804 = vsel %vm803, %v800, %v802
        %v807 = vsel %vm303, %v798, 0
        %809 = vmatprep.subr.mxu0 0.0
        %810 = vmatpush1.msra.mxu0 0.0
        %811 = vmatprep.subr.mxu0 0.0
        %812 = vmatpush1.msra.mxu0 0.0
        %813 = vmatprep.subr.mxu0 0.0
        %814 = vmatpush1.msra.mxu0 0.0
        %815 = vmatprep.subr.mxu0 0.0
        %816 = vmatpush1.msra.mxu0 0.0
        %817 = vmatprep.subr.mxu0 0.0
        %818 = vmatpush1.msra.mxu0 0.0
        %819 = vmatprep.subr.mxu0 0.0
        %820 = vmatpush1.msra.mxu0 0.0
        %821 = vmatprep.subr.mxu0 0.0
        %822 = vmatpush1.msra.mxu0 0.0
        %823 = vmatprep.subr.mxu0 0.0
        %824 = vmatpush1.msra.mxu0 0.0
        %825 = vmatprep.subr.mxu0 0.0
        %826 = vmatpush1.msra.mxu0 0.0
        %827 = vmatprep.subr.mxu0 0.0
        %828 = vmatpush1.msra.mxu0 0.0
        %829 = vmatprep.subr.mxu0 0.0
        %830 = vmatpush1.msra.mxu0 0.0
        %831 = vmatprep.subr.mxu0 0.0
        %832 = vmatpush1.msra.mxu0 0.0
        %833 = vmatprep.subr.mxu0 0.0
        %834 = vmatpush1.msra.mxu0 0.0
        %835 = vmatprep.subr.mxu0 0.0
        %836 = vmatpush1.msra.mxu0 0.0
        %837 = vmatprep.subr.mxu0 0.0
        %838 = vmatpush1.msra.mxu0 0.0
        %839 = vmatprep.subr.mxu0 0.0
        %840 = vmatpush1.msra.mxu0 %v804
        %841 = vmatprep.subr.mxu0 0.0
        %842 = vmatpush2.msra.mxu0 0.0
        %843 = vmatprep.subr.mxu0 0.0
        %844 = vmatpush2.msra.mxu0 0.0
        %845 = vmatprep.subr.mxu0 0.0
        %846 = vmatpush2.msra.mxu0 0.0
        %847 = vmatprep.subr.mxu0 0.0
        %848 = vmatpush2.msra.mxu0 0.0
        %849 = vmatprep.subr.mxu0 0.0
        %850 = vmatpush2.msra.mxu0 0.0
        %851 = vmatprep.subr.mxu0 0.0
        %852 = vmatpush2.msra.mxu0 0.0
        %853 = vmatprep.subr.mxu0 0.0
        %854 = vmatpush2.msra.mxu0 0.0
        %855 = vmatprep.subr.mxu0 0.0
        %856 = vmatpush2.msra.mxu0 0.0
        %857 = vmatprep.subr.mxu0 0.0
        %858 = vmatpush2.msra.mxu0 0.0
        %859 = vmatprep.subr.mxu0 0.0
        %860 = vmatpush2.msra.mxu0 0.0
        %861 = vmatprep.subr.mxu0 0.0
        %862 = vmatpush2.msra.mxu0 0.0
        %863 = vmatprep.subr.mxu0 0.0
        %864 = vmatpush2.msra.mxu0 0.0
        %865 = vmatprep.subr.mxu0 0.0
        %866 = vmatpush2.msra.mxu0 0.0
        %867 = vmatprep.subr.mxu0 0.0
        %868 = vmatpush2.msra.mxu0 0.0
        %869 = vmatprep.subr.mxu0 0.0
        %870 = vmatpush2.msra.mxu0 0.0
        %871 = vmatprep.subr.mxu0 0.0
        %872 = vmatpush2.msra.mxu0 0.0
        %873 = vmatprep.mubr.f32.mxu0 0.0
        %874 = vmatmul.mubr.f32.gmra.mxu0 %v807
        %v875 = vpop.f32.mrf.mxu0
        %v876 = vadd.f32 0.0, %v875
        %v877 = vpop.f32.mrf.mxu0
        %878 = vdwg.mxu0
        %v879 = vadd.f32 %v796, %v876
        %s880 = scalar_lea.vmem %s2, 48
        %v881 = vld [vmem:[%s880] sm:$0xff]
        %882 = vrot.lane.b32.xlu0 %v388, 122
        %v883 = vpop.permute.xlu0 %882
        %884 = vrot.lane.b32.xlu0 %v389, 122
        %v885 = vpop.permute.xlu0 %884
        %vm886 = vcmask 998400
        %v887 = vsel %vm886, %v883, %v885
        %v890 = vsel %vm303, %v881, 0
        %892 = vmatprep.subr.mxu0 0.0
        %893 = vmatpush1.msra.mxu0 0.0
        %894 = vmatprep.subr.mxu0 0.0
        %895 = vmatpush1.msra.mxu0 0.0
        %896 = vmatprep.subr.mxu0 0.0
        %897 = vmatpush1.msra.mxu0 0.0
        %898 = vmatprep.subr.mxu0 0.0
        %899 = vmatpush1.msra.mxu0 0.0
        %900 = vmatprep.subr.mxu0 0.0
        %901 = vmatpush1.msra.mxu0 0.0
        %902 = vmatprep.subr.mxu0 0.0
        %903 = vmatpush1.msra.mxu0 0.0
        %904 = vmatprep.subr.mxu0 0.0
        %905 = vmatpush1.msra.mxu0 0.0
        %906 = vmatprep.subr.mxu0 0.0
        %907 = vmatpush1.msra.mxu0 0.0
        %908 = vmatprep.subr.mxu0 0.0
        %909 = vmatpush1.msra.mxu0 0.0
        %910 = vmatprep.subr.mxu0 0.0
        %911 = vmatpush1.msra.mxu0 0.0
        %912 = vmatprep.subr.mxu0 0.0
        %913 = vmatpush1.msra.mxu0 0.0
        %914 = vmatprep.subr.mxu0 0.0
        %915 = vmatpush1.msra.mxu0 0.0
        %916 = vmatprep.subr.mxu0 0.0
        %917 = vmatpush1.msra.mxu0 0.0
        %918 = vmatprep.subr.mxu0 0.0
        %919 = vmatpush1.msra.mxu0 0.0
        %920 = vmatprep.subr.mxu0 0.0
        %921 = vmatpush1.msra.mxu0 0.0
        %922 = vmatprep.subr.mxu0 0.0
        %923 = vmatpush1.msra.mxu0 %v887
        %924 = vmatprep.subr.mxu0 0.0
        %925 = vmatpush2.msra.mxu0 0.0
        %926 = vmatprep.subr.mxu0 0.0
        %927 = vmatpush2.msra.mxu0 0.0
        %928 = vmatprep.subr.mxu0 0.0
        %929 = vmatpush2.msra.mxu0 0.0
        %930 = vmatprep.subr.mxu0 0.0
        %931 = vmatpush2.msra.mxu0 0.0
        %932 = vmatprep.subr.mxu0 0.0
        %933 = vmatpush2.msra.mxu0 0.0
        %934 = vmatprep.subr.mxu0 0.0
        %935 = vmatpush2.msra.mxu0 0.0
        %936 = vmatprep.subr.mxu0 0.0
        %937 = vmatpush2.msra.mxu0 0.0
        %938 = vmatprep.subr.mxu0 0.0
        %939 = vmatpush2.msra.mxu0 0.0
        %940 = vmatprep.subr.mxu0 0.0
        %941 = vmatpush2.msra.mxu0 0.0
        %942 = vmatprep.subr.mxu0 0.0
        %943 = vmatpush2.msra.mxu0 0.0
        %944 = vmatprep.subr.mxu0 0.0
        %945 = vmatpush2.msra.mxu0 0.0
        %946 = vmatprep.subr.mxu0 0.0
        %947 = vmatpush2.msra.mxu0 0.0
        %948 = vmatprep.subr.mxu0 0.0
        %949 = vmatpush2.msra.mxu0 0.0
        %950 = vmatprep.subr.mxu0 0.0
        %951 = vmatpush2.msra.mxu0 0.0
        %952 = vmatprep.subr.mxu0 0.0
        %953 = vmatpush2.msra.mxu0 0.0
        %954 = vmatprep.subr.mxu0 0.0
        %955 = vmatpush2.msra.mxu0 0.0
        %956 = vmatprep.mubr.f32.mxu0 0.0
        %957 = vmatmul.mubr.f32.gmra.mxu0 %v890
        %v958 = vpop.f32.mrf.mxu0
        %v959 = vadd.f32 0.0, %v958
        %v960 = vpop.f32.mrf.mxu0
        %961 = vdwg.mxu0
        %v962 = vadd.f32 %v879, %v959
        %s963 = scalar_lea.vmem %s2, 56
        %v964 = vld [vmem:[%s963] sm:$0xff]
        %965 = vrot.lane.b32.xlu0 %v388, 121
        %v966 = vpop.permute.xlu0 %965
        %967 = vrot.lane.b32.xlu0 %v389, 121
        %v968 = vpop.permute.xlu0 %967
        %vm969 = vcmask 990208
        %v970 = vsel %vm969, %v966, %v968
        %v973 = vsel %vm303, %v964, 0
        %975 = vmatprep.subr.mxu0 0.0
        %976 = vmatpush1.msra.mxu0 0.0
        %977 = vmatprep.subr.mxu0 0.0
        %978 = vmatpush1.msra.mxu0 0.0
        %979 = vmatprep.subr.mxu0 0.0
        %980 = vmatpush1.msra.mxu0 0.0
        %981 = vmatprep.subr.mxu0 0.0
        %982 = vmatpush1.msra.mxu0 0.0
        %983 = vmatprep.subr.mxu0 0.0
        %984 = vmatpush1.msra.mxu0 0.0
        %985 = vmatprep.subr.mxu0 0.0
        %986 = vmatpush1.msra.mxu0 0.0
        %987 = vmatprep.subr.mxu0 0.0
        %988 = vmatpush1.msra.mxu0 0.0
        %989 = vmatprep.subr.mxu0 0.0
        %990 = vmatpush1.msra.mxu0 0.0
        %991 = vmatprep.subr.mxu0 0.0
        %992 = vmatpush1.msra.mxu0 0.0
        %993 = vmatprep.subr.mxu0 0.0
        %994 = vmatpush1.msra.mxu0 0.0
        %995 = vmatprep.subr.mxu0 0.0
        %996 = vmatpush1.msra.mxu0 0.0
        %997 = vmatprep.subr.mxu0 0.0
        %998 = vmatpush1.msra.mxu0 0.0
        %999 = vmatprep.subr.mxu0 0.0
        %1000 = vmatpush1.msra.mxu0 0.0
        %1001 = vmatprep.subr.mxu0 0.0
        %1002 = vmatpush1.msra.mxu0 0.0
        %1003 = vmatprep.subr.mxu0 0.0
        %1004 = vmatpush1.msra.mxu0 0.0
        %1005 = vmatprep.subr.mxu0 0.0
        %1006 = vmatpush1.msra.mxu0 %v970
        %1007 = vmatprep.subr.mxu0 0.0
        %1008 = vmatpush2.msra.mxu0 0.0
        %1009 = vmatprep.subr.mxu0 0.0
        %1010 = vmatpush2.msra.mxu0 0.0
        %1011 = vmatprep.subr.mxu0 0.0
        %1012 = vmatpush2.msra.mxu0 0.0
        %1013 = vmatprep.subr.mxu0 0.0
        %1014 = vmatpush2.msra.mxu0 0.0
        %1015 = vmatprep.subr.mxu0 0.0
        %1016 = vmatpush2.msra.mxu0 0.0
        %1017 = vmatprep.subr.mxu0 0.0
        %1018 = vmatpush2.msra.mxu0 0.0
        %1019 = vmatprep.subr.mxu0 0.0
        %1020 = vmatpush2.msra.mxu0 0.0
        %1021 = vmatprep.subr.mxu0 0.0
        %1022 = vmatpush2.msra.mxu0 0.0
        %1023 = vmatprep.subr.mxu0 0.0
        %1024 = vmatpush2.msra.mxu0 0.0
        %1025 = vmatprep.subr.mxu0 0.0
        %1026 = vmatpush2.msra.mxu0 0.0
        %1027 = vmatprep.subr.mxu0 0.0
        %1028 = vmatpush2.msra.mxu0 0.0
        %1029 = vmatprep.subr.mxu0 0.0
        %1030 = vmatpush2.msra.mxu0 0.0
        %1031 = vmatprep.subr.mxu0 0.0
        %1032 = vmatpush2.msra.mxu0 0.0
        %1033 = vmatprep.subr.mxu0 0.0
        %1034 = vmatpush2.msra.mxu0 0.0
        %1035 = vmatprep.subr.mxu0 0.0
        %1036 = vmatpush2.msra.mxu0 0.0
        %1037 = vmatprep.subr.mxu0 0.0
        %1038 = vmatpush2.msra.mxu0 0.0
        %1039 = vmatprep.mubr.f32.mxu0 0.0
        %1040 = vmatmul.mubr.f32.gmra.mxu0 %v973
        %v1041 = vpop.f32.mrf.mxu0
        %v1042 = vadd.f32 0.0, %v1041
        %v1043 = vpop.f32.mrf.mxu0
        %1044 = vdwg.mxu0
        %v1045 = vadd.f32 %v962, %v1042
        %s1046 = scalar_lea.vmem %s2, 64
        %v1047 = vld [vmem:[%s1046] sm:$0xff]
        %1048 = vrot.lane.b32.xlu0 %v388, 120
        %v1049 = vpop.permute.xlu0 %1048
        %1050 = vrot.lane.b32.xlu0 %v389, 120
        %v1051 = vpop.permute.xlu0 %1050
        %vm1052 = vcmask 982016
        %v1053 = vsel %vm1052, %v1049, %v1051
        %v1056 = vsel %vm303, %v1047, 0
        %1058 = vmatprep.subr.mxu0 0.0
        %1059 = vmatpush1.msra.mxu0 0.0
        %1060 = vmatprep.subr.mxu0 0.0
        %1061 = vmatpush1.msra.mxu0 0.0
        %1062 = vmatprep.subr.mxu0 0.0
        %1063 = vmatpush1.msra.mxu0 0.0
        %1064 = vmatprep.subr.mxu0 0.0
        %1065 = vmatpush1.msra.mxu0 0.0
        %1066 = vmatprep.subr.mxu0 0.0
        %1067 = vmatpush1.msra.mxu0 0.0
        %1068 = vmatprep.subr.mxu0 0.0
        %1069 = vmatpush1.msra.mxu0 0.0
        %1070 = vmatprep.subr.mxu0 0.0
        %1071 = vmatpush1.msra.mxu0 0.0
        %1072 = vmatprep.subr.mxu0 0.0
        %1073 = vmatpush1.msra.mxu0 0.0
        %1074 = vmatprep.subr.mxu0 0.0
        %1075 = vmatpush1.msra.mxu0 0.0
        %1076 = vmatprep.subr.mxu0 0.0
        %1077 = vmatpush1.msra.mxu0 0.0
        %1078 = vmatprep.subr.mxu0 0.0
        %1079 = vmatpush1.msra.mxu0 0.0
        %1080 = vmatprep.subr.mxu0 0.0
        %1081 = vmatpush1.msra.mxu0 0.0
        %1082 = vmatprep.subr.mxu0 0.0
        %1083 = vmatpush1.msra.mxu0 0.0
        %1084 = vmatprep.subr.mxu0 0.0
        %1085 = vmatpush1.msra.mxu0 0.0
        %1086 = vmatprep.subr.mxu0 0.0
        %1087 = vmatpush1.msra.mxu0 0.0
        %1088 = vmatprep.subr.mxu0 0.0
        %1089 = vmatpush1.msra.mxu0 %v1053
        %1090 = vmatprep.subr.mxu0 0.0
        %1091 = vmatpush2.msra.mxu0 0.0
        %1092 = vmatprep.subr.mxu0 0.0
        %1093 = vmatpush2.msra.mxu0 0.0
        %1094 = vmatprep.subr.mxu0 0.0
        %1095 = vmatpush2.msra.mxu0 0.0
        %1096 = vmatprep.subr.mxu0 0.0
        %1097 = vmatpush2.msra.mxu0 0.0
        %1098 = vmatprep.subr.mxu0 0.0
        %1099 = vmatpush2.msra.mxu0 0.0
        %1100 = vmatprep.subr.mxu0 0.0
        %1101 = vmatpush2.msra.mxu0 0.0
        %1102 = vmatprep.subr.mxu0 0.0
        %1103 = vmatpush2.msra.mxu0 0.0
        %1104 = vmatprep.subr.mxu0 0.0
        %1105 = vmatpush2.msra.mxu0 0.0
        %1106 = vmatprep.subr.mxu0 0.0
        %1107 = vmatpush2.msra.mxu0 0.0
        %1108 = vmatprep.subr.mxu0 0.0
        %1109 = vmatpush2.msra.mxu0 0.0
        %1110 = vmatprep.subr.mxu0 0.0
        %1111 = vmatpush2.msra.mxu0 0.0
        %1112 = vmatprep.subr.mxu0 0.0
        %1113 = vmatpush2.msra.mxu0 0.0
        %1114 = vmatprep.subr.mxu0 0.0
        %1115 = vmatpush2.msra.mxu0 0.0
        %1116 = vmatprep.subr.mxu0 0.0
        %1117 = vmatpush2.msra.mxu0 0.0
        %1118 = vmatprep.subr.mxu0 0.0
        %1119 = vmatpush2.msra.mxu0 0.0
        %1120 = vmatprep.subr.mxu0 0.0
        %1121 = vmatpush2.msra.mxu0 0.0
        %1122 = vmatprep.mubr.f32.mxu0 0.0
        %1123 = vmatmul.mubr.f32.gmra.mxu0 %v1056
        %v1124 = vpop.f32.mrf.mxu0
        %v1125 = vadd.f32 0.0, %v1124
        %v1126 = vpop.f32.mrf.mxu0
        %1127 = vdwg.mxu0
        %v1128 = vadd.f32 %v1045, %v1125
        %s1129 = scalar_lea.vmem %s2, 72
        %v1130 = vld [vmem:[%s1129] sm:$0xff]
        %1131 = vrot.lane.b32.xlu0 %v388, 119
        %v1132 = vpop.permute.xlu0 %1131
        %1133 = vrot.lane.b32.xlu0 %v389, 119
        %v1134 = vpop.permute.xlu0 %1133
        %vm1135 = vcmask 973824
        %v1136 = vsel %vm1135, %v1132, %v1134
        %v1139 = vsel %vm303, %v1130, 0
        %1141 = vmatprep.subr.mxu0 0.0
        %1142 = vmatpush1.msra.mxu0 0.0
        %1143 = vmatprep.subr.mxu0 0.0
        %1144 = vmatpush1.msra.mxu0 0.0
        %1145 = vmatprep.subr.mxu0 0.0
        %1146 = vmatpush1.msra.mxu0 0.0
        %1147 = vmatprep.subr.mxu0 0.0
        %1148 = vmatpush1.msra.mxu0 0.0
        %1149 = vmatprep.subr.mxu0 0.0
        %1150 = vmatpush1.msra.mxu0 0.0
        %1151 = vmatprep.subr.mxu0 0.0
        %1152 = vmatpush1.msra.mxu0 0.0
        %1153 = vmatprep.subr.mxu0 0.0
        %1154 = vmatpush1.msra.mxu0 0.0
        %1155 = vmatprep.subr.mxu0 0.0
        %1156 = vmatpush1.msra.mxu0 0.0
        %1157 = vmatprep.subr.mxu0 0.0
        %1158 = vmatpush1.msra.mxu0 0.0
        %1159 = vmatprep.subr.mxu0 0.0
        %1160 = vmatpush1.msra.mxu0 0.0
        %1161 = vmatprep.subr.mxu0 0.0
        %1162 = vmatpush1.msra.mxu0 0.0
        %1163 = vmatprep.subr.mxu0 0.0
        %1164 = vmatpush1.msra.mxu0 0.0
        %1165 = vmatprep.subr.mxu0 0.0
        %1166 = vmatpush1.msra.mxu0 0.0
        %1167 = vmatprep.subr.mxu0 0.0
        %1168 = vmatpush1.msra.mxu0 0.0
        %1169 = vmatprep.subr.mxu0 0.0
        %1170 = vmatpush1.msra.mxu0 0.0
        %1171 = vmatprep.subr.mxu0 0.0
        %1172 = vmatpush1.msra.mxu0 %v1136
        %1173 = vmatprep.subr.mxu0 0.0
        %1174 = vmatpush2.msra.mxu0 0.0
        %1175 = vmatprep.subr.mxu0 0.0
        %1176 = vmatpush2.msra.mxu0 0.0
        %1177 = vmatprep.subr.mxu0 0.0
        %1178 = vmatpush2.msra.mxu0 0.0
        %1179 = vmatprep.subr.mxu0 0.0
        %1180 = vmatpush2.msra.mxu0 0.0
        %1181 = vmatprep.subr.mxu0 0.0
        %1182 = vmatpush2.msra.mxu0 0.0
        %1183 = vmatprep.subr.mxu0 0.0
        %1184 = vmatpush2.msra.mxu0 0.0
        %1185 = vmatprep.subr.mxu0 0.0
        %1186 = vmatpush2.msra.mxu0 0.0
        %1187 = vmatprep.subr.mxu0 0.0
        %1188 = vmatpush2.msra.mxu0 0.0
        %1189 = vmatprep.subr.mxu0 0.0
        %1190 = vmatpush2.msra.mxu0 0.0
        %1191 = vmatprep.subr.mxu0 0.0
        %1192 = vmatpush2.msra.mxu0 0.0
        %1193 = vmatprep.subr.mxu0 0.0
        %1194 = vmatpush2.msra.mxu0 0.0
        %1195 = vmatprep.subr.mxu0 0.0
        %1196 = vmatpush2.msra.mxu0 0.0
        %1197 = vmatprep.subr.mxu0 0.0
        %1198 = vmatpush2.msra.mxu0 0.0
        %1199 = vmatprep.subr.mxu0 0.0
        %1200 = vmatpush2.msra.mxu0 0.0
        %1201 = vmatprep.subr.mxu0 0.0
        %1202 = vmatpush2.msra.mxu0 0.0
        %1203 = vmatprep.subr.mxu0 0.0
        %1204 = vmatpush2.msra.mxu0 0.0
        %1205 = vmatprep.mubr.f32.mxu0 0.0
        %1206 = vmatmul.mubr.f32.gmra.mxu0 %v1139
        %v1207 = vpop.f32.mrf.mxu0
        %v1208 = vadd.f32 0.0, %v1207
        %v1209 = vpop.f32.mrf.mxu0
        %1210 = vdwg.mxu0
        %v1211 = vadd.f32 %v1128, %v1208
        %s1212 = scalar_lea.vmem %s2, 80
        %v1213 = vld [vmem:[%s1212] sm:$0xff]
        %1214 = vrot.lane.b32.xlu0 %v388, 118
        %v1215 = vpop.permute.xlu0 %1214
        %1216 = vrot.lane.b32.xlu0 %v389, 118
        %v1217 = vpop.permute.xlu0 %1216
        %vm1218 = vcmask 965632
        %v1219 = vsel %vm1218, %v1215, %v1217
        %v1222 = vsel %vm303, %v1213, 0
        %1224 = vmatprep.subr.mxu0 0.0
        %1225 = vmatpush1.msra.mxu0 0.0
        %1226 = vmatprep.subr.mxu0 0.0
        %1227 = vmatpush1.msra.mxu0 0.0
        %1228 = vmatprep.subr.mxu0 0.0
        %1229 = vmatpush1.msra.mxu0 0.0
        %1230 = vmatprep.subr.mxu0 0.0
        %1231 = vmatpush1.msra.mxu0 0.0
        %1232 = vmatprep.subr.mxu0 0.0
        %1233 = vmatpush1.msra.mxu0 0.0
        %1234 = vmatprep.subr.mxu0 0.0
        %1235 = vmatpush1.msra.mxu0 0.0
        %1236 = vmatprep.subr.mxu0 0.0
        %1237 = vmatpush1.msra.mxu0 0.0
        %1238 = vmatprep.subr.mxu0 0.0
        %1239 = vmatpush1.msra.mxu0 0.0
        %1240 = vmatprep.subr.mxu0 0.0
        %1241 = vmatpush1.msra.mxu0 0.0
        %1242 = vmatprep.subr.mxu0 0.0
        %1243 = vmatpush1.msra.mxu0 0.0
        %1244 = vmatprep.subr.mxu0 0.0
        %1245 = vmatpush1.msra.mxu0 0.0
        %1246 = vmatprep.subr.mxu0 0.0
        %1247 = vmatpush1.msra.mxu0 0.0
        %1248 = vmatprep.subr.mxu0 0.0
        %1249 = vmatpush1.msra.mxu0 0.0
        %1250 = vmatprep.subr.mxu0 0.0
        %1251 = vmatpush1.msra.mxu0 0.0
        %1252 = vmatprep.subr.mxu0 0.0
        %1253 = vmatpush1.msra.mxu0 0.0
        %1254 = vmatprep.subr.mxu0 0.0
        %1255 = vmatpush1.msra.mxu0 %v1219
        %1256 = vmatprep.subr.mxu0 0.0
        %1257 = vmatpush2.msra.mxu0 0.0
        %1258 = vmatprep.subr.mxu0 0.0
        %1259 = vmatpush2.msra.mxu0 0.0
        %1260 = vmatprep.subr.mxu0 0.0
        %1261 = vmatpush2.msra.mxu0 0.0
        %1262 = vmatprep.subr.mxu0 0.0
        %1263 = vmatpush2.msra.mxu0 0.0
        %1264 = vmatprep.subr.mxu0 0.0
        %1265 = vmatpush2.msra.mxu0 0.0
        %1266 = vmatprep.subr.mxu0 0.0
        %1267 = vmatpush2.msra.mxu0 0.0
        %1268 = vmatprep.subr.mxu0 0.0
        %1269 = vmatpush2.msra.mxu0 0.0
        %1270 = vmatprep.subr.mxu0 0.0
        %1271 = vmatpush2.msra.mxu0 0.0
        %1272 = vmatprep.subr.mxu0 0.0
        %1273 = vmatpush2.msra.mxu0 0.0
        %1274 = vmatprep.subr.mxu0 0.0
        %1275 = vmatpush2.msra.mxu0 0.0
        %1276 = vmatprep.subr.mxu0 0.0
        %1277 = vmatpush2.msra.mxu0 0.0
        %1278 = vmatprep.subr.mxu0 0.0
        %1279 = vmatpush2.msra.mxu0 0.0
        %1280 = vmatprep.subr.mxu0 0.0
        %1281 = vmatpush2.msra.mxu0 0.0
        %1282 = vmatprep.subr.mxu0 0.0
        %1283 = vmatpush2.msra.mxu0 0.0
        %1284 = vmatprep.subr.mxu0 0.0
        %1285 = vmatpush2.msra.mxu0 0.0
        %1286 = vmatprep.subr.mxu0 0.0
        %1287 = vmatpush2.msra.mxu0 0.0
        %1288 = vmatprep.mubr.f32.mxu0 0.0
        %1289 = vmatmul.mubr.f32.gmra.mxu0 %v1222
        %v1290 = vpop.f32.mrf.mxu0
        %v1291 = vadd.f32 0.0, %v1290
        %v1292 = vpop.f32.mrf.mxu0
        %1293 = vdwg.mxu0
        %v1294 = vadd.f32 %v1211, %v1291
        %s1295 = scalar_lea.vmem %s2, 88
        %v1296 = vld [vmem:[%s1295] sm:$0xff]
        %1297 = vrot.lane.b32.xlu0 %v388, 117
        %v1298 = vpop.permute.xlu0 %1297
        %1299 = vrot.lane.b32.xlu0 %v389, 117
        %v1300 = vpop.permute.xlu0 %1299
        %vm1301 = vcmask 957440
        %v1302 = vsel %vm1301, %v1298, %v1300
        %v1305 = vsel %vm303, %v1296, 0
        %1307 = vmatprep.subr.mxu0 0.0
        %1308 = vmatpush1.msra.mxu0 0.0
        %1309 = vmatprep.subr.mxu0 0.0
        %1310 = vmatpush1.msra.mxu0 0.0
        %1311 = vmatprep.subr.mxu0 0.0
        %1312 = vmatpush1.msra.mxu0 0.0
        %1313 = vmatprep.subr.mxu0 0.0
        %1314 = vmatpush1.msra.mxu0 0.0
        %1315 = vmatprep.subr.mxu0 0.0
        %1316 = vmatpush1.msra.mxu0 0.0
        %1317 = vmatprep.subr.mxu0 0.0
        %1318 = vmatpush1.msra.mxu0 0.0
        %1319 = vmatprep.subr.mxu0 0.0
        %1320 = vmatpush1.msra.mxu0 0.0
        %1321 = vmatprep.subr.mxu0 0.0
        %1322 = vmatpush1.msra.mxu0 0.0
        %1323 = vmatprep.subr.mxu0 0.0
        %1324 = vmatpush1.msra.mxu0 0.0
        %1325 = vmatprep.subr.mxu0 0.0
        %1326 = vmatpush1.msra.mxu0 0.0
        %1327 = vmatprep.subr.mxu0 0.0
        %1328 = vmatpush1.msra.mxu0 0.0
        %1329 = vmatprep.subr.mxu0 0.0
        %1330 = vmatpush1.msra.mxu0 0.0
        %1331 = vmatprep.subr.mxu0 0.0
        %1332 = vmatpush1.msra.mxu0 0.0
        %1333 = vmatprep.subr.mxu0 0.0
        %1334 = vmatpush1.msra.mxu0 0.0
        %1335 = vmatprep.subr.mxu0 0.0
        %1336 = vmatpush1.msra.mxu0 0.0
        %1337 = vmatprep.subr.mxu0 0.0
        %1338 = vmatpush1.msra.mxu0 %v1302
        %1339 = vmatprep.subr.mxu0 0.0
        %1340 = vmatpush2.msra.mxu0 0.0
        %1341 = vmatprep.subr.mxu0 0.0
        %1342 = vmatpush2.msra.mxu0 0.0
        %1343 = vmatprep.subr.mxu0 0.0
        %1344 = vmatpush2.msra.mxu0 0.0
        %1345 = vmatprep.subr.mxu0 0.0
        %1346 = vmatpush2.msra.mxu0 0.0
        %1347 = vmatprep.subr.mxu0 0.0
        %1348 = vmatpush2.msra.mxu0 0.0
        %1349 = vmatprep.subr.mxu0 0.0
        %1350 = vmatpush2.msra.mxu0 0.0
        %1351 = vmatprep.subr.mxu0 0.0
        %1352 = vmatpush2.msra.mxu0 0.0
        %1353 = vmatprep.subr.mxu0 0.0
        %1354 = vmatpush2.msra.mxu0 0.0
        %1355 = vmatprep.subr.mxu0 0.0
        %1356 = vmatpush2.msra.mxu0 0.0
        %1357 = vmatprep.subr.mxu0 0.0
        %1358 = vmatpush2.msra.mxu0 0.0
        %1359 = vmatprep.subr.mxu0 0.0
        %1360 = vmatpush2.msra.mxu0 0.0
        %1361 = vmatprep.subr.mxu0 0.0
        %1362 = vmatpush2.msra.mxu0 0.0
        %1363 = vmatprep.subr.mxu0 0.0
        %1364 = vmatpush2.msra.mxu0 0.0
        %1365 = vmatprep.subr.mxu0 0.0
        %1366 = vmatpush2.msra.mxu0 0.0
        %1367 = vmatprep.subr.mxu0 0.0
        %1368 = vmatpush2.msra.mxu0 0.0
        %1369 = vmatprep.subr.mxu0 0.0
        %1370 = vmatpush2.msra.mxu0 0.0
        %1371 = vmatprep.mubr.f32.mxu0 0.0
        %1372 = vmatmul.mubr.f32.gmra.mxu0 %v1305
        %v1373 = vpop.f32.mrf.mxu0
        %v1374 = vadd.f32 0.0, %v1373
        %v1375 = vpop.f32.mrf.mxu0
        %1376 = vdwg.mxu0
        %v1377 = vadd.f32 %v1294, %v1374
        %s1378 = scalar_lea.vmem %s2, 96
        %v1379 = vld [vmem:[%s1378] sm:$0xff]
        %1380 = vrot.lane.b32.xlu0 %v388, 116
        %v1381 = vpop.permute.xlu0 %1380
        %1382 = vrot.lane.b32.xlu0 %v389, 116
        %v1383 = vpop.permute.xlu0 %1382
        %vm1384 = vcmask 949248
        %v1385 = vsel %vm1384, %v1381, %v1383
        %v1388 = vsel %vm303, %v1379, 0
        %1390 = vmatprep.subr.mxu0 0.0
        %1391 = vmatpush1.msra.mxu0 0.0
        %1392 = vmatprep.subr.mxu0 0.0
        %1393 = vmatpush1.msra.mxu0 0.0
        %1394 = vmatprep.subr.mxu0 0.0
        %1395 = vmatpush1.msra.mxu0 0.0
        %1396 = vmatprep.subr.mxu0 0.0
        %1397 = vmatpush1.msra.mxu0 0.0
        %1398 = vmatprep.subr.mxu0 0.0
        %1399 = vmatpush1.msra.mxu0 0.0
        %1400 = vmatprep.subr.mxu0 0.0
        %1401 = vmatpush1.msra.mxu0 0.0
        %1402 = vmatprep.subr.mxu0 0.0
        %1403 = vmatpush1.msra.mxu0 0.0
        %1404 = vmatprep.subr.mxu0 0.0
        %1405 = vmatpush1.msra.mxu0 0.0
        %1406 = vmatprep.subr.mxu0 0.0
        %1407 = vmatpush1.msra.mxu0 0.0
        %1408 = vmatprep.subr.mxu0 0.0
        %1409 = vmatpush1.msra.mxu0 0.0
        %1410 = vmatprep.subr.mxu0 0.0
        %1411 = vmatpush1.msra.mxu0 0.0
        %1412 = vmatprep.subr.mxu0 0.0
        %1413 = vmatpush1.msra.mxu0 0.0
        %1414 = vmatprep.subr.mxu0 0.0
        %1415 = vmatpush1.msra.mxu0 0.0
        %1416 = vmatprep.subr.mxu0 0.0
        %1417 = vmatpush1.msra.mxu0 0.0
        %1418 = vmatprep.subr.mxu0 0.0
        %1419 = vmatpush1.msra.mxu0 0.0
        %1420 = vmatprep.subr.mxu0 0.0
        %1421 = vmatpush1.msra.mxu0 %v1385
        %1422 = vmatprep.subr.mxu0 0.0
        %1423 = vmatpush2.msra.mxu0 0.0
        %1424 = vmatprep.subr.mxu0 0.0
        %1425 = vmatpush2.msra.mxu0 0.0
        %1426 = vmatprep.subr.mxu0 0.0
        %1427 = vmatpush2.msra.mxu0 0.0
        %1428 = vmatprep.subr.mxu0 0.0
        %1429 = vmatpush2.msra.mxu0 0.0
        %1430 = vmatprep.subr.mxu0 0.0
        %1431 = vmatpush2.msra.mxu0 0.0
        %1432 = vmatprep.subr.mxu0 0.0
        %1433 = vmatpush2.msra.mxu0 0.0
        %1434 = vmatprep.subr.mxu0 0.0
        %1435 = vmatpush2.msra.mxu0 0.0
        %1436 = vmatprep.subr.mxu0 0.0
        %1437 = vmatpush2.msra.mxu0 0.0
        %1438 = vmatprep.subr.mxu0 0.0
        %1439 = vmatpush2.msra.mxu0 0.0
        %1440 = vmatprep.subr.mxu0 0.0
        %1441 = vmatpush2.msra.mxu0 0.0
        %1442 = vmatprep.subr.mxu0 0.0
        %1443 = vmatpush2.msra.mxu0 0.0
        %1444 = vmatprep.subr.mxu0 0.0
        %1445 = vmatpush2.msra.mxu0 0.0
        %1446 = vmatprep.subr.mxu0 0.0
        %1447 = vmatpush2.msra.mxu0 0.0
        %1448 = vmatprep.subr.mxu0 0.0
        %1449 = vmatpush2.msra.mxu0 0.0
        %1450 = vmatprep.subr.mxu0 0.0
        %1451 = vmatpush2.msra.mxu0 0.0
        %1452 = vmatprep.subr.mxu0 0.0
        %1453 = vmatpush2.msra.mxu0 0.0
        %1454 = vmatprep.mubr.f32.mxu0 0.0
        %1455 = vmatmul.mubr.f32.gmra.mxu0 %v1388
        %v1456 = vpop.f32.mrf.mxu0
        %v1457 = vadd.f32 0.0, %v1456
        %v1458 = vpop.f32.mrf.mxu0
        %1459 = vdwg.mxu0
        %v1460 = vadd.f32 %v1377, %v1457
        %s1461 = scalar_lea.vmem %s2, 104
        %v1462 = vld [vmem:[%s1461] sm:$0xff]
        %1463 = vrot.lane.b32.xlu0 %v388, 115
        %v1464 = vpop.permute.xlu0 %1463
        %1465 = vrot.lane.b32.xlu0 %v389, 115
        %v1466 = vpop.permute.xlu0 %1465
        %vm1467 = vcmask 941056
        %v1468 = vsel %vm1467, %v1464, %v1466
        %v1471 = vsel %vm303, %v1462, 0
        %1473 = vmatprep.subr.mxu0 0.0
        %1474 = vmatpush1.msra.mxu0 0.0
        %1475 = vmatprep.subr.mxu0 0.0
        %1476 = vmatpush1.msra.mxu0 0.0
        %1477 = vmatprep.subr.mxu0 0.0
        %1478 = vmatpush1.msra.mxu0 0.0
        %1479 = vmatprep.subr.mxu0 0.0
        %1480 = vmatpush1.msra.mxu0 0.0
        %1481 = vmatprep.subr.mxu0 0.0
        %1482 = vmatpush1.msra.mxu0 0.0
        %1483 = vmatprep.subr.mxu0 0.0
        %1484 = vmatpush1.msra.mxu0 0.0
        %1485 = vmatprep.subr.mxu0 0.0
        %1486 = vmatpush1.msra.mxu0 0.0
        %1487 = vmatprep.subr.mxu0 0.0
        %1488 = vmatpush1.msra.mxu0 0.0
        %1489 = vmatprep.subr.mxu0 0.0
        %1490 = vmatpush1.msra.mxu0 0.0
        %1491 = vmatprep.subr.mxu0 0.0
        %1492 = vmatpush1.msra.mxu0 0.0
        %1493 = vmatprep.subr.mxu0 0.0
        %1494 = vmatpush1.msra.mxu0 0.0
        %1495 = vmatprep.subr.mxu0 0.0
        %1496 = vmatpush1.msra.mxu0 0.0
        %1497 = vmatprep.subr.mxu0 0.0
        %1498 = vmatpush1.msra.mxu0 0.0
        %1499 = vmatprep.subr.mxu0 0.0
        %1500 = vmatpush1.msra.mxu0 0.0
        %1501 = vmatprep.subr.mxu0 0.0
        %1502 = vmatpush1.msra.mxu0 0.0
        %1503 = vmatprep.subr.mxu0 0.0
        %1504 = vmatpush1.msra.mxu0 %v1468
        %1505 = vmatprep.subr.mxu0 0.0
        %1506 = vmatpush2.msra.mxu0 0.0
        %1507 = vmatprep.subr.mxu0 0.0
        %1508 = vmatpush2.msra.mxu0 0.0
        %1509 = vmatprep.subr.mxu0 0.0
        %1510 = vmatpush2.msra.mxu0 0.0
        %1511 = vmatprep.subr.mxu0 0.0
        %1512 = vmatpush2.msra.mxu0 0.0
        %1513 = vmatprep.subr.mxu0 0.0
        %1514 = vmatpush2.msra.mxu0 0.0
        %1515 = vmatprep.subr.mxu0 0.0
        %1516 = vmatpush2.msra.mxu0 0.0
        %1517 = vmatprep.subr.mxu0 0.0
        %1518 = vmatpush2.msra.mxu0 0.0
        %1519 = vmatprep.subr.mxu0 0.0
        %1520 = vmatpush2.msra.mxu0 0.0
        %1521 = vmatprep.subr.mxu0 0.0
        %1522 = vmatpush2.msra.mxu0 0.0
        %1523 = vmatprep.subr.mxu0 0.0
        %1524 = vmatpush2.msra.mxu0 0.0
        %1525 = vmatprep.subr.mxu0 0.0
        %1526 = vmatpush2.msra.mxu0 0.0
        %1527 = vmatprep.subr.mxu0 0.0
        %1528 = vmatpush2.msra.mxu0 0.0
        %1529 = vmatprep.subr.mxu0 0.0
        %1530 = vmatpush2.msra.mxu0 0.0
        %1531 = vmatprep.subr.mxu0 0.0
        %1532 = vmatpush2.msra.mxu0 0.0
        %1533 = vmatprep.subr.mxu0 0.0
        %1534 = vmatpush2.msra.mxu0 0.0
        %1535 = vmatprep.subr.mxu0 0.0
        %1536 = vmatpush2.msra.mxu0 0.0
        %1537 = vmatprep.mubr.f32.mxu0 0.0
        %1538 = vmatmul.mubr.f32.gmra.mxu0 %v1471
        %v1539 = vpop.f32.mrf.mxu0
        %v1540 = vadd.f32 0.0, %v1539
        %v1541 = vpop.f32.mrf.mxu0
        %1542 = vdwg.mxu0
        %v1543 = vadd.f32 %v1460, %v1540
        %s1544 = scalar_lea.vmem %s2, 112
        %v1545 = vld [vmem:[%s1544] sm:$0xff]
        %1546 = vrot.lane.b32.xlu0 %v388, 114
        %v1547 = vpop.permute.xlu0 %1546
        %1548 = vrot.lane.b32.xlu0 %v389, 114
        %v1549 = vpop.permute.xlu0 %1548
        %vm1550 = vcmask 932864
        %v1551 = vsel %vm1550, %v1547, %v1549
        %v1554 = vsel %vm303, %v1545, 0
        %1556 = vmatprep.subr.mxu0 0.0
        %1557 = vmatpush1.msra.mxu0 0.0
        %1558 = vmatprep.subr.mxu0 0.0
        %1559 = vmatpush1.msra.mxu0 0.0
        %1560 = vmatprep.subr.mxu0 0.0
        %1561 = vmatpush1.msra.mxu0 0.0
        %1562 = vmatprep.subr.mxu0 0.0
        %1563 = vmatpush1.msra.mxu0 0.0
        %1564 = vmatprep.subr.mxu0 0.0
        %1565 = vmatpush1.msra.mxu0 0.0
        %1566 = vmatprep.subr.mxu0 0.0
        %1567 = vmatpush1.msra.mxu0 0.0
        %1568 = vmatprep.subr.mxu0 0.0
        %1569 = vmatpush1.msra.mxu0 0.0
        %1570 = vmatprep.subr.mxu0 0.0
        %1571 = vmatpush1.msra.mxu0 0.0
        %1572 = vmatprep.subr.mxu0 0.0
        %1573 = vmatpush1.msra.mxu0 0.0
        %1574 = vmatprep.subr.mxu0 0.0
        %1575 = vmatpush1.msra.mxu0 0.0
        %1576 = vmatprep.subr.mxu0 0.0
        %1577 = vmatpush1.msra.mxu0 0.0
        %1578 = vmatprep.subr.mxu0 0.0
        %1579 = vmatpush1.msra.mxu0 0.0
        %1580 = vmatprep.subr.mxu0 0.0
        %1581 = vmatpush1.msra.mxu0 0.0
        %1582 = vmatprep.subr.mxu0 0.0
        %1583 = vmatpush1.msra.mxu0 0.0
        %1584 = vmatprep.subr.mxu0 0.0
        %1585 = vmatpush1.msra.mxu0 0.0
        %1586 = vmatprep.subr.mxu0 0.0
        %1587 = vmatpush1.msra.mxu0 %v1551
        %1588 = vmatprep.subr.mxu0 0.0
        %1589 = vmatpush2.msra.mxu0 0.0
        %1590 = vmatprep.subr.mxu0 0.0
        %1591 = vmatpush2.msra.mxu0 0.0
        %1592 = vmatprep.subr.mxu0 0.0
        %1593 = vmatpush2.msra.mxu0 0.0
        %1594 = vmatprep.subr.mxu0 0.0
        %1595 = vmatpush2.msra.mxu0 0.0
        %1596 = vmatprep.subr.mxu0 0.0
        %1597 = vmatpush2.msra.mxu0 0.0
        %1598 = vmatprep.subr.mxu0 0.0
        %1599 = vmatpush2.msra.mxu0 0.0
        %1600 = vmatprep.subr.mxu0 0.0
        %1601 = vmatpush2.msra.mxu0 0.0
        %1602 = vmatprep.subr.mxu0 0.0
        %1603 = vmatpush2.msra.mxu0 0.0
        %1604 = vmatprep.subr.mxu0 0.0
        %1605 = vmatpush2.msra.mxu0 0.0
        %1606 = vmatprep.subr.mxu0 0.0
        %1607 = vmatpush2.msra.mxu0 0.0
        %1608 = vmatprep.subr.mxu0 0.0
        %1609 = vmatpush2.msra.mxu0 0.0
        %1610 = vmatprep.subr.mxu0 0.0
        %1611 = vmatpush2.msra.mxu0 0.0
        %1612 = vmatprep.subr.mxu0 0.0
        %1613 = vmatpush2.msra.mxu0 0.0
        %1614 = vmatprep.subr.mxu0 0.0
        %1615 = vmatpush2.msra.mxu0 0.0
        %1616 = vmatprep.subr.mxu0 0.0
        %1617 = vmatpush2.msra.mxu0 0.0
        %1618 = vmatprep.subr.mxu0 0.0
        %1619 = vmatpush2.msra.mxu0 0.0
        %1620 = vmatprep.mubr.f32.mxu0 0.0
        %1621 = vmatmul.mubr.f32.gmra.mxu0 %v1554
        %v1622 = vpop.f32.mrf.mxu0
        %v1623 = vadd.f32 0.0, %v1622
        %v1624 = vpop.f32.mrf.mxu0
        %1625 = vdwg.mxu0
        %v1626 = vadd.f32 %v1543, %v1623
        %s1627 = scalar_lea.vmem %s2, 120
        %v1628 = vld [vmem:[%s1627] sm:$0xff]
        %1629 = vrot.lane.b32.xlu0 %v388, 113
        %v1630 = vpop.permute.xlu0 %1629
        %1631 = vrot.lane.b32.xlu0 %v389, 113
        %v1632 = vpop.permute.xlu0 %1631
        %vm1633 = vcmask 924672
        %v1634 = vsel %vm1633, %v1630, %v1632
        %v1637 = vsel %vm303, %v1628, 0
        %1639 = vmatprep.subr.mxu0 0.0
        %1640 = vmatpush1.msra.mxu0 0.0
        %1641 = vmatprep.subr.mxu0 0.0
        %1642 = vmatpush1.msra.mxu0 0.0
        %1643 = vmatprep.subr.mxu0 0.0
        %1644 = vmatpush1.msra.mxu0 0.0
        %1645 = vmatprep.subr.mxu0 0.0
        %1646 = vmatpush1.msra.mxu0 0.0
        %1647 = vmatprep.subr.mxu0 0.0
        %1648 = vmatpush1.msra.mxu0 0.0
        %1649 = vmatprep.subr.mxu0 0.0
        %1650 = vmatpush1.msra.mxu0 0.0
        %1651 = vmatprep.subr.mxu0 0.0
        %1652 = vmatpush1.msra.mxu0 0.0
        %1653 = vmatprep.subr.mxu0 0.0
        %1654 = vmatpush1.msra.mxu0 0.0
        %1655 = vmatprep.subr.mxu0 0.0
        %1656 = vmatpush1.msra.mxu0 0.0
        %1657 = vmatprep.subr.mxu0 0.0
        %1658 = vmatpush1.msra.mxu0 0.0
        %1659 = vmatprep.subr.mxu0 0.0
        %1660 = vmatpush1.msra.mxu0 0.0
        %1661 = vmatprep.subr.mxu0 0.0
        %1662 = vmatpush1.msra.mxu0 0.0
        %1663 = vmatprep.subr.mxu0 0.0
        %1664 = vmatpush1.msra.mxu0 0.0
        %1665 = vmatprep.subr.mxu0 0.0
        %1666 = vmatpush1.msra.mxu0 0.0
        %1667 = vmatprep.subr.mxu0 0.0
        %1668 = vmatpush1.msra.mxu0 0.0
        %1669 = vmatprep.subr.mxu0 0.0
        %1670 = vmatpush1.msra.mxu0 %v1634
        %1671 = vmatprep.subr.mxu0 0.0
        %1672 = vmatpush2.msra.mxu0 0.0
        %1673 = vmatprep.subr.mxu0 0.0
        %1674 = vmatpush2.msra.mxu0 0.0
        %1675 = vmatprep.subr.mxu0 0.0
        %1676 = vmatpush2.msra.mxu0 0.0
        %1677 = vmatprep.subr.mxu0 0.0
        %1678 = vmatpush2.msra.mxu0 0.0
        %1679 = vmatprep.subr.mxu0 0.0
        %1680 = vmatpush2.msra.mxu0 0.0
        %1681 = vmatprep.subr.mxu0 0.0
        %1682 = vmatpush2.msra.mxu0 0.0
        %1683 = vmatprep.subr.mxu0 0.0
        %1684 = vmatpush2.msra.mxu0 0.0
        %1685 = vmatprep.subr.mxu0 0.0
        %1686 = vmatpush2.msra.mxu0 0.0
        %1687 = vmatprep.subr.mxu0 0.0
        %1688 = vmatpush2.msra.mxu0 0.0
        %1689 = vmatprep.subr.mxu0 0.0
        %1690 = vmatpush2.msra.mxu0 0.0
        %1691 = vmatprep.subr.mxu0 0.0
        %1692 = vmatpush2.msra.mxu0 0.0
        %1693 = vmatprep.subr.mxu0 0.0
        %1694 = vmatpush2.msra.mxu0 0.0
        %1695 = vmatprep.subr.mxu0 0.0
        %1696 = vmatpush2.msra.mxu0 0.0
        %1697 = vmatprep.subr.mxu0 0.0
        %1698 = vmatpush2.msra.mxu0 0.0
        %1699 = vmatprep.subr.mxu0 0.0
        %1700 = vmatpush2.msra.mxu0 0.0
        %1701 = vmatprep.subr.mxu0 0.0
        %1702 = vmatpush2.msra.mxu0 0.0
        %1703 = vmatprep.mubr.f32.mxu0 0.0
        %1704 = vmatmul.mubr.f32.gmra.mxu0 %v1637
        %v1705 = vpop.f32.mrf.mxu0
        %v1706 = vadd.f32 0.0, %v1705
        %v1707 = vpop.f32.mrf.mxu0
        %1708 = vdwg.mxu0
        %v1709 = vadd.f32 %v1626, %v1706
        %s1710 = scalar_lea.vmem %s2, 128
        %v1711 = vld [vmem:[%s1710] sm:$0xff]
        %1712 = vrot.lane.b32.xlu0 %v388, 112
        %v1713 = vpop.permute.xlu0 %1712
        %1714 = vrot.lane.b32.xlu0 %v389, 112
        %v1715 = vpop.permute.xlu0 %1714
        %vm1716 = vcmask 916480
        %v1717 = vsel %vm1716, %v1713, %v1715
        %v1720 = vsel %vm303, %v1711, 0
        %1722 = vmatprep.subr.mxu0 0.0
        %1723 = vmatpush1.msra.mxu0 0.0
        %1724 = vmatprep.subr.mxu0 0.0
        %1725 = vmatpush1.msra.mxu0 0.0
        %1726 = vmatprep.subr.mxu0 0.0
        %1727 = vmatpush1.msra.mxu0 0.0
        %1728 = vmatprep.subr.mxu0 0.0
        %1729 = vmatpush1.msra.mxu0 0.0
        %1730 = vmatprep.subr.mxu0 0.0
        %1731 = vmatpush1.msra.mxu0 0.0
        %1732 = vmatprep.subr.mxu0 0.0
        %1733 = vmatpush1.msra.mxu0 0.0
        %1734 = vmatprep.subr.mxu0 0.0
        %1735 = vmatpush1.msra.mxu0 0.0
        %1736 = vmatprep.subr.mxu0 0.0
        %1737 = vmatpush1.msra.mxu0 0.0
        %1738 = vmatprep.subr.mxu0 0.0
        %1739 = vmatpush1.msra.mxu0 0.0
        %1740 = vmatprep.subr.mxu0 0.0
        %1741 = vmatpush1.msra.mxu0 0.0
        %1742 = vmatprep.subr.mxu0 0.0
        %1743 = vmatpush1.msra.mxu0 0.0
        %1744 = vmatprep.subr.mxu0 0.0
        %1745 = vmatpush1.msra.mxu0 0.0
        %1746 = vmatprep.subr.mxu0 0.0
        %1747 = vmatpush1.msra.mxu0 0.0
        %1748 = vmatprep.subr.mxu0 0.0
        %1749 = vmatpush1.msra.mxu0 0.0
        %1750 = vmatprep.subr.mxu0 0.0
        %1751 = vmatpush1.msra.mxu0 0.0
        %1752 = vmatprep.subr.mxu0 0.0
        %1753 = vmatpush1.msra.mxu0 %v1717
        %1754 = vmatprep.subr.mxu0 0.0
        %1755 = vmatpush2.msra.mxu0 0.0
        %1756 = vmatprep.subr.mxu0 0.0
        %1757 = vmatpush2.msra.mxu0 0.0
        %1758 = vmatprep.subr.mxu0 0.0
        %1759 = vmatpush2.msra.mxu0 0.0
        %1760 = vmatprep.subr.mxu0 0.0
        %1761 = vmatpush2.msra.mxu0 0.0
        %1762 = vmatprep.subr.mxu0 0.0
        %1763 = vmatpush2.msra.mxu0 0.0
        %1764 = vmatprep.subr.mxu0 0.0
        %1765 = vmatpush2.msra.mxu0 0.0
        %1766 = vmatprep.subr.mxu0 0.0
        %1767 = vmatpush2.msra.mxu0 0.0
        %1768 = vmatprep.subr.mxu0 0.0
        %1769 = vmatpush2.msra.mxu0 0.0
        %1770 = vmatprep.subr.mxu0 0.0
        %1771 = vmatpush2.msra.mxu0 0.0
        %1772 = vmatprep.subr.mxu0 0.0
        %1773 = vmatpush2.msra.mxu0 0.0
        %1774 = vmatprep.subr.mxu0 0.0
        %1775 = vmatpush2.msra.mxu0 0.0
        %1776 = vmatprep.subr.mxu0 0.0
        %1777 = vmatpush2.msra.mxu0 0.0
        %1778 = vmatprep.subr.mxu0 0.0
        %1779 = vmatpush2.msra.mxu0 0.0
        %1780 = vmatprep.subr.mxu0 0.0
        %1781 = vmatpush2.msra.mxu0 0.0
        %1782 = vmatprep.subr.mxu0 0.0
        %1783 = vmatpush2.msra.mxu0 0.0
        %1784 = vmatprep.subr.mxu0 0.0
        %1785 = vmatpush2.msra.mxu0 0.0
        %1786 = vmatprep.mubr.f32.mxu0 0.0
        %1787 = vmatmul.mubr.f32.gmra.mxu0 %v1720
        %v1788 = vpop.f32.mrf.mxu0
        %v1789 = vadd.f32 0.0, %v1788
        %v1790 = vpop.f32.mrf.mxu0
        %1791 = vdwg.mxu0
        %v1792 = vadd.f32 %v1709, %v1789
        %s1793 = scalar_lea.vmem %s2, 136
        %v1794 = vld [vmem:[%s1793] sm:$0xff]
        %1795 = vrot.lane.b32.xlu0 %v388, 111
        %v1796 = vpop.permute.xlu0 %1795
        %1797 = vrot.lane.b32.xlu0 %v389, 111
        %v1798 = vpop.permute.xlu0 %1797
        %vm1799 = vcmask 908288
        %v1800 = vsel %vm1799, %v1796, %v1798
        %v1803 = vsel %vm303, %v1794, 0
        %1805 = vmatprep.subr.mxu0 0.0
        %1806 = vmatpush1.msra.mxu0 0.0
        %1807 = vmatprep.subr.mxu0 0.0
        %1808 = vmatpush1.msra.mxu0 0.0
        %1809 = vmatprep.subr.mxu0 0.0
        %1810 = vmatpush1.msra.mxu0 0.0
        %1811 = vmatprep.subr.mxu0 0.0
        %1812 = vmatpush1.msra.mxu0 0.0
        %1813 = vmatprep.subr.mxu0 0.0
        %1814 = vmatpush1.msra.mxu0 0.0
        %1815 = vmatprep.subr.mxu0 0.0
        %1816 = vmatpush1.msra.mxu0 0.0
        %1817 = vmatprep.subr.mxu0 0.0
        %1818 = vmatpush1.msra.mxu0 0.0
        %1819 = vmatprep.subr.mxu0 0.0
        %1820 = vmatpush1.msra.mxu0 0.0
        %1821 = vmatprep.subr.mxu0 0.0
        %1822 = vmatpush1.msra.mxu0 0.0
        %1823 = vmatprep.subr.mxu0 0.0
        %1824 = vmatpush1.msra.mxu0 0.0
        %1825 = vmatprep.subr.mxu0 0.0
        %1826 = vmatpush1.msra.mxu0 0.0
        %1827 = vmatprep.subr.mxu0 0.0
        %1828 = vmatpush1.msra.mxu0 0.0
        %1829 = vmatprep.subr.mxu0 0.0
        %1830 = vmatpush1.msra.mxu0 0.0
        %1831 = vmatprep.subr.mxu0 0.0
        %1832 = vmatpush1.msra.mxu0 0.0
        %1833 = vmatprep.subr.mxu0 0.0
        %1834 = vmatpush1.msra.mxu0 0.0
        %1835 = vmatprep.subr.mxu0 0.0
        %1836 = vmatpush1.msra.mxu0 %v1800
        %1837 = vmatprep.subr.mxu0 0.0
        %1838 = vmatpush2.msra.mxu0 0.0
        %1839 = vmatprep.subr.mxu0 0.0
        %1840 = vmatpush2.msra.mxu0 0.0
        %1841 = vmatprep.subr.mxu0 0.0
        %1842 = vmatpush2.msra.mxu0 0.0
        %1843 = vmatprep.subr.mxu0 0.0
        %1844 = vmatpush2.msra.mxu0 0.0
        %1845 = vmatprep.subr.mxu0 0.0
        %1846 = vmatpush2.msra.mxu0 0.0
        %1847 = vmatprep.subr.mxu0 0.0
        %1848 = vmatpush2.msra.mxu0 0.0
        %1849 = vmatprep.subr.mxu0 0.0
        %1850 = vmatpush2.msra.mxu0 0.0
        %1851 = vmatprep.subr.mxu0 0.0
        %1852 = vmatpush2.msra.mxu0 0.0
        %1853 = vmatprep.subr.mxu0 0.0
        %1854 = vmatpush2.msra.mxu0 0.0
        %1855 = vmatprep.subr.mxu0 0.0
        %1856 = vmatpush2.msra.mxu0 0.0
        %1857 = vmatprep.subr.mxu0 0.0
        %1858 = vmatpush2.msra.mxu0 0.0
        %1859 = vmatprep.subr.mxu0 0.0
        %1860 = vmatpush2.msra.mxu0 0.0
        %1861 = vmatprep.subr.mxu0 0.0
        %1862 = vmatpush2.msra.mxu0 0.0
        %1863 = vmatprep.subr.mxu0 0.0
        %1864 = vmatpush2.msra.mxu0 0.0
        %1865 = vmatprep.subr.mxu0 0.0
        %1866 = vmatpush2.msra.mxu0 0.0
        %1867 = vmatprep.subr.mxu0 0.0
        %1868 = vmatpush2.msra.mxu0 0.0
        %1869 = vmatprep.mubr.f32.mxu0 0.0
        %1870 = vmatmul.mubr.f32.gmra.mxu0 %v1803
        %v1871 = vpop.f32.mrf.mxu0
        %v1872 = vadd.f32 0.0, %v1871
        %v1873 = vpop.f32.mrf.mxu0
        %1874 = vdwg.mxu0
        %v1875 = vadd.f32 %v1792, %v1872
        %s1876 = scalar_lea.vmem %s2, 144
        %v1877 = vld [vmem:[%s1876] sm:$0xff]
        %1878 = vrot.lane.b32.xlu0 %v388, 110
        %v1879 = vpop.permute.xlu0 %1878
        %1880 = vrot.lane.b32.xlu0 %v389, 110
        %v1881 = vpop.permute.xlu0 %1880
        %vm1882 = vcmask 900096
        %v1883 = vsel %vm1882, %v1879, %v1881
        %v1886 = vsel %vm303, %v1877, 0
        %1888 = vmatprep.subr.mxu0 0.0
        %1889 = vmatpush1.msra.mxu0 0.0
        %1890 = vmatprep.subr.mxu0 0.0
        %1891 = vmatpush1.msra.mxu0 0.0
        %1892 = vmatprep.subr.mxu0 0.0
        %1893 = vmatpush1.msra.mxu0 0.0
        %1894 = vmatprep.subr.mxu0 0.0
        %1895 = vmatpush1.msra.mxu0 0.0
        %1896 = vmatprep.subr.mxu0 0.0
        %1897 = vmatpush1.msra.mxu0 0.0
        %1898 = vmatprep.subr.mxu0 0.0
        %1899 = vmatpush1.msra.mxu0 0.0
        %1900 = vmatprep.subr.mxu0 0.0
        %1901 = vmatpush1.msra.mxu0 0.0
        %1902 = vmatprep.subr.mxu0 0.0
        %1903 = vmatpush1.msra.mxu0 0.0
        %1904 = vmatprep.subr.mxu0 0.0
        %1905 = vmatpush1.msra.mxu0 0.0
        %1906 = vmatprep.subr.mxu0 0.0
        %1907 = vmatpush1.msra.mxu0 0.0
        %1908 = vmatprep.subr.mxu0 0.0
        %1909 = vmatpush1.msra.mxu0 0.0
        %1910 = vmatprep.subr.mxu0 0.0
        %1911 = vmatpush1.msra.mxu0 0.0
        %1912 = vmatprep.subr.mxu0 0.0
        %1913 = vmatpush1.msra.mxu0 0.0
        %1914 = vmatprep.subr.mxu0 0.0
        %1915 = vmatpush1.msra.mxu0 0.0
        %1916 = vmatprep.subr.mxu0 0.0
        %1917 = vmatpush1.msra.mxu0 0.0
        %1918 = vmatprep.subr.mxu0 0.0
        %1919 = vmatpush1.msra.mxu0 %v1883
        %1920 = vmatprep.subr.mxu0 0.0
        %1921 = vmatpush2.msra.mxu0 0.0
        %1922 = vmatprep.subr.mxu0 0.0
        %1923 = vmatpush2.msra.mxu0 0.0
        %1924 = vmatprep.subr.mxu0 0.0
        %1925 = vmatpush2.msra.mxu0 0.0
        %1926 = vmatprep.subr.mxu0 0.0
        %1927 = vmatpush2.msra.mxu0 0.0
        %1928 = vmatprep.subr.mxu0 0.0
        %1929 = vmatpush2.msra.mxu0 0.0
        %1930 = vmatprep.subr.mxu0 0.0
        %1931 = vmatpush2.msra.mxu0 0.0
        %1932 = vmatprep.subr.mxu0 0.0
        %1933 = vmatpush2.msra.mxu0 0.0
        %1934 = vmatprep.subr.mxu0 0.0
        %1935 = vmatpush2.msra.mxu0 0.0
        %1936 = vmatprep.subr.mxu0 0.0
        %1937 = vmatpush2.msra.mxu0 0.0
        %1938 = vmatprep.subr.mxu0 0.0
        %1939 = vmatpush2.msra.mxu0 0.0
        %1940 = vmatprep.subr.mxu0 0.0
        %1941 = vmatpush2.msra.mxu0 0.0
        %1942 = vmatprep.subr.mxu0 0.0
        %1943 = vmatpush2.msra.mxu0 0.0
        %1944 = vmatprep.subr.mxu0 0.0
        %1945 = vmatpush2.msra.mxu0 0.0
        %1946 = vmatprep.subr.mxu0 0.0
        %1947 = vmatpush2.msra.mxu0 0.0
        %1948 = vmatprep.subr.mxu0 0.0
        %1949 = vmatpush2.msra.mxu0 0.0
        %1950 = vmatprep.subr.mxu0 0.0
        %1951 = vmatpush2.msra.mxu0 0.0
        %1952 = vmatprep.mubr.f32.mxu0 0.0
        %1953 = vmatmul.mubr.f32.gmra.mxu0 %v1886
        %v1954 = vpop.f32.mrf.mxu0
        %v1955 = vadd.f32 0.0, %v1954
        %v1956 = vpop.f32.mrf.mxu0
        %1957 = vdwg.mxu0
        %v1958 = vadd.f32 %v1875, %v1955
        %s1959 = scalar_lea.vmem %s2, 152
        %v1960 = vld [vmem:[%s1959] sm:$0xff]
        %1961 = vrot.lane.b32.xlu0 %v388, 109
        %v1962 = vpop.permute.xlu0 %1961
        %1963 = vrot.lane.b32.xlu0 %v389, 109
        %v1964 = vpop.permute.xlu0 %1963
        %vm1965 = vcmask 891904
        %v1966 = vsel %vm1965, %v1962, %v1964
        %v1969 = vsel %vm303, %v1960, 0
        %1971 = vmatprep.subr.mxu0 0.0
        %1972 = vmatpush1.msra.mxu0 0.0
        %1973 = vmatprep.subr.mxu0 0.0
        %1974 = vmatpush1.msra.mxu0 0.0
        %1975 = vmatprep.subr.mxu0 0.0
        %1976 = vmatpush1.msra.mxu0 0.0
        %1977 = vmatprep.subr.mxu0 0.0
        %1978 = vmatpush1.msra.mxu0 0.0
        %1979 = vmatprep.subr.mxu0 0.0
        %1980 = vmatpush1.msra.mxu0 0.0
        %1981 = vmatprep.subr.mxu0 0.0
        %1982 = vmatpush1.msra.mxu0 0.0
        %1983 = vmatprep.subr.mxu0 0.0
        %1984 = vmatpush1.msra.mxu0 0.0
        %1985 = vmatprep.subr.mxu0 0.0
        %1986 = vmatpush1.msra.mxu0 0.0
        %1987 = vmatprep.subr.mxu0 0.0
        %1988 = vmatpush1.msra.mxu0 0.0
        %1989 = vmatprep.subr.mxu0 0.0
        %1990 = vmatpush1.msra.mxu0 0.0
        %1991 = vmatprep.subr.mxu0 0.0
        %1992 = vmatpush1.msra.mxu0 0.0
        %1993 = vmatprep.subr.mxu0 0.0
        %1994 = vmatpush1.msra.mxu0 0.0
        %1995 = vmatprep.subr.mxu0 0.0
        %1996 = vmatpush1.msra.mxu0 0.0
        %1997 = vmatprep.subr.mxu0 0.0
        %1998 = vmatpush1.msra.mxu0 0.0
        %1999 = vmatprep.subr.mxu0 0.0
        %2000 = vmatpush1.msra.mxu0 0.0
        %2001 = vmatprep.subr.mxu0 0.0
        %2002 = vmatpush1.msra.mxu0 %v1966
        %2003 = vmatprep.subr.mxu0 0.0
        %2004 = vmatpush2.msra.mxu0 0.0
        %2005 = vmatprep.subr.mxu0 0.0
        %2006 = vmatpush2.msra.mxu0 0.0
        %2007 = vmatprep.subr.mxu0 0.0
        %2008 = vmatpush2.msra.mxu0 0.0
        %2009 = vmatprep.subr.mxu0 0.0
        %2010 = vmatpush2.msra.mxu0 0.0
        %2011 = vmatprep.subr.mxu0 0.0
        %2012 = vmatpush2.msra.mxu0 0.0
        %2013 = vmatprep.subr.mxu0 0.0
        %2014 = vmatpush2.msra.mxu0 0.0
        %2015 = vmatprep.subr.mxu0 0.0
        %2016 = vmatpush2.msra.mxu0 0.0
        %2017 = vmatprep.subr.mxu0 0.0
        %2018 = vmatpush2.msra.mxu0 0.0
        %2019 = vmatprep.subr.mxu0 0.0
        %2020 = vmatpush2.msra.mxu0 0.0
        %2021 = vmatprep.subr.mxu0 0.0
        %2022 = vmatpush2.msra.mxu0 0.0
        %2023 = vmatprep.subr.mxu0 0.0
        %2024 = vmatpush2.msra.mxu0 0.0
        %2025 = vmatprep.subr.mxu0 0.0
        %2026 = vmatpush2.msra.mxu0 0.0
        %2027 = vmatprep.subr.mxu0 0.0
        %2028 = vmatpush2.msra.mxu0 0.0
        %2029 = vmatprep.subr.mxu0 0.0
        %2030 = vmatpush2.msra.mxu0 0.0
        %2031 = vmatprep.subr.mxu0 0.0
        %2032 = vmatpush2.msra.mxu0 0.0
        %2033 = vmatprep.subr.mxu0 0.0
        %2034 = vmatpush2.msra.mxu0 0.0
        %2035 = vmatprep.mubr.f32.mxu0 0.0
        %2036 = vmatmul.mubr.f32.gmra.mxu0 %v1969
        %v2037 = vpop.f32.mrf.mxu0
        %v2038 = vadd.f32 0.0, %v2037
        %v2039 = vpop.f32.mrf.mxu0
        %2040 = vdwg.mxu0
        %v2041 = vadd.f32 %v1958, %v2038
        %s2042 = scalar_lea.vmem %s2, 160
        %v2043 = vld [vmem:[%s2042] sm:$0xff]
        %2044 = vrot.lane.b32.xlu0 %v388, 108
        %v2045 = vpop.permute.xlu0 %2044
        %2046 = vrot.lane.b32.xlu0 %v389, 108
        %v2047 = vpop.permute.xlu0 %2046
        %vm2048 = vcmask 883712
        %v2049 = vsel %vm2048, %v2045, %v2047
        %v2052 = vsel %vm303, %v2043, 0
        %2054 = vmatprep.subr.mxu0 0.0
        %2055 = vmatpush1.msra.mxu0 0.0
        %2056 = vmatprep.subr.mxu0 0.0
        %2057 = vmatpush1.msra.mxu0 0.0
        %2058 = vmatprep.subr.mxu0 0.0
        %2059 = vmatpush1.msra.mxu0 0.0
        %2060 = vmatprep.subr.mxu0 0.0
        %2061 = vmatpush1.msra.mxu0 0.0
        %2062 = vmatprep.subr.mxu0 0.0
        %2063 = vmatpush1.msra.mxu0 0.0
        %2064 = vmatprep.subr.mxu0 0.0
        %2065 = vmatpush1.msra.mxu0 0.0
        %2066 = vmatprep.subr.mxu0 0.0
        %2067 = vmatpush1.msra.mxu0 0.0
        %2068 = vmatprep.subr.mxu0 0.0
        %2069 = vmatpush1.msra.mxu0 0.0
        %2070 = vmatprep.subr.mxu0 0.0
        %2071 = vmatpush1.msra.mxu0 0.0
        %2072 = vmatprep.subr.mxu0 0.0
        %2073 = vmatpush1.msra.mxu0 0.0
        %2074 = vmatprep.subr.mxu0 0.0
        %2075 = vmatpush1.msra.mxu0 0.0
        %2076 = vmatprep.subr.mxu0 0.0
        %2077 = vmatpush1.msra.mxu0 0.0
        %2078 = vmatprep.subr.mxu0 0.0
        %2079 = vmatpush1.msra.mxu0 0.0
        %2080 = vmatprep.subr.mxu0 0.0
        %2081 = vmatpush1.msra.mxu0 0.0
        %2082 = vmatprep.subr.mxu0 0.0
        %2083 = vmatpush1.msra.mxu0 0.0
        %2084 = vmatprep.subr.mxu0 0.0
        %2085 = vmatpush1.msra.mxu0 %v2049
        %2086 = vmatprep.subr.mxu0 0.0
        %2087 = vmatpush2.msra.mxu0 0.0
        %2088 = vmatprep.subr.mxu0 0.0
        %2089 = vmatpush2.msra.mxu0 0.0
        %2090 = vmatprep.subr.mxu0 0.0
        %2091 = vmatpush2.msra.mxu0 0.0
        %2092 = vmatprep.subr.mxu0 0.0
        %2093 = vmatpush2.msra.mxu0 0.0
        %2094 = vmatprep.subr.mxu0 0.0
        %2095 = vmatpush2.msra.mxu0 0.0
        %2096 = vmatprep.subr.mxu0 0.0
        %2097 = vmatpush2.msra.mxu0 0.0
        %2098 = vmatprep.subr.mxu0 0.0
        %2099 = vmatpush2.msra.mxu0 0.0
        %2100 = vmatprep.subr.mxu0 0.0
        %2101 = vmatpush2.msra.mxu0 0.0
        %2102 = vmatprep.subr.mxu0 0.0
        %2103 = vmatpush2.msra.mxu0 0.0
        %2104 = vmatprep.subr.mxu0 0.0
        %2105 = vmatpush2.msra.mxu0 0.0
        %2106 = vmatprep.subr.mxu0 0.0
        %2107 = vmatpush2.msra.mxu0 0.0
        %2108 = vmatprep.subr.mxu0 0.0
        %2109 = vmatpush2.msra.mxu0 0.0
        %2110 = vmatprep.subr.mxu0 0.0
        %2111 = vmatpush2.msra.mxu0 0.0
        %2112 = vmatprep.subr.mxu0 0.0
        %2113 = vmatpush2.msra.mxu0 0.0
        %2114 = vmatprep.subr.mxu0 0.0
        %2115 = vmatpush2.msra.mxu0 0.0
        %2116 = vmatprep.subr.mxu0 0.0
        %2117 = vmatpush2.msra.mxu0 0.0
        %2118 = vmatprep.mubr.f32.mxu0 0.0
        %2119 = vmatmul.mubr.f32.gmra.mxu0 %v2052
        %v2120 = vpop.f32.mrf.mxu0
        %v2121 = vadd.f32 0.0, %v2120
        %v2122 = vpop.f32.mrf.mxu0
        %2123 = vdwg.mxu0
        %v2124 = vadd.f32 %v2041, %v2121
        %s2125 = scalar_lea.vmem %s2, 168
        %v2126 = vld [vmem:[%s2125] sm:$0xff]
        %2127 = vrot.lane.b32.xlu0 %v388, 107
        %v2128 = vpop.permute.xlu0 %2127
        %2129 = vrot.lane.b32.xlu0 %v389, 107
        %v2130 = vpop.permute.xlu0 %2129
        %vm2131 = vcmask 875520
        %v2132 = vsel %vm2131, %v2128, %v2130
        %v2135 = vsel %vm303, %v2126, 0
        %2137 = vmatprep.subr.mxu0 0.0
        %2138 = vmatpush1.msra.mxu0 0.0
        %2139 = vmatprep.subr.mxu0 0.0
        %2140 = vmatpush1.msra.mxu0 0.0
        %2141 = vmatprep.subr.mxu0 0.0
        %2142 = vmatpush1.msra.mxu0 0.0
        %2143 = vmatprep.subr.mxu0 0.0
        %2144 = vmatpush1.msra.mxu0 0.0
        %2145 = vmatprep.subr.mxu0 0.0
        %2146 = vmatpush1.msra.mxu0 0.0
        %2147 = vmatprep.subr.mxu0 0.0
        %2148 = vmatpush1.msra.mxu0 0.0
        %2149 = vmatprep.subr.mxu0 0.0
        %2150 = vmatpush1.msra.mxu0 0.0
        %2151 = vmatprep.subr.mxu0 0.0
        %2152 = vmatpush1.msra.mxu0 0.0
        %2153 = vmatprep.subr.mxu0 0.0
        %2154 = vmatpush1.msra.mxu0 0.0
        %2155 = vmatprep.subr.mxu0 0.0
        %2156 = vmatpush1.msra.mxu0 0.0
        %2157 = vmatprep.subr.mxu0 0.0
        %2158 = vmatpush1.msra.mxu0 0.0
        %2159 = vmatprep.subr.mxu0 0.0
        %2160 = vmatpush1.msra.mxu0 0.0
        %2161 = vmatprep.subr.mxu0 0.0
        %2162 = vmatpush1.msra.mxu0 0.0
        %2163 = vmatprep.subr.mxu0 0.0
        %2164 = vmatpush1.msra.mxu0 0.0
        %2165 = vmatprep.subr.mxu0 0.0
        %2166 = vmatpush1.msra.mxu0 0.0
        %2167 = vmatprep.subr.mxu0 0.0
        %2168 = vmatpush1.msra.mxu0 %v2132
        %2169 = vmatprep.subr.mxu0 0.0
        %2170 = vmatpush2.msra.mxu0 0.0
        %2171 = vmatprep.subr.mxu0 0.0
        %2172 = vmatpush2.msra.mxu0 0.0
        %2173 = vmatprep.subr.mxu0 0.0
        %2174 = vmatpush2.msra.mxu0 0.0
        %2175 = vmatprep.subr.mxu0 0.0
        %2176 = vmatpush2.msra.mxu0 0.0
        %2177 = vmatprep.subr.mxu0 0.0
        %2178 = vmatpush2.msra.mxu0 0.0
        %2179 = vmatprep.subr.mxu0 0.0
        %2180 = vmatpush2.msra.mxu0 0.0
        %2181 = vmatprep.subr.mxu0 0.0
        %2182 = vmatpush2.msra.mxu0 0.0
        %2183 = vmatprep.subr.mxu0 0.0
        %2184 = vmatpush2.msra.mxu0 0.0
        %2185 = vmatprep.subr.mxu0 0.0
        %2186 = vmatpush2.msra.mxu0 0.0
        %2187 = vmatprep.subr.mxu0 0.0
        %2188 = vmatpush2.msra.mxu0 0.0
        %2189 = vmatprep.subr.mxu0 0.0
        %2190 = vmatpush2.msra.mxu0 0.0
        %2191 = vmatprep.subr.mxu0 0.0
        %2192 = vmatpush2.msra.mxu0 0.0
        %2193 = vmatprep.subr.mxu0 0.0
        %2194 = vmatpush2.msra.mxu0 0.0
        %2195 = vmatprep.subr.mxu0 0.0
        %2196 = vmatpush2.msra.mxu0 0.0
        %2197 = vmatprep.subr.mxu0 0.0
        %2198 = vmatpush2.msra.mxu0 0.0
        %2199 = vmatprep.subr.mxu0 0.0
        %2200 = vmatpush2.msra.mxu0 0.0
        %2201 = vmatprep.mubr.f32.mxu0 0.0
        %2202 = vmatmul.mubr.f32.gmra.mxu0 %v2135
        %v2203 = vpop.f32.mrf.mxu0
        %v2204 = vadd.f32 0.0, %v2203
        %v2205 = vpop.f32.mrf.mxu0
        %2206 = vdwg.mxu0
        %v2207 = vadd.f32 %v2124, %v2204
        %s2208 = scalar_lea.vmem %s2, 176
        %v2209 = vld [vmem:[%s2208] sm:$0xff]
        %2210 = vrot.lane.b32.xlu0 %v388, 106
        %v2211 = vpop.permute.xlu0 %2210
        %2212 = vrot.lane.b32.xlu0 %v389, 106
        %v2213 = vpop.permute.xlu0 %2212
        %vm2214 = vcmask 867328
        %v2215 = vsel %vm2214, %v2211, %v2213
        %v2218 = vsel %vm303, %v2209, 0
        %2220 = vmatprep.subr.mxu0 0.0
        %2221 = vmatpush1.msra.mxu0 0.0
        %2222 = vmatprep.subr.mxu0 0.0
        %2223 = vmatpush1.msra.mxu0 0.0
        %2224 = vmatprep.subr.mxu0 0.0
        %2225 = vmatpush1.msra.mxu0 0.0
        %2226 = vmatprep.subr.mxu0 0.0
        %2227 = vmatpush1.msra.mxu0 0.0
        %2228 = vmatprep.subr.mxu0 0.0
        %2229 = vmatpush1.msra.mxu0 0.0
        %2230 = vmatprep.subr.mxu0 0.0
        %2231 = vmatpush1.msra.mxu0 0.0
        %2232 = vmatprep.subr.mxu0 0.0
        %2233 = vmatpush1.msra.mxu0 0.0
        %2234 = vmatprep.subr.mxu0 0.0
        %2235 = vmatpush1.msra.mxu0 0.0
        %2236 = vmatprep.subr.mxu0 0.0
        %2237 = vmatpush1.msra.mxu0 0.0
        %2238 = vmatprep.subr.mxu0 0.0
        %2239 = vmatpush1.msra.mxu0 0.0
        %2240 = vmatprep.subr.mxu0 0.0
        %2241 = vmatpush1.msra.mxu0 0.0
        %2242 = vmatprep.subr.mxu0 0.0
        %2243 = vmatpush1.msra.mxu0 0.0
        %2244 = vmatprep.subr.mxu0 0.0
        %2245 = vmatpush1.msra.mxu0 0.0
        %2246 = vmatprep.subr.mxu0 0.0
        %2247 = vmatpush1.msra.mxu0 0.0
        %2248 = vmatprep.subr.mxu0 0.0
        %2249 = vmatpush1.msra.mxu0 0.0
        %2250 = vmatprep.subr.mxu0 0.0
        %2251 = vmatpush1.msra.mxu0 %v2215
        %2252 = vmatprep.subr.mxu0 0.0
        %2253 = vmatpush2.msra.mxu0 0.0
        %2254 = vmatprep.subr.mxu0 0.0
        %2255 = vmatpush2.msra.mxu0 0.0
        %2256 = vmatprep.subr.mxu0 0.0
        %2257 = vmatpush2.msra.mxu0 0.0
        %2258 = vmatprep.subr.mxu0 0.0
        %2259 = vmatpush2.msra.mxu0 0.0
        %2260 = vmatprep.subr.mxu0 0.0
        %2261 = vmatpush2.msra.mxu0 0.0
        %2262 = vmatprep.subr.mxu0 0.0
        %2263 = vmatpush2.msra.mxu0 0.0
        %2264 = vmatprep.subr.mxu0 0.0
        %2265 = vmatpush2.msra.mxu0 0.0
        %2266 = vmatprep.subr.mxu0 0.0
        %2267 = vmatpush2.msra.mxu0 0.0
        %2268 = vmatprep.subr.mxu0 0.0
        %2269 = vmatpush2.msra.mxu0 0.0
        %2270 = vmatprep.subr.mxu0 0.0
        %2271 = vmatpush2.msra.mxu0 0.0
        %2272 = vmatprep.subr.mxu0 0.0
        %2273 = vmatpush2.msra.mxu0 0.0
        %2274 = vmatprep.subr.mxu0 0.0
        %2275 = vmatpush2.msra.mxu0 0.0
        %2276 = vmatprep.subr.mxu0 0.0
        %2277 = vmatpush2.msra.mxu0 0.0
        %2278 = vmatprep.subr.mxu0 0.0
        %2279 = vmatpush2.msra.mxu0 0.0
        %2280 = vmatprep.subr.mxu0 0.0
        %2281 = vmatpush2.msra.mxu0 0.0
        %2282 = vmatprep.subr.mxu0 0.0
        %2283 = vmatpush2.msra.mxu0 0.0
        %2284 = vmatprep.mubr.f32.mxu0 0.0
        %2285 = vmatmul.mubr.f32.gmra.mxu0 %v2218
        %v2286 = vpop.f32.mrf.mxu0
        %v2287 = vadd.f32 0.0, %v2286
        %v2288 = vpop.f32.mrf.mxu0
        %2289 = vdwg.mxu0
        %v2290 = vadd.f32 %v2207, %v2287
        %s2291 = scalar_lea.vmem %s2, 184
        %v2292 = vld [vmem:[%s2291] sm:$0xff]
        %2293 = vrot.lane.b32.xlu0 %v388, 105
        %v2294 = vpop.permute.xlu0 %2293
        %2295 = vrot.lane.b32.xlu0 %v389, 105
        %v2296 = vpop.permute.xlu0 %2295
        %vm2297 = vcmask 859136
        %v2298 = vsel %vm2297, %v2294, %v2296
        %v2301 = vsel %vm303, %v2292, 0
        %2303 = vmatprep.subr.mxu0 0.0
        %2304 = vmatpush1.msra.mxu0 0.0
        %2305 = vmatprep.subr.mxu0 0.0
        %2306 = vmatpush1.msra.mxu0 0.0
        %2307 = vmatprep.subr.mxu0 0.0
        %2308 = vmatpush1.msra.mxu0 0.0
        %2309 = vmatprep.subr.mxu0 0.0
        %2310 = vmatpush1.msra.mxu0 0.0
        %2311 = vmatprep.subr.mxu0 0.0
        %2312 = vmatpush1.msra.mxu0 0.0
        %2313 = vmatprep.subr.mxu0 0.0
        %2314 = vmatpush1.msra.mxu0 0.0
        %2315 = vmatprep.subr.mxu0 0.0
        %2316 = vmatpush1.msra.mxu0 0.0
        %2317 = vmatprep.subr.mxu0 0.0
        %2318 = vmatpush1.msra.mxu0 0.0
        %2319 = vmatprep.subr.mxu0 0.0
        %2320 = vmatpush1.msra.mxu0 0.0
        %2321 = vmatprep.subr.mxu0 0.0
        %2322 = vmatpush1.msra.mxu0 0.0
        %2323 = vmatprep.subr.mxu0 0.0
        %2324 = vmatpush1.msra.mxu0 0.0
        %2325 = vmatprep.subr.mxu0 0.0
        %2326 = vmatpush1.msra.mxu0 0.0
        %2327 = vmatprep.subr.mxu0 0.0
        %2328 = vmatpush1.msra.mxu0 0.0
        %2329 = vmatprep.subr.mxu0 0.0
        %2330 = vmatpush1.msra.mxu0 0.0
        %2331 = vmatprep.subr.mxu0 0.0
        %2332 = vmatpush1.msra.mxu0 0.0
        %2333 = vmatprep.subr.mxu0 0.0
        %2334 = vmatpush1.msra.mxu0 %v2298
        %2335 = vmatprep.subr.mxu0 0.0
        %2336 = vmatpush2.msra.mxu0 0.0
        %2337 = vmatprep.subr.mxu0 0.0
        %2338 = vmatpush2.msra.mxu0 0.0
        %2339 = vmatprep.subr.mxu0 0.0
        %2340 = vmatpush2.msra.mxu0 0.0
        %2341 = vmatprep.subr.mxu0 0.0
        %2342 = vmatpush2.msra.mxu0 0.0
        %2343 = vmatprep.subr.mxu0 0.0
        %2344 = vmatpush2.msra.mxu0 0.0
        %2345 = vmatprep.subr.mxu0 0.0
        %2346 = vmatpush2.msra.mxu0 0.0
        %2347 = vmatprep.subr.mxu0 0.0
        %2348 = vmatpush2.msra.mxu0 0.0
        %2349 = vmatprep.subr.mxu0 0.0
        %2350 = vmatpush2.msra.mxu0 0.0
        %2351 = vmatprep.subr.mxu0 0.0
        %2352 = vmatpush2.msra.mxu0 0.0
        %2353 = vmatprep.subr.mxu0 0.0
        %2354 = vmatpush2.msra.mxu0 0.0
        %2355 = vmatprep.subr.mxu0 0.0
        %2356 = vmatpush2.msra.mxu0 0.0
        %2357 = vmatprep.subr.mxu0 0.0
        %2358 = vmatpush2.msra.mxu0 0.0
        %2359 = vmatprep.subr.mxu0 0.0
        %2360 = vmatpush2.msra.mxu0 0.0
        %2361 = vmatprep.subr.mxu0 0.0
        %2362 = vmatpush2.msra.mxu0 0.0
        %2363 = vmatprep.subr.mxu0 0.0
        %2364 = vmatpush2.msra.mxu0 0.0
        %2365 = vmatprep.subr.mxu0 0.0
        %2366 = vmatpush2.msra.mxu0 0.0
        %2367 = vmatprep.mubr.f32.mxu0 0.0
        %2368 = vmatmul.mubr.f32.gmra.mxu0 %v2301
        %v2369 = vpop.f32.mrf.mxu0
        %v2370 = vadd.f32 0.0, %v2369
        %v2371 = vpop.f32.mrf.mxu0
        %2372 = vdwg.mxu0
        %v2373 = vadd.f32 %v2290, %v2370
        %s2374 = scalar_lea.vmem %s2, 192
        %v2375 = vld [vmem:[%s2374] sm:$0xff]
        %2376 = vrot.lane.b32.xlu0 %v388, 104
        %v2377 = vpop.permute.xlu0 %2376
        %2378 = vrot.lane.b32.xlu0 %v389, 104
        %v2379 = vpop.permute.xlu0 %2378
        %vm2380 = vcmask 850944
        %v2381 = vsel %vm2380, %v2377, %v2379
        %v2384 = vsel %vm303, %v2375, 0
        %2386 = vmatprep.subr.mxu0 0.0
        %2387 = vmatpush1.msra.mxu0 0.0
        %2388 = vmatprep.subr.mxu0 0.0
        %2389 = vmatpush1.msra.mxu0 0.0
        %2390 = vmatprep.subr.mxu0 0.0
        %2391 = vmatpush1.msra.mxu0 0.0
        %2392 = vmatprep.subr.mxu0 0.0
        %2393 = vmatpush1.msra.mxu0 0.0
        %2394 = vmatprep.subr.mxu0 0.0
        %2395 = vmatpush1.msra.mxu0 0.0
        %2396 = vmatprep.subr.mxu0 0.0
        %2397 = vmatpush1.msra.mxu0 0.0
        %2398 = vmatprep.subr.mxu0 0.0
        %2399 = vmatpush1.msra.mxu0 0.0
        %2400 = vmatprep.subr.mxu0 0.0
        %2401 = vmatpush1.msra.mxu0 0.0
        %2402 = vmatprep.subr.mxu0 0.0
        %2403 = vmatpush1.msra.mxu0 0.0
        %2404 = vmatprep.subr.mxu0 0.0
        %2405 = vmatpush1.msra.mxu0 0.0
        %2406 = vmatprep.subr.mxu0 0.0
        %2407 = vmatpush1.msra.mxu0 0.0
        %2408 = vmatprep.subr.mxu0 0.0
        %2409 = vmatpush1.msra.mxu0 0.0
        %2410 = vmatprep.subr.mxu0 0.0
        %2411 = vmatpush1.msra.mxu0 0.0
        %2412 = vmatprep.subr.mxu0 0.0
        %2413 = vmatpush1.msra.mxu0 0.0
        %2414 = vmatprep.subr.mxu0 0.0
        %2415 = vmatpush1.msra.mxu0 0.0
        %2416 = vmatprep.subr.mxu0 0.0
        %2417 = vmatpush1.msra.mxu0 %v2381
        %2418 = vmatprep.subr.mxu0 0.0
        %2419 = vmatpush2.msra.mxu0 0.0
        %2420 = vmatprep.subr.mxu0 0.0
        %2421 = vmatpush2.msra.mxu0 0.0
        %2422 = vmatprep.subr.mxu0 0.0
        %2423 = vmatpush2.msra.mxu0 0.0
        %2424 = vmatprep.subr.mxu0 0.0
        %2425 = vmatpush2.msra.mxu0 0.0
        %2426 = vmatprep.subr.mxu0 0.0
        %2427 = vmatpush2.msra.mxu0 0.0
        %2428 = vmatprep.subr.mxu0 0.0
        %2429 = vmatpush2.msra.mxu0 0.0
        %2430 = vmatprep.subr.mxu0 0.0
        %2431 = vmatpush2.msra.mxu0 0.0
        %2432 = vmatprep.subr.mxu0 0.0
        %2433 = vmatpush2.msra.mxu0 0.0
        %2434 = vmatprep.subr.mxu0 0.0
        %2435 = vmatpush2.msra.mxu0 0.0
        %2436 = vmatprep.subr.mxu0 0.0
        %2437 = vmatpush2.msra.mxu0 0.0
        %2438 = vmatprep.subr.mxu0 0.0
        %2439 = vmatpush2.msra.mxu0 0.0
        %2440 = vmatprep.subr.mxu0 0.0
        %2441 = vmatpush2.msra.mxu0 0.0
        %2442 = vmatprep.subr.mxu0 0.0
        %2443 = vmatpush2.msra.mxu0 0.0
        %2444 = vmatprep.subr.mxu0 0.0
        %2445 = vmatpush2.msra.mxu0 0.0
        %2446 = vmatprep.subr.mxu0 0.0
        %2447 = vmatpush2.msra.mxu0 0.0
        %2448 = vmatprep.subr.mxu0 0.0
        %2449 = vmatpush2.msra.mxu0 0.0
        %2450 = vmatprep.mubr.f32.mxu0 0.0
        %2451 = vmatmul.mubr.f32.gmra.mxu0 %v2384
        %v2452 = vpop.f32.mrf.mxu0
        %v2453 = vadd.f32 0.0, %v2452
        %v2454 = vpop.f32.mrf.mxu0
        %2455 = vdwg.mxu0
        %v2456 = vadd.f32 %v2373, %v2453
        %s2457 = scalar_lea.vmem %s2, 200
        %v2458 = vld [vmem:[%s2457] sm:$0xff]
        %2459 = vrot.lane.b32.xlu0 %v388, 103
        %v2460 = vpop.permute.xlu0 %2459
        %2461 = vrot.lane.b32.xlu0 %v389, 103
        %v2462 = vpop.permute.xlu0 %2461
        %vm2463 = vcmask 842752
        %v2464 = vsel %vm2463, %v2460, %v2462
        %v2467 = vsel %vm303, %v2458, 0
        %2469 = vmatprep.subr.mxu0 0.0
        %2470 = vmatpush1.msra.mxu0 0.0
        %2471 = vmatprep.subr.mxu0 0.0
        %2472 = vmatpush1.msra.mxu0 0.0
        %2473 = vmatprep.subr.mxu0 0.0
        %2474 = vmatpush1.msra.mxu0 0.0
        %2475 = vmatprep.subr.mxu0 0.0
        %2476 = vmatpush1.msra.mxu0 0.0
        %2477 = vmatprep.subr.mxu0 0.0
        %2478 = vmatpush1.msra.mxu0 0.0
        %2479 = vmatprep.subr.mxu0 0.0
        %2480 = vmatpush1.msra.mxu0 0.0
        %2481 = vmatprep.subr.mxu0 0.0
        %2482 = vmatpush1.msra.mxu0 0.0
        %2483 = vmatprep.subr.mxu0 0.0
        %2484 = vmatpush1.msra.mxu0 0.0
        %2485 = vmatprep.subr.mxu0 0.0
        %2486 = vmatpush1.msra.mxu0 0.0
        %2487 = vmatprep.subr.mxu0 0.0
        %2488 = vmatpush1.msra.mxu0 0.0
        %2489 = vmatprep.subr.mxu0 0.0
        %2490 = vmatpush1.msra.mxu0 0.0
        %2491 = vmatprep.subr.mxu0 0.0
        %2492 = vmatpush1.msra.mxu0 0.0
        %2493 = vmatprep.subr.mxu0 0.0
        %2494 = vmatpush1.msra.mxu0 0.0
        %2495 = vmatprep.subr.mxu0 0.0
        %2496 = vmatpush1.msra.mxu0 0.0
        %2497 = vmatprep.subr.mxu0 0.0
        %2498 = vmatpush1.msra.mxu0 0.0
        %2499 = vmatprep.subr.mxu0 0.0
        %2500 = vmatpush1.msra.mxu0 %v2464
        %2501 = vmatprep.subr.mxu0 0.0
        %2502 = vmatpush2.msra.mxu0 0.0
        %2503 = vmatprep.subr.mxu0 0.0
        %2504 = vmatpush2.msra.mxu0 0.0
        %2505 = vmatprep.subr.mxu0 0.0
        %2506 = vmatpush2.msra.mxu0 0.0
        %2507 = vmatprep.subr.mxu0 0.0
        %2508 = vmatpush2.msra.mxu0 0.0
        %2509 = vmatprep.subr.mxu0 0.0
        %2510 = vmatpush2.msra.mxu0 0.0
        %2511 = vmatprep.subr.mxu0 0.0
        %2512 = vmatpush2.msra.mxu0 0.0
        %2513 = vmatprep.subr.mxu0 0.0
        %2514 = vmatpush2.msra.mxu0 0.0
        %2515 = vmatprep.subr.mxu0 0.0
        %2516 = vmatpush2.msra.mxu0 0.0
        %2517 = vmatprep.subr.mxu0 0.0
        %2518 = vmatpush2.msra.mxu0 0.0
        %2519 = vmatprep.subr.mxu0 0.0
        %2520 = vmatpush2.msra.mxu0 0.0
        %2521 = vmatprep.subr.mxu0 0.0
        %2522 = vmatpush2.msra.mxu0 0.0
        %2523 = vmatprep.subr.mxu0 0.0
        %2524 = vmatpush2.msra.mxu0 0.0
        %2525 = vmatprep.subr.mxu0 0.0
        %2526 = vmatpush2.msra.mxu0 0.0
        %2527 = vmatprep.subr.mxu0 0.0
        %2528 = vmatpush2.msra.mxu0 0.0
        %2529 = vmatprep.subr.mxu0 0.0
        %2530 = vmatpush2.msra.mxu0 0.0
        %2531 = vmatprep.subr.mxu0 0.0
        %2532 = vmatpush2.msra.mxu0 0.0
        %2533 = vmatprep.mubr.f32.mxu0 0.0
        %2534 = vmatmul.mubr.f32.gmra.mxu0 %v2467
        %v2535 = vpop.f32.mrf.mxu0
        %v2536 = vadd.f32 0.0, %v2535
        %v2537 = vpop.f32.mrf.mxu0
        %2538 = vdwg.mxu0
        %v2539 = vadd.f32 %v2456, %v2536
        %s2540 = scalar_lea.vmem %s2, 208
        %v2541 = vld [vmem:[%s2540] sm:$0xff]
        %2542 = vrot.lane.b32.xlu0 %v388, 102
        %v2543 = vpop.permute.xlu0 %2542
        %2544 = vrot.lane.b32.xlu0 %v389, 102
        %v2545 = vpop.permute.xlu0 %2544
        %vm2546 = vcmask 834560
        %v2547 = vsel %vm2546, %v2543, %v2545
        %v2550 = vsel %vm303, %v2541, 0
        %2552 = vmatprep.subr.mxu0 0.0
        %2553 = vmatpush1.msra.mxu0 0.0
        %2554 = vmatprep.subr.mxu0 0.0
        %2555 = vmatpush1.msra.mxu0 0.0
        %2556 = vmatprep.subr.mxu0 0.0
        %2557 = vmatpush1.msra.mxu0 0.0
        %2558 = vmatprep.subr.mxu0 0.0
        %2559 = vmatpush1.msra.mxu0 0.0
        %2560 = vmatprep.subr.mxu0 0.0
        %2561 = vmatpush1.msra.mxu0 0.0
        %2562 = vmatprep.subr.mxu0 0.0
        %2563 = vmatpush1.msra.mxu0 0.0
        %2564 = vmatprep.subr.mxu0 0.0
        %2565 = vmatpush1.msra.mxu0 0.0
        %2566 = vmatprep.subr.mxu0 0.0
        %2567 = vmatpush1.msra.mxu0 0.0
        %2568 = vmatprep.subr.mxu0 0.0
        %2569 = vmatpush1.msra.mxu0 0.0
        %2570 = vmatprep.subr.mxu0 0.0
        %2571 = vmatpush1.msra.mxu0 0.0
        %2572 = vmatprep.subr.mxu0 0.0
        %2573 = vmatpush1.msra.mxu0 0.0
        %2574 = vmatprep.subr.mxu0 0.0
        %2575 = vmatpush1.msra.mxu0 0.0
        %2576 = vmatprep.subr.mxu0 0.0
        %2577 = vmatpush1.msra.mxu0 0.0
        %2578 = vmatprep.subr.mxu0 0.0
        %2579 = vmatpush1.msra.mxu0 0.0
        %2580 = vmatprep.subr.mxu0 0.0
        %2581 = vmatpush1.msra.mxu0 0.0
        %2582 = vmatprep.subr.mxu0 0.0
        %2583 = vmatpush1.msra.mxu0 %v2547
        %2584 = vmatprep.subr.mxu0 0.0
        %2585 = vmatpush2.msra.mxu0 0.0
        %2586 = vmatprep.subr.mxu0 0.0
        %2587 = vmatpush2.msra.mxu0 0.0
        %2588 = vmatprep.subr.mxu0 0.0
        %2589 = vmatpush2.msra.mxu0 0.0
        %2590 = vmatprep.subr.mxu0 0.0
        %2591 = vmatpush2.msra.mxu0 0.0
        %2592 = vmatprep.subr.mxu0 0.0
        %2593 = vmatpush2.msra.mxu0 0.0
        %2594 = vmatprep.subr.mxu0 0.0
        %2595 = vmatpush2.msra.mxu0 0.0
        %2596 = vmatprep.subr.mxu0 0.0
        %2597 = vmatpush2.msra.mxu0 0.0
        %2598 = vmatprep.subr.mxu0 0.0
        %2599 = vmatpush2.msra.mxu0 0.0
        %2600 = vmatprep.subr.mxu0 0.0
        %2601 = vmatpush2.msra.mxu0 0.0
        %2602 = vmatprep.subr.mxu0 0.0
        %2603 = vmatpush2.msra.mxu0 0.0
        %2604 = vmatprep.subr.mxu0 0.0
        %2605 = vmatpush2.msra.mxu0 0.0
        %2606 = vmatprep.subr.mxu0 0.0
        %2607 = vmatpush2.msra.mxu0 0.0
        %2608 = vmatprep.subr.mxu0 0.0
        %2609 = vmatpush2.msra.mxu0 0.0
        %2610 = vmatprep.subr.mxu0 0.0
        %2611 = vmatpush2.msra.mxu0 0.0
        %2612 = vmatprep.subr.mxu0 0.0
        %2613 = vmatpush2.msra.mxu0 0.0
        %2614 = vmatprep.subr.mxu0 0.0
        %2615 = vmatpush2.msra.mxu0 0.0
        %2616 = vmatprep.mubr.f32.mxu0 0.0
        %2617 = vmatmul.mubr.f32.gmra.mxu0 %v2550
        %v2618 = vpop.f32.mrf.mxu0
        %v2619 = vadd.f32 0.0, %v2618
        %v2620 = vpop.f32.mrf.mxu0
        %2621 = vdwg.mxu0
        %v2622 = vadd.f32 %v2539, %v2619
        %s2623 = scalar_lea.vmem %s2, 216
        %v2624 = vld [vmem:[%s2623] sm:$0xff]
        %2625 = vrot.lane.b32.xlu0 %v388, 101
        %v2626 = vpop.permute.xlu0 %2625
        %2627 = vrot.lane.b32.xlu0 %v389, 101
        %v2628 = vpop.permute.xlu0 %2627
        %vm2629 = vcmask 826368
        %v2630 = vsel %vm2629, %v2626, %v2628
        %v2633 = vsel %vm303, %v2624, 0
        %2635 = vmatprep.subr.mxu0 0.0
        %2636 = vmatpush1.msra.mxu0 0.0
        %2637 = vmatprep.subr.mxu0 0.0
        %2638 = vmatpush1.msra.mxu0 0.0
        %2639 = vmatprep.subr.mxu0 0.0
        %2640 = vmatpush1.msra.mxu0 0.0
        %2641 = vmatprep.subr.mxu0 0.0
        %2642 = vmatpush1.msra.mxu0 0.0
        %2643 = vmatprep.subr.mxu0 0.0
        %2644 = vmatpush1.msra.mxu0 0.0
        %2645 = vmatprep.subr.mxu0 0.0
        %2646 = vmatpush1.msra.mxu0 0.0
        %2647 = vmatprep.subr.mxu0 0.0
        %2648 = vmatpush1.msra.mxu0 0.0
        %2649 = vmatprep.subr.mxu0 0.0
        %2650 = vmatpush1.msra.mxu0 0.0
        %2651 = vmatprep.subr.mxu0 0.0
        %2652 = vmatpush1.msra.mxu0 0.0
        %2653 = vmatprep.subr.mxu0 0.0
        %2654 = vmatpush1.msra.mxu0 0.0
        %2655 = vmatprep.subr.mxu0 0.0
        %2656 = vmatpush1.msra.mxu0 0.0
        %2657 = vmatprep.subr.mxu0 0.0
        %2658 = vmatpush1.msra.mxu0 0.0
        %2659 = vmatprep.subr.mxu0 0.0
        %2660 = vmatpush1.msra.mxu0 0.0
        %2661 = vmatprep.subr.mxu0 0.0
        %2662 = vmatpush1.msra.mxu0 0.0
        %2663 = vmatprep.subr.mxu0 0.0
        %2664 = vmatpush1.msra.mxu0 0.0
        %2665 = vmatprep.subr.mxu0 0.0
        %2666 = vmatpush1.msra.mxu0 %v2630
        %2667 = vmatprep.subr.mxu0 0.0
        %2668 = vmatpush2.msra.mxu0 0.0
        %2669 = vmatprep.subr.mxu0 0.0
        %2670 = vmatpush2.msra.mxu0 0.0
        %2671 = vmatprep.subr.mxu0 0.0
        %2672 = vmatpush2.msra.mxu0 0.0
        %2673 = vmatprep.subr.mxu0 0.0
        %2674 = vmatpush2.msra.mxu0 0.0
        %2675 = vmatprep.subr.mxu0 0.0
        %2676 = vmatpush2.msra.mxu0 0.0
        %2677 = vmatprep.subr.mxu0 0.0
        %2678 = vmatpush2.msra.mxu0 0.0
        %2679 = vmatprep.subr.mxu0 0.0
        %2680 = vmatpush2.msra.mxu0 0.0
        %2681 = vmatprep.subr.mxu0 0.0
        %2682 = vmatpush2.msra.mxu0 0.0
        %2683 = vmatprep.subr.mxu0 0.0
        %2684 = vmatpush2.msra.mxu0 0.0
        %2685 = vmatprep.subr.mxu0 0.0
        %2686 = vmatpush2.msra.mxu0 0.0
        %2687 = vmatprep.subr.mxu0 0.0
        %2688 = vmatpush2.msra.mxu0 0.0
        %2689 = vmatprep.subr.mxu0 0.0
        %2690 = vmatpush2.msra.mxu0 0.0
        %2691 = vmatprep.subr.mxu0 0.0
        %2692 = vmatpush2.msra.mxu0 0.0
        %2693 = vmatprep.subr.mxu0 0.0
        %2694 = vmatpush2.msra.mxu0 0.0
        %2695 = vmatprep.subr.mxu0 0.0
        %2696 = vmatpush2.msra.mxu0 0.0
        %2697 = vmatprep.subr.mxu0 0.0
        %2698 = vmatpush2.msra.mxu0 0.0
        %2699 = vmatprep.mubr.f32.mxu0 0.0
        %2700 = vmatmul.mubr.f32.gmra.mxu0 %v2633
        %v2701 = vpop.f32.mrf.mxu0
        %v2702 = vadd.f32 0.0, %v2701
        %v2703 = vpop.f32.mrf.mxu0
        %2704 = vdwg.mxu0
        %v2705 = vadd.f32 %v2622, %v2702
        %s2706 = scalar_lea.vmem %s2, 224
        %v2707 = vld [vmem:[%s2706] sm:$0xff]
        %2708 = vrot.lane.b32.xlu0 %v388, 100
        %v2709 = vpop.permute.xlu0 %2708
        %2710 = vrot.lane.b32.xlu0 %v389, 100
        %v2711 = vpop.permute.xlu0 %2710
        %vm2712 = vcmask 818176
        %v2713 = vsel %vm2712, %v2709, %v2711
        %v2716 = vsel %vm303, %v2707, 0
        %2718 = vmatprep.subr.mxu0 0.0
        %2719 = vmatpush1.msra.mxu0 0.0
        %2720 = vmatprep.subr.mxu0 0.0
        %2721 = vmatpush1.msra.mxu0 0.0
        %2722 = vmatprep.subr.mxu0 0.0
        %2723 = vmatpush1.msra.mxu0 0.0
        %2724 = vmatprep.subr.mxu0 0.0
        %2725 = vmatpush1.msra.mxu0 0.0
        %2726 = vmatprep.subr.mxu0 0.0
        %2727 = vmatpush1.msra.mxu0 0.0
        %2728 = vmatprep.subr.mxu0 0.0
        %2729 = vmatpush1.msra.mxu0 0.0
        %2730 = vmatprep.subr.mxu0 0.0
        %2731 = vmatpush1.msra.mxu0 0.0
        %2732 = vmatprep.subr.mxu0 0.0
        %2733 = vmatpush1.msra.mxu0 0.0
        %2734 = vmatprep.subr.mxu0 0.0
        %2735 = vmatpush1.msra.mxu0 0.0
        %2736 = vmatprep.subr.mxu0 0.0
        %2737 = vmatpush1.msra.mxu0 0.0
        %2738 = vmatprep.subr.mxu0 0.0
        %2739 = vmatpush1.msra.mxu0 0.0
        %2740 = vmatprep.subr.mxu0 0.0
        %2741 = vmatpush1.msra.mxu0 0.0
        %2742 = vmatprep.subr.mxu0 0.0
        %2743 = vmatpush1.msra.mxu0 0.0
        %2744 = vmatprep.subr.mxu0 0.0
        %2745 = vmatpush1.msra.mxu0 0.0
        %2746 = vmatprep.subr.mxu0 0.0
        %2747 = vmatpush1.msra.mxu0 0.0
        %2748 = vmatprep.subr.mxu0 0.0
        %2749 = vmatpush1.msra.mxu0 %v2713
        %2750 = vmatprep.subr.mxu0 0.0
        %2751 = vmatpush2.msra.mxu0 0.0
        %2752 = vmatprep.subr.mxu0 0.0
        %2753 = vmatpush2.msra.mxu0 0.0
        %2754 = vmatprep.subr.mxu0 0.0
        %2755 = vmatpush2.msra.mxu0 0.0
        %2756 = vmatprep.subr.mxu0 0.0
        %2757 = vmatpush2.msra.mxu0 0.0
        %2758 = vmatprep.subr.mxu0 0.0
        %2759 = vmatpush2.msra.mxu0 0.0
        %2760 = vmatprep.subr.mxu0 0.0
        %2761 = vmatpush2.msra.mxu0 0.0
        %2762 = vmatprep.subr.mxu0 0.0
        %2763 = vmatpush2.msra.mxu0 0.0
        %2764 = vmatprep.subr.mxu0 0.0
        %2765 = vmatpush2.msra.mxu0 0.0
        %2766 = vmatprep.subr.mxu0 0.0
        %2767 = vmatpush2.msra.mxu0 0.0
        %2768 = vmatprep.subr.mxu0 0.0
        %2769 = vmatpush2.msra.mxu0 0.0
        %2770 = vmatprep.subr.mxu0 0.0
        %2771 = vmatpush2.msra.mxu0 0.0
        %2772 = vmatprep.subr.mxu0 0.0
        %2773 = vmatpush2.msra.mxu0 0.0
        %2774 = vmatprep.subr.mxu0 0.0
        %2775 = vmatpush2.msra.mxu0 0.0
        %2776 = vmatprep.subr.mxu0 0.0
        %2777 = vmatpush2.msra.mxu0 0.0
        %2778 = vmatprep.subr.mxu0 0.0
        %2779 = vmatpush2.msra.mxu0 0.0
        %2780 = vmatprep.subr.mxu0 0.0
        %2781 = vmatpush2.msra.mxu0 0.0
        %2782 = vmatprep.mubr.f32.mxu0 0.0
        %2783 = vmatmul.mubr.f32.gmra.mxu0 %v2716
        %v2784 = vpop.f32.mrf.mxu0
        %v2785 = vadd.f32 0.0, %v2784
        %v2786 = vpop.f32.mrf.mxu0
        %2787 = vdwg.mxu0
        %v2788 = vadd.f32 %v2705, %v2785
        %s2789 = scalar_lea.vmem %s2, 232
        %v2790 = vld [vmem:[%s2789] sm:$0xff]
        %2791 = vrot.lane.b32.xlu0 %v388, 99
        %v2792 = vpop.permute.xlu0 %2791
        %2793 = vrot.lane.b32.xlu0 %v389, 99
        %v2794 = vpop.permute.xlu0 %2793
        %vm2795 = vcmask 809984
        %v2796 = vsel %vm2795, %v2792, %v2794
        %v2799 = vsel %vm303, %v2790, 0
        %2801 = vmatprep.subr.mxu0 0.0
        %2802 = vmatpush1.msra.mxu0 0.0
        %2803 = vmatprep.subr.mxu0 0.0
        %2804 = vmatpush1.msra.mxu0 0.0
        %2805 = vmatprep.subr.mxu0 0.0
        %2806 = vmatpush1.msra.mxu0 0.0
        %2807 = vmatprep.subr.mxu0 0.0
        %2808 = vmatpush1.msra.mxu0 0.0
        %2809 = vmatprep.subr.mxu0 0.0
        %2810 = vmatpush1.msra.mxu0 0.0
        %2811 = vmatprep.subr.mxu0 0.0
        %2812 = vmatpush1.msra.mxu0 0.0
        %2813 = vmatprep.subr.mxu0 0.0
        %2814 = vmatpush1.msra.mxu0 0.0
        %2815 = vmatprep.subr.mxu0 0.0
        %2816 = vmatpush1.msra.mxu0 0.0
        %2817 = vmatprep.subr.mxu0 0.0
        %2818 = vmatpush1.msra.mxu0 0.0
        %2819 = vmatprep.subr.mxu0 0.0
        %2820 = vmatpush1.msra.mxu0 0.0
        %2821 = vmatprep.subr.mxu0 0.0
        %2822 = vmatpush1.msra.mxu0 0.0
        %2823 = vmatprep.subr.mxu0 0.0
        %2824 = vmatpush1.msra.mxu0 0.0
        %2825 = vmatprep.subr.mxu0 0.0
        %2826 = vmatpush1.msra.mxu0 0.0
        %2827 = vmatprep.subr.mxu0 0.0
        %2828 = vmatpush1.msra.mxu0 0.0
        %2829 = vmatprep.subr.mxu0 0.0
        %2830 = vmatpush1.msra.mxu0 0.0
        %2831 = vmatprep.subr.mxu0 0.0
        %2832 = vmatpush1.msra.mxu0 %v2796
        %2833 = vmatprep.subr.mxu0 0.0
        %2834 = vmatpush2.msra.mxu0 0.0
        %2835 = vmatprep.subr.mxu0 0.0
        %2836 = vmatpush2.msra.mxu0 0.0
        %2837 = vmatprep.subr.mxu0 0.0
        %2838 = vmatpush2.msra.mxu0 0.0
        %2839 = vmatprep.subr.mxu0 0.0
        %2840 = vmatpush2.msra.mxu0 0.0
        %2841 = vmatprep.subr.mxu0 0.0
        %2842 = vmatpush2.msra.mxu0 0.0
        %2843 = vmatprep.subr.mxu0 0.0
        %2844 = vmatpush2.msra.mxu0 0.0
        %2845 = vmatprep.subr.mxu0 0.0
        %2846 = vmatpush2.msra.mxu0 0.0
        %2847 = vmatprep.subr.mxu0 0.0
        %2848 = vmatpush2.msra.mxu0 0.0
        %2849 = vmatprep.subr.mxu0 0.0
        %2850 = vmatpush2.msra.mxu0 0.0
        %2851 = vmatprep.subr.mxu0 0.0
        %2852 = vmatpush2.msra.mxu0 0.0
        %2853 = vmatprep.subr.mxu0 0.0
        %2854 = vmatpush2.msra.mxu0 0.0
        %2855 = vmatprep.subr.mxu0 0.0
        %2856 = vmatpush2.msra.mxu0 0.0
        %2857 = vmatprep.subr.mxu0 0.0
        %2858 = vmatpush2.msra.mxu0 0.0
        %2859 = vmatprep.subr.mxu0 0.0
        %2860 = vmatpush2.msra.mxu0 0.0
        %2861 = vmatprep.subr.mxu0 0.0
        %2862 = vmatpush2.msra.mxu0 0.0
        %2863 = vmatprep.subr.mxu0 0.0
        %2864 = vmatpush2.msra.mxu0 0.0
        %2865 = vmatprep.mubr.f32.mxu0 0.0
        %2866 = vmatmul.mubr.f32.gmra.mxu0 %v2799
        %v2867 = vpop.f32.mrf.mxu0
        %v2868 = vadd.f32 0.0, %v2867
        %v2869 = vpop.f32.mrf.mxu0
        %2870 = vdwg.mxu0
        %v2871 = vadd.f32 %v2788, %v2868
        %s2872 = scalar_lea.vmem %s2, 240
        %v2873 = vld [vmem:[%s2872] sm:$0xff]
        %2874 = vrot.lane.b32.xlu0 %v388, 98
        %v2875 = vpop.permute.xlu0 %2874
        %2876 = vrot.lane.b32.xlu0 %v389, 98
        %v2877 = vpop.permute.xlu0 %2876
        %vm2878 = vcmask 801792
        %v2879 = vsel %vm2878, %v2875, %v2877
        %v2882 = vsel %vm303, %v2873, 0
        %2884 = vmatprep.subr.mxu0 0.0
        %2885 = vmatpush1.msra.mxu0 0.0
        %2886 = vmatprep.subr.mxu0 0.0
        %2887 = vmatpush1.msra.mxu0 0.0
        %2888 = vmatprep.subr.mxu0 0.0
        %2889 = vmatpush1.msra.mxu0 0.0
        %2890 = vmatprep.subr.mxu0 0.0
        %2891 = vmatpush1.msra.mxu0 0.0
        %2892 = vmatprep.subr.mxu0 0.0
        %2893 = vmatpush1.msra.mxu0 0.0
        %2894 = vmatprep.subr.mxu0 0.0
        %2895 = vmatpush1.msra.mxu0 0.0
        %2896 = vmatprep.subr.mxu0 0.0
        %2897 = vmatpush1.msra.mxu0 0.0
        %2898 = vmatprep.subr.mxu0 0.0
        %2899 = vmatpush1.msra.mxu0 0.0
        %2900 = vmatprep.subr.mxu0 0.0
        %2901 = vmatpush1.msra.mxu0 0.0
        %2902 = vmatprep.subr.mxu0 0.0
        %2903 = vmatpush1.msra.mxu0 0.0
        %2904 = vmatprep.subr.mxu0 0.0
        %2905 = vmatpush1.msra.mxu0 0.0
        %2906 = vmatprep.subr.mxu0 0.0
        %2907 = vmatpush1.msra.mxu0 0.0
        %2908 = vmatprep.subr.mxu0 0.0
        %2909 = vmatpush1.msra.mxu0 0.0
        %2910 = vmatprep.subr.mxu0 0.0
        %2911 = vmatpush1.msra.mxu0 0.0
        %2912 = vmatprep.subr.mxu0 0.0
        %2913 = vmatpush1.msra.mxu0 0.0
        %2914 = vmatprep.subr.mxu0 0.0
        %2915 = vmatpush1.msra.mxu0 %v2879
        %2916 = vmatprep.subr.mxu0 0.0
        %2917 = vmatpush2.msra.mxu0 0.0
        %2918 = vmatprep.subr.mxu0 0.0
        %2919 = vmatpush2.msra.mxu0 0.0
        %2920 = vmatprep.subr.mxu0 0.0
        %2921 = vmatpush2.msra.mxu0 0.0
        %2922 = vmatprep.subr.mxu0 0.0
        %2923 = vmatpush2.msra.mxu0 0.0
        %2924 = vmatprep.subr.mxu0 0.0
        %2925 = vmatpush2.msra.mxu0 0.0
        %2926 = vmatprep.subr.mxu0 0.0
        %2927 = vmatpush2.msra.mxu0 0.0
        %2928 = vmatprep.subr.mxu0 0.0
        %2929 = vmatpush2.msra.mxu0 0.0
        %2930 = vmatprep.subr.mxu0 0.0
        %2931 = vmatpush2.msra.mxu0 0.0
        %2932 = vmatprep.subr.mxu0 0.0
        %2933 = vmatpush2.msra.mxu0 0.0
        %2934 = vmatprep.subr.mxu0 0.0
        %2935 = vmatpush2.msra.mxu0 0.0
        %2936 = vmatprep.subr.mxu0 0.0
        %2937 = vmatpush2.msra.mxu0 0.0
        %2938 = vmatprep.subr.mxu0 0.0
        %2939 = vmatpush2.msra.mxu0 0.0
        %2940 = vmatprep.subr.mxu0 0.0
        %2941 = vmatpush2.msra.mxu0 0.0
        %2942 = vmatprep.subr.mxu0 0.0
        %2943 = vmatpush2.msra.mxu0 0.0
        %2944 = vmatprep.subr.mxu0 0.0
        %2945 = vmatpush2.msra.mxu0 0.0
        %2946 = vmatprep.subr.mxu0 0.0
        %2947 = vmatpush2.msra.mxu0 0.0
        %2948 = vmatprep.mubr.f32.mxu0 0.0
        %2949 = vmatmul.mubr.f32.gmra.mxu0 %v2882
        %v2950 = vpop.f32.mrf.mxu0
        %v2951 = vadd.f32 0.0, %v2950
        %v2952 = vpop.f32.mrf.mxu0
        %2953 = vdwg.mxu0
        %v2954 = vadd.f32 %v2871, %v2951
        %s2955 = scalar_lea.vmem %s2, 248
        %v2956 = vld [vmem:[%s2955] sm:$0xff]
        %2957 = vrot.lane.b32.xlu0 %v388, 97
        %v2958 = vpop.permute.xlu0 %2957
        %2959 = vrot.lane.b32.xlu0 %v389, 97
        %v2960 = vpop.permute.xlu0 %2959
        %vm2961 = vcmask 793600
        %v2962 = vsel %vm2961, %v2958, %v2960
        %v2965 = vsel %vm303, %v2956, 0
        %2967 = vmatprep.subr.mxu0 0.0
        %2968 = vmatpush1.msra.mxu0 0.0
        %2969 = vmatprep.subr.mxu0 0.0
        %2970 = vmatpush1.msra.mxu0 0.0
        %2971 = vmatprep.subr.mxu0 0.0
        %2972 = vmatpush1.msra.mxu0 0.0
        %2973 = vmatprep.subr.mxu0 0.0
        %2974 = vmatpush1.msra.mxu0 0.0
        %2975 = vmatprep.subr.mxu0 0.0
        %2976 = vmatpush1.msra.mxu0 0.0
        %2977 = vmatprep.subr.mxu0 0.0
        %2978 = vmatpush1.msra.mxu0 0.0
        %2979 = vmatprep.subr.mxu0 0.0
        %2980 = vmatpush1.msra.mxu0 0.0
        %2981 = vmatprep.subr.mxu0 0.0
        %2982 = vmatpush1.msra.mxu0 0.0
        %2983 = vmatprep.subr.mxu0 0.0
        %2984 = vmatpush1.msra.mxu0 0.0
        %2985 = vmatprep.subr.mxu0 0.0
        %2986 = vmatpush1.msra.mxu0 0.0
        %2987 = vmatprep.subr.mxu0 0.0
        %2988 = vmatpush1.msra.mxu0 0.0
        %2989 = vmatprep.subr.mxu0 0.0
        %2990 = vmatpush1.msra.mxu0 0.0
        %2991 = vmatprep.subr.mxu0 0.0
        %2992 = vmatpush1.msra.mxu0 0.0
        %2993 = vmatprep.subr.mxu0 0.0
        %2994 = vmatpush1.msra.mxu0 0.0
        %2995 = vmatprep.subr.mxu0 0.0
        %2996 = vmatpush1.msra.mxu0 0.0
        %2997 = vmatprep.subr.mxu0 0.0
        %2998 = vmatpush1.msra.mxu0 %v2962
        %2999 = vmatprep.subr.mxu0 0.0
        %3000 = vmatpush2.msra.mxu0 0.0
        %3001 = vmatprep.subr.mxu0 0.0
        %3002 = vmatpush2.msra.mxu0 0.0
        %3003 = vmatprep.subr.mxu0 0.0
        %3004 = vmatpush2.msra.mxu0 0.0
        %3005 = vmatprep.subr.mxu0 0.0
        %3006 = vmatpush2.msra.mxu0 0.0
        %3007 = vmatprep.subr.mxu0 0.0
        %3008 = vmatpush2.msra.mxu0 0.0
        %3009 = vmatprep.subr.mxu0 0.0
        %3010 = vmatpush2.msra.mxu0 0.0
        %3011 = vmatprep.subr.mxu0 0.0
        %3012 = vmatpush2.msra.mxu0 0.0
        %3013 = vmatprep.subr.mxu0 0.0
        %3014 = vmatpush2.msra.mxu0 0.0
        %3015 = vmatprep.subr.mxu0 0.0
        %3016 = vmatpush2.msra.mxu0 0.0
        %3017 = vmatprep.subr.mxu0 0.0
        %3018 = vmatpush2.msra.mxu0 0.0
        %3019 = vmatprep.subr.mxu0 0.0
        %3020 = vmatpush2.msra.mxu0 0.0
        %3021 = vmatprep.subr.mxu0 0.0
        %3022 = vmatpush2.msra.mxu0 0.0
        %3023 = vmatprep.subr.mxu0 0.0
        %3024 = vmatpush2.msra.mxu0 0.0
        %3025 = vmatprep.subr.mxu0 0.0
        %3026 = vmatpush2.msra.mxu0 0.0
        %3027 = vmatprep.subr.mxu0 0.0
        %3028 = vmatpush2.msra.mxu0 0.0
        %3029 = vmatprep.subr.mxu0 0.0
        %3030 = vmatpush2.msra.mxu0 0.0
        %3031 = vmatprep.mubr.f32.mxu0 0.0
        %3032 = vmatmul.mubr.f32.gmra.mxu0 %v2965
        %v3033 = vpop.f32.mrf.mxu0
        %v3034 = vadd.f32 0.0, %v3033
        %v3035 = vpop.f32.mrf.mxu0
        %3036 = vdwg.mxu0
        %v3037 = vadd.f32 %v2954, %v3034
        %s3038 = scalar_lea.vmem %s2, 256
        %v3039 = vld [vmem:[%s3038] sm:$0xff]
        %3040 = vrot.lane.b32.xlu0 %v388, 96
        %v3041 = vpop.permute.xlu0 %3040
        %3042 = vrot.lane.b32.xlu0 %v389, 96
        %v3043 = vpop.permute.xlu0 %3042
        %vm3044 = vcmask 785408
        %v3045 = vsel %vm3044, %v3041, %v3043
        %v3048 = vsel %vm303, %v3039, 0
        %3050 = vmatprep.subr.mxu0 0.0
        %3051 = vmatpush1.msra.mxu0 0.0
        %3052 = vmatprep.subr.mxu0 0.0
        %3053 = vmatpush1.msra.mxu0 0.0
        %3054 = vmatprep.subr.mxu0 0.0
        %3055 = vmatpush1.msra.mxu0 0.0
        %3056 = vmatprep.subr.mxu0 0.0
        %3057 = vmatpush1.msra.mxu0 0.0
        %3058 = vmatprep.subr.mxu0 0.0
        %3059 = vmatpush1.msra.mxu0 0.0
        %3060 = vmatprep.subr.mxu0 0.0
        %3061 = vmatpush1.msra.mxu0 0.0
        %3062 = vmatprep.subr.mxu0 0.0
        %3063 = vmatpush1.msra.mxu0 0.0
        %3064 = vmatprep.subr.mxu0 0.0
        %3065 = vmatpush1.msra.mxu0 0.0
        %3066 = vmatprep.subr.mxu0 0.0
        %3067 = vmatpush1.msra.mxu0 0.0
        %3068 = vmatprep.subr.mxu0 0.0
        %3069 = vmatpush1.msra.mxu0 0.0
        %3070 = vmatprep.subr.mxu0 0.0
        %3071 = vmatpush1.msra.mxu0 0.0
        %3072 = vmatprep.subr.mxu0 0.0
        %3073 = vmatpush1.msra.mxu0 0.0
        %3074 = vmatprep.subr.mxu0 0.0
        %3075 = vmatpush1.msra.mxu0 0.0
        %3076 = vmatprep.subr.mxu0 0.0
        %3077 = vmatpush1.msra.mxu0 0.0
        %3078 = vmatprep.subr.mxu0 0.0
        %3079 = vmatpush1.msra.mxu0 0.0
        %3080 = vmatprep.subr.mxu0 0.0
        %3081 = vmatpush1.msra.mxu0 %v3045
        %3082 = vmatprep.subr.mxu0 0.0
        %3083 = vmatpush2.msra.mxu0 0.0
        %3084 = vmatprep.subr.mxu0 0.0
        %3085 = vmatpush2.msra.mxu0 0.0
        %3086 = vmatprep.subr.mxu0 0.0
        %3087 = vmatpush2.msra.mxu0 0.0
        %3088 = vmatprep.subr.mxu0 0.0
        %3089 = vmatpush2.msra.mxu0 0.0
        %3090 = vmatprep.subr.mxu0 0.0
        %3091 = vmatpush2.msra.mxu0 0.0
        %3092 = vmatprep.subr.mxu0 0.0
        %3093 = vmatpush2.msra.mxu0 0.0
        %3094 = vmatprep.subr.mxu0 0.0
        %3095 = vmatpush2.msra.mxu0 0.0
        %3096 = vmatprep.subr.mxu0 0.0
        %3097 = vmatpush2.msra.mxu0 0.0
        %3098 = vmatprep.subr.mxu0 0.0
        %3099 = vmatpush2.msra.mxu0 0.0
        %3100 = vmatprep.subr.mxu0 0.0
        %3101 = vmatpush2.msra.mxu0 0.0
        %3102 = vmatprep.subr.mxu0 0.0
        %3103 = vmatpush2.msra.mxu0 0.0
        %3104 = vmatprep.subr.mxu0 0.0
        %3105 = vmatpush2.msra.mxu0 0.0
        %3106 = vmatprep.subr.mxu0 0.0
        %3107 = vmatpush2.msra.mxu0 0.0
        %3108 = vmatprep.subr.mxu0 0.0
        %3109 = vmatpush2.msra.mxu0 0.0
        %3110 = vmatprep.subr.mxu0 0.0
        %3111 = vmatpush2.msra.mxu0 0.0
        %3112 = vmatprep.subr.mxu0 0.0
        %3113 = vmatpush2.msra.mxu0 0.0
        %3114 = vmatprep.mubr.f32.mxu0 0.0
        %3115 = vmatmul.mubr.f32.gmra.mxu0 %v3048
        %v3116 = vpop.f32.mrf.mxu0
        %v3117 = vadd.f32 0.0, %v3116
        %v3118 = vpop.f32.mrf.mxu0
        %3119 = vdwg.mxu0
        %v3120 = vadd.f32 %v3037, %v3117
        %s3121 = scalar_lea.vmem %s2, 264
        %v3122 = vld [vmem:[%s3121] sm:$0xff]
        %3123 = vrot.lane.b32.xlu0 %v388, 95
        %v3124 = vpop.permute.xlu0 %3123
        %3125 = vrot.lane.b32.xlu0 %v389, 95
        %v3126 = vpop.permute.xlu0 %3125
        %vm3127 = vcmask 777216
        %v3128 = vsel %vm3127, %v3124, %v3126
        %v3131 = vsel %vm303, %v3122, 0
        %3133 = vmatprep.subr.mxu0 0.0
        %3134 = vmatpush1.msra.mxu0 0.0
        %3135 = vmatprep.subr.mxu0 0.0
        %3136 = vmatpush1.msra.mxu0 0.0
        %3137 = vmatprep.subr.mxu0 0.0
        %3138 = vmatpush1.msra.mxu0 0.0
        %3139 = vmatprep.subr.mxu0 0.0
        %3140 = vmatpush1.msra.mxu0 0.0
        %3141 = vmatprep.subr.mxu0 0.0
        %3142 = vmatpush1.msra.mxu0 0.0
        %3143 = vmatprep.subr.mxu0 0.0
        %3144 = vmatpush1.msra.mxu0 0.0
        %3145 = vmatprep.subr.mxu0 0.0
        %3146 = vmatpush1.msra.mxu0 0.0
        %3147 = vmatprep.subr.mxu0 0.0
        %3148 = vmatpush1.msra.mxu0 0.0
        %3149 = vmatprep.subr.mxu0 0.0
        %3150 = vmatpush1.msra.mxu0 0.0
        %3151 = vmatprep.subr.mxu0 0.0
        %3152 = vmatpush1.msra.mxu0 0.0
        %3153 = vmatprep.subr.mxu0 0.0
        %3154 = vmatpush1.msra.mxu0 0.0
        %3155 = vmatprep.subr.mxu0 0.0
        %3156 = vmatpush1.msra.mxu0 0.0
        %3157 = vmatprep.subr.mxu0 0.0
        %3158 = vmatpush1.msra.mxu0 0.0
        %3159 = vmatprep.subr.mxu0 0.0
        %3160 = vmatpush1.msra.mxu0 0.0
        %3161 = vmatprep.subr.mxu0 0.0
        %3162 = vmatpush1.msra.mxu0 0.0
        %3163 = vmatprep.subr.mxu0 0.0
        %3164 = vmatpush1.msra.mxu0 %v3128
        %3165 = vmatprep.subr.mxu0 0.0
        %3166 = vmatpush2.msra.mxu0 0.0
        %3167 = vmatprep.subr.mxu0 0.0
        %3168 = vmatpush2.msra.mxu0 0.0
        %3169 = vmatprep.subr.mxu0 0.0
        %3170 = vmatpush2.msra.mxu0 0.0
        %3171 = vmatprep.subr.mxu0 0.0
        %3172 = vmatpush2.msra.mxu0 0.0
        %3173 = vmatprep.subr.mxu0 0.0
        %3174 = vmatpush2.msra.mxu0 0.0
        %3175 = vmatprep.subr.mxu0 0.0
        %3176 = vmatpush2.msra.mxu0 0.0
        %3177 = vmatprep.subr.mxu0 0.0
        %3178 = vmatpush2.msra.mxu0 0.0
        %3179 = vmatprep.subr.mxu0 0.0
        %3180 = vmatpush2.msra.mxu0 0.0
        %3181 = vmatprep.subr.mxu0 0.0
        %3182 = vmatpush2.msra.mxu0 0.0
        %3183 = vmatprep.subr.mxu0 0.0
        %3184 = vmatpush2.msra.mxu0 0.0
        %3185 = vmatprep.subr.mxu0 0.0
        %3186 = vmatpush2.msra.mxu0 0.0
        %3187 = vmatprep.subr.mxu0 0.0
        %3188 = vmatpush2.msra.mxu0 0.0
        %3189 = vmatprep.subr.mxu0 0.0
        %3190 = vmatpush2.msra.mxu0 0.0
        %3191 = vmatprep.subr.mxu0 0.0
        %3192 = vmatpush2.msra.mxu0 0.0
        %3193 = vmatprep.subr.mxu0 0.0
        %3194 = vmatpush2.msra.mxu0 0.0
        %3195 = vmatprep.subr.mxu0 0.0
        %3196 = vmatpush2.msra.mxu0 0.0
        %3197 = vmatprep.mubr.f32.mxu0 0.0
        %3198 = vmatmul.mubr.f32.gmra.mxu0 %v3131
        %v3199 = vpop.f32.mrf.mxu0
        %v3200 = vadd.f32 0.0, %v3199
        %v3201 = vpop.f32.mrf.mxu0
        %3202 = vdwg.mxu0
        %v3203 = vadd.f32 %v3120, %v3200
        %s3204 = scalar_lea.vmem %s2, 272
        %v3205 = vld [vmem:[%s3204] sm:$0xff]
        %3206 = vrot.lane.b32.xlu0 %v388, 94
        %v3207 = vpop.permute.xlu0 %3206
        %3208 = vrot.lane.b32.xlu0 %v389, 94
        %v3209 = vpop.permute.xlu0 %3208
        %vm3210 = vcmask 769024
        %v3211 = vsel %vm3210, %v3207, %v3209
        %v3214 = vsel %vm303, %v3205, 0
        %3216 = vmatprep.subr.mxu0 0.0
        %3217 = vmatpush1.msra.mxu0 0.0
        %3218 = vmatprep.subr.mxu0 0.0
        %3219 = vmatpush1.msra.mxu0 0.0
        %3220 = vmatprep.subr.mxu0 0.0
        %3221 = vmatpush1.msra.mxu0 0.0
        %3222 = vmatprep.subr.mxu0 0.0
        %3223 = vmatpush1.msra.mxu0 0.0
        %3224 = vmatprep.subr.mxu0 0.0
        %3225 = vmatpush1.msra.mxu0 0.0
        %3226 = vmatprep.subr.mxu0 0.0
        %3227 = vmatpush1.msra.mxu0 0.0
        %3228 = vmatprep.subr.mxu0 0.0
        %3229 = vmatpush1.msra.mxu0 0.0
        %3230 = vmatprep.subr.mxu0 0.0
        %3231 = vmatpush1.msra.mxu0 0.0
        %3232 = vmatprep.subr.mxu0 0.0
        %3233 = vmatpush1.msra.mxu0 0.0
        %3234 = vmatprep.subr.mxu0 0.0
        %3235 = vmatpush1.msra.mxu0 0.0
        %3236 = vmatprep.subr.mxu0 0.0
        %3237 = vmatpush1.msra.mxu0 0.0
        %3238 = vmatprep.subr.mxu0 0.0
        %3239 = vmatpush1.msra.mxu0 0.0
        %3240 = vmatprep.subr.mxu0 0.0
        %3241 = vmatpush1.msra.mxu0 0.0
        %3242 = vmatprep.subr.mxu0 0.0
        %3243 = vmatpush1.msra.mxu0 0.0
        %3244 = vmatprep.subr.mxu0 0.0
        %3245 = vmatpush1.msra.mxu0 0.0
        %3246 = vmatprep.subr.mxu0 0.0
        %3247 = vmatpush1.msra.mxu0 %v3211
        %3248 = vmatprep.subr.mxu0 0.0
        %3249 = vmatpush2.msra.mxu0 0.0
        %3250 = vmatprep.subr.mxu0 0.0
        %3251 = vmatpush2.msra.mxu0 0.0
        %3252 = vmatprep.subr.mxu0 0.0
        %3253 = vmatpush2.msra.mxu0 0.0
        %3254 = vmatprep.subr.mxu0 0.0
        %3255 = vmatpush2.msra.mxu0 0.0
        %3256 = vmatprep.subr.mxu0 0.0
        %3257 = vmatpush2.msra.mxu0 0.0
        %3258 = vmatprep.subr.mxu0 0.0
        %3259 = vmatpush2.msra.mxu0 0.0
        %3260 = vmatprep.subr.mxu0 0.0
        %3261 = vmatpush2.msra.mxu0 0.0
        %3262 = vmatprep.subr.mxu0 0.0
        %3263 = vmatpush2.msra.mxu0 0.0
        %3264 = vmatprep.subr.mxu0 0.0
        %3265 = vmatpush2.msra.mxu0 0.0
        %3266 = vmatprep.subr.mxu0 0.0
        %3267 = vmatpush2.msra.mxu0 0.0
        %3268 = vmatprep.subr.mxu0 0.0
        %3269 = vmatpush2.msra.mxu0 0.0
        %3270 = vmatprep.subr.mxu0 0.0
        %3271 = vmatpush2.msra.mxu0 0.0
        %3272 = vmatprep.subr.mxu0 0.0
        %3273 = vmatpush2.msra.mxu0 0.0
        %3274 = vmatprep.subr.mxu0 0.0
        %3275 = vmatpush2.msra.mxu0 0.0
        %3276 = vmatprep.subr.mxu0 0.0
        %3277 = vmatpush2.msra.mxu0 0.0
        %3278 = vmatprep.subr.mxu0 0.0
        %3279 = vmatpush2.msra.mxu0 0.0
        %3280 = vmatprep.mubr.f32.mxu0 0.0
        %3281 = vmatmul.mubr.f32.gmra.mxu0 %v3214
        %v3282 = vpop.f32.mrf.mxu0
        %v3283 = vadd.f32 0.0, %v3282
        %v3284 = vpop.f32.mrf.mxu0
        %3285 = vdwg.mxu0
        %v3286 = vadd.f32 %v3203, %v3283
        %s3287 = scalar_lea.vmem %s2, 280
        %v3288 = vld [vmem:[%s3287] sm:$0xff]
        %3289 = vrot.lane.b32.xlu0 %v388, 93
        %v3290 = vpop.permute.xlu0 %3289
        %3291 = vrot.lane.b32.xlu0 %v389, 93
        %v3292 = vpop.permute.xlu0 %3291
        %vm3293 = vcmask 760832
        %v3294 = vsel %vm3293, %v3290, %v3292
        %v3297 = vsel %vm303, %v3288, 0
        %3299 = vmatprep.subr.mxu0 0.0
        %3300 = vmatpush1.msra.mxu0 0.0
        %3301 = vmatprep.subr.mxu0 0.0
        %3302 = vmatpush1.msra.mxu0 0.0
        %3303 = vmatprep.subr.mxu0 0.0
        %3304 = vmatpush1.msra.mxu0 0.0
        %3305 = vmatprep.subr.mxu0 0.0
        %3306 = vmatpush1.msra.mxu0 0.0
        %3307 = vmatprep.subr.mxu0 0.0
        %3308 = vmatpush1.msra.mxu0 0.0
        %3309 = vmatprep.subr.mxu0 0.0
        %3310 = vmatpush1.msra.mxu0 0.0
        %3311 = vmatprep.subr.mxu0 0.0
        %3312 = vmatpush1.msra.mxu0 0.0
        %3313 = vmatprep.subr.mxu0 0.0
        %3314 = vmatpush1.msra.mxu0 0.0
        %3315 = vmatprep.subr.mxu0 0.0
        %3316 = vmatpush1.msra.mxu0 0.0
        %3317 = vmatprep.subr.mxu0 0.0
        %3318 = vmatpush1.msra.mxu0 0.0
        %3319 = vmatprep.subr.mxu0 0.0
        %3320 = vmatpush1.msra.mxu0 0.0
        %3321 = vmatprep.subr.mxu0 0.0
        %3322 = vmatpush1.msra.mxu0 0.0
        %3323 = vmatprep.subr.mxu0 0.0
        %3324 = vmatpush1.msra.mxu0 0.0
        %3325 = vmatprep.subr.mxu0 0.0
        %3326 = vmatpush1.msra.mxu0 0.0
        %3327 = vmatprep.subr.mxu0 0.0
        %3328 = vmatpush1.msra.mxu0 0.0
        %3329 = vmatprep.subr.mxu0 0.0
        %3330 = vmatpush1.msra.mxu0 %v3294
        %3331 = vmatprep.subr.mxu0 0.0
        %3332 = vmatpush2.msra.mxu0 0.0
        %3333 = vmatprep.subr.mxu0 0.0
        %3334 = vmatpush2.msra.mxu0 0.0
        %3335 = vmatprep.subr.mxu0 0.0
        %3336 = vmatpush2.msra.mxu0 0.0
        %3337 = vmatprep.subr.mxu0 0.0
        %3338 = vmatpush2.msra.mxu0 0.0
        %3339 = vmatprep.subr.mxu0 0.0
        %3340 = vmatpush2.msra.mxu0 0.0
        %3341 = vmatprep.subr.mxu0 0.0
        %3342 = vmatpush2.msra.mxu0 0.0
        %3343 = vmatprep.subr.mxu0 0.0
        %3344 = vmatpush2.msra.mxu0 0.0
        %3345 = vmatprep.subr.mxu0 0.0
        %3346 = vmatpush2.msra.mxu0 0.0
        %3347 = vmatprep.subr.mxu0 0.0
        %3348 = vmatpush2.msra.mxu0 0.0
        %3349 = vmatprep.subr.mxu0 0.0
        %3350 = vmatpush2.msra.mxu0 0.0
        %3351 = vmatprep.subr.mxu0 0.0
        %3352 = vmatpush2.msra.mxu0 0.0
        %3353 = vmatprep.subr.mxu0 0.0
        %3354 = vmatpush2.msra.mxu0 0.0
        %3355 = vmatprep.subr.mxu0 0.0
        %3356 = vmatpush2.msra.mxu0 0.0
        %3357 = vmatprep.subr.mxu0 0.0
        %3358 = vmatpush2.msra.mxu0 0.0
        %3359 = vmatprep.subr.mxu0 0.0
        %3360 = vmatpush2.msra.mxu0 0.0
        %3361 = vmatprep.subr.mxu0 0.0
        %3362 = vmatpush2.msra.mxu0 0.0
        %3363 = vmatprep.mubr.f32.mxu0 0.0
        %3364 = vmatmul.mubr.f32.gmra.mxu0 %v3297
        %v3365 = vpop.f32.mrf.mxu0
        %v3366 = vadd.f32 0.0, %v3365
        %v3367 = vpop.f32.mrf.mxu0
        %3368 = vdwg.mxu0
        %v3369 = vadd.f32 %v3286, %v3366
        %s3370 = scalar_lea.vmem %s2, 288
        %v3371 = vld [vmem:[%s3370] sm:$0xff]
        %3372 = vrot.lane.b32.xlu0 %v388, 92
        %v3373 = vpop.permute.xlu0 %3372
        %3374 = vrot.lane.b32.xlu0 %v389, 92
        %v3375 = vpop.permute.xlu0 %3374
        %vm3376 = vcmask 752640
        %v3377 = vsel %vm3376, %v3373, %v3375
        %v3380 = vsel %vm303, %v3371, 0
        %3382 = vmatprep.subr.mxu0 0.0
        %3383 = vmatpush1.msra.mxu0 0.0
        %3384 = vmatprep.subr.mxu0 0.0
        %3385 = vmatpush1.msra.mxu0 0.0
        %3386 = vmatprep.subr.mxu0 0.0
        %3387 = vmatpush1.msra.mxu0 0.0
        %3388 = vmatprep.subr.mxu0 0.0
        %3389 = vmatpush1.msra.mxu0 0.0
        %3390 = vmatprep.subr.mxu0 0.0
        %3391 = vmatpush1.msra.mxu0 0.0
        %3392 = vmatprep.subr.mxu0 0.0
        %3393 = vmatpush1.msra.mxu0 0.0
        %3394 = vmatprep.subr.mxu0 0.0
        %3395 = vmatpush1.msra.mxu0 0.0
        %3396 = vmatprep.subr.mxu0 0.0
        %3397 = vmatpush1.msra.mxu0 0.0
        %3398 = vmatprep.subr.mxu0 0.0
        %3399 = vmatpush1.msra.mxu0 0.0
        %3400 = vmatprep.subr.mxu0 0.0
        %3401 = vmatpush1.msra.mxu0 0.0
        %3402 = vmatprep.subr.mxu0 0.0
        %3403 = vmatpush1.msra.mxu0 0.0
        %3404 = vmatprep.subr.mxu0 0.0
        %3405 = vmatpush1.msra.mxu0 0.0
        %3406 = vmatprep.subr.mxu0 0.0
        %3407 = vmatpush1.msra.mxu0 0.0
        %3408 = vmatprep.subr.mxu0 0.0
        %3409 = vmatpush1.msra.mxu0 0.0
        %3410 = vmatprep.subr.mxu0 0.0
        %3411 = vmatpush1.msra.mxu0 0.0
        %3412 = vmatprep.subr.mxu0 0.0
        %3413 = vmatpush1.msra.mxu0 %v3377
        %3414 = vmatprep.subr.mxu0 0.0
        %3415 = vmatpush2.msra.mxu0 0.0
        %3416 = vmatprep.subr.mxu0 0.0
        %3417 = vmatpush2.msra.mxu0 0.0
        %3418 = vmatprep.subr.mxu0 0.0
        %3419 = vmatpush2.msra.mxu0 0.0
        %3420 = vmatprep.subr.mxu0 0.0
        %3421 = vmatpush2.msra.mxu0 0.0
        %3422 = vmatprep.subr.mxu0 0.0
        %3423 = vmatpush2.msra.mxu0 0.0
        %3424 = vmatprep.subr.mxu0 0.0
        %3425 = vmatpush2.msra.mxu0 0.0
        %3426 = vmatprep.subr.mxu0 0.0
        %3427 = vmatpush2.msra.mxu0 0.0
        %3428 = vmatprep.subr.mxu0 0.0
        %3429 = vmatpush2.msra.mxu0 0.0
        %3430 = vmatprep.subr.mxu0 0.0
        %3431 = vmatpush2.msra.mxu0 0.0
        %3432 = vmatprep.subr.mxu0 0.0
        %3433 = vmatpush2.msra.mxu0 0.0
        %3434 = vmatprep.subr.mxu0 0.0
        %3435 = vmatpush2.msra.mxu0 0.0
        %3436 = vmatprep.subr.mxu0 0.0
        %3437 = vmatpush2.msra.mxu0 0.0
        %3438 = vmatprep.subr.mxu0 0.0
        %3439 = vmatpush2.msra.mxu0 0.0
        %3440 = vmatprep.subr.mxu0 0.0
        %3441 = vmatpush2.msra.mxu0 0.0
        %3442 = vmatprep.subr.mxu0 0.0
        %3443 = vmatpush2.msra.mxu0 0.0
        %3444 = vmatprep.subr.mxu0 0.0
        %3445 = vmatpush2.msra.mxu0 0.0
        %3446 = vmatprep.mubr.f32.mxu0 0.0
        %3447 = vmatmul.mubr.f32.gmra.mxu0 %v3380
        %v3448 = vpop.f32.mrf.mxu0
        %v3449 = vadd.f32 0.0, %v3448
        %v3450 = vpop.f32.mrf.mxu0
        %3451 = vdwg.mxu0
        %v3452 = vadd.f32 %v3369, %v3449
        %s3453 = scalar_lea.vmem %s2, 296
        %v3454 = vld [vmem:[%s3453] sm:$0xff]
        %3455 = vrot.lane.b32.xlu0 %v388, 91
        %v3456 = vpop.permute.xlu0 %3455
        %3457 = vrot.lane.b32.xlu0 %v389, 91
        %v3458 = vpop.permute.xlu0 %3457
        %vm3459 = vcmask 744448
        %v3460 = vsel %vm3459, %v3456, %v3458
        %v3463 = vsel %vm303, %v3454, 0
        %3465 = vmatprep.subr.mxu0 0.0
        %3466 = vmatpush1.msra.mxu0 0.0
        %3467 = vmatprep.subr.mxu0 0.0
        %3468 = vmatpush1.msra.mxu0 0.0
        %3469 = vmatprep.subr.mxu0 0.0
        %3470 = vmatpush1.msra.mxu0 0.0
        %3471 = vmatprep.subr.mxu0 0.0
        %3472 = vmatpush1.msra.mxu0 0.0
        %3473 = vmatprep.subr.mxu0 0.0
        %3474 = vmatpush1.msra.mxu0 0.0
        %3475 = vmatprep.subr.mxu0 0.0
        %3476 = vmatpush1.msra.mxu0 0.0
        %3477 = vmatprep.subr.mxu0 0.0
        %3478 = vmatpush1.msra.mxu0 0.0
        %3479 = vmatprep.subr.mxu0 0.0
        %3480 = vmatpush1.msra.mxu0 0.0
        %3481 = vmatprep.subr.mxu0 0.0
        %3482 = vmatpush1.msra.mxu0 0.0
        %3483 = vmatprep.subr.mxu0 0.0
        %3484 = vmatpush1.msra.mxu0 0.0
        %3485 = vmatprep.subr.mxu0 0.0
        %3486 = vmatpush1.msra.mxu0 0.0
        %3487 = vmatprep.subr.mxu0 0.0
        %3488 = vmatpush1.msra.mxu0 0.0
        %3489 = vmatprep.subr.mxu0 0.0
        %3490 = vmatpush1.msra.mxu0 0.0
        %3491 = vmatprep.subr.mxu0 0.0
        %3492 = vmatpush1.msra.mxu0 0.0
        %3493 = vmatprep.subr.mxu0 0.0
        %3494 = vmatpush1.msra.mxu0 0.0
        %3495 = vmatprep.subr.mxu0 0.0
        %3496 = vmatpush1.msra.mxu0 %v3460
        %3497 = vmatprep.subr.mxu0 0.0
        %3498 = vmatpush2.msra.mxu0 0.0
        %3499 = vmatprep.subr.mxu0 0.0
        %3500 = vmatpush2.msra.mxu0 0.0
        %3501 = vmatprep.subr.mxu0 0.0
        %3502 = vmatpush2.msra.mxu0 0.0
        %3503 = vmatprep.subr.mxu0 0.0
        %3504 = vmatpush2.msra.mxu0 0.0
        %3505 = vmatprep.subr.mxu0 0.0
        %3506 = vmatpush2.msra.mxu0 0.0
        %3507 = vmatprep.subr.mxu0 0.0
        %3508 = vmatpush2.msra.mxu0 0.0
        %3509 = vmatprep.subr.mxu0 0.0
        %3510 = vmatpush2.msra.mxu0 0.0
        %3511 = vmatprep.subr.mxu0 0.0
        %3512 = vmatpush2.msra.mxu0 0.0
        %3513 = vmatprep.subr.mxu0 0.0
        %3514 = vmatpush2.msra.mxu0 0.0
        %3515 = vmatprep.subr.mxu0 0.0
        %3516 = vmatpush2.msra.mxu0 0.0
        %3517 = vmatprep.subr.mxu0 0.0
        %3518 = vmatpush2.msra.mxu0 0.0
        %3519 = vmatprep.subr.mxu0 0.0
        %3520 = vmatpush2.msra.mxu0 0.0
        %3521 = vmatprep.subr.mxu0 0.0
        %3522 = vmatpush2.msra.mxu0 0.0
        %3523 = vmatprep.subr.mxu0 0.0
        %3524 = vmatpush2.msra.mxu0 0.0
        %3525 = vmatprep.subr.mxu0 0.0
        %3526 = vmatpush2.msra.mxu0 0.0
        %3527 = vmatprep.subr.mxu0 0.0
        %3528 = vmatpush2.msra.mxu0 0.0
        %3529 = vmatprep.mubr.f32.mxu0 0.0
        %3530 = vmatmul.mubr.f32.gmra.mxu0 %v3463
        %v3531 = vpop.f32.mrf.mxu0
        %v3532 = vadd.f32 0.0, %v3531
        %v3533 = vpop.f32.mrf.mxu0
        %3534 = vdwg.mxu0
        %v3535 = vadd.f32 %v3452, %v3532
        %s3536 = scalar_lea.vmem %s2, 304
        %v3537 = vld [vmem:[%s3536] sm:$0xff]
        %3538 = vrot.lane.b32.xlu0 %v388, 90
        %v3539 = vpop.permute.xlu0 %3538
        %3540 = vrot.lane.b32.xlu0 %v389, 90
        %v3541 = vpop.permute.xlu0 %3540
        %vm3542 = vcmask 736256
        %v3543 = vsel %vm3542, %v3539, %v3541
        %v3546 = vsel %vm303, %v3537, 0
        %3548 = vmatprep.subr.mxu0 0.0
        %3549 = vmatpush1.msra.mxu0 0.0
        %3550 = vmatprep.subr.mxu0 0.0
        %3551 = vmatpush1.msra.mxu0 0.0
        %3552 = vmatprep.subr.mxu0 0.0
        %3553 = vmatpush1.msra.mxu0 0.0
        %3554 = vmatprep.subr.mxu0 0.0
        %3555 = vmatpush1.msra.mxu0 0.0
        %3556 = vmatprep.subr.mxu0 0.0
        %3557 = vmatpush1.msra.mxu0 0.0
        %3558 = vmatprep.subr.mxu0 0.0
        %3559 = vmatpush1.msra.mxu0 0.0
        %3560 = vmatprep.subr.mxu0 0.0
        %3561 = vmatpush1.msra.mxu0 0.0
        %3562 = vmatprep.subr.mxu0 0.0
        %3563 = vmatpush1.msra.mxu0 0.0
        %3564 = vmatprep.subr.mxu0 0.0
        %3565 = vmatpush1.msra.mxu0 0.0
        %3566 = vmatprep.subr.mxu0 0.0
        %3567 = vmatpush1.msra.mxu0 0.0
        %3568 = vmatprep.subr.mxu0 0.0
        %3569 = vmatpush1.msra.mxu0 0.0
        %3570 = vmatprep.subr.mxu0 0.0
        %3571 = vmatpush1.msra.mxu0 0.0
        %3572 = vmatprep.subr.mxu0 0.0
        %3573 = vmatpush1.msra.mxu0 0.0
        %3574 = vmatprep.subr.mxu0 0.0
        %3575 = vmatpush1.msra.mxu0 0.0
        %3576 = vmatprep.subr.mxu0 0.0
        %3577 = vmatpush1.msra.mxu0 0.0
        %3578 = vmatprep.subr.mxu0 0.0
        %3579 = vmatpush1.msra.mxu0 %v3543
        %3580 = vmatprep.subr.mxu0 0.0
        %3581 = vmatpush2.msra.mxu0 0.0
        %3582 = vmatprep.subr.mxu0 0.0
        %3583 = vmatpush2.msra.mxu0 0.0
        %3584 = vmatprep.subr.mxu0 0.0
        %3585 = vmatpush2.msra.mxu0 0.0
        %3586 = vmatprep.subr.mxu0 0.0
        %3587 = vmatpush2.msra.mxu0 0.0
        %3588 = vmatprep.subr.mxu0 0.0
        %3589 = vmatpush2.msra.mxu0 0.0
        %3590 = vmatprep.subr.mxu0 0.0
        %3591 = vmatpush2.msra.mxu0 0.0
        %3592 = vmatprep.subr.mxu0 0.0
        %3593 = vmatpush2.msra.mxu0 0.0
        %3594 = vmatprep.subr.mxu0 0.0
        %3595 = vmatpush2.msra.mxu0 0.0
        %3596 = vmatprep.subr.mxu0 0.0
        %3597 = vmatpush2.msra.mxu0 0.0
        %3598 = vmatprep.subr.mxu0 0.0
        %3599 = vmatpush2.msra.mxu0 0.0
        %3600 = vmatprep.subr.mxu0 0.0
        %3601 = vmatpush2.msra.mxu0 0.0
        %3602 = vmatprep.subr.mxu0 0.0
        %3603 = vmatpush2.msra.mxu0 0.0
        %3604 = vmatprep.subr.mxu0 0.0
        %3605 = vmatpush2.msra.mxu0 0.0
        %3606 = vmatprep.subr.mxu0 0.0
        %3607 = vmatpush2.msra.mxu0 0.0
        %3608 = vmatprep.subr.mxu0 0.0
        %3609 = vmatpush2.msra.mxu0 0.0
        %3610 = vmatprep.subr.mxu0 0.0
        %3611 = vmatpush2.msra.mxu0 0.0
        %3612 = vmatprep.mubr.f32.mxu0 0.0
        %3613 = vmatmul.mubr.f32.gmra.mxu0 %v3546
        %v3614 = vpop.f32.mrf.mxu0
        %v3615 = vadd.f32 0.0, %v3614
        %v3616 = vpop.f32.mrf.mxu0
        %3617 = vdwg.mxu0
        %v3618 = vadd.f32 %v3535, %v3615
        %v3619 = vld [vmem:[%s3] sm:$0xff]
        %s3620 = scalar_lea.vmem %s3, 8
        %v3621 = vld [vmem:[%s3620] sm:$0xff]
        %v3623 = vsel %vm303, %v3621, 0
        %3625 = vmatprep.subr.mxu0 0.0
        %3626 = vmatpush1.msra.mxu0 0.0
        %3627 = vmatprep.subr.mxu0 0.0
        %3628 = vmatpush1.msra.mxu0 0.0
        %3629 = vmatprep.subr.mxu0 0.0
        %3630 = vmatpush1.msra.mxu0 0.0
        %3631 = vmatprep.subr.mxu0 0.0
        %3632 = vmatpush1.msra.mxu0 0.0
        %3633 = vmatprep.subr.mxu0 0.0
        %3634 = vmatpush1.msra.mxu0 0.0
        %3635 = vmatprep.subr.mxu0 0.0
        %3636 = vmatpush1.msra.mxu0 0.0
        %3637 = vmatprep.subr.mxu0 0.0
        %3638 = vmatpush1.msra.mxu0 0.0
        %3639 = vmatprep.subr.mxu0 0.0
        %3640 = vmatpush1.msra.mxu0 0.0
        %3641 = vmatprep.subr.mxu0 0.0
        %3642 = vmatpush1.msra.mxu0 0.0
        %3643 = vmatprep.subr.mxu0 0.0
        %3644 = vmatpush1.msra.mxu0 0.0
        %3645 = vmatprep.subr.mxu0 0.0
        %3646 = vmatpush1.msra.mxu0 0.0
        %3647 = vmatprep.subr.mxu0 0.0
        %3648 = vmatpush1.msra.mxu0 0.0
        %3649 = vmatprep.subr.mxu0 0.0
        %3650 = vmatpush1.msra.mxu0 0.0
        %3651 = vmatprep.subr.mxu0 0.0
        %3652 = vmatpush1.msra.mxu0 0.0
        %3653 = vmatprep.subr.mxu0 0.0
        %3654 = vmatpush1.msra.mxu0 0.0
        %3655 = vmatprep.subr.mxu0 0.0
        %3656 = vmatpush1.msra.mxu0 %v1302
        %3657 = vmatprep.subr.mxu0 0.0
        %3658 = vmatpush2.msra.mxu0 0.0
        %3659 = vmatprep.subr.mxu0 0.0
        %3660 = vmatpush2.msra.mxu0 0.0
        %3661 = vmatprep.subr.mxu0 0.0
        %3662 = vmatpush2.msra.mxu0 0.0
        %3663 = vmatprep.subr.mxu0 0.0
        %3664 = vmatpush2.msra.mxu0 0.0
        %3665 = vmatprep.subr.mxu0 0.0
        %3666 = vmatpush2.msra.mxu0 0.0
        %3667 = vmatprep.subr.mxu0 0.0
        %3668 = vmatpush2.msra.mxu0 0.0
        %3669 = vmatprep.subr.mxu0 0.0
        %3670 = vmatpush2.msra.mxu0 0.0
        %3671 = vmatprep.subr.mxu0 0.0
        %3672 = vmatpush2.msra.mxu0 0.0
        %3673 = vmatprep.subr.mxu0 0.0
        %3674 = vmatpush2.msra.mxu0 0.0
        %3675 = vmatprep.subr.mxu0 0.0
        %3676 = vmatpush2.msra.mxu0 0.0
        %3677 = vmatprep.subr.mxu0 0.0
        %3678 = vmatpush2.msra.mxu0 0.0
        %3679 = vmatprep.subr.mxu0 0.0
        %3680 = vmatpush2.msra.mxu0 0.0
        %3681 = vmatprep.subr.mxu0 0.0
        %3682 = vmatpush2.msra.mxu0 0.0
        %3683 = vmatprep.subr.mxu0 0.0
        %3684 = vmatpush2.msra.mxu0 0.0
        %3685 = vmatprep.subr.mxu0 0.0
        %3686 = vmatpush2.msra.mxu0 0.0
        %3687 = vmatprep.subr.mxu0 0.0
        %3688 = vmatpush2.msra.mxu0 0.0
        %3689 = vmatprep.mubr.f32.mxu0 0.0
        %3690 = vmatmul.mubr.f32.gmra.mxu0 %v3623
        %v3691 = vpop.f32.mrf.mxu0
        %v3692 = vadd.f32 0.0, %v3691
        %v3693 = vpop.f32.mrf.mxu0
        %3694 = vdwg.mxu0
        %v3696 = vsel %vm303, %v3619, 0
        %3698 = vmatprep.subr.mxu0 0.0
        %3699 = vmatpush1.msra.mxu0 0.0
        %3700 = vmatprep.subr.mxu0 0.0
        %3701 = vmatpush1.msra.mxu0 0.0
        %3702 = vmatprep.subr.mxu0 0.0
        %3703 = vmatpush1.msra.mxu0 0.0
        %3704 = vmatprep.subr.mxu0 0.0
        %3705 = vmatpush1.msra.mxu0 0.0
        %3706 = vmatprep.subr.mxu0 0.0
        %3707 = vmatpush1.msra.mxu0 0.0
        %3708 = vmatprep.subr.mxu0 0.0
        %3709 = vmatpush1.msra.mxu0 0.0
        %3710 = vmatprep.subr.mxu0 0.0
        %3711 = vmatpush1.msra.mxu0 0.0
        %3712 = vmatprep.subr.mxu0 0.0
        %3713 = vmatpush1.msra.mxu0 0.0
        %3714 = vmatprep.subr.mxu0 0.0
        %3715 = vmatpush1.msra.mxu0 0.0
        %3716 = vmatprep.subr.mxu0 0.0
        %3717 = vmatpush1.msra.mxu0 0.0
        %3718 = vmatprep.subr.mxu0 0.0
        %3719 = vmatpush1.msra.mxu0 0.0
        %3720 = vmatprep.subr.mxu0 0.0
        %3721 = vmatpush1.msra.mxu0 0.0
        %3722 = vmatprep.subr.mxu0 0.0
        %3723 = vmatpush1.msra.mxu0 0.0
        %3724 = vmatprep.subr.mxu0 0.0
        %3725 = vmatpush1.msra.mxu0 0.0
        %3726 = vmatprep.subr.mxu0 0.0
        %3727 = vmatpush1.msra.mxu0 0.0
        %3728 = vmatprep.subr.mxu0 0.0
        %3729 = vmatpush1.msra.mxu0 %v1219
        %3730 = vmatprep.subr.mxu0 0.0
        %3731 = vmatpush2.msra.mxu0 0.0
        %3732 = vmatprep.subr.mxu0 0.0
        %3733 = vmatpush2.msra.mxu0 0.0
        %3734 = vmatprep.subr.mxu0 0.0
        %3735 = vmatpush2.msra.mxu0 0.0
        %3736 = vmatprep.subr.mxu0 0.0
        %3737 = vmatpush2.msra.mxu0 0.0
        %3738 = vmatprep.subr.mxu0 0.0
        %3739 = vmatpush2.msra.mxu0 0.0
        %3740 = vmatprep.subr.mxu0 0.0
        %3741 = vmatpush2.msra.mxu0 0.0
        %3742 = vmatprep.subr.mxu0 0.0
        %3743 = vmatpush2.msra.mxu0 0.0
        %3744 = vmatprep.subr.mxu0 0.0
        %3745 = vmatpush2.msra.mxu0 0.0
        %3746 = vmatprep.subr.mxu0 0.0
        %3747 = vmatpush2.msra.mxu0 0.0
        %3748 = vmatprep.subr.mxu0 0.0
        %3749 = vmatpush2.msra.mxu0 0.0
        %3750 = vmatprep.subr.mxu0 0.0
        %3751 = vmatpush2.msra.mxu0 0.0
        %3752 = vmatprep.subr.mxu0 0.0
        %3753 = vmatpush2.msra.mxu0 0.0
        %3754 = vmatprep.subr.mxu0 0.0
        %3755 = vmatpush2.msra.mxu0 0.0
        %3756 = vmatprep.subr.mxu0 0.0
        %3757 = vmatpush2.msra.mxu0 0.0
        %3758 = vmatprep.subr.mxu0 0.0
        %3759 = vmatpush2.msra.mxu0 0.0
        %3760 = vmatprep.subr.mxu0 0.0
        %3761 = vmatpush2.msra.mxu0 0.0
        %3762 = vmatprep.mubr.f32.mxu0 0.0
        %3763 = vmatmul.mubr.f32.gmra.mxu0 %v3696
        %v3764 = vpop.f32.mrf.mxu0
        %v3765 = vadd.f32 %v3692, %v3764
        %v3766 = vpop.f32.mrf.mxu0
        %3767 = vdwg.mxu0
        %s3768 = scalar_lea.vmem %s3, 16
        %v3769 = vld [vmem:[%s3768] sm:$0xff]
        %v3771 = vsel %vm303, %v3769, 0
        %3773 = vmatprep.subr.mxu0 0.0
        %3774 = vmatpush1.msra.mxu0 0.0
        %3775 = vmatprep.subr.mxu0 0.0
        %3776 = vmatpush1.msra.mxu0 0.0
        %3777 = vmatprep.subr.mxu0 0.0
        %3778 = vmatpush1.msra.mxu0 0.0
        %3779 = vmatprep.subr.mxu0 0.0
        %3780 = vmatpush1.msra.mxu0 0.0
        %3781 = vmatprep.subr.mxu0 0.0
        %3782 = vmatpush1.msra.mxu0 0.0
        %3783 = vmatprep.subr.mxu0 0.0
        %3784 = vmatpush1.msra.mxu0 0.0
        %3785 = vmatprep.subr.mxu0 0.0
        %3786 = vmatpush1.msra.mxu0 0.0
        %3787 = vmatprep.subr.mxu0 0.0
        %3788 = vmatpush1.msra.mxu0 0.0
        %3789 = vmatprep.subr.mxu0 0.0
        %3790 = vmatpush1.msra.mxu0 0.0
        %3791 = vmatprep.subr.mxu0 0.0
        %3792 = vmatpush1.msra.mxu0 0.0
        %3793 = vmatprep.subr.mxu0 0.0
        %3794 = vmatpush1.msra.mxu0 0.0
        %3795 = vmatprep.subr.mxu0 0.0
        %3796 = vmatpush1.msra.mxu0 0.0
        %3797 = vmatprep.subr.mxu0 0.0
        %3798 = vmatpush1.msra.mxu0 0.0
        %3799 = vmatprep.subr.mxu0 0.0
        %3800 = vmatpush1.msra.mxu0 0.0
        %3801 = vmatprep.subr.mxu0 0.0
        %3802 = vmatpush1.msra.mxu0 0.0
        %3803 = vmatprep.subr.mxu0 0.0
        %3804 = vmatpush1.msra.mxu0 %v1385
        %3805 = vmatprep.subr.mxu0 0.0
        %3806 = vmatpush2.msra.mxu0 0.0
        %3807 = vmatprep.subr.mxu0 0.0
        %3808 = vmatpush2.msra.mxu0 0.0
        %3809 = vmatprep.subr.mxu0 0.0
        %3810 = vmatpush2.msra.mxu0 0.0
        %3811 = vmatprep.subr.mxu0 0.0
        %3812 = vmatpush2.msra.mxu0 0.0
        %3813 = vmatprep.subr.mxu0 0.0
        %3814 = vmatpush2.msra.mxu0 0.0
        %3815 = vmatprep.subr.mxu0 0.0
        %3816 = vmatpush2.msra.mxu0 0.0
        %3817 = vmatprep.subr.mxu0 0.0
        %3818 = vmatpush2.msra.mxu0 0.0
        %3819 = vmatprep.subr.mxu0 0.0
        %3820 = vmatpush2.msra.mxu0 0.0
        %3821 = vmatprep.subr.mxu0 0.0
        %3822 = vmatpush2.msra.mxu0 0.0
        %3823 = vmatprep.subr.mxu0 0.0
        %3824 = vmatpush2.msra.mxu0 0.0
        %3825 = vmatprep.subr.mxu0 0.0
        %3826 = vmatpush2.msra.mxu0 0.0
        %3827 = vmatprep.subr.mxu0 0.0
        %3828 = vmatpush2.msra.mxu0 0.0
        %3829 = vmatprep.subr.mxu0 0.0
        %3830 = vmatpush2.msra.mxu0 0.0
        %3831 = vmatprep.subr.mxu0 0.0
        %3832 = vmatpush2.msra.mxu0 0.0
        %3833 = vmatprep.subr.mxu0 0.0
        %3834 = vmatpush2.msra.mxu0 0.0
        %3835 = vmatprep.subr.mxu0 0.0
        %3836 = vmatpush2.msra.mxu0 0.0
        %3837 = vmatprep.mubr.f32.mxu0 0.0
        %3838 = vmatmul.mubr.f32.gmra.mxu0 %v3771
        %v3839 = vpop.f32.mrf.mxu0
        %v3840 = vadd.f32 0.0, %v3839
        %v3841 = vpop.f32.mrf.mxu0
        %3842 = vdwg.mxu0
        %v3843 = vadd.f32 %v3765, %v3840
        %s3844 = scalar_lea.vmem %s3, 24
        %v3845 = vld [vmem:[%s3844] sm:$0xff]
        %v3847 = vsel %vm303, %v3845, 0
        %3849 = vmatprep.subr.mxu0 0.0
        %3850 = vmatpush1.msra.mxu0 0.0
        %3851 = vmatprep.subr.mxu0 0.0
        %3852 = vmatpush1.msra.mxu0 0.0
        %3853 = vmatprep.subr.mxu0 0.0
        %3854 = vmatpush1.msra.mxu0 0.0
        %3855 = vmatprep.subr.mxu0 0.0
        %3856 = vmatpush1.msra.mxu0 0.0
        %3857 = vmatprep.subr.mxu0 0.0
        %3858 = vmatpush1.msra.mxu0 0.0
        %3859 = vmatprep.subr.mxu0 0.0
        %3860 = vmatpush1.msra.mxu0 0.0
        %3861 = vmatprep.subr.mxu0 0.0
        %3862 = vmatpush1.msra.mxu0 0.0
        %3863 = vmatprep.subr.mxu0 0.0
        %3864 = vmatpush1.msra.mxu0 0.0
        %3865 = vmatprep.subr.mxu0 0.0
        %3866 = vmatpush1.msra.mxu0 0.0
        %3867 = vmatprep.subr.mxu0 0.0
        %3868 = vmatpush1.msra.mxu0 0.0
        %3869 = vmatprep.subr.mxu0 0.0
        %3870 = vmatpush1.msra.mxu0 0.0
        %3871 = vmatprep.subr.mxu0 0.0
        %3872 = vmatpush1.msra.mxu0 0.0
        %3873 = vmatprep.subr.mxu0 0.0
        %3874 = vmatpush1.msra.mxu0 0.0
        %3875 = vmatprep.subr.mxu0 0.0
        %3876 = vmatpush1.msra.mxu0 0.0
        %3877 = vmatprep.subr.mxu0 0.0
        %3878 = vmatpush1.msra.mxu0 0.0
        %3879 = vmatprep.subr.mxu0 0.0
        %3880 = vmatpush1.msra.mxu0 %v1468
        %3881 = vmatprep.subr.mxu0 0.0
        %3882 = vmatpush2.msra.mxu0 0.0
        %3883 = vmatprep.subr.mxu0 0.0
        %3884 = vmatpush2.msra.mxu0 0.0
        %3885 = vmatprep.subr.mxu0 0.0
        %3886 = vmatpush2.msra.mxu0 0.0
        %3887 = vmatprep.subr.mxu0 0.0
        %3888 = vmatpush2.msra.mxu0 0.0
        %3889 = vmatprep.subr.mxu0 0.0
        %3890 = vmatpush2.msra.mxu0 0.0
        %3891 = vmatprep.subr.mxu0 0.0
        %3892 = vmatpush2.msra.mxu0 0.0
        %3893 = vmatprep.subr.mxu0 0.0
        %3894 = vmatpush2.msra.mxu0 0.0
        %3895 = vmatprep.subr.mxu0 0.0
        %3896 = vmatpush2.msra.mxu0 0.0
        %3897 = vmatprep.subr.mxu0 0.0
        %3898 = vmatpush2.msra.mxu0 0.0
        %3899 = vmatprep.subr.mxu0 0.0
        %3900 = vmatpush2.msra.mxu0 0.0
        %3901 = vmatprep.subr.mxu0 0.0
        %3902 = vmatpush2.msra.mxu0 0.0
        %3903 = vmatprep.subr.mxu0 0.0
        %3904 = vmatpush2.msra.mxu0 0.0
        %3905 = vmatprep.subr.mxu0 0.0
        %3906 = vmatpush2.msra.mxu0 0.0
        %3907 = vmatprep.subr.mxu0 0.0
        %3908 = vmatpush2.msra.mxu0 0.0
        %3909 = vmatprep.subr.mxu0 0.0
        %3910 = vmatpush2.msra.mxu0 0.0
        %3911 = vmatprep.subr.mxu0 0.0
        %3912 = vmatpush2.msra.mxu0 0.0
        %3913 = vmatprep.mubr.f32.mxu0 0.0
        %3914 = vmatmul.mubr.f32.gmra.mxu0 %v3847
        %v3915 = vpop.f32.mrf.mxu0
        %v3916 = vadd.f32 0.0, %v3915
        %v3917 = vpop.f32.mrf.mxu0
        %3918 = vdwg.mxu0
        %v3919 = vadd.f32 %v3843, %v3916
        %s3920 = scalar_lea.vmem %s3, 32
        %v3921 = vld [vmem:[%s3920] sm:$0xff]
        %v3923 = vsel %vm303, %v3921, 0
        %3925 = vmatprep.subr.mxu0 0.0
        %3926 = vmatpush1.msra.mxu0 0.0
        %3927 = vmatprep.subr.mxu0 0.0
        %3928 = vmatpush1.msra.mxu0 0.0
        %3929 = vmatprep.subr.mxu0 0.0
        %3930 = vmatpush1.msra.mxu0 0.0
        %3931 = vmatprep.subr.mxu0 0.0
        %3932 = vmatpush1.msra.mxu0 0.0
        %3933 = vmatprep.subr.mxu0 0.0
        %3934 = vmatpush1.msra.mxu0 0.0
        %3935 = vmatprep.subr.mxu0 0.0
        %3936 = vmatpush1.msra.mxu0 0.0
        %3937 = vmatprep.subr.mxu0 0.0
        %3938 = vmatpush1.msra.mxu0 0.0
        %3939 = vmatprep.subr.mxu0 0.0
        %3940 = vmatpush1.msra.mxu0 0.0
        %3941 = vmatprep.subr.mxu0 0.0
        %3942 = vmatpush1.msra.mxu0 0.0
        %3943 = vmatprep.subr.mxu0 0.0
        %3944 = vmatpush1.msra.mxu0 0.0
        %3945 = vmatprep.subr.mxu0 0.0
        %3946 = vmatpush1.msra.mxu0 0.0
        %3947 = vmatprep.subr.mxu0 0.0
        %3948 = vmatpush1.msra.mxu0 0.0
        %3949 = vmatprep.subr.mxu0 0.0
        %3950 = vmatpush1.msra.mxu0 0.0
        %3951 = vmatprep.subr.mxu0 0.0
        %3952 = vmatpush1.msra.mxu0 0.0
        %3953 = vmatprep.subr.mxu0 0.0
        %3954 = vmatpush1.msra.mxu0 0.0
        %3955 = vmatprep.subr.mxu0 0.0
        %3956 = vmatpush1.msra.mxu0 %v1551
        %3957 = vmatprep.subr.mxu0 0.0
        %3958 = vmatpush2.msra.mxu0 0.0
        %3959 = vmatprep.subr.mxu0 0.0
        %3960 = vmatpush2.msra.mxu0 0.0
        %3961 = vmatprep.subr.mxu0 0.0
        %3962 = vmatpush2.msra.mxu0 0.0
        %3963 = vmatprep.subr.mxu0 0.0
        %3964 = vmatpush2.msra.mxu0 0.0
        %3965 = vmatprep.subr.mxu0 0.0
        %3966 = vmatpush2.msra.mxu0 0.0
        %3967 = vmatprep.subr.mxu0 0.0
        %3968 = vmatpush2.msra.mxu0 0.0
        %3969 = vmatprep.subr.mxu0 0.0
        %3970 = vmatpush2.msra.mxu0 0.0
        %3971 = vmatprep.subr.mxu0 0.0
        %3972 = vmatpush2.msra.mxu0 0.0
        %3973 = vmatprep.subr.mxu0 0.0
        %3974 = vmatpush2.msra.mxu0 0.0
        %3975 = vmatprep.subr.mxu0 0.0
        %3976 = vmatpush2.msra.mxu0 0.0
        %3977 = vmatprep.subr.mxu0 0.0
        %3978 = vmatpush2.msra.mxu0 0.0
        %3979 = vmatprep.subr.mxu0 0.0
        %3980 = vmatpush2.msra.mxu0 0.0
        %3981 = vmatprep.subr.mxu0 0.0
        %3982 = vmatpush2.msra.mxu0 0.0
        %3983 = vmatprep.subr.mxu0 0.0
        %3984 = vmatpush2.msra.mxu0 0.0
        %3985 = vmatprep.subr.mxu0 0.0
        %3986 = vmatpush2.msra.mxu0 0.0
        %3987 = vmatprep.subr.mxu0 0.0
        %3988 = vmatpush2.msra.mxu0 0.0
        %3989 = vmatprep.mubr.f32.mxu0 0.0
        %3990 = vmatmul.mubr.f32.gmra.mxu0 %v3923
        %v3991 = vpop.f32.mrf.mxu0
        %v3992 = vadd.f32 0.0, %v3991
        %v3993 = vpop.f32.mrf.mxu0
        %3994 = vdwg.mxu0
        %v3995 = vadd.f32 %v3919, %v3992
        %s3996 = scalar_lea.vmem %s3, 40
        %v3997 = vld [vmem:[%s3996] sm:$0xff]
        %v3999 = vsel %vm303, %v3997, 0
        %4001 = vmatprep.subr.mxu0 0.0
        %4002 = vmatpush1.msra.mxu0 0.0
        %4003 = vmatprep.subr.mxu0 0.0
        %4004 = vmatpush1.msra.mxu0 0.0
        %4005 = vmatprep.subr.mxu0 0.0
        %4006 = vmatpush1.msra.mxu0 0.0
        %4007 = vmatprep.subr.mxu0 0.0
        %4008 = vmatpush1.msra.mxu0 0.0
        %4009 = vmatprep.subr.mxu0 0.0
        %4010 = vmatpush1.msra.mxu0 0.0
        %4011 = vmatprep.subr.mxu0 0.0
        %4012 = vmatpush1.msra.mxu0 0.0
        %4013 = vmatprep.subr.mxu0 0.0
        %4014 = vmatpush1.msra.mxu0 0.0
        %4015 = vmatprep.subr.mxu0 0.0
        %4016 = vmatpush1.msra.mxu0 0.0
        %4017 = vmatprep.subr.mxu0 0.0
        %4018 = vmatpush1.msra.mxu0 0.0
        %4019 = vmatprep.subr.mxu0 0.0
        %4020 = vmatpush1.msra.mxu0 0.0
        %4021 = vmatprep.subr.mxu0 0.0
        %4022 = vmatpush1.msra.mxu0 0.0
        %4023 = vmatprep.subr.mxu0 0.0
        %4024 = vmatpush1.msra.mxu0 0.0
        %4025 = vmatprep.subr.mxu0 0.0
        %4026 = vmatpush1.msra.mxu0 0.0
        %4027 = vmatprep.subr.mxu0 0.0
        %4028 = vmatpush1.msra.mxu0 0.0
        %4029 = vmatprep.subr.mxu0 0.0
        %4030 = vmatpush1.msra.mxu0 0.0
        %4031 = vmatprep.subr.mxu0 0.0
        %4032 = vmatpush1.msra.mxu0 %v1634
        %4033 = vmatprep.subr.mxu0 0.0
        %4034 = vmatpush2.msra.mxu0 0.0
        %4035 = vmatprep.subr.mxu0 0.0
        %4036 = vmatpush2.msra.mxu0 0.0
        %4037 = vmatprep.subr.mxu0 0.0
        %4038 = vmatpush2.msra.mxu0 0.0
        %4039 = vmatprep.subr.mxu0 0.0
        %4040 = vmatpush2.msra.mxu0 0.0
        %4041 = vmatprep.subr.mxu0 0.0
        %4042 = vmatpush2.msra.mxu0 0.0
        %4043 = vmatprep.subr.mxu0 0.0
        %4044 = vmatpush2.msra.mxu0 0.0
        %4045 = vmatprep.subr.mxu0 0.0
        %4046 = vmatpush2.msra.mxu0 0.0
        %4047 = vmatprep.subr.mxu0 0.0
        %4048 = vmatpush2.msra.mxu0 0.0
        %4049 = vmatprep.subr.mxu0 0.0
        %4050 = vmatpush2.msra.mxu0 0.0
        %4051 = vmatprep.subr.mxu0 0.0
        %4052 = vmatpush2.msra.mxu0 0.0
        %4053 = vmatprep.subr.mxu0 0.0
        %4054 = vmatpush2.msra.mxu0 0.0
        %4055 = vmatprep.subr.mxu0 0.0
        %4056 = vmatpush2.msra.mxu0 0.0
        %4057 = vmatprep.subr.mxu0 0.0
        %4058 = vmatpush2.msra.mxu0 0.0
        %4059 = vmatprep.subr.mxu0 0.0
        %4060 = vmatpush2.msra.mxu0 0.0
        %4061 = vmatprep.subr.mxu0 0.0
        %4062 = vmatpush2.msra.mxu0 0.0
        %4063 = vmatprep.subr.mxu0 0.0
        %4064 = vmatpush2.msra.mxu0 0.0
        %4065 = vmatprep.mubr.f32.mxu0 0.0
        %4066 = vmatmul.mubr.f32.gmra.mxu0 %v3999
        %v4067 = vpop.f32.mrf.mxu0
        %v4068 = vadd.f32 0.0, %v4067
        %v4069 = vpop.f32.mrf.mxu0
        %4070 = vdwg.mxu0
        %v4071 = vadd.f32 %v3995, %v4068
        %s4072 = scalar_lea.vmem %s3, 48
        %v4073 = vld [vmem:[%s4072] sm:$0xff]
        %v4075 = vsel %vm303, %v4073, 0
        %4077 = vmatprep.subr.mxu0 0.0
        %4078 = vmatpush1.msra.mxu0 0.0
        %4079 = vmatprep.subr.mxu0 0.0
        %4080 = vmatpush1.msra.mxu0 0.0
        %4081 = vmatprep.subr.mxu0 0.0
        %4082 = vmatpush1.msra.mxu0 0.0
        %4083 = vmatprep.subr.mxu0 0.0
        %4084 = vmatpush1.msra.mxu0 0.0
        %4085 = vmatprep.subr.mxu0 0.0
        %4086 = vmatpush1.msra.mxu0 0.0
        %4087 = vmatprep.subr.mxu0 0.0
        %4088 = vmatpush1.msra.mxu0 0.0
        %4089 = vmatprep.subr.mxu0 0.0
        %4090 = vmatpush1.msra.mxu0 0.0
        %4091 = vmatprep.subr.mxu0 0.0
        %4092 = vmatpush1.msra.mxu0 0.0
        %4093 = vmatprep.subr.mxu0 0.0
        %4094 = vmatpush1.msra.mxu0 0.0
        %4095 = vmatprep.subr.mxu0 0.0
        %4096 = vmatpush1.msra.mxu0 0.0
        %4097 = vmatprep.subr.mxu0 0.0
        %4098 = vmatpush1.msra.mxu0 0.0
        %4099 = vmatprep.subr.mxu0 0.0
        %4100 = vmatpush1.msra.mxu0 0.0
        %4101 = vmatprep.subr.mxu0 0.0
        %4102 = vmatpush1.msra.mxu0 0.0
        %4103 = vmatprep.subr.mxu0 0.0
        %4104 = vmatpush1.msra.mxu0 0.0
        %4105 = vmatprep.subr.mxu0 0.0
        %4106 = vmatpush1.msra.mxu0 0.0
        %4107 = vmatprep.subr.mxu0 0.0
        %4108 = vmatpush1.msra.mxu0 %v1717
        %4109 = vmatprep.subr.mxu0 0.0
        %4110 = vmatpush2.msra.mxu0 0.0
        %4111 = vmatprep.subr.mxu0 0.0
        %4112 = vmatpush2.msra.mxu0 0.0
        %4113 = vmatprep.subr.mxu0 0.0
        %4114 = vmatpush2.msra.mxu0 0.0
        %4115 = vmatprep.subr.mxu0 0.0
        %4116 = vmatpush2.msra.mxu0 0.0
        %4117 = vmatprep.subr.mxu0 0.0
        %4118 = vmatpush2.msra.mxu0 0.0
        %4119 = vmatprep.subr.mxu0 0.0
        %4120 = vmatpush2.msra.mxu0 0.0
        %4121 = vmatprep.subr.mxu0 0.0
        %4122 = vmatpush2.msra.mxu0 0.0
        %4123 = vmatprep.subr.mxu0 0.0
        %4124 = vmatpush2.msra.mxu0 0.0
        %4125 = vmatprep.subr.mxu0 0.0
        %4126 = vmatpush2.msra.mxu0 0.0
        %4127 = vmatprep.subr.mxu0 0.0
        %4128 = vmatpush2.msra.mxu0 0.0
        %4129 = vmatprep.subr.mxu0 0.0
        %4130 = vmatpush2.msra.mxu0 0.0
        %4131 = vmatprep.subr.mxu0 0.0
        %4132 = vmatpush2.msra.mxu0 0.0
        %4133 = vmatprep.subr.mxu0 0.0
        %4134 = vmatpush2.msra.mxu0 0.0
        %4135 = vmatprep.subr.mxu0 0.0
        %4136 = vmatpush2.msra.mxu0 0.0
        %4137 = vmatprep.subr.mxu0 0.0
        %4138 = vmatpush2.msra.mxu0 0.0
        %4139 = vmatprep.subr.mxu0 0.0
        %4140 = vmatpush2.msra.mxu0 0.0
        %4141 = vmatprep.mubr.f32.mxu0 0.0
        %4142 = vmatmul.mubr.f32.gmra.mxu0 %v4075
        %v4143 = vpop.f32.mrf.mxu0
        %v4144 = vadd.f32 0.0, %v4143
        %v4145 = vpop.f32.mrf.mxu0
        %4146 = vdwg.mxu0
        %v4147 = vadd.f32 %v4071, %v4144
        %s4148 = scalar_lea.vmem %s3, 56
        %v4149 = vld [vmem:[%s4148] sm:$0xff]
        %v4151 = vsel %vm303, %v4149, 0
        %4153 = vmatprep.subr.mxu0 0.0
        %4154 = vmatpush1.msra.mxu0 0.0
        %4155 = vmatprep.subr.mxu0 0.0
        %4156 = vmatpush1.msra.mxu0 0.0
        %4157 = vmatprep.subr.mxu0 0.0
        %4158 = vmatpush1.msra.mxu0 0.0
        %4159 = vmatprep.subr.mxu0 0.0
        %4160 = vmatpush1.msra.mxu0 0.0
        %4161 = vmatprep.subr.mxu0 0.0
        %4162 = vmatpush1.msra.mxu0 0.0
        %4163 = vmatprep.subr.mxu0 0.0
        %4164 = vmatpush1.msra.mxu0 0.0
        %4165 = vmatprep.subr.mxu0 0.0
        %4166 = vmatpush1.msra.mxu0 0.0
        %4167 = vmatprep.subr.mxu0 0.0
        %4168 = vmatpush1.msra.mxu0 0.0
        %4169 = vmatprep.subr.mxu0 0.0
        %4170 = vmatpush1.msra.mxu0 0.0
        %4171 = vmatprep.subr.mxu0 0.0
        %4172 = vmatpush1.msra.mxu0 0.0
        %4173 = vmatprep.subr.mxu0 0.0
        %4174 = vmatpush1.msra.mxu0 0.0
        %4175 = vmatprep.subr.mxu0 0.0
        %4176 = vmatpush1.msra.mxu0 0.0
        %4177 = vmatprep.subr.mxu0 0.0
        %4178 = vmatpush1.msra.mxu0 0.0
        %4179 = vmatprep.subr.mxu0 0.0
        %4180 = vmatpush1.msra.mxu0 0.0
        %4181 = vmatprep.subr.mxu0 0.0
        %4182 = vmatpush1.msra.mxu0 0.0
        %4183 = vmatprep.subr.mxu0 0.0
        %4184 = vmatpush1.msra.mxu0 %v1800
        %4185 = vmatprep.subr.mxu0 0.0
        %4186 = vmatpush2.msra.mxu0 0.0
        %4187 = vmatprep.subr.mxu0 0.0
        %4188 = vmatpush2.msra.mxu0 0.0
        %4189 = vmatprep.subr.mxu0 0.0
        %4190 = vmatpush2.msra.mxu0 0.0
        %4191 = vmatprep.subr.mxu0 0.0
        %4192 = vmatpush2.msra.mxu0 0.0
        %4193 = vmatprep.subr.mxu0 0.0
        %4194 = vmatpush2.msra.mxu0 0.0
        %4195 = vmatprep.subr.mxu0 0.0
        %4196 = vmatpush2.msra.mxu0 0.0
        %4197 = vmatprep.subr.mxu0 0.0
        %4198 = vmatpush2.msra.mxu0 0.0
        %4199 = vmatprep.subr.mxu0 0.0
        %4200 = vmatpush2.msra.mxu0 0.0
        %4201 = vmatprep.subr.mxu0 0.0
        %4202 = vmatpush2.msra.mxu0 0.0
        %4203 = vmatprep.subr.mxu0 0.0
        %4204 = vmatpush2.msra.mxu0 0.0
        %4205 = vmatprep.subr.mxu0 0.0
        %4206 = vmatpush2.msra.mxu0 0.0
        %4207 = vmatprep.subr.mxu0 0.0
        %4208 = vmatpush2.msra.mxu0 0.0
        %4209 = vmatprep.subr.mxu0 0.0
        %4210 = vmatpush2.msra.mxu0 0.0
        %4211 = vmatprep.subr.mxu0 0.0
        %4212 = vmatpush2.msra.mxu0 0.0
        %4213 = vmatprep.subr.mxu0 0.0
        %4214 = vmatpush2.msra.mxu0 0.0
        %4215 = vmatprep.subr.mxu0 0.0
        %4216 = vmatpush2.msra.mxu0 0.0
        %4217 = vmatprep.mubr.f32.mxu0 0.0
        %4218 = vmatmul.mubr.f32.gmra.mxu0 %v4151
        %v4219 = vpop.f32.mrf.mxu0
        %v4220 = vadd.f32 0.0, %v4219
        %v4221 = vpop.f32.mrf.mxu0
        %4222 = vdwg.mxu0
        %v4223 = vadd.f32 %v4147, %v4220
        %s4224 = scalar_lea.vmem %s3, 64
        %v4225 = vld [vmem:[%s4224] sm:$0xff]
        %v4227 = vsel %vm303, %v4225, 0
        %4229 = vmatprep.subr.mxu0 0.0
        %4230 = vmatpush1.msra.mxu0 0.0
        %4231 = vmatprep.subr.mxu0 0.0
        %4232 = vmatpush1.msra.mxu0 0.0
        %4233 = vmatprep.subr.mxu0 0.0
        %4234 = vmatpush1.msra.mxu0 0.0
        %4235 = vmatprep.subr.mxu0 0.0
        %4236 = vmatpush1.msra.mxu0 0.0
        %4237 = vmatprep.subr.mxu0 0.0
        %4238 = vmatpush1.msra.mxu0 0.0
        %4239 = vmatprep.subr.mxu0 0.0
        %4240 = vmatpush1.msra.mxu0 0.0
        %4241 = vmatprep.subr.mxu0 0.0
        %4242 = vmatpush1.msra.mxu0 0.0
        %4243 = vmatprep.subr.mxu0 0.0
        %4244 = vmatpush1.msra.mxu0 0.0
        %4245 = vmatprep.subr.mxu0 0.0
        %4246 = vmatpush1.msra.mxu0 0.0
        %4247 = vmatprep.subr.mxu0 0.0
        %4248 = vmatpush1.msra.mxu0 0.0
        %4249 = vmatprep.subr.mxu0 0.0
        %4250 = vmatpush1.msra.mxu0 0.0
        %4251 = vmatprep.subr.mxu0 0.0
        %4252 = vmatpush1.msra.mxu0 0.0
        %4253 = vmatprep.subr.mxu0 0.0
        %4254 = vmatpush1.msra.mxu0 0.0
        %4255 = vmatprep.subr.mxu0 0.0
        %4256 = vmatpush1.msra.mxu0 0.0
        %4257 = vmatprep.subr.mxu0 0.0
        %4258 = vmatpush1.msra.mxu0 0.0
        %4259 = vmatprep.subr.mxu0 0.0
        %4260 = vmatpush1.msra.mxu0 %v1883
        %4261 = vmatprep.subr.mxu0 0.0
        %4262 = vmatpush2.msra.mxu0 0.0
        %4263 = vmatprep.subr.mxu0 0.0
        %4264 = vmatpush2.msra.mxu0 0.0
        %4265 = vmatprep.subr.mxu0 0.0
        %4266 = vmatpush2.msra.mxu0 0.0
        %4267 = vmatprep.subr.mxu0 0.0
        %4268 = vmatpush2.msra.mxu0 0.0
        %4269 = vmatprep.subr.mxu0 0.0
        %4270 = vmatpush2.msra.mxu0 0.0
        %4271 = vmatprep.subr.mxu0 0.0
        %4272 = vmatpush2.msra.mxu0 0.0
        %4273 = vmatprep.subr.mxu0 0.0
        %4274 = vmatpush2.msra.mxu0 0.0
        %4275 = vmatprep.subr.mxu0 0.0
        %4276 = vmatpush2.msra.mxu0 0.0
        %4277 = vmatprep.subr.mxu0 0.0
        %4278 = vmatpush2.msra.mxu0 0.0
        %4279 = vmatprep.subr.mxu0 0.0
        %4280 = vmatpush2.msra.mxu0 0.0
        %4281 = vmatprep.subr.mxu0 0.0
        %4282 = vmatpush2.msra.mxu0 0.0
        %4283 = vmatprep.subr.mxu0 0.0
        %4284 = vmatpush2.msra.mxu0 0.0
        %4285 = vmatprep.subr.mxu0 0.0
        %4286 = vmatpush2.msra.mxu0 0.0
        %4287 = vmatprep.subr.mxu0 0.0
        %4288 = vmatpush2.msra.mxu0 0.0
        %4289 = vmatprep.subr.mxu0 0.0
        %4290 = vmatpush2.msra.mxu0 0.0
        %4291 = vmatprep.subr.mxu0 0.0
        %4292 = vmatpush2.msra.mxu0 0.0
        %4293 = vmatprep.mubr.f32.mxu0 0.0
        %4294 = vmatmul.mubr.f32.gmra.mxu0 %v4227
        %v4295 = vpop.f32.mrf.mxu0
        %v4296 = vadd.f32 0.0, %v4295
        %v4297 = vpop.f32.mrf.mxu0
        %4298 = vdwg.mxu0
        %v4299 = vadd.f32 %v4223, %v4296
        %s4300 = scalar_lea.vmem %s3, 72
        %v4301 = vld [vmem:[%s4300] sm:$0xff]
        %v4303 = vsel %vm303, %v4301, 0
        %4305 = vmatprep.subr.mxu0 0.0
        %4306 = vmatpush1.msra.mxu0 0.0
        %4307 = vmatprep.subr.mxu0 0.0
        %4308 = vmatpush1.msra.mxu0 0.0
        %4309 = vmatprep.subr.mxu0 0.0
        %4310 = vmatpush1.msra.mxu0 0.0
        %4311 = vmatprep.subr.mxu0 0.0
        %4312 = vmatpush1.msra.mxu0 0.0
        %4313 = vmatprep.subr.mxu0 0.0
        %4314 = vmatpush1.msra.mxu0 0.0
        %4315 = vmatprep.subr.mxu0 0.0
        %4316 = vmatpush1.msra.mxu0 0.0
        %4317 = vmatprep.subr.mxu0 0.0
        %4318 = vmatpush1.msra.mxu0 0.0
        %4319 = vmatprep.subr.mxu0 0.0
        %4320 = vmatpush1.msra.mxu0 0.0
        %4321 = vmatprep.subr.mxu0 0.0
        %4322 = vmatpush1.msra.mxu0 0.0
        %4323 = vmatprep.subr.mxu0 0.0
        %4324 = vmatpush1.msra.mxu0 0.0
        %4325 = vmatprep.subr.mxu0 0.0
        %4326 = vmatpush1.msra.mxu0 0.0
        %4327 = vmatprep.subr.mxu0 0.0
        %4328 = vmatpush1.msra.mxu0 0.0
        %4329 = vmatprep.subr.mxu0 0.0
        %4330 = vmatpush1.msra.mxu0 0.0
        %4331 = vmatprep.subr.mxu0 0.0
        %4332 = vmatpush1.msra.mxu0 0.0
        %4333 = vmatprep.subr.mxu0 0.0
        %4334 = vmatpush1.msra.mxu0 0.0
        %4335 = vmatprep.subr.mxu0 0.0
        %4336 = vmatpush1.msra.mxu0 %v1966
        %4337 = vmatprep.subr.mxu0 0.0
        %4338 = vmatpush2.msra.mxu0 0.0
        %4339 = vmatprep.subr.mxu0 0.0
        %4340 = vmatpush2.msra.mxu0 0.0
        %4341 = vmatprep.subr.mxu0 0.0
        %4342 = vmatpush2.msra.mxu0 0.0
        %4343 = vmatprep.subr.mxu0 0.0
        %4344 = vmatpush2.msra.mxu0 0.0
        %4345 = vmatprep.subr.mxu0 0.0
        %4346 = vmatpush2.msra.mxu0 0.0
        %4347 = vmatprep.subr.mxu0 0.0
        %4348 = vmatpush2.msra.mxu0 0.0
        %4349 = vmatprep.subr.mxu0 0.0
        %4350 = vmatpush2.msra.mxu0 0.0
        %4351 = vmatprep.subr.mxu0 0.0
        %4352 = vmatpush2.msra.mxu0 0.0
        %4353 = vmatprep.subr.mxu0 0.0
        %4354 = vmatpush2.msra.mxu0 0.0
        %4355 = vmatprep.subr.mxu0 0.0
        %4356 = vmatpush2.msra.mxu0 0.0
        %4357 = vmatprep.subr.mxu0 0.0
        %4358 = vmatpush2.msra.mxu0 0.0
        %4359 = vmatprep.subr.mxu0 0.0
        %4360 = vmatpush2.msra.mxu0 0.0
        %4361 = vmatprep.subr.mxu0 0.0
        %4362 = vmatpush2.msra.mxu0 0.0
        %4363 = vmatprep.subr.mxu0 0.0
        %4364 = vmatpush2.msra.mxu0 0.0
        %4365 = vmatprep.subr.mxu0 0.0
        %4366 = vmatpush2.msra.mxu0 0.0
        %4367 = vmatprep.subr.mxu0 0.0
        %4368 = vmatpush2.msra.mxu0 0.0
        %4369 = vmatprep.mubr.f32.mxu0 0.0
        %4370 = vmatmul.mubr.f32.gmra.mxu0 %v4303
        %v4371 = vpop.f32.mrf.mxu0
        %v4372 = vadd.f32 0.0, %v4371
        %v4373 = vpop.f32.mrf.mxu0
        %4374 = vdwg.mxu0
        %v4375 = vadd.f32 %v4299, %v4372
        %s4376 = scalar_lea.vmem %s3, 80
        %v4377 = vld [vmem:[%s4376] sm:$0xff]
        %v4379 = vsel %vm303, %v4377, 0
        %4381 = vmatprep.subr.mxu0 0.0
        %4382 = vmatpush1.msra.mxu0 0.0
        %4383 = vmatprep.subr.mxu0 0.0
        %4384 = vmatpush1.msra.mxu0 0.0
        %4385 = vmatprep.subr.mxu0 0.0
        %4386 = vmatpush1.msra.mxu0 0.0
        %4387 = vmatprep.subr.mxu0 0.0
        %4388 = vmatpush1.msra.mxu0 0.0
        %4389 = vmatprep.subr.mxu0 0.0
        %4390 = vmatpush1.msra.mxu0 0.0
        %4391 = vmatprep.subr.mxu0 0.0
        %4392 = vmatpush1.msra.mxu0 0.0
        %4393 = vmatprep.subr.mxu0 0.0
        %4394 = vmatpush1.msra.mxu0 0.0
        %4395 = vmatprep.subr.mxu0 0.0
        %4396 = vmatpush1.msra.mxu0 0.0
        %4397 = vmatprep.subr.mxu0 0.0
        %4398 = vmatpush1.msra.mxu0 0.0
        %4399 = vmatprep.subr.mxu0 0.0
        %4400 = vmatpush1.msra.mxu0 0.0
        %4401 = vmatprep.subr.mxu0 0.0
        %4402 = vmatpush1.msra.mxu0 0.0
        %4403 = vmatprep.subr.mxu0 0.0
        %4404 = vmatpush1.msra.mxu0 0.0
        %4405 = vmatprep.subr.mxu0 0.0
        %4406 = vmatpush1.msra.mxu0 0.0
        %4407 = vmatprep.subr.mxu0 0.0
        %4408 = vmatpush1.msra.mxu0 0.0
        %4409 = vmatprep.subr.mxu0 0.0
        %4410 = vmatpush1.msra.mxu0 0.0
        %4411 = vmatprep.subr.mxu0 0.0
        %4412 = vmatpush1.msra.mxu0 %v2049
        %4413 = vmatprep.subr.mxu0 0.0
        %4414 = vmatpush2.msra.mxu0 0.0
        %4415 = vmatprep.subr.mxu0 0.0
        %4416 = vmatpush2.msra.mxu0 0.0
        %4417 = vmatprep.subr.mxu0 0.0
        %4418 = vmatpush2.msra.mxu0 0.0
        %4419 = vmatprep.subr.mxu0 0.0
        %4420 = vmatpush2.msra.mxu0 0.0
        %4421 = vmatprep.subr.mxu0 0.0
        %4422 = vmatpush2.msra.mxu0 0.0
        %4423 = vmatprep.subr.mxu0 0.0
        %4424 = vmatpush2.msra.mxu0 0.0
        %4425 = vmatprep.subr.mxu0 0.0
        %4426 = vmatpush2.msra.mxu0 0.0
        %4427 = vmatprep.subr.mxu0 0.0
        %4428 = vmatpush2.msra.mxu0 0.0
        %4429 = vmatprep.subr.mxu0 0.0
        %4430 = vmatpush2.msra.mxu0 0.0
        %4431 = vmatprep.subr.mxu0 0.0
        %4432 = vmatpush2.msra.mxu0 0.0
        %4433 = vmatprep.subr.mxu0 0.0
        %4434 = vmatpush2.msra.mxu0 0.0
        %4435 = vmatprep.subr.mxu0 0.0
        %4436 = vmatpush2.msra.mxu0 0.0
        %4437 = vmatprep.subr.mxu0 0.0
        %4438 = vmatpush2.msra.mxu0 0.0
        %4439 = vmatprep.subr.mxu0 0.0
        %4440 = vmatpush2.msra.mxu0 0.0
        %4441 = vmatprep.subr.mxu0 0.0
        %4442 = vmatpush2.msra.mxu0 0.0
        %4443 = vmatprep.subr.mxu0 0.0
        %4444 = vmatpush2.msra.mxu0 0.0
        %4445 = vmatprep.mubr.f32.mxu0 0.0
        %4446 = vmatmul.mubr.f32.gmra.mxu0 %v4379
        %v4447 = vpop.f32.mrf.mxu0
        %v4448 = vadd.f32 0.0, %v4447
        %v4449 = vpop.f32.mrf.mxu0
        %4450 = vdwg.mxu0
        %v4451 = vadd.f32 %v4375, %v4448
        %s4452 = scalar_lea.vmem %s3, 88
        %v4453 = vld [vmem:[%s4452] sm:$0xff]
        %v4455 = vsel %vm303, %v4453, 0
        %4457 = vmatprep.subr.mxu0 0.0
        %4458 = vmatpush1.msra.mxu0 0.0
        %4459 = vmatprep.subr.mxu0 0.0
        %4460 = vmatpush1.msra.mxu0 0.0
        %4461 = vmatprep.subr.mxu0 0.0
        %4462 = vmatpush1.msra.mxu0 0.0
        %4463 = vmatprep.subr.mxu0 0.0
        %4464 = vmatpush1.msra.mxu0 0.0
        %4465 = vmatprep.subr.mxu0 0.0
        %4466 = vmatpush1.msra.mxu0 0.0
        %4467 = vmatprep.subr.mxu0 0.0
        %4468 = vmatpush1.msra.mxu0 0.0
        %4469 = vmatprep.subr.mxu0 0.0
        %4470 = vmatpush1.msra.mxu0 0.0
        %4471 = vmatprep.subr.mxu0 0.0
        %4472 = vmatpush1.msra.mxu0 0.0
        %4473 = vmatprep.subr.mxu0 0.0
        %4474 = vmatpush1.msra.mxu0 0.0
        %4475 = vmatprep.subr.mxu0 0.0
        %4476 = vmatpush1.msra.mxu0 0.0
        %4477 = vmatprep.subr.mxu0 0.0
        %4478 = vmatpush1.msra.mxu0 0.0
        %4479 = vmatprep.subr.mxu0 0.0
        %4480 = vmatpush1.msra.mxu0 0.0
        %4481 = vmatprep.subr.mxu0 0.0
        %4482 = vmatpush1.msra.mxu0 0.0
        %4483 = vmatprep.subr.mxu0 0.0
        %4484 = vmatpush1.msra.mxu0 0.0
        %4485 = vmatprep.subr.mxu0 0.0
        %4486 = vmatpush1.msra.mxu0 0.0
        %4487 = vmatprep.subr.mxu0 0.0
        %4488 = vmatpush1.msra.mxu0 %v2132
        %4489 = vmatprep.subr.mxu0 0.0
        %4490 = vmatpush2.msra.mxu0 0.0
        %4491 = vmatprep.subr.mxu0 0.0
        %4492 = vmatpush2.msra.mxu0 0.0
        %4493 = vmatprep.subr.mxu0 0.0
        %4494 = vmatpush2.msra.mxu0 0.0
        %4495 = vmatprep.subr.mxu0 0.0
        %4496 = vmatpush2.msra.mxu0 0.0
        %4497 = vmatprep.subr.mxu0 0.0
        %4498 = vmatpush2.msra.mxu0 0.0
        %4499 = vmatprep.subr.mxu0 0.0
        %4500 = vmatpush2.msra.mxu0 0.0
        %4501 = vmatprep.subr.mxu0 0.0
        %4502 = vmatpush2.msra.mxu0 0.0
        %4503 = vmatprep.subr.mxu0 0.0
        %4504 = vmatpush2.msra.mxu0 0.0
        %4505 = vmatprep.subr.mxu0 0.0
        %4506 = vmatpush2.msra.mxu0 0.0
        %4507 = vmatprep.subr.mxu0 0.0
        %4508 = vmatpush2.msra.mxu0 0.0
        %4509 = vmatprep.subr.mxu0 0.0
        %4510 = vmatpush2.msra.mxu0 0.0
        %4511 = vmatprep.subr.mxu0 0.0
        %4512 = vmatpush2.msra.mxu0 0.0
        %4513 = vmatprep.subr.mxu0 0.0
        %4514 = vmatpush2.msra.mxu0 0.0
        %4515 = vmatprep.subr.mxu0 0.0
        %4516 = vmatpush2.msra.mxu0 0.0
        %4517 = vmatprep.subr.mxu0 0.0
        %4518 = vmatpush2.msra.mxu0 0.0
        %4519 = vmatprep.subr.mxu0 0.0
        %4520 = vmatpush2.msra.mxu0 0.0
        %4521 = vmatprep.mubr.f32.mxu0 0.0
        %4522 = vmatmul.mubr.f32.gmra.mxu0 %v4455
        %v4523 = vpop.f32.mrf.mxu0
        %v4524 = vadd.f32 0.0, %v4523
        %v4525 = vpop.f32.mrf.mxu0
        %4526 = vdwg.mxu0
        %v4527 = vadd.f32 %v4451, %v4524
        %s4528 = scalar_lea.vmem %s3, 96
        %v4529 = vld [vmem:[%s4528] sm:$0xff]
        %v4531 = vsel %vm303, %v4529, 0
        %4533 = vmatprep.subr.mxu0 0.0
        %4534 = vmatpush1.msra.mxu0 0.0
        %4535 = vmatprep.subr.mxu0 0.0
        %4536 = vmatpush1.msra.mxu0 0.0
        %4537 = vmatprep.subr.mxu0 0.0
        %4538 = vmatpush1.msra.mxu0 0.0
        %4539 = vmatprep.subr.mxu0 0.0
        %4540 = vmatpush1.msra.mxu0 0.0
        %4541 = vmatprep.subr.mxu0 0.0
        %4542 = vmatpush1.msra.mxu0 0.0
        %4543 = vmatprep.subr.mxu0 0.0
        %4544 = vmatpush1.msra.mxu0 0.0
        %4545 = vmatprep.subr.mxu0 0.0
        %4546 = vmatpush1.msra.mxu0 0.0
        %4547 = vmatprep.subr.mxu0 0.0
        %4548 = vmatpush1.msra.mxu0 0.0
        %4549 = vmatprep.subr.mxu0 0.0
        %4550 = vmatpush1.msra.mxu0 0.0
        %4551 = vmatprep.subr.mxu0 0.0
        %4552 = vmatpush1.msra.mxu0 0.0
        %4553 = vmatprep.subr.mxu0 0.0
        %4554 = vmatpush1.msra.mxu0 0.0
        %4555 = vmatprep.subr.mxu0 0.0
        %4556 = vmatpush1.msra.mxu0 0.0
        %4557 = vmatprep.subr.mxu0 0.0
        %4558 = vmatpush1.msra.mxu0 0.0
        %4559 = vmatprep.subr.mxu0 0.0
        %4560 = vmatpush1.msra.mxu0 0.0
        %4561 = vmatprep.subr.mxu0 0.0
        %4562 = vmatpush1.msra.mxu0 0.0
        %4563 = vmatprep.subr.mxu0 0.0
        %4564 = vmatpush1.msra.mxu0 %v2215
        %4565 = vmatprep.subr.mxu0 0.0
        %4566 = vmatpush2.msra.mxu0 0.0
        %4567 = vmatprep.subr.mxu0 0.0
        %4568 = vmatpush2.msra.mxu0 0.0
        %4569 = vmatprep.subr.mxu0 0.0
        %4570 = vmatpush2.msra.mxu0 0.0
        %4571 = vmatprep.subr.mxu0 0.0
        %4572 = vmatpush2.msra.mxu0 0.0
        %4573 = vmatprep.subr.mxu0 0.0
        %4574 = vmatpush2.msra.mxu0 0.0
        %4575 = vmatprep.subr.mxu0 0.0
        %4576 = vmatpush2.msra.mxu0 0.0
        %4577 = vmatprep.subr.mxu0 0.0
        %4578 = vmatpush2.msra.mxu0 0.0
        %4579 = vmatprep.subr.mxu0 0.0
        %4580 = vmatpush2.msra.mxu0 0.0
        %4581 = vmatprep.subr.mxu0 0.0
        %4582 = vmatpush2.msra.mxu0 0.0
        %4583 = vmatprep.subr.mxu0 0.0
        %4584 = vmatpush2.msra.mxu0 0.0
        %4585 = vmatprep.subr.mxu0 0.0
        %4586 = vmatpush2.msra.mxu0 0.0
        %4587 = vmatprep.subr.mxu0 0.0
        %4588 = vmatpush2.msra.mxu0 0.0
        %4589 = vmatprep.subr.mxu0 0.0
        %4590 = vmatpush2.msra.mxu0 0.0
        %4591 = vmatprep.subr.mxu0 0.0
        %4592 = vmatpush2.msra.mxu0 0.0
        %4593 = vmatprep.subr.mxu0 0.0
        %4594 = vmatpush2.msra.mxu0 0.0
        %4595 = vmatprep.subr.mxu0 0.0
        %4596 = vmatpush2.msra.mxu0 0.0
        %4597 = vmatprep.mubr.f32.mxu0 0.0
        %4598 = vmatmul.mubr.f32.gmra.mxu0 %v4531
        %v4599 = vpop.f32.mrf.mxu0
        %v4600 = vadd.f32 0.0, %v4599
        %v4601 = vpop.f32.mrf.mxu0
        %4602 = vdwg.mxu0
        %v4603 = vadd.f32 %v4527, %v4600
        %s4604 = scalar_lea.vmem %s3, 104
        %v4605 = vld [vmem:[%s4604] sm:$0xff]
        %v4607 = vsel %vm303, %v4605, 0
        %4609 = vmatprep.subr.mxu0 0.0
        %4610 = vmatpush1.msra.mxu0 0.0
        %4611 = vmatprep.subr.mxu0 0.0
        %4612 = vmatpush1.msra.mxu0 0.0
        %4613 = vmatprep.subr.mxu0 0.0
        %4614 = vmatpush1.msra.mxu0 0.0
        %4615 = vmatprep.subr.mxu0 0.0
        %4616 = vmatpush1.msra.mxu0 0.0
        %4617 = vmatprep.subr.mxu0 0.0
        %4618 = vmatpush1.msra.mxu0 0.0
        %4619 = vmatprep.subr.mxu0 0.0
        %4620 = vmatpush1.msra.mxu0 0.0
        %4621 = vmatprep.subr.mxu0 0.0
        %4622 = vmatpush1.msra.mxu0 0.0
        %4623 = vmatprep.subr.mxu0 0.0
        %4624 = vmatpush1.msra.mxu0 0.0
        %4625 = vmatprep.subr.mxu0 0.0
        %4626 = vmatpush1.msra.mxu0 0.0
        %4627 = vmatprep.subr.mxu0 0.0
        %4628 = vmatpush1.msra.mxu0 0.0
        %4629 = vmatprep.subr.mxu0 0.0
        %4630 = vmatpush1.msra.mxu0 0.0
        %4631 = vmatprep.subr.mxu0 0.0
        %4632 = vmatpush1.msra.mxu0 0.0
        %4633 = vmatprep.subr.mxu0 0.0
        %4634 = vmatpush1.msra.mxu0 0.0
        %4635 = vmatprep.subr.mxu0 0.0
        %4636 = vmatpush1.msra.mxu0 0.0
        %4637 = vmatprep.subr.mxu0 0.0
        %4638 = vmatpush1.msra.mxu0 0.0
        %4639 = vmatprep.subr.mxu0 0.0
        %4640 = vmatpush1.msra.mxu0 %v2298
        %4641 = vmatprep.subr.mxu0 0.0
        %4642 = vmatpush2.msra.mxu0 0.0
        %4643 = vmatprep.subr.mxu0 0.0
        %4644 = vmatpush2.msra.mxu0 0.0
        %4645 = vmatprep.subr.mxu0 0.0
        %4646 = vmatpush2.msra.mxu0 0.0
        %4647 = vmatprep.subr.mxu0 0.0
        %4648 = vmatpush2.msra.mxu0 0.0
        %4649 = vmatprep.subr.mxu0 0.0
        %4650 = vmatpush2.msra.mxu0 0.0
        %4651 = vmatprep.subr.mxu0 0.0
        %4652 = vmatpush2.msra.mxu0 0.0
        %4653 = vmatprep.subr.mxu0 0.0
        %4654 = vmatpush2.msra.mxu0 0.0
        %4655 = vmatprep.subr.mxu0 0.0
        %4656 = vmatpush2.msra.mxu0 0.0
        %4657 = vmatprep.subr.mxu0 0.0
        %4658 = vmatpush2.msra.mxu0 0.0
        %4659 = vmatprep.subr.mxu0 0.0
        %4660 = vmatpush2.msra.mxu0 0.0
        %4661 = vmatprep.subr.mxu0 0.0
        %4662 = vmatpush2.msra.mxu0 0.0
        %4663 = vmatprep.subr.mxu0 0.0
        %4664 = vmatpush2.msra.mxu0 0.0
        %4665 = vmatprep.subr.mxu0 0.0
        %4666 = vmatpush2.msra.mxu0 0.0
        %4667 = vmatprep.subr.mxu0 0.0
        %4668 = vmatpush2.msra.mxu0 0.0
        %4669 = vmatprep.subr.mxu0 0.0
        %4670 = vmatpush2.msra.mxu0 0.0
        %4671 = vmatprep.subr.mxu0 0.0
        %4672 = vmatpush2.msra.mxu0 0.0
        %4673 = vmatprep.mubr.f32.mxu0 0.0
        %4674 = vmatmul.mubr.f32.gmra.mxu0 %v4607
        %v4675 = vpop.f32.mrf.mxu0
        %v4676 = vadd.f32 0.0, %v4675
        %v4677 = vpop.f32.mrf.mxu0
        %4678 = vdwg.mxu0
        %v4679 = vadd.f32 %v4603, %v4676
        %s4680 = scalar_lea.vmem %s3, 112
        %v4681 = vld [vmem:[%s4680] sm:$0xff]
        %v4683 = vsel %vm303, %v4681, 0
        %4685 = vmatprep.subr.mxu0 0.0
        %4686 = vmatpush1.msra.mxu0 0.0
        %4687 = vmatprep.subr.mxu0 0.0
        %4688 = vmatpush1.msra.mxu0 0.0
        %4689 = vmatprep.subr.mxu0 0.0
        %4690 = vmatpush1.msra.mxu0 0.0
        %4691 = vmatprep.subr.mxu0 0.0
        %4692 = vmatpush1.msra.mxu0 0.0
        %4693 = vmatprep.subr.mxu0 0.0
        %4694 = vmatpush1.msra.mxu0 0.0
        %4695 = vmatprep.subr.mxu0 0.0
        %4696 = vmatpush1.msra.mxu0 0.0
        %4697 = vmatprep.subr.mxu0 0.0
        %4698 = vmatpush1.msra.mxu0 0.0
        %4699 = vmatprep.subr.mxu0 0.0
        %4700 = vmatpush1.msra.mxu0 0.0
        %4701 = vmatprep.subr.mxu0 0.0
        %4702 = vmatpush1.msra.mxu0 0.0
        %4703 = vmatprep.subr.mxu0 0.0
        %4704 = vmatpush1.msra.mxu0 0.0
        %4705 = vmatprep.subr.mxu0 0.0
        %4706 = vmatpush1.msra.mxu0 0.0
        %4707 = vmatprep.subr.mxu0 0.0
        %4708 = vmatpush1.msra.mxu0 0.0
        %4709 = vmatprep.subr.mxu0 0.0
        %4710 = vmatpush1.msra.mxu0 0.0
        %4711 = vmatprep.subr.mxu0 0.0
        %4712 = vmatpush1.msra.mxu0 0.0
        %4713 = vmatprep.subr.mxu0 0.0
        %4714 = vmatpush1.msra.mxu0 0.0
        %4715 = vmatprep.subr.mxu0 0.0
        %4716 = vmatpush1.msra.mxu0 %v2381
        %4717 = vmatprep.subr.mxu0 0.0
        %4718 = vmatpush2.msra.mxu0 0.0
        %4719 = vmatprep.subr.mxu0 0.0
        %4720 = vmatpush2.msra.mxu0 0.0
        %4721 = vmatprep.subr.mxu0 0.0
        %4722 = vmatpush2.msra.mxu0 0.0
        %4723 = vmatprep.subr.mxu0 0.0
        %4724 = vmatpush2.msra.mxu0 0.0
        %4725 = vmatprep.subr.mxu0 0.0
        %4726 = vmatpush2.msra.mxu0 0.0
        %4727 = vmatprep.subr.mxu0 0.0
        %4728 = vmatpush2.msra.mxu0 0.0
        %4729 = vmatprep.subr.mxu0 0.0
        %4730 = vmatpush2.msra.mxu0 0.0
        %4731 = vmatprep.subr.mxu0 0.0
        %4732 = vmatpush2.msra.mxu0 0.0
        %4733 = vmatprep.subr.mxu0 0.0
        %4734 = vmatpush2.msra.mxu0 0.0
        %4735 = vmatprep.subr.mxu0 0.0
        %4736 = vmatpush2.msra.mxu0 0.0
        %4737 = vmatprep.subr.mxu0 0.0
        %4738 = vmatpush2.msra.mxu0 0.0
        %4739 = vmatprep.subr.mxu0 0.0
        %4740 = vmatpush2.msra.mxu0 0.0
        %4741 = vmatprep.subr.mxu0 0.0
        %4742 = vmatpush2.msra.mxu0 0.0
        %4743 = vmatprep.subr.mxu0 0.0
        %4744 = vmatpush2.msra.mxu0 0.0
        %4745 = vmatprep.subr.mxu0 0.0
        %4746 = vmatpush2.msra.mxu0 0.0
        %4747 = vmatprep.subr.mxu0 0.0
        %4748 = vmatpush2.msra.mxu0 0.0
        %4749 = vmatprep.mubr.f32.mxu0 0.0
        %4750 = vmatmul.mubr.f32.gmra.mxu0 %v4683
        %v4751 = vpop.f32.mrf.mxu0
        %v4752 = vadd.f32 0.0, %v4751
        %v4753 = vpop.f32.mrf.mxu0
        %4754 = vdwg.mxu0
        %v4755 = vadd.f32 %v4679, %v4752
        %s4756 = scalar_lea.vmem %s3, 120
        %v4757 = vld [vmem:[%s4756] sm:$0xff]
        %v4759 = vsel %vm303, %v4757, 0
        %4761 = vmatprep.subr.mxu0 0.0
        %4762 = vmatpush1.msra.mxu0 0.0
        %4763 = vmatprep.subr.mxu0 0.0
        %4764 = vmatpush1.msra.mxu0 0.0
        %4765 = vmatprep.subr.mxu0 0.0
        %4766 = vmatpush1.msra.mxu0 0.0
        %4767 = vmatprep.subr.mxu0 0.0
        %4768 = vmatpush1.msra.mxu0 0.0
        %4769 = vmatprep.subr.mxu0 0.0
        %4770 = vmatpush1.msra.mxu0 0.0
        %4771 = vmatprep.subr.mxu0 0.0
        %4772 = vmatpush1.msra.mxu0 0.0
        %4773 = vmatprep.subr.mxu0 0.0
        %4774 = vmatpush1.msra.mxu0 0.0
        %4775 = vmatprep.subr.mxu0 0.0
        %4776 = vmatpush1.msra.mxu0 0.0
        %4777 = vmatprep.subr.mxu0 0.0
        %4778 = vmatpush1.msra.mxu0 0.0
        %4779 = vmatprep.subr.mxu0 0.0
        %4780 = vmatpush1.msra.mxu0 0.0
        %4781 = vmatprep.subr.mxu0 0.0
        %4782 = vmatpush1.msra.mxu0 0.0
        %4783 = vmatprep.subr.mxu0 0.0
        %4784 = vmatpush1.msra.mxu0 0.0
        %4785 = vmatprep.subr.mxu0 0.0
        %4786 = vmatpush1.msra.mxu0 0.0
        %4787 = vmatprep.subr.mxu0 0.0
        %4788 = vmatpush1.msra.mxu0 0.0
        %4789 = vmatprep.subr.mxu0 0.0
        %4790 = vmatpush1.msra.mxu0 0.0
        %4791 = vmatprep.subr.mxu0 0.0
        %4792 = vmatpush1.msra.mxu0 %v2464
        %4793 = vmatprep.subr.mxu0 0.0
        %4794 = vmatpush2.msra.mxu0 0.0
        %4795 = vmatprep.subr.mxu0 0.0
        %4796 = vmatpush2.msra.mxu0 0.0
        %4797 = vmatprep.subr.mxu0 0.0
        %4798 = vmatpush2.msra.mxu0 0.0
        %4799 = vmatprep.subr.mxu0 0.0
        %4800 = vmatpush2.msra.mxu0 0.0
        %4801 = vmatprep.subr.mxu0 0.0
        %4802 = vmatpush2.msra.mxu0 0.0
        %4803 = vmatprep.subr.mxu0 0.0
        %4804 = vmatpush2.msra.mxu0 0.0
        %4805 = vmatprep.subr.mxu0 0.0
        %4806 = vmatpush2.msra.mxu0 0.0
        %4807 = vmatprep.subr.mxu0 0.0
        %4808 = vmatpush2.msra.mxu0 0.0
        %4809 = vmatprep.subr.mxu0 0.0
        %4810 = vmatpush2.msra.mxu0 0.0
        %4811 = vmatprep.subr.mxu0 0.0
        %4812 = vmatpush2.msra.mxu0 0.0
        %4813 = vmatprep.subr.mxu0 0.0
        %4814 = vmatpush2.msra.mxu0 0.0
        %4815 = vmatprep.subr.mxu0 0.0
        %4816 = vmatpush2.msra.mxu0 0.0
        %4817 = vmatprep.subr.mxu0 0.0
        %4818 = vmatpush2.msra.mxu0 0.0
        %4819 = vmatprep.subr.mxu0 0.0
        %4820 = vmatpush2.msra.mxu0 0.0
        %4821 = vmatprep.subr.mxu0 0.0
        %4822 = vmatpush2.msra.mxu0 0.0
        %4823 = vmatprep.subr.mxu0 0.0
        %4824 = vmatpush2.msra.mxu0 0.0
        %4825 = vmatprep.mubr.f32.mxu0 0.0
        %4826 = vmatmul.mubr.f32.gmra.mxu0 %v4759
        %v4827 = vpop.f32.mrf.mxu0
        %v4828 = vadd.f32 0.0, %v4827
        %v4829 = vpop.f32.mrf.mxu0
        %4830 = vdwg.mxu0
        %v4831 = vadd.f32 %v4755, %v4828
        %s4832 = scalar_lea.vmem %s3, 128
        %v4833 = vld [vmem:[%s4832] sm:$0xff]
        %v4835 = vsel %vm303, %v4833, 0
        %4837 = vmatprep.subr.mxu0 0.0
        %4838 = vmatpush1.msra.mxu0 0.0
        %4839 = vmatprep.subr.mxu0 0.0
        %4840 = vmatpush1.msra.mxu0 0.0
        %4841 = vmatprep.subr.mxu0 0.0
        %4842 = vmatpush1.msra.mxu0 0.0
        %4843 = vmatprep.subr.mxu0 0.0
        %4844 = vmatpush1.msra.mxu0 0.0
        %4845 = vmatprep.subr.mxu0 0.0
        %4846 = vmatpush1.msra.mxu0 0.0
        %4847 = vmatprep.subr.mxu0 0.0
        %4848 = vmatpush1.msra.mxu0 0.0
        %4849 = vmatprep.subr.mxu0 0.0
        %4850 = vmatpush1.msra.mxu0 0.0
        %4851 = vmatprep.subr.mxu0 0.0
        %4852 = vmatpush1.msra.mxu0 0.0
        %4853 = vmatprep.subr.mxu0 0.0
        %4854 = vmatpush1.msra.mxu0 0.0
        %4855 = vmatprep.subr.mxu0 0.0
        %4856 = vmatpush1.msra.mxu0 0.0
        %4857 = vmatprep.subr.mxu0 0.0
        %4858 = vmatpush1.msra.mxu0 0.0
        %4859 = vmatprep.subr.mxu0 0.0
        %4860 = vmatpush1.msra.mxu0 0.0
        %4861 = vmatprep.subr.mxu0 0.0
        %4862 = vmatpush1.msra.mxu0 0.0
        %4863 = vmatprep.subr.mxu0 0.0
        %4864 = vmatpush1.msra.mxu0 0.0
        %4865 = vmatprep.subr.mxu0 0.0
        %4866 = vmatpush1.msra.mxu0 0.0
        %4867 = vmatprep.subr.mxu0 0.0
        %4868 = vmatpush1.msra.mxu0 %v2547
        %4869 = vmatprep.subr.mxu0 0.0
        %4870 = vmatpush2.msra.mxu0 0.0
        %4871 = vmatprep.subr.mxu0 0.0
        %4872 = vmatpush2.msra.mxu0 0.0
        %4873 = vmatprep.subr.mxu0 0.0
        %4874 = vmatpush2.msra.mxu0 0.0
        %4875 = vmatprep.subr.mxu0 0.0
        %4876 = vmatpush2.msra.mxu0 0.0
        %4877 = vmatprep.subr.mxu0 0.0
        %4878 = vmatpush2.msra.mxu0 0.0
        %4879 = vmatprep.subr.mxu0 0.0
        %4880 = vmatpush2.msra.mxu0 0.0
        %4881 = vmatprep.subr.mxu0 0.0
        %4882 = vmatpush2.msra.mxu0 0.0
        %4883 = vmatprep.subr.mxu0 0.0
        %4884 = vmatpush2.msra.mxu0 0.0
        %4885 = vmatprep.subr.mxu0 0.0
        %4886 = vmatpush2.msra.mxu0 0.0
        %4887 = vmatprep.subr.mxu0 0.0
        %4888 = vmatpush2.msra.mxu0 0.0
        %4889 = vmatprep.subr.mxu0 0.0
        %4890 = vmatpush2.msra.mxu0 0.0
        %4891 = vmatprep.subr.mxu0 0.0
        %4892 = vmatpush2.msra.mxu0 0.0
        %4893 = vmatprep.subr.mxu0 0.0
        %4894 = vmatpush2.msra.mxu0 0.0
        %4895 = vmatprep.subr.mxu0 0.0
        %4896 = vmatpush2.msra.mxu0 0.0
        %4897 = vmatprep.subr.mxu0 0.0
        %4898 = vmatpush2.msra.mxu0 0.0
        %4899 = vmatprep.subr.mxu0 0.0
        %4900 = vmatpush2.msra.mxu0 0.0
        %4901 = vmatprep.mubr.f32.mxu0 0.0
        %4902 = vmatmul.mubr.f32.gmra.mxu0 %v4835
        %v4903 = vpop.f32.mrf.mxu0
        %v4904 = vadd.f32 0.0, %v4903
        %v4905 = vpop.f32.mrf.mxu0
        %4906 = vdwg.mxu0
        %v4907 = vadd.f32 %v4831, %v4904
        %s4908 = scalar_lea.vmem %s3, 136
        %v4909 = vld [vmem:[%s4908] sm:$0xff]
        %v4911 = vsel %vm303, %v4909, 0
        %4913 = vmatprep.subr.mxu0 0.0
        %4914 = vmatpush1.msra.mxu0 0.0
        %4915 = vmatprep.subr.mxu0 0.0
        %4916 = vmatpush1.msra.mxu0 0.0
        %4917 = vmatprep.subr.mxu0 0.0
        %4918 = vmatpush1.msra.mxu0 0.0
        %4919 = vmatprep.subr.mxu0 0.0
        %4920 = vmatpush1.msra.mxu0 0.0
        %4921 = vmatprep.subr.mxu0 0.0
        %4922 = vmatpush1.msra.mxu0 0.0
        %4923 = vmatprep.subr.mxu0 0.0
        %4924 = vmatpush1.msra.mxu0 0.0
        %4925 = vmatprep.subr.mxu0 0.0
        %4926 = vmatpush1.msra.mxu0 0.0
        %4927 = vmatprep.subr.mxu0 0.0
        %4928 = vmatpush1.msra.mxu0 0.0
        %4929 = vmatprep.subr.mxu0 0.0
        %4930 = vmatpush1.msra.mxu0 0.0
        %4931 = vmatprep.subr.mxu0 0.0
        %4932 = vmatpush1.msra.mxu0 0.0
        %4933 = vmatprep.subr.mxu0 0.0
        %4934 = vmatpush1.msra.mxu0 0.0
        %4935 = vmatprep.subr.mxu0 0.0
        %4936 = vmatpush1.msra.mxu0 0.0
        %4937 = vmatprep.subr.mxu0 0.0
        %4938 = vmatpush1.msra.mxu0 0.0
        %4939 = vmatprep.subr.mxu0 0.0
        %4940 = vmatpush1.msra.mxu0 0.0
        %4941 = vmatprep.subr.mxu0 0.0
        %4942 = vmatpush1.msra.mxu0 0.0
        %4943 = vmatprep.subr.mxu0 0.0
        %4944 = vmatpush1.msra.mxu0 %v2630
        %4945 = vmatprep.subr.mxu0 0.0
        %4946 = vmatpush2.msra.mxu0 0.0
        %4947 = vmatprep.subr.mxu0 0.0
        %4948 = vmatpush2.msra.mxu0 0.0
        %4949 = vmatprep.subr.mxu0 0.0
        %4950 = vmatpush2.msra.mxu0 0.0
        %4951 = vmatprep.subr.mxu0 0.0
        %4952 = vmatpush2.msra.mxu0 0.0
        %4953 = vmatprep.subr.mxu0 0.0
        %4954 = vmatpush2.msra.mxu0 0.0
        %4955 = vmatprep.subr.mxu0 0.0
        %4956 = vmatpush2.msra.mxu0 0.0
        %4957 = vmatprep.subr.mxu0 0.0
        %4958 = vmatpush2.msra.mxu0 0.0
        %4959 = vmatprep.subr.mxu0 0.0
        %4960 = vmatpush2.msra.mxu0 0.0
        %4961 = vmatprep.subr.mxu0 0.0
        %4962 = vmatpush2.msra.mxu0 0.0
        %4963 = vmatprep.subr.mxu0 0.0
        %4964 = vmatpush2.msra.mxu0 0.0
        %4965 = vmatprep.subr.mxu0 0.0
        %4966 = vmatpush2.msra.mxu0 0.0
        %4967 = vmatprep.subr.mxu0 0.0
        %4968 = vmatpush2.msra.mxu0 0.0
        %4969 = vmatprep.subr.mxu0 0.0
        %4970 = vmatpush2.msra.mxu0 0.0
        %4971 = vmatprep.subr.mxu0 0.0
        %4972 = vmatpush2.msra.mxu0 0.0
        %4973 = vmatprep.subr.mxu0 0.0
        %4974 = vmatpush2.msra.mxu0 0.0
        %4975 = vmatprep.subr.mxu0 0.0
        %4976 = vmatpush2.msra.mxu0 0.0
        %4977 = vmatprep.mubr.f32.mxu0 0.0
        %4978 = vmatmul.mubr.f32.gmra.mxu0 %v4911
        %v4979 = vpop.f32.mrf.mxu0
        %v4980 = vadd.f32 0.0, %v4979
        %v4981 = vpop.f32.mrf.mxu0
        %4982 = vdwg.mxu0
        %v4983 = vadd.f32 %v4907, %v4980
        %s4984 = scalar_lea.vmem %s3, 144
        %v4985 = vld [vmem:[%s4984] sm:$0xff]
        %v4987 = vsel %vm303, %v4985, 0
        %4989 = vmatprep.subr.mxu0 0.0
        %4990 = vmatpush1.msra.mxu0 0.0
        %4991 = vmatprep.subr.mxu0 0.0
        %4992 = vmatpush1.msra.mxu0 0.0
        %4993 = vmatprep.subr.mxu0 0.0
        %4994 = vmatpush1.msra.mxu0 0.0
        %4995 = vmatprep.subr.mxu0 0.0
        %4996 = vmatpush1.msra.mxu0 0.0
        %4997 = vmatprep.subr.mxu0 0.0
        %4998 = vmatpush1.msra.mxu0 0.0
        %4999 = vmatprep.subr.mxu0 0.0
        %5000 = vmatpush1.msra.mxu0 0.0
        %5001 = vmatprep.subr.mxu0 0.0
        %5002 = vmatpush1.msra.mxu0 0.0
        %5003 = vmatprep.subr.mxu0 0.0
        %5004 = vmatpush1.msra.mxu0 0.0
        %5005 = vmatprep.subr.mxu0 0.0
        %5006 = vmatpush1.msra.mxu0 0.0
        %5007 = vmatprep.subr.mxu0 0.0
        %5008 = vmatpush1.msra.mxu0 0.0
        %5009 = vmatprep.subr.mxu0 0.0
        %5010 = vmatpush1.msra.mxu0 0.0
        %5011 = vmatprep.subr.mxu0 0.0
        %5012 = vmatpush1.msra.mxu0 0.0
        %5013 = vmatprep.subr.mxu0 0.0
        %5014 = vmatpush1.msra.mxu0 0.0
        %5015 = vmatprep.subr.mxu0 0.0
        %5016 = vmatpush1.msra.mxu0 0.0
        %5017 = vmatprep.subr.mxu0 0.0
        %5018 = vmatpush1.msra.mxu0 0.0
        %5019 = vmatprep.subr.mxu0 0.0
        %5020 = vmatpush1.msra.mxu0 %v2713
        %5021 = vmatprep.subr.mxu0 0.0
        %5022 = vmatpush2.msra.mxu0 0.0
        %5023 = vmatprep.subr.mxu0 0.0
        %5024 = vmatpush2.msra.mxu0 0.0
        %5025 = vmatprep.subr.mxu0 0.0
        %5026 = vmatpush2.msra.mxu0 0.0
        %5027 = vmatprep.subr.mxu0 0.0
        %5028 = vmatpush2.msra.mxu0 0.0
        %5029 = vmatprep.subr.mxu0 0.0
        %5030 = vmatpush2.msra.mxu0 0.0
        %5031 = vmatprep.subr.mxu0 0.0
        %5032 = vmatpush2.msra.mxu0 0.0
        %5033 = vmatprep.subr.mxu0 0.0
        %5034 = vmatpush2.msra.mxu0 0.0
        %5035 = vmatprep.subr.mxu0 0.0
        %5036 = vmatpush2.msra.mxu0 0.0
        %5037 = vmatprep.subr.mxu0 0.0
        %5038 = vmatpush2.msra.mxu0 0.0
        %5039 = vmatprep.subr.mxu0 0.0
        %5040 = vmatpush2.msra.mxu0 0.0
        %5041 = vmatprep.subr.mxu0 0.0
        %5042 = vmatpush2.msra.mxu0 0.0
        %5043 = vmatprep.subr.mxu0 0.0
        %5044 = vmatpush2.msra.mxu0 0.0
        %5045 = vmatprep.subr.mxu0 0.0
        %5046 = vmatpush2.msra.mxu0 0.0
        %5047 = vmatprep.subr.mxu0 0.0
        %5048 = vmatpush2.msra.mxu0 0.0
        %5049 = vmatprep.subr.mxu0 0.0
        %5050 = vmatpush2.msra.mxu0 0.0
        %5051 = vmatprep.subr.mxu0 0.0
        %5052 = vmatpush2.msra.mxu0 0.0
        %5053 = vmatprep.mubr.f32.mxu0 0.0
        %5054 = vmatmul.mubr.f32.gmra.mxu0 %v4987
        %v5055 = vpop.f32.mrf.mxu0
        %v5056 = vadd.f32 0.0, %v5055
        %v5057 = vpop.f32.mrf.mxu0
        %5058 = vdwg.mxu0
        %v5059 = vadd.f32 %v4983, %v5056
        %v5060 = vld [vmem:[%s4] sm:$0xff]
        %s5061 = scalar_lea.vmem %s4, 8
        %v5062 = vld [vmem:[%s5061] sm:$0xff]
        %v5064 = vsel %vm303, %v5062, 0
        %5066 = vmatprep.subr.mxu0 0.0
        %5067 = vmatpush1.msra.mxu0 0.0
        %5068 = vmatprep.subr.mxu0 0.0
        %5069 = vmatpush1.msra.mxu0 0.0
        %5070 = vmatprep.subr.mxu0 0.0
        %5071 = vmatpush1.msra.mxu0 0.0
        %5072 = vmatprep.subr.mxu0 0.0
        %5073 = vmatpush1.msra.mxu0 0.0
        %5074 = vmatprep.subr.mxu0 0.0
        %5075 = vmatpush1.msra.mxu0 0.0
        %5076 = vmatprep.subr.mxu0 0.0
        %5077 = vmatpush1.msra.mxu0 0.0
        %5078 = vmatprep.subr.mxu0 0.0
        %5079 = vmatpush1.msra.mxu0 0.0
        %5080 = vmatprep.subr.mxu0 0.0
        %5081 = vmatpush1.msra.mxu0 0.0
        %5082 = vmatprep.subr.mxu0 0.0
        %5083 = vmatpush1.msra.mxu0 0.0
        %5084 = vmatprep.subr.mxu0 0.0
        %5085 = vmatpush1.msra.mxu0 0.0
        %5086 = vmatprep.subr.mxu0 0.0
        %5087 = vmatpush1.msra.mxu0 0.0
        %5088 = vmatprep.subr.mxu0 0.0
        %5089 = vmatpush1.msra.mxu0 0.0
        %5090 = vmatprep.subr.mxu0 0.0
        %5091 = vmatpush1.msra.mxu0 0.0
        %5092 = vmatprep.subr.mxu0 0.0
        %5093 = vmatpush1.msra.mxu0 0.0
        %5094 = vmatprep.subr.mxu0 0.0
        %5095 = vmatpush1.msra.mxu0 0.0
        %5096 = vmatprep.subr.mxu0 0.0
        %5097 = vmatpush1.msra.mxu0 %v1717
        %5098 = vmatprep.subr.mxu0 0.0
        %5099 = vmatpush2.msra.mxu0 0.0
        %5100 = vmatprep.subr.mxu0 0.0
        %5101 = vmatpush2.msra.mxu0 0.0
        %5102 = vmatprep.subr.mxu0 0.0
        %5103 = vmatpush2.msra.mxu0 0.0
        %5104 = vmatprep.subr.mxu0 0.0
        %5105 = vmatpush2.msra.mxu0 0.0
        %5106 = vmatprep.subr.mxu0 0.0
        %5107 = vmatpush2.msra.mxu0 0.0
        %5108 = vmatprep.subr.mxu0 0.0
        %5109 = vmatpush2.msra.mxu0 0.0
        %5110 = vmatprep.subr.mxu0 0.0
        %5111 = vmatpush2.msra.mxu0 0.0
        %5112 = vmatprep.subr.mxu0 0.0
        %5113 = vmatpush2.msra.mxu0 0.0
        %5114 = vmatprep.subr.mxu0 0.0
        %5115 = vmatpush2.msra.mxu0 0.0
        %5116 = vmatprep.subr.mxu0 0.0
        %5117 = vmatpush2.msra.mxu0 0.0
        %5118 = vmatprep.subr.mxu0 0.0
        %5119 = vmatpush2.msra.mxu0 0.0
        %5120 = vmatprep.subr.mxu0 0.0
        %5121 = vmatpush2.msra.mxu0 0.0
        %5122 = vmatprep.subr.mxu0 0.0
        %5123 = vmatpush2.msra.mxu0 0.0
        %5124 = vmatprep.subr.mxu0 0.0
        %5125 = vmatpush2.msra.mxu0 0.0
        %5126 = vmatprep.subr.mxu0 0.0
        %5127 = vmatpush2.msra.mxu0 0.0
        %5128 = vmatprep.subr.mxu0 0.0
        %5129 = vmatpush2.msra.mxu0 0.0
        %5130 = vmatprep.mubr.f32.mxu0 0.0
        %5131 = vmatmul.mubr.f32.gmra.mxu0 %v5064
        %v5132 = vpop.f32.mrf.mxu0
        %v5133 = vadd.f32 0.0, %v5132
        %v5134 = vpop.f32.mrf.mxu0
        %5135 = vdwg.mxu0
        %v5137 = vsel %vm303, %v5060, 0
        %5139 = vmatprep.subr.mxu0 0.0
        %5140 = vmatpush1.msra.mxu0 0.0
        %5141 = vmatprep.subr.mxu0 0.0
        %5142 = vmatpush1.msra.mxu0 0.0
        %5143 = vmatprep.subr.mxu0 0.0
        %5144 = vmatpush1.msra.mxu0 0.0
        %5145 = vmatprep.subr.mxu0 0.0
        %5146 = vmatpush1.msra.mxu0 0.0
        %5147 = vmatprep.subr.mxu0 0.0
        %5148 = vmatpush1.msra.mxu0 0.0
        %5149 = vmatprep.subr.mxu0 0.0
        %5150 = vmatpush1.msra.mxu0 0.0
        %5151 = vmatprep.subr.mxu0 0.0
        %5152 = vmatpush1.msra.mxu0 0.0
        %5153 = vmatprep.subr.mxu0 0.0
        %5154 = vmatpush1.msra.mxu0 0.0
        %5155 = vmatprep.subr.mxu0 0.0
        %5156 = vmatpush1.msra.mxu0 0.0
        %5157 = vmatprep.subr.mxu0 0.0
        %5158 = vmatpush1.msra.mxu0 0.0
        %5159 = vmatprep.subr.mxu0 0.0
        %5160 = vmatpush1.msra.mxu0 0.0
        %5161 = vmatprep.subr.mxu0 0.0
        %5162 = vmatpush1.msra.mxu0 0.0
        %5163 = vmatprep.subr.mxu0 0.0
        %5164 = vmatpush1.msra.mxu0 0.0
        %5165 = vmatprep.subr.mxu0 0.0
        %5166 = vmatpush1.msra.mxu0 0.0
        %5167 = vmatprep.subr.mxu0 0.0
        %5168 = vmatpush1.msra.mxu0 0.0
        %5169 = vmatprep.subr.mxu0 0.0
        %5170 = vmatpush1.msra.mxu0 %v1634
        %5171 = vmatprep.subr.mxu0 0.0
        %5172 = vmatpush2.msra.mxu0 0.0
        %5173 = vmatprep.subr.mxu0 0.0
        %5174 = vmatpush2.msra.mxu0 0.0
        %5175 = vmatprep.subr.mxu0 0.0
        %5176 = vmatpush2.msra.mxu0 0.0
        %5177 = vmatprep.subr.mxu0 0.0
        %5178 = vmatpush2.msra.mxu0 0.0
        %5179 = vmatprep.subr.mxu0 0.0
        %5180 = vmatpush2.msra.mxu0 0.0
        %5181 = vmatprep.subr.mxu0 0.0
        %5182 = vmatpush2.msra.mxu0 0.0
        %5183 = vmatprep.subr.mxu0 0.0
        %5184 = vmatpush2.msra.mxu0 0.0
        %5185 = vmatprep.subr.mxu0 0.0
        %5186 = vmatpush2.msra.mxu0 0.0
        %5187 = vmatprep.subr.mxu0 0.0
        %5188 = vmatpush2.msra.mxu0 0.0
        %5189 = vmatprep.subr.mxu0 0.0
        %5190 = vmatpush2.msra.mxu0 0.0
        %5191 = vmatprep.subr.mxu0 0.0
        %5192 = vmatpush2.msra.mxu0 0.0
        %5193 = vmatprep.subr.mxu0 0.0
        %5194 = vmatpush2.msra.mxu0 0.0
        %5195 = vmatprep.subr.mxu0 0.0
        %5196 = vmatpush2.msra.mxu0 0.0
        %5197 = vmatprep.subr.mxu0 0.0
        %5198 = vmatpush2.msra.mxu0 0.0
        %5199 = vmatprep.subr.mxu0 0.0
        %5200 = vmatpush2.msra.mxu0 0.0
        %5201 = vmatprep.subr.mxu0 0.0
        %5202 = vmatpush2.msra.mxu0 0.0
        %5203 = vmatprep.mubr.f32.mxu0 0.0
        %5204 = vmatmul.mubr.f32.gmra.mxu0 %v5137
        %v5205 = vpop.f32.mrf.mxu0
        %v5206 = vadd.f32 %v5133, %v5205
        %v5207 = vpop.f32.mrf.mxu0
        %5208 = vdwg.mxu0
        %s5209 = scalar_lea.vmem %s4, 16
        %v5210 = vld [vmem:[%s5209] sm:$0xff]
        %v5212 = vsel %vm303, %v5210, 0
        %5214 = vmatprep.subr.mxu0 0.0
        %5215 = vmatpush1.msra.mxu0 0.0
        %5216 = vmatprep.subr.mxu0 0.0
        %5217 = vmatpush1.msra.mxu0 0.0
        %5218 = vmatprep.subr.mxu0 0.0
        %5219 = vmatpush1.msra.mxu0 0.0
        %5220 = vmatprep.subr.mxu0 0.0
        %5221 = vmatpush1.msra.mxu0 0.0
        %5222 = vmatprep.subr.mxu0 0.0
        %5223 = vmatpush1.msra.mxu0 0.0
        %5224 = vmatprep.subr.mxu0 0.0
        %5225 = vmatpush1.msra.mxu0 0.0
        %5226 = vmatprep.subr.mxu0 0.0
        %5227 = vmatpush1.msra.mxu0 0.0
        %5228 = vmatprep.subr.mxu0 0.0
        %5229 = vmatpush1.msra.mxu0 0.0
        %5230 = vmatprep.subr.mxu0 0.0
        %5231 = vmatpush1.msra.mxu0 0.0
        %5232 = vmatprep.subr.mxu0 0.0
        %5233 = vmatpush1.msra.mxu0 0.0
        %5234 = vmatprep.subr.mxu0 0.0
        %5235 = vmatpush1.msra.mxu0 0.0
        %5236 = vmatprep.subr.mxu0 0.0
        %5237 = vmatpush1.msra.mxu0 0.0
        %5238 = vmatprep.subr.mxu0 0.0
        %5239 = vmatpush1.msra.mxu0 0.0
        %5240 = vmatprep.subr.mxu0 0.0
        %5241 = vmatpush1.msra.mxu0 0.0
        %5242 = vmatprep.subr.mxu0 0.0
        %5243 = vmatpush1.msra.mxu0 0.0
        %5244 = vmatprep.subr.mxu0 0.0
        %5245 = vmatpush1.msra.mxu0 %v1800
        %5246 = vmatprep.subr.mxu0 0.0
        %5247 = vmatpush2.msra.mxu0 0.0
        %5248 = vmatprep.subr.mxu0 0.0
        %5249 = vmatpush2.msra.mxu0 0.0
        %5250 = vmatprep.subr.mxu0 0.0
        %5251 = vmatpush2.msra.mxu0 0.0
        %5252 = vmatprep.subr.mxu0 0.0
        %5253 = vmatpush2.msra.mxu0 0.0
        %5254 = vmatprep.subr.mxu0 0.0
        %5255 = vmatpush2.msra.mxu0 0.0
        %5256 = vmatprep.subr.mxu0 0.0
        %5257 = vmatpush2.msra.mxu0 0.0
        %5258 = vmatprep.subr.mxu0 0.0
        %5259 = vmatpush2.msra.mxu0 0.0
        %5260 = vmatprep.subr.mxu0 0.0
        %5261 = vmatpush2.msra.mxu0 0.0
        %5262 = vmatprep.subr.mxu0 0.0
        %5263 = vmatpush2.msra.mxu0 0.0
        %5264 = vmatprep.subr.mxu0 0.0
        %5265 = vmatpush2.msra.mxu0 0.0
        %5266 = vmatprep.subr.mxu0 0.0
        %5267 = vmatpush2.msra.mxu0 0.0
        %5268 = vmatprep.subr.mxu0 0.0
        %5269 = vmatpush2.msra.mxu0 0.0
        %5270 = vmatprep.subr.mxu0 0.0
        %5271 = vmatpush2.msra.mxu0 0.0
        %5272 = vmatprep.subr.mxu0 0.0
        %5273 = vmatpush2.msra.mxu0 0.0
        %5274 = vmatprep.subr.mxu0 0.0
        %5275 = vmatpush2.msra.mxu0 0.0
        %5276 = vmatprep.subr.mxu0 0.0
        %5277 = vmatpush2.msra.mxu0 0.0
        %5278 = vmatprep.mubr.f32.mxu0 0.0
        %5279 = vmatmul.mubr.f32.gmra.mxu0 %v5212
        %v5280 = vpop.f32.mrf.mxu0
        %v5281 = vadd.f32 0.0, %v5280
        %v5282 = vpop.f32.mrf.mxu0
        %5283 = vdwg.mxu0
        %v5284 = vadd.f32 %v5206, %v5281
        %s5285 = scalar_lea.vmem %s4, 24
        %v5286 = vld [vmem:[%s5285] sm:$0xff]
        %v5288 = vsel %vm303, %v5286, 0
        %5290 = vmatprep.subr.mxu0 0.0
        %5291 = vmatpush1.msra.mxu0 0.0
        %5292 = vmatprep.subr.mxu0 0.0
        %5293 = vmatpush1.msra.mxu0 0.0
        %5294 = vmatprep.subr.mxu0 0.0
        %5295 = vmatpush1.msra.mxu0 0.0
        %5296 = vmatprep.subr.mxu0 0.0
        %5297 = vmatpush1.msra.mxu0 0.0
        %5298 = vmatprep.subr.mxu0 0.0
        %5299 = vmatpush1.msra.mxu0 0.0
        %5300 = vmatprep.subr.mxu0 0.0
        %5301 = vmatpush1.msra.mxu0 0.0
        %5302 = vmatprep.subr.mxu0 0.0
        %5303 = vmatpush1.msra.mxu0 0.0
        %5304 = vmatprep.subr.mxu0 0.0
        %5305 = vmatpush1.msra.mxu0 0.0
        %5306 = vmatprep.subr.mxu0 0.0
        %5307 = vmatpush1.msra.mxu0 0.0
        %5308 = vmatprep.subr.mxu0 0.0
        %5309 = vmatpush1.msra.mxu0 0.0
        %5310 = vmatprep.subr.mxu0 0.0
        %5311 = vmatpush1.msra.mxu0 0.0
        %5312 = vmatprep.subr.mxu0 0.0
        %5313 = vmatpush1.msra.mxu0 0.0
        %5314 = vmatprep.subr.mxu0 0.0
        %5315 = vmatpush1.msra.mxu0 0.0
        %5316 = vmatprep.subr.mxu0 0.0
        %5317 = vmatpush1.msra.mxu0 0.0
        %5318 = vmatprep.subr.mxu0 0.0
        %5319 = vmatpush1.msra.mxu0 0.0
        %5320 = vmatprep.subr.mxu0 0.0
        %5321 = vmatpush1.msra.mxu0 %v1883
        %5322 = vmatprep.subr.mxu0 0.0
        %5323 = vmatpush2.msra.mxu0 0.0
        %5324 = vmatprep.subr.mxu0 0.0
        %5325 = vmatpush2.msra.mxu0 0.0
        %5326 = vmatprep.subr.mxu0 0.0
        %5327 = vmatpush2.msra.mxu0 0.0
        %5328 = vmatprep.subr.mxu0 0.0
        %5329 = vmatpush2.msra.mxu0 0.0
        %5330 = vmatprep.subr.mxu0 0.0
        %5331 = vmatpush2.msra.mxu0 0.0
        %5332 = vmatprep.subr.mxu0 0.0
        %5333 = vmatpush2.msra.mxu0 0.0
        %5334 = vmatprep.subr.mxu0 0.0
        %5335 = vmatpush2.msra.mxu0 0.0
        %5336 = vmatprep.subr.mxu0 0.0
        %5337 = vmatpush2.msra.mxu0 0.0
        %5338 = vmatprep.subr.mxu0 0.0
        %5339 = vmatpush2.msra.mxu0 0.0
        %5340 = vmatprep.subr.mxu0 0.0
        %5341 = vmatpush2.msra.mxu0 0.0
        %5342 = vmatprep.subr.mxu0 0.0
        %5343 = vmatpush2.msra.mxu0 0.0
        %5344 = vmatprep.subr.mxu0 0.0
        %5345 = vmatpush2.msra.mxu0 0.0
        %5346 = vmatprep.subr.mxu0 0.0
        %5347 = vmatpush2.msra.mxu0 0.0
        %5348 = vmatprep.subr.mxu0 0.0
        %5349 = vmatpush2.msra.mxu0 0.0
        %5350 = vmatprep.subr.mxu0 0.0
        %5351 = vmatpush2.msra.mxu0 0.0
        %5352 = vmatprep.subr.mxu0 0.0
        %5353 = vmatpush2.msra.mxu0 0.0
        %5354 = vmatprep.mubr.f32.mxu0 0.0
        %5355 = vmatmul.mubr.f32.gmra.mxu0 %v5288
        %v5356 = vpop.f32.mrf.mxu0
        %v5357 = vadd.f32 0.0, %v5356
        %v5358 = vpop.f32.mrf.mxu0
        %5359 = vdwg.mxu0
        %v5360 = vadd.f32 %v5284, %v5357
        %s5361 = scalar_lea.vmem %s4, 32
        %v5362 = vld [vmem:[%s5361] sm:$0xff]
        %v5364 = vsel %vm303, %v5362, 0
        %5366 = vmatprep.subr.mxu0 0.0
        %5367 = vmatpush1.msra.mxu0 0.0
        %5368 = vmatprep.subr.mxu0 0.0
        %5369 = vmatpush1.msra.mxu0 0.0
        %5370 = vmatprep.subr.mxu0 0.0
        %5371 = vmatpush1.msra.mxu0 0.0
        %5372 = vmatprep.subr.mxu0 0.0
        %5373 = vmatpush1.msra.mxu0 0.0
        %5374 = vmatprep.subr.mxu0 0.0
        %5375 = vmatpush1.msra.mxu0 0.0
        %5376 = vmatprep.subr.mxu0 0.0
        %5377 = vmatpush1.msra.mxu0 0.0
        %5378 = vmatprep.subr.mxu0 0.0
        %5379 = vmatpush1.msra.mxu0 0.0
        %5380 = vmatprep.subr.mxu0 0.0
        %5381 = vmatpush1.msra.mxu0 0.0
        %5382 = vmatprep.subr.mxu0 0.0
        %5383 = vmatpush1.msra.mxu0 0.0
        %5384 = vmatprep.subr.mxu0 0.0
        %5385 = vmatpush1.msra.mxu0 0.0
        %5386 = vmatprep.subr.mxu0 0.0
        %5387 = vmatpush1.msra.mxu0 0.0
        %5388 = vmatprep.subr.mxu0 0.0
        %5389 = vmatpush1.msra.mxu0 0.0
        %5390 = vmatprep.subr.mxu0 0.0
        %5391 = vmatpush1.msra.mxu0 0.0
        %5392 = vmatprep.subr.mxu0 0.0
        %5393 = vmatpush1.msra.mxu0 0.0
        %5394 = vmatprep.subr.mxu0 0.0
        %5395 = vmatpush1.msra.mxu0 0.0
        %5396 = vmatprep.subr.mxu0 0.0
        %5397 = vmatpush1.msra.mxu0 %v1966
        %5398 = vmatprep.subr.mxu0 0.0
        %5399 = vmatpush2.msra.mxu0 0.0
        %5400 = vmatprep.subr.mxu0 0.0
        %5401 = vmatpush2.msra.mxu0 0.0
        %5402 = vmatprep.subr.mxu0 0.0
        %5403 = vmatpush2.msra.mxu0 0.0
        %5404 = vmatprep.subr.mxu0 0.0
        %5405 = vmatpush2.msra.mxu0 0.0
        %5406 = vmatprep.subr.mxu0 0.0
        %5407 = vmatpush2.msra.mxu0 0.0
        %5408 = vmatprep.subr.mxu0 0.0
        %5409 = vmatpush2.msra.mxu0 0.0
        %5410 = vmatprep.subr.mxu0 0.0
        %5411 = vmatpush2.msra.mxu0 0.0
        %5412 = vmatprep.subr.mxu0 0.0
        %5413 = vmatpush2.msra.mxu0 0.0
        %5414 = vmatprep.subr.mxu0 0.0
        %5415 = vmatpush2.msra.mxu0 0.0
        %5416 = vmatprep.subr.mxu0 0.0
        %5417 = vmatpush2.msra.mxu0 0.0
        %5418 = vmatprep.subr.mxu0 0.0
        %5419 = vmatpush2.msra.mxu0 0.0
        %5420 = vmatprep.subr.mxu0 0.0
        %5421 = vmatpush2.msra.mxu0 0.0
        %5422 = vmatprep.subr.mxu0 0.0
        %5423 = vmatpush2.msra.mxu0 0.0
        %5424 = vmatprep.subr.mxu0 0.0
        %5425 = vmatpush2.msra.mxu0 0.0
        %5426 = vmatprep.subr.mxu0 0.0
        %5427 = vmatpush2.msra.mxu0 0.0
        %5428 = vmatprep.subr.mxu0 0.0
        %5429 = vmatpush2.msra.mxu0 0.0
        %5430 = vmatprep.mubr.f32.mxu0 0.0
        %5431 = vmatmul.mubr.f32.gmra.mxu0 %v5364
        %v5432 = vpop.f32.mrf.mxu0
        %v5433 = vadd.f32 0.0, %v5432
        %v5434 = vpop.f32.mrf.mxu0
        %5435 = vdwg.mxu0
        %v5436 = vadd.f32 %v5360, %v5433
        %s5437 = scalar_lea.vmem %s4, 40
        %v5438 = vld [vmem:[%s5437] sm:$0xff]
        %v5440 = vsel %vm303, %v5438, 0
        %5442 = vmatprep.subr.mxu0 0.0
        %5443 = vmatpush1.msra.mxu0 0.0
        %5444 = vmatprep.subr.mxu0 0.0
        %5445 = vmatpush1.msra.mxu0 0.0
        %5446 = vmatprep.subr.mxu0 0.0
        %5447 = vmatpush1.msra.mxu0 0.0
        %5448 = vmatprep.subr.mxu0 0.0
        %5449 = vmatpush1.msra.mxu0 0.0
        %5450 = vmatprep.subr.mxu0 0.0
        %5451 = vmatpush1.msra.mxu0 0.0
        %5452 = vmatprep.subr.mxu0 0.0
        %5453 = vmatpush1.msra.mxu0 0.0
        %5454 = vmatprep.subr.mxu0 0.0
        %5455 = vmatpush1.msra.mxu0 0.0
        %5456 = vmatprep.subr.mxu0 0.0
        %5457 = vmatpush1.msra.mxu0 0.0
        %5458 = vmatprep.subr.mxu0 0.0
        %5459 = vmatpush1.msra.mxu0 0.0
        %5460 = vmatprep.subr.mxu0 0.0
        %5461 = vmatpush1.msra.mxu0 0.0
        %5462 = vmatprep.subr.mxu0 0.0
        %5463 = vmatpush1.msra.mxu0 0.0
        %5464 = vmatprep.subr.mxu0 0.0
        %5465 = vmatpush1.msra.mxu0 0.0
        %5466 = vmatprep.subr.mxu0 0.0
        %5467 = vmatpush1.msra.mxu0 0.0
        %5468 = vmatprep.subr.mxu0 0.0
        %5469 = vmatpush1.msra.mxu0 0.0
        %5470 = vmatprep.subr.mxu0 0.0
        %5471 = vmatpush1.msra.mxu0 0.0
        %5472 = vmatprep.subr.mxu0 0.0
        %5473 = vmatpush1.msra.mxu0 %v2049
        %5474 = vmatprep.subr.mxu0 0.0
        %5475 = vmatpush2.msra.mxu0 0.0
        %5476 = vmatprep.subr.mxu0 0.0
        %5477 = vmatpush2.msra.mxu0 0.0
        %5478 = vmatprep.subr.mxu0 0.0
        %5479 = vmatpush2.msra.mxu0 0.0
        %5480 = vmatprep.subr.mxu0 0.0
        %5481 = vmatpush2.msra.mxu0 0.0
        %5482 = vmatprep.subr.mxu0 0.0
        %5483 = vmatpush2.msra.mxu0 0.0
        %5484 = vmatprep.subr.mxu0 0.0
        %5485 = vmatpush2.msra.mxu0 0.0
        %5486 = vmatprep.subr.mxu0 0.0
        %5487 = vmatpush2.msra.mxu0 0.0
        %5488 = vmatprep.subr.mxu0 0.0
        %5489 = vmatpush2.msra.mxu0 0.0
        %5490 = vmatprep.subr.mxu0 0.0
        %5491 = vmatpush2.msra.mxu0 0.0
        %5492 = vmatprep.subr.mxu0 0.0
        %5493 = vmatpush2.msra.mxu0 0.0
        %5494 = vmatprep.subr.mxu0 0.0
        %5495 = vmatpush2.msra.mxu0 0.0
        %5496 = vmatprep.subr.mxu0 0.0
        %5497 = vmatpush2.msra.mxu0 0.0
        %5498 = vmatprep.subr.mxu0 0.0
        %5499 = vmatpush2.msra.mxu0 0.0
        %5500 = vmatprep.subr.mxu0 0.0
        %5501 = vmatpush2.msra.mxu0 0.0
        %5502 = vmatprep.subr.mxu0 0.0
        %5503 = vmatpush2.msra.mxu0 0.0
        %5504 = vmatprep.subr.mxu0 0.0
        %5505 = vmatpush2.msra.mxu0 0.0
        %5506 = vmatprep.mubr.f32.mxu0 0.0
        %5507 = vmatmul.mubr.f32.gmra.mxu0 %v5440
        %v5508 = vpop.f32.mrf.mxu0
        %v5509 = vadd.f32 0.0, %v5508
        %v5510 = vpop.f32.mrf.mxu0
        %5511 = vdwg.mxu0
        %v5512 = vadd.f32 %v5436, %v5509
        %s5513 = scalar_lea.vmem %s4, 48
        %v5514 = vld [vmem:[%s5513] sm:$0xff]
        %v5516 = vsel %vm303, %v5514, 0
        %5518 = vmatprep.subr.mxu0 0.0
        %5519 = vmatpush1.msra.mxu0 0.0
        %5520 = vmatprep.subr.mxu0 0.0
        %5521 = vmatpush1.msra.mxu0 0.0
        %5522 = vmatprep.subr.mxu0 0.0
        %5523 = vmatpush1.msra.mxu0 0.0
        %5524 = vmatprep.subr.mxu0 0.0
        %5525 = vmatpush1.msra.mxu0 0.0
        %5526 = vmatprep.subr.mxu0 0.0
        %5527 = vmatpush1.msra.mxu0 0.0
        %5528 = vmatprep.subr.mxu0 0.0
        %5529 = vmatpush1.msra.mxu0 0.0
        %5530 = vmatprep.subr.mxu0 0.0
        %5531 = vmatpush1.msra.mxu0 0.0
        %5532 = vmatprep.subr.mxu0 0.0
        %5533 = vmatpush1.msra.mxu0 0.0
        %5534 = vmatprep.subr.mxu0 0.0
        %5535 = vmatpush1.msra.mxu0 0.0
        %5536 = vmatprep.subr.mxu0 0.0
        %5537 = vmatpush1.msra.mxu0 0.0
        %5538 = vmatprep.subr.mxu0 0.0
        %5539 = vmatpush1.msra.mxu0 0.0
        %5540 = vmatprep.subr.mxu0 0.0
        %5541 = vmatpush1.msra.mxu0 0.0
        %5542 = vmatprep.subr.mxu0 0.0
        %5543 = vmatpush1.msra.mxu0 0.0
        %5544 = vmatprep.subr.mxu0 0.0
        %5545 = vmatpush1.msra.mxu0 0.0
        %5546 = vmatprep.subr.mxu0 0.0
        %5547 = vmatpush1.msra.mxu0 0.0
        %5548 = vmatprep.subr.mxu0 0.0
        %5549 = vmatpush1.msra.mxu0 %v2132
        %5550 = vmatprep.subr.mxu0 0.0
        %5551 = vmatpush2.msra.mxu0 0.0
        %5552 = vmatprep.subr.mxu0 0.0
        %5553 = vmatpush2.msra.mxu0 0.0
        %5554 = vmatprep.subr.mxu0 0.0
        %5555 = vmatpush2.msra.mxu0 0.0
        %5556 = vmatprep.subr.mxu0 0.0
        %5557 = vmatpush2.msra.mxu0 0.0
        %5558 = vmatprep.subr.mxu0 0.0
        %5559 = vmatpush2.msra.mxu0 0.0
        %5560 = vmatprep.subr.mxu0 0.0
        %5561 = vmatpush2.msra.mxu0 0.0
        %5562 = vmatprep.subr.mxu0 0.0
        %5563 = vmatpush2.msra.mxu0 0.0
        %5564 = vmatprep.subr.mxu0 0.0
        %5565 = vmatpush2.msra.mxu0 0.0
        %5566 = vmatprep.subr.mxu0 0.0
        %5567 = vmatpush2.msra.mxu0 0.0
        %5568 = vmatprep.subr.mxu0 0.0
        %5569 = vmatpush2.msra.mxu0 0.0
        %5570 = vmatprep.subr.mxu0 0.0
        %5571 = vmatpush2.msra.mxu0 0.0
        %5572 = vmatprep.subr.mxu0 0.0
        %5573 = vmatpush2.msra.mxu0 0.0
        %5574 = vmatprep.subr.mxu0 0.0
        %5575 = vmatpush2.msra.mxu0 0.0
        %5576 = vmatprep.subr.mxu0 0.0
        %5577 = vmatpush2.msra.mxu0 0.0
        %5578 = vmatprep.subr.mxu0 0.0
        %5579 = vmatpush2.msra.mxu0 0.0
        %5580 = vmatprep.subr.mxu0 0.0
        %5581 = vmatpush2.msra.mxu0 0.0
        %5582 = vmatprep.mubr.f32.mxu0 0.0
        %5583 = vmatmul.mubr.f32.gmra.mxu0 %v5516
        %v5584 = vpop.f32.mrf.mxu0
        %v5585 = vadd.f32 0.0, %v5584
        %v5586 = vpop.f32.mrf.mxu0
        %5587 = vdwg.mxu0
        %v5588 = vadd.f32 %v5512, %v5585
        %s5589 = scalar_lea.vmem %s4, 56
        %v5590 = vld [vmem:[%s5589] sm:$0xff]
        %v5592 = vsel %vm303, %v5590, 0
        %5594 = vmatprep.subr.mxu0 0.0
        %5595 = vmatpush1.msra.mxu0 0.0
        %5596 = vmatprep.subr.mxu0 0.0
        %5597 = vmatpush1.msra.mxu0 0.0
        %5598 = vmatprep.subr.mxu0 0.0
        %5599 = vmatpush1.msra.mxu0 0.0
        %5600 = vmatprep.subr.mxu0 0.0
        %5601 = vmatpush1.msra.mxu0 0.0
        %5602 = vmatprep.subr.mxu0 0.0
        %5603 = vmatpush1.msra.mxu0 0.0
        %5604 = vmatprep.subr.mxu0 0.0
        %5605 = vmatpush1.msra.mxu0 0.0
        %5606 = vmatprep.subr.mxu0 0.0
        %5607 = vmatpush1.msra.mxu0 0.0
        %5608 = vmatprep.subr.mxu0 0.0
        %5609 = vmatpush1.msra.mxu0 0.0
        %5610 = vmatprep.subr.mxu0 0.0
        %5611 = vmatpush1.msra.mxu0 0.0
        %5612 = vmatprep.subr.mxu0 0.0
        %5613 = vmatpush1.msra.mxu0 0.0
        %5614 = vmatprep.subr.mxu0 0.0
        %5615 = vmatpush1.msra.mxu0 0.0
        %5616 = vmatprep.subr.mxu0 0.0
        %5617 = vmatpush1.msra.mxu0 0.0
        %5618 = vmatprep.subr.mxu0 0.0
        %5619 = vmatpush1.msra.mxu0 0.0
        %5620 = vmatprep.subr.mxu0 0.0
        %5621 = vmatpush1.msra.mxu0 0.0
        %5622 = vmatprep.subr.mxu0 0.0
        %5623 = vmatpush1.msra.mxu0 0.0
        %5624 = vmatprep.subr.mxu0 0.0
        %5625 = vmatpush1.msra.mxu0 %v2215
        %5626 = vmatprep.subr.mxu0 0.0
        %5627 = vmatpush2.msra.mxu0 0.0
        %5628 = vmatprep.subr.mxu0 0.0
        %5629 = vmatpush2.msra.mxu0 0.0
        %5630 = vmatprep.subr.mxu0 0.0
        %5631 = vmatpush2.msra.mxu0 0.0
        %5632 = vmatprep.subr.mxu0 0.0
        %5633 = vmatpush2.msra.mxu0 0.0
        %5634 = vmatprep.subr.mxu0 0.0
        %5635 = vmatpush2.msra.mxu0 0.0
        %5636 = vmatprep.subr.mxu0 0.0
        %5637 = vmatpush2.msra.mxu0 0.0
        %5638 = vmatprep.subr.mxu0 0.0
        %5639 = vmatpush2.msra.mxu0 0.0
        %5640 = vmatprep.subr.mxu0 0.0
        %5641 = vmatpush2.msra.mxu0 0.0
        %5642 = vmatprep.subr.mxu0 0.0
        %5643 = vmatpush2.msra.mxu0 0.0
        %5644 = vmatprep.subr.mxu0 0.0
        %5645 = vmatpush2.msra.mxu0 0.0
        %5646 = vmatprep.subr.mxu0 0.0
        %5647 = vmatpush2.msra.mxu0 0.0
        %5648 = vmatprep.subr.mxu0 0.0
        %5649 = vmatpush2.msra.mxu0 0.0
        %5650 = vmatprep.subr.mxu0 0.0
        %5651 = vmatpush2.msra.mxu0 0.0
        %5652 = vmatprep.subr.mxu0 0.0
        %5653 = vmatpush2.msra.mxu0 0.0
        %5654 = vmatprep.subr.mxu0 0.0
        %5655 = vmatpush2.msra.mxu0 0.0
        %5656 = vmatprep.subr.mxu0 0.0
        %5657 = vmatpush2.msra.mxu0 0.0
        %5658 = vmatprep.mubr.f32.mxu0 0.0
        %5659 = vmatmul.mubr.f32.gmra.mxu0 %v5592
        %v5660 = vpop.f32.mrf.mxu0
        %v5661 = vadd.f32 0.0, %v5660
        %v5662 = vpop.f32.mrf.mxu0
        %5663 = vdwg.mxu0
        %v5664 = vadd.f32 %v5588, %v5661
        %s5665 = scalar_lea.vmem %s4, 64
        %v5666 = vld [vmem:[%s5665] sm:$0xff]
        %v5668 = vsel %vm303, %v5666, 0
        %5670 = vmatprep.subr.mxu0 0.0
        %5671 = vmatpush1.msra.mxu0 0.0
        %5672 = vmatprep.subr.mxu0 0.0
        %5673 = vmatpush1.msra.mxu0 0.0
        %5674 = vmatprep.subr.mxu0 0.0
        %5675 = vmatpush1.msra.mxu0 0.0
        %5676 = vmatprep.subr.mxu0 0.0
        %5677 = vmatpush1.msra.mxu0 0.0
        %5678 = vmatprep.subr.mxu0 0.0
        %5679 = vmatpush1.msra.mxu0 0.0
        %5680 = vmatprep.subr.mxu0 0.0
        %5681 = vmatpush1.msra.mxu0 0.0
        %5682 = vmatprep.subr.mxu0 0.0
        %5683 = vmatpush1.msra.mxu0 0.0
        %5684 = vmatprep.subr.mxu0 0.0
        %5685 = vmatpush1.msra.mxu0 0.0
        %5686 = vmatprep.subr.mxu0 0.0
        %5687 = vmatpush1.msra.mxu0 0.0
        %5688 = vmatprep.subr.mxu0 0.0
        %5689 = vmatpush1.msra.mxu0 0.0
        %5690 = vmatprep.subr.mxu0 0.0
        %5691 = vmatpush1.msra.mxu0 0.0
        %5692 = vmatprep.subr.mxu0 0.0
        %5693 = vmatpush1.msra.mxu0 0.0
        %5694 = vmatprep.subr.mxu0 0.0
        %5695 = vmatpush1.msra.mxu0 0.0
        %5696 = vmatprep.subr.mxu0 0.0
        %5697 = vmatpush1.msra.mxu0 0.0
        %5698 = vmatprep.subr.mxu0 0.0
        %5699 = vmatpush1.msra.mxu0 0.0
        %5700 = vmatprep.subr.mxu0 0.0
        %5701 = vmatpush1.msra.mxu0 %v2298
        %5702 = vmatprep.subr.mxu0 0.0
        %5703 = vmatpush2.msra.mxu0 0.0
        %5704 = vmatprep.subr.mxu0 0.0
        %5705 = vmatpush2.msra.mxu0 0.0
        %5706 = vmatprep.subr.mxu0 0.0
        %5707 = vmatpush2.msra.mxu0 0.0
        %5708 = vmatprep.subr.mxu0 0.0
        %5709 = vmatpush2.msra.mxu0 0.0
        %5710 = vmatprep.subr.mxu0 0.0
        %5711 = vmatpush2.msra.mxu0 0.0
        %5712 = vmatprep.subr.mxu0 0.0
        %5713 = vmatpush2.msra.mxu0 0.0
        %5714 = vmatprep.subr.mxu0 0.0
        %5715 = vmatpush2.msra.mxu0 0.0
        %5716 = vmatprep.subr.mxu0 0.0
        %5717 = vmatpush2.msra.mxu0 0.0
        %5718 = vmatprep.subr.mxu0 0.0
        %5719 = vmatpush2.msra.mxu0 0.0
        %5720 = vmatprep.subr.mxu0 0.0
        %5721 = vmatpush2.msra.mxu0 0.0
        %5722 = vmatprep.subr.mxu0 0.0
        %5723 = vmatpush2.msra.mxu0 0.0
        %5724 = vmatprep.subr.mxu0 0.0
        %5725 = vmatpush2.msra.mxu0 0.0
        %5726 = vmatprep.subr.mxu0 0.0
        %5727 = vmatpush2.msra.mxu0 0.0
        %5728 = vmatprep.subr.mxu0 0.0
        %5729 = vmatpush2.msra.mxu0 0.0
        %5730 = vmatprep.subr.mxu0 0.0
        %5731 = vmatpush2.msra.mxu0 0.0
        %5732 = vmatprep.subr.mxu0 0.0
        %5733 = vmatpush2.msra.mxu0 0.0
        %5734 = vmatprep.mubr.f32.mxu0 0.0
        %5735 = vmatmul.mubr.f32.gmra.mxu0 %v5668
        %v5736 = vpop.f32.mrf.mxu0
        %v5737 = vadd.f32 0.0, %v5736
        %v5738 = vpop.f32.mrf.mxu0
        %5739 = vdwg.mxu0
        %v5740 = vadd.f32 %v5664, %v5737
        %5741 = vst [vmem:[#allocation3] sm:$0xff] -1e+30
        %vm5742 = vcmask 15360
        %5743 = vst.msk [vmem:[#allocation3 + $0x8] sm:$0xff] %vm5742, -1e+30
        %5745 = vrot.lane.b32.xlu0 %v301, 1
        %v5746 = vpop.permute.xlu0 %5745
        %vm5748 = vcmask 1047560
        %5749 = vst.msk [vmem:[#allocation3] sm:$0xff] %vm5748, %v5746
        %vm5750 = vcmask 7168
        %5751 = vst.msk [vmem:[#allocation3 + $0x8] sm:$0xff] %vm5750, %v5746
        %v5752 = vld [vmem:[#allocation3] sm:$0xff]
        %v5753 = vld [vmem:[#allocation3 + $0x8] sm:$0xff]
        %5756 = vrot.lane.b32.xlu0 %v5752, 127
        %v5757 = vpop.permute.xlu0 %5756
        %5758 = vrot.lane.b32.xlu0 %v5753, 127
        %v5759 = vpop.permute.xlu0 %5758
        %v5760 = vsel %vm399, %v5757, %v5759
        %v5762 = vmax.f32 %v5752, %v5760
        %5763 = vrot.lane.b32.xlu0 %v5752, 126
        %v5764 = vpop.permute.xlu0 %5763
        %5765 = vrot.lane.b32.xlu0 %v5753, 126
        %v5766 = vpop.permute.xlu0 %5765
        %v5767 = vsel %vm554, %v5764, %v5766
        %v5769 = vmax.f32 %v5762, %v5767
        %v5770 = vld [vmem:[%s5] sm:$0xff]
        %v5772 = vsel %vm303, %v5770, 0
        %5774 = vmatprep.subr.mxu0 0.0
        %5775 = vmatpush1.msra.mxu0 0.0
        %5776 = vmatprep.subr.mxu0 0.0
        %5777 = vmatpush1.msra.mxu0 0.0
        %5778 = vmatprep.subr.mxu0 0.0
        %5779 = vmatpush1.msra.mxu0 0.0
        %5780 = vmatprep.subr.mxu0 0.0
        %5781 = vmatpush1.msra.mxu0 0.0
        %5782 = vmatprep.subr.mxu0 0.0
        %5783 = vmatpush1.msra.mxu0 0.0
        %5784 = vmatprep.subr.mxu0 0.0
        %5785 = vmatpush1.msra.mxu0 0.0
        %5786 = vmatprep.subr.mxu0 0.0
        %5787 = vmatpush1.msra.mxu0 0.0
        %5788 = vmatprep.subr.mxu0 0.0
        %5789 = vmatpush1.msra.mxu0 0.0
        %5790 = vmatprep.subr.mxu0 0.0
        %5791 = vmatpush1.msra.mxu0 0.0
        %5792 = vmatprep.subr.mxu0 0.0
        %5793 = vmatpush1.msra.mxu0 0.0
        %5794 = vmatprep.subr.mxu0 0.0
        %5795 = vmatpush1.msra.mxu0 0.0
        %5796 = vmatprep.subr.mxu0 0.0
        %5797 = vmatpush1.msra.mxu0 0.0
        %5798 = vmatprep.subr.mxu0 0.0
        %5799 = vmatpush1.msra.mxu0 0.0
        %5800 = vmatprep.subr.mxu0 0.0
        %5801 = vmatpush1.msra.mxu0 0.0
        %5802 = vmatprep.subr.mxu0 0.0
        %5803 = vmatpush1.msra.mxu0 0.0
        %5804 = vmatprep.subr.mxu0 0.0
        %5805 = vmatpush1.msra.mxu0 %v5769
        %5806 = vmatprep.subr.mxu0 0.0
        %5807 = vmatpush2.msra.mxu0 0.0
        %5808 = vmatprep.subr.mxu0 0.0
        %5809 = vmatpush2.msra.mxu0 0.0
        %5810 = vmatprep.subr.mxu0 0.0
        %5811 = vmatpush2.msra.mxu0 0.0
        %5812 = vmatprep.subr.mxu0 0.0
        %5813 = vmatpush2.msra.mxu0 0.0
        %5814 = vmatprep.subr.mxu0 0.0
        %5815 = vmatpush2.msra.mxu0 0.0
        %5816 = vmatprep.subr.mxu0 0.0
        %5817 = vmatpush2.msra.mxu0 0.0
        %5818 = vmatprep.subr.mxu0 0.0
        %5819 = vmatpush2.msra.mxu0 0.0
        %5820 = vmatprep.subr.mxu0 0.0
        %5821 = vmatpush2.msra.mxu0 0.0
        %5822 = vmatprep.subr.mxu0 0.0
        %5823 = vmatpush2.msra.mxu0 0.0
        %5824 = vmatprep.subr.mxu0 0.0
        %5825 = vmatpush2.msra.mxu0 0.0
        %5826 = vmatprep.subr.mxu0 0.0
        %5827 = vmatpush2.msra.mxu0 0.0
        %5828 = vmatprep.subr.mxu0 0.0
        %5829 = vmatpush2.msra.mxu0 0.0
        %5830 = vmatprep.subr.mxu0 0.0
        %5831 = vmatpush2.msra.mxu0 0.0
        %5832 = vmatprep.subr.mxu0 0.0
        %5833 = vmatpush2.msra.mxu0 0.0
        %5834 = vmatprep.subr.mxu0 0.0
        %5835 = vmatpush2.msra.mxu0 0.0
        %5836 = vmatprep.subr.mxu0 0.0
        %5837 = vmatpush2.msra.mxu0 0.0
        %5838 = vmatprep.mubr.f32.mxu0 0.0
        %5839 = vmatmul.mubr.f32.gmra.mxu0 %v5772
        %v5840 = vpop.f32.mrf.mxu0
        %v5841 = vadd.f32 0.0, %v5840
        %v5842 = vpop.f32.mrf.mxu0
        %5843 = vdwg.mxu0
        %v5844 = vld [vmem:[%s6] sm:$0xff]
        %v5845 = vld [vmem:[%s7] sm:$0xff]
        %5847 = vset.pattern.permute.xlu0 0
        %5848 = vperm.xlu0 %5847, %v5844
        %v5849 = vpop.permute.xlu0 %5848
        %v5851 = vmul.f32 %v5841, %v5849
        %5853 = vset.pattern.permute.xlu0 0
        %5854 = vperm.xlu0 %5853, %v5845
        %v5855 = vpop.permute.xlu0 %5854
        %v5857 = vadd.f32 %v5851, %v5855
        %v5858 = vmax.f32 %v5857, 0.0
        %5859 = vst [vmem:[%s296] sm:$0xff] %v5858
        %v5860 = vld [vmem:[%s6 + $0x8] sm:$0xff]
        %v5861 = vld [vmem:[%s7 + $0x8] sm:$0xff]
        %5863 = vset.pattern.permute.xlu0 0
        %5864 = vperm.xlu0 %5863, %v5860
        %v5865 = vpop.permute.xlu0 %5864
        %v5867 = vmul.f32 %v5740, %v5865
        %5869 = vset.pattern.permute.xlu0 0
        %5870 = vperm.xlu0 %5869, %v5861
        %v5871 = vpop.permute.xlu0 %5870
        %v5873 = vadd.f32 %v5867, %v5871
        %v5874 = vmax.f32 %v5873, 0.0
        %5875 = vst [vmem:[%s296 + $0x8] sm:$0xff] %v5874
        %v5876 = vld [vmem:[%s6 + $0x10] sm:$0xff]
        %v5877 = vld [vmem:[%s7 + $0x10] sm:$0xff]
        %5879 = vset.pattern.permute.xlu0 0
        %5880 = vperm.xlu0 %5879, %v5876
        %v5881 = vpop.permute.xlu0 %5880
        %v5883 = vmul.f32 %v5059, %v5881
        %5885 = vset.pattern.permute.xlu0 0
        %5886 = vperm.xlu0 %5885, %v5877
        %v5887 = vpop.permute.xlu0 %5886
        %v5889 = vadd.f32 %v5883, %v5887
        %v5890 = vmax.f32 %v5889, 0.0
        %5891 = vst [vmem:[%s296 + $0x10] sm:$0xff] %v5890
        %v5892 = vld [vmem:[%s6 + $0x18] sm:$0xff]
        %v5893 = vld [vmem:[%s7 + $0x18] sm:$0xff]
        %5895 = vset.pattern.permute.xlu0 0
        %5896 = vperm.xlu0 %5895, %v5892
        %v5897 = vpop.permute.xlu0 %5896
        %v5899 = vmul.f32 %v3618, %v5897
        %5901 = vset.pattern.permute.xlu0 0
        %5902 = vperm.xlu0 %5901, %v5893
        %v5903 = vpop.permute.xlu0 %5902
        %v5905 = vadd.f32 %v5899, %v5903
        %v5906 = vmax.f32 %v5905, 0.0
        %5907 = vst [vmem:[%s296 + $0x18] sm:$0xff] %v5906
        %s5908 = sand.u32 %s203, 1
        %s5909 = scalar_lea.sflag [#allocation5], %s5908
        %s5910 = sand.u32 %s203, 1
        %s5911 = smul.addr %s5910, 32
        %s5912 = scalar_lea.vmem [#allocation4], %s5911
        // Predicated region
        $region53: #{tpu_custom_call.1} parent=51 // pred_check
          %p5913 = pneg %p213
        $region54: #{tpu_custom_call.1} parent=51 // pred_check_branch
          %5915 = sbr.rel (%p5913) target = $region56
        $region55: #{tpu_custom_call.1} parent=51 // pred_region
          %s5917 = ssub.s32 512, 512
          %5918 = vsyncadd %s5909, %s5917
          %s5919 = smul.addr %s22, 4
          %s5920 = smul.addr %s5919, 128
          %s5921 = scalar_lea.hbm %s8, %s5920
          %s5922 = sshll.u32 %s5912, 4
          %s5923 = int_to_ptr.vmem [resolvable:$true] %s5922
          %5928 = dma.vmem_to_hbm [thread:$0]  %s5923, 512, %s5921, %s5909, 128, 128, 8
        $region56: #{tpu_custom_call.1} parent=51 // pred_fallthru
          _
      $region52: #{tpu_custom_call.1} parent=5 // pred_fallthru
        _
      %p5929 = scmp.le.s32.totalorder 2, %s17
      // Predicated region
      $region57: #{tpu_custom_call.1} parent=5 // pred_check
        %p5930 = pneg %p5929
      $region58: #{tpu_custom_call.1} parent=5 // pred_check_branch
        %5932 = sbr.rel (%p5930) target = $region60
      $region59: #{tpu_custom_call.1} parent=5 // pred_region
        %s5933 = ssub.s32 %s17, 2
        // Predicated region
        $region61: #{tpu_custom_call.1} parent=59 // pred_check
          %p5934 = pneg %p219
        $region62: #{tpu_custom_call.1} parent=59 // pred_check_branch
          %5936 = sbr.rel (%p5934) target = $region64
        $region63: #{tpu_custom_call.1} parent=59 // pred_region
          %s5937 = sand.u32 %s204, 1
          %s5938 = scalar_lea.sflag [#allocation5], %s5937
          %s5939 = sand.u32 %s204, 1
          %s5940 = smul.addr %s5939, 32
          %s5941 = scalar_lea.vmem [#allocation4], %s5940
          %5942 = dma.done %s5938, 512
        $region64: #{tpu_custom_call.1} parent=59 // pred_fallthru
          _
      $region60: #{tpu_custom_call.1} parent=5 // pred_fallthru
        _
    $region6: #{tpu_custom_call.1} parent=1 // loop_footer
      %s21 = sadd.s32 1, %s17
    $region7: #{tpu_custom_call.1} parent=1 // loop_footer_branch
      %16 = sbr.rel target = $region3
    $region8: #{tpu_custom_call.1} parent=1 // loop_exit
      _
    %5943 = vsyncpa [#allocation5], 1
    %s5944 = scalar_lea.sflag [#allocation5], 1
    %5945 = vsyncpa %s5944, 1

</llo_original>
